<compile_context>
chip_gen: v7x
topology: tpu7x:2x2x1
jax: 0.10.0
libtpu: 0.0.40
codegen_flags: <defaults>
</compile_context>

<pallas_src>
import math

import jax
import jax.numpy as jnp
from jax import lax
from jax.experimental import pallas as pl
from jax.experimental.pallas import tpu as pltpu


# ---------------------------------------------------------------------------
# Fused Conv1d (+ bias + LeakyReLU) Pallas kernel
# ---------------------------------------------------------------------------

def _round_up(v, m):
    return ((v + m - 1) // m) * m


def _make_conv_kernel(kc, lout_pad, act, neg_slope=0.2):
    """Kernel: acc[Coutp, Lout_pad] = sum_j W_j @ X[:, j:j+Lout_pad] + b, act()."""

    def kernel(x_ref, w_ref, b_ref, o_ref):
        acc = jnp.dot(w_ref[0], x_ref[:, 0:lout_pad],
                      preferred_element_type=jnp.float32)
        for j in range(1, kc):                      # static unrolled tap loop
            acc = acc + jnp.dot(w_ref[j], x_ref[:, j:j + lout_pad],
                                preferred_element_type=jnp.float32)
        acc = acc + b_ref[...]                      # (Coutp,1) broadcast over lanes
        if act == "leaky":
            acc = jnp.where(acc >= 0.0, acc, neg_slope * acc)
        o_ref[...] = acc

    return kernel


# Densify grouped convs whose block-diagonal dense weight (bf16) fits easily
# in VMEM; above this we keep the per-group grid path.
_DENSE_GROUP_BYTES = 4 * 1024 * 1024


def _block_diag_weight(w, groups):
    """(Cout, Cin_g, K) grouped weight -> (Cout, Cin, K) block-diagonal dense."""
    Cout, Cin_g, K = w.shape
    Cout_g = Cout // groups
    w_r = w.reshape(groups, Cout_g, Cin_g, K)
    eye = jnp.eye(groups, dtype=w.dtype)
    wd = jnp.einsum("gh,goik->gohik", eye, w_r)          # zero off-diagonal blocks
    return wd.reshape(Cout, groups * Cin_g, K)


def conv1d_fused(x, w, b, *, stride=1, pad=0, pad_mode="zero", groups=1,
                 act="leaky"):
    """PyTorch-style Conv1d with fused bias + LeakyReLU(0.2).

    x: (B, Cin, L) f32, w: (Cout, Cin//groups, K), b: (Cout,).
    Returns (B, Cout, Lout) f32.
    """
    B, Cin, L = x.shape
    Cout, Cin_g, K = w.shape
    s = stride
    Kc = -(-K // s)                      # taps after phase split = ceil(K/s)

    # -- densify small grouped convs (bigger MXU matmuls, G x fewer steps) --
    if groups > 1 and Cout * Cin * Kc * s * 2 <= _DENSE_GROUP_BYTES:
        w = _block_diag_weight(w, groups)
        groups = 1
        Cin_g = Cin
    G = groups
    assert Cin == Cin_g * G and Cout % G == 0
    Cout_g = Cout // G

    # -- spatial padding (reflection / zero), once, in XLA glue -------------
    if pad > 0:
        mode = "reflect" if pad_mode == "reflect" else "constant"
        x = jnp.pad(x, ((0, 0), (0, 0), (pad, pad)), mode=mode)
    Lp = L + 2 * pad
    Lout = (Lp - K) // s + 1
    Lout_pad = _round_up(Lout, 128)      # lane-dense output slab
    Lw = Lout_pad + Kc - 1               # phase-expanded input length
    Lpp = Lw * s                         # raw samples the kernel consumes
    if Lpp > Lp:
        x = jnp.pad(x, ((0, 0), (0, 0), (0, Lpp - Lp)))   # zero tail (safe)
    else:
        x = x[:, :, :Lpp]

    # -- phase expansion: strided conv -> stride-1 conv over Cin*s channels -
    # x_ph[b, ci, p, m] = x[b, ci, m*s + p]
    x = x.reshape(B, Cin, Lw, s).transpose(0, 1, 3, 2)        # (B, Cin, s, Lw)
    x = x.reshape(B, G, Cin_g * s, Lw)                        # virtual channels
    CK = Cin_g * s
    CKp = _round_up(max(CK, 8), 8)
    if CKp > CK:
        x = jnp.pad(x, ((0, 0), (0, 0), (0, CKp - CK), (0, 0)))
    x = x.astype(jnp.bfloat16)

    # -- weights: (Cout, Cin_g, K) -> (G, Kc, Cout_g_pad, CKp) bf16 ----------
    wz = jnp.pad(w, ((0, 0), (0, 0), (0, Kc * s - K)))        # zero extra taps
    wz = wz.reshape(Cout, Cin_g, Kc, s).transpose(0, 2, 1, 3)  # (Cout,Kc,Cin_g,s)
    wz = wz.reshape(Cout, Kc, CK)
    wz = wz.reshape(G, Cout_g, Kc, CK).transpose(0, 2, 1, 3)   # (G,Kc,Cout_g,CK)
    Coutp = _round_up(max(Cout_g, 8), 8)
    wz = jnp.pad(wz, ((0, 0), (0, 0), (0, Coutp - Cout_g), (0, CKp - CK)))
    wz = wz.astype(jnp.bfloat16)

    bz = b if b is not None else jnp.zeros((Cout,), jnp.float32)
    bz = bz.astype(jnp.float32).reshape(G, Cout_g)
    bz = jnp.pad(bz, ((0, 0), (0, Coutp - Cout_g))).reshape(G, Coutp, 1)

    kernel = _make_conv_kernel(Kc, Lout_pad, act)
    # Grid ordered (G, B): weight block index depends only on the outer axis,
    # so Pallas keeps the weight tile resident across the batch loop.
    out = pl.pallas_call(
        kernel,
        out_shape=jax.ShapeDtypeStruct((B, G, Coutp, Lout_pad), jnp.float32),
        grid=(G, B),
        in_specs=[
            pl.BlockSpec((None, None, CKp, Lw), lambda gg, bb: (bb, gg, 0, 0)),
            pl.BlockSpec((None, Kc, Coutp, CKp), lambda gg, bb: (gg, 0, 0, 0)),
            pl.BlockSpec((None, Coutp, 1), lambda gg, bb: (gg, 0, 0)),
        ],
        out_specs=pl.BlockSpec((None, None, Coutp, Lout_pad),
                               lambda gg, bb: (bb, gg, 0, 0)),
        compiler_params=pltpu.CompilerParams(
            dimension_semantics=("parallel", "parallel")),
    )(x, wz, bz)

    out = out[:, :, :Cout_g, :Lout].reshape(B, Cout, Lout)
    return out


def avg_pool_1d(x):
    """F.avg_pool2d(x, (1,4), stride=(1,2), padding=(0,1), count_include_pad=True)
    on (B, C, L) audio, expressed as the same fused Pallas conv kernel."""
    B, C, L = x.shape
    w = jnp.full((C, 1, 4), 0.25, jnp.float32)       # depthwise averaging taps
    b = jnp.zeros((C,), jnp.float32)
    return conv1d_fused(x, w, b, stride=2, pad=1, pad_mode="zero",
                        groups=C, act="none")


def speaker_gather(x, y):
    """out[b, t] = x[b, y[b], t]  (torch.gather(dim=1) + squeeze)."""
    # TODO(synk): data-dependent channel gather kept in XLA glue; a dedicated
    # Pallas gather kernel adds nothing at these sizes.
    B, C, T = x.shape
    idx = jnp.broadcast_to(y.reshape(B, 1, 1).astype(jnp.int32), (B, 1, T))
    return jnp.take_along_axis(x, idx, axis=1).squeeze(1)


# ---------------------------------------------------------------------------
# Architecture (static, NOT part of the traced pytree) and parameter init
# ---------------------------------------------------------------------------

CFG = dict(ndf=16, n_layers_D=2, num_D=2, downsamp_factor=2, n_speakers=4)


def build_arch(cfg):
    s = cfg["downsamp_factor"]
    layers = []
    # block 0: ReflectionPad1d(7) + Conv1d(1, ndf, 15) + LeakyReLU(0.2)
    layers.append(dict(cin=1, cout=cfg["ndf"], k=15, stride=1, pad=7,
                       pad_mode="reflect", groups=1))
    cin = cfg["ndf"]
    # strided grouped blocks
    for _ in range(cfg["n_layers_D"]):
        cout = min(cin * s, 1024)
        layers.append(dict(cin=cin, cout=cout, k=s * 10 + 1, stride=s,
                           pad=s * 5, pad_mode="zero", groups=cin // 4))
        cin = cout
    # extra conv block (kernel 5)
    cout = min(cin * 2, 1024)
    layers.append(dict(cin=cin, cout=cout, k=5, stride=1, pad=2,
                       pad_mode="zero", groups=1))
    cin = cout
    # last_layer: Conv1d(cin, n_speakers, 3, pad=1) + LeakyReLU
    layers.append(dict(cin=cin, cout=cfg["n_speakers"], k=3, stride=1, pad=1,
                       pad_mode="zero", groups=1))
    return layers


def init_params(key, arch, num_d):
    params = []
    for _ in range(num_d):
        layers = []
        for spec in arch:
            key, kw, kb = jax.random.split(key, 3)
            cin_g = spec["cin"] // spec["groups"]
            fan_in = cin_g * spec["k"]
            bound = 1.0 / math.sqrt(fan_in)
            w = jax.random.uniform(kw, (spec["cout"], cin_g, spec["k"]),
                                   jnp.float32, -bound, bound)
            b = jax.random.uniform(kb, (spec["cout"],), jnp.float32,
                                   -bound, bound)
            layers.append({"w": w, "b": b})
        params.append(layers)
    return params


# ---------------------------------------------------------------------------
# Forward passes (NLayerDiscriminator / Discriminator)
# ---------------------------------------------------------------------------

def nlayer_discriminator_fwd(layer_params, arch, x, y):
    results = []
    h = x
    # discriminator_blocks (everything except last_layer)
    for spec, p in zip(arch[:-1], layer_params[:-1]):
        h = conv1d_fused(h, p["w"], p["b"], stride=spec["stride"],
                         pad=spec["pad"], pad_mode=spec["pad_mode"],
                         groups=spec["groups"], act="leaky")
        results.append(h)
    # last_layer
    spec, p = arch[-1], layer_params[-1]
    h = conv1d_fused(h, p["w"], p["b"], stride=spec["stride"], pad=spec["pad"],
                     pad_mode=spec["pad_mode"], groups=spec["groups"],
                     act="leaky")
    if y is not None:
        h = speaker_gather(h, y)
    results.append(h)
    return results


def make_discriminator(cfg):
    arch = build_arch(cfg)
    num_d = cfg["num_D"]

    def forward(params, x, y):
        results = []
        h = x
        for i in range(num_d):
            results.append(nlayer_discriminator_fwd(params[i], arch, h, y))
            if i + 1 < num_d:          # pooled x after the last scale is unused
                h = avg_pool_1d(h)
        return results

    return arch, forward


# ---------------------------------------------------------------------------
# Pure-XLA reference (lax.conv) for numerical validation
# ---------------------------------------------------------------------------

def make_reference(cfg, arch):
    num_d = cfg["num_D"]

    def conv_ref(x, w, b, spec):
        pad, mode = spec["pad"], spec["pad_mode"]
        if pad > 0 and mode == "reflect":
            x = jnp.pad(x, ((0, 0), (0, 0), (pad, pad)), mode="reflect")
            pad = 0
        y = lax.conv_general_dilated(
            x, w, window_strides=(spec["stride"],), padding=[(pad, pad)],
            dimension_numbers=("NCH", "OIH", "NCH"),
            feature_group_count=spec["groups"])
        y = y + b[None, :, None]
        return jnp.where(y >= 0.0, y, 0.2 * y)

    def pool_ref(h):
        B, C, L = h.shape
        wp = jnp.full((C, 1, 4), 0.25, jnp.float32)
        return lax.conv_general_dilated(
            h, wp, window_strides=(2,), padding=[(1, 1)],
            dimension_numbers=("NCH", "OIH", "NCH"), feature_group_count=C)

    def forward(params, x, y):
        results = []
        h = x
        for i in range(num_d):
            scale = []
            hh = h
            for spec, p in zip(arch, params[i]):
                hh = conv_ref(hh, p["w"], p["b"], spec)
                scale.append(hh)
            if y is not None:
                scale[-1] = speaker_gather(scale[-1], y)
            results.append(scale)
            if i + 1 < num_d:
                h = pool_ref(h)
        return results

    return forward


# ---------------------------------------------------------------------------

if __name__ == "__main__":
    arch, disc_fwd = make_discriminator(CFG)
    ref_fwd = make_reference(CFG, arch)

    key = jax.random.PRNGKey(0)
    kp, kx, ky = jax.random.split(key, 3)
    params = init_params(kp, arch, CFG["num_D"])

    B, L = 2, 256
    x = jax.random.normal(kx, (B, 1, L), jnp.float32)           # raw audio
    y = jax.random.randint(ky, (B, 1), 0, CFG["n_speakers"])    # speaker ids

    fwd = jax.jit(disc_fwd)
    out = fwd(params, x, y)
    out = jax.block_until_ready(out)

    # structural checks: num_D scales, each with n_layers_D + 3 tensors
    assert len(out) == CFG["num_D"]
    for scale_out in out:
        assert len(scale_out) == CFG["n_layers_D"] + 3
        for t in scale_out:
            assert bool(jnp.all(jnp.isfinite(t)))
    assert out[0][0].shape == (B, CFG["ndf"], 256)
    assert out[0][-1].shape == (B, 64)     # gathered speaker logits, scale 0
    assert out[1][-1].shape == (B, 32)     # gathered speaker logits, scale 1

    # numerical check vs pure-XLA lax.conv reference (bf16 MXU tolerance)
    ref_out = jax.block_until_ready(jax.jit(ref_fwd)(params, x, y))
    max_rel = 0.0
    for so, sr in zip(out, ref_out):
        for a, r in zip(so, sr):
            assert a.shape == r.shape
            err = float(jnp.max(jnp.abs(a - r)) / (jnp.max(jnp.abs(r)) + 1e-6))
            max_rel = max(max_rel, err)
    assert max_rel < 0.1, f"numerical mismatch vs lax reference: {max_rel}"

    print("KERNEL_OK")
</pallas_src>

<mosaic_0001>
module attributes {stable_mosaic.version = 11 : i64} {
  func.func @kernel(%arg0: i32, %arg1: i32, %arg2: memref<1x1x8x129xbf16, #tpu.memory_space<vmem>>, %arg3: memref<1x2x8x8xbf16, #tpu.memory_space<vmem>>, %arg4: memref<1x8x1xf32, #tpu.memory_space<vmem>>, %arg5: memref<1x1x8x128xf32, #tpu.memory_space<vmem>>) attributes {dimension_semantics = [#tpu.dimension_semantics<parallel>, #tpu.dimension_semantics<parallel>], iteration_bounds = array<i64: 1, 2>, scalar_prefetch = 0 : i64, scratch_operands = 0 : i64, tpu.core_type = #tpu.core_type<tc>, window_params = [{transform_indices = @transform_0, window_bounds = array<i64: 1, 1, 8, 129>}, {transform_indices = @transform_1, window_bounds = array<i64: 1, 2, 8, 8>}, {transform_indices = @transform_2, window_bounds = array<i64: 1, 8, 1>}, {transform_indices = @transform_3, window_bounds = array<i64: 1, 1, 8, 128>}]} {
    %c0 = arith.constant 0 : index
    %c0_0 = arith.constant 0 : index
    %c0_1 = arith.constant 0 : index
    %c0_2 = arith.constant 0 : index
    %0 = vector.load %arg3[%c0, %c0_0, %c0_1, %c0_2] : memref<1x2x8x8xbf16, #tpu.memory_space<vmem>>, vector<1x1x8x8xbf16>
    %1 = vector.shape_cast %0 : vector<1x1x8x8xbf16> to vector<8x8xbf16>
    %c0_3 = arith.constant 0 : index
    %c0_4 = arith.constant 0 : index
    %c0_5 = arith.constant 0 : index
    %c0_6 = arith.constant 0 : index
    %2 = vector.load %arg2[%c0_3, %c0_4, %c0_5, %c0_6] : memref<1x1x8x129xbf16, #tpu.memory_space<vmem>>, vector<1x1x8x128xbf16>
    %3 = vector.shape_cast %2 : vector<1x1x8x128xbf16> to vector<8x128xbf16>
    %cst = arith.constant dense<0.000000e+00> : vector<8x128xf32>
    %4 = tpu.matmul %1, %3, %cst {dimension_numbers = #tpu.dot_dimension_numbers<[1], [0], [0], [1], [0, 0, 1, 1], [], []>} : vector<8x8xbf16>, vector<8x128xbf16>, vector<8x128xf32> -> vector<8x128xf32>
    %c0_7 = arith.constant 0 : index
    %c1 = arith.constant 1 : index
    %c0_8 = arith.constant 0 : index
    %c0_9 = arith.constant 0 : index
    %5 = vector.load %arg3[%c0_7, %c1, %c0_8, %c0_9] : memref<1x2x8x8xbf16, #tpu.memory_space<vmem>>, vector<1x1x8x8xbf16>
    %6 = vector.shape_cast %5 : vector<1x1x8x8xbf16> to vector<8x8xbf16>
    %c0_10 = arith.constant 0 : index
    %c0_11 = arith.constant 0 : index
    %c0_12 = arith.constant 0 : index
    %c1_13 = arith.constant 1 : index
    %7 = vector.load %arg2[%c0_10, %c0_11, %c0_12, %c1_13] : memref<1x1x8x129xbf16, #tpu.memory_space<vmem>>, vector<1x1x8x128xbf16>
    %8 = vector.shape_cast %7 : vector<1x1x8x128xbf16> to vector<8x128xbf16>
    %cst_14 = arith.constant dense<0.000000e+00> : vector<8x128xf32>
    %9 = tpu.matmul %6, %8, %cst_14 {dimension_numbers = #tpu.dot_dimension_numbers<[1], [0], [0], [1], [0, 0, 1, 1], [], []>} : vector<8x8xbf16>, vector<8x128xbf16>, vector<8x128xf32> -> vector<8x128xf32>
    %10 = arith.addf %4, %9 : vector<8x128xf32>
    %c0_15 = arith.constant 0 : index
    %c0_16 = arith.constant 0 : index
    %c0_17 = arith.constant 0 : index
    %11 = vector.load %arg4[%c0_15, %c0_16, %c0_17] : memref<1x8x1xf32, #tpu.memory_space<vmem>>, vector<1x8x1xf32>
    %12 = vector.shape_cast %11 : vector<1x8x1xf32> to vector<8x1xf32>
    %13 = vector.broadcast %12 : vector<8x1xf32> to vector<8x128xf32>
    %14 = arith.addf %10, %13 : vector<8x128xf32>
    %c0_18 = arith.constant 0 : index
    %c0_19 = arith.constant 0 : index
    %c0_20 = arith.constant 0 : index
    %c0_21 = arith.constant 0 : index
    %15 = vector.load %arg5[%c0_18, %c0_19, %c0_20, %c0_21] : memref<1x1x8x128xf32, #tpu.memory_space<vmem>>, vector<1x1x8x128xf32>
    %16 = vector.shape_cast %15 : vector<1x1x8x128xf32> to vector<8x128xf32>
    %17 = vector.shape_cast %14 : vector<8x128xf32> to vector<1x1x8x128xf32>
    tpu.vector_store %arg5[%c0_18, %c0_19, %c0_20, %c0_21], %17 {strides = array<i32>} : memref<1x1x8x128xf32, #tpu.memory_space<vmem>>, vector<1x1x8x128xf32>,
    return
  }
  func.func @transform_0(%arg0: i32, %arg1: i32) -> (i32, i32, i32, i32) {
    %c0_i32 = arith.constant 0 : i32
    %c0_i32_0 = arith.constant 0 : i32
    %c0_i32_1 = arith.constant 0 : i32
    return %arg1, %arg0, %c0_i32, %c0_i32_0 : i32, i32, i32, i32
  }
  func.func @transform_1(%arg0: i32, %arg1: i32) -> (i32, i32, i32, i32) {
    %c0_i32 = arith.constant 0 : i32
    %c0_i32_0 = arith.constant 0 : i32
    %c0_i32_1 = arith.constant 0 : i32
    %c0_i32_2 = arith.constant 0 : i32
    return %arg0, %c0_i32, %c0_i32_0, %c0_i32_1 : i32, i32, i32, i32
  }
  func.func @transform_2(%arg0: i32, %arg1: i32) -> (i32, i32, i32) {
    %c0_i32 = arith.constant 0 : i32
    %c0_i32_0 = arith.constant 0 : i32
    %c0_i32_1 = arith.constant 0 : i32
    return %arg0, %c0_i32, %c0_i32_0 : i32, i32, i32
  }
  func.func @transform_3(%arg0: i32, %arg1: i32) -> (i32, i32, i32, i32) {
    %c0_i32 = arith.constant 0 : i32
    %c0_i32_0 = arith.constant 0 : i32
    %c0_i32_1 = arith.constant 0 : i32
    return %arg1, %arg0, %c0_i32, %c0_i32_0 : i32, i32, i32, i32
  }
}

module attributes {stable_mosaic.version = 11 : i64} {
  func.func @kernel(%arg0: i32, %arg1: i32, %arg2: memref<1x1x8x142xbf16, #tpu.memory_space<vmem>>, %arg3: memref<1x15x16x8xbf16, #tpu.memory_space<vmem>>, %arg4: memref<1x16x1xf32, #tpu.memory_space<vmem>>, %arg5: memref<1x1x16x128xf32, #tpu.memory_space<vmem>>) attributes {dimension_semantics = [#tpu.dimension_semantics<parallel>, #tpu.dimension_semantics<parallel>], iteration_bounds = array<i64: 1, 2>, scalar_prefetch = 0 : i64, scratch_operands = 0 : i64, tpu.core_type = #tpu.core_type<tc>, window_params = [{transform_indices = @transform_0, window_bounds = array<i64: 1, 1, 8, 142>}, {transform_indices = @transform_1, window_bounds = array<i64: 1, 15, 16, 8>}, {transform_indices = @transform_2, window_bounds = array<i64: 1, 16, 1>}, {transform_indices = @transform_3, window_bounds = array<i64: 1, 1, 16, 128>}]} {
    %c0 = arith.constant 0 : index
    %c0_0 = arith.constant 0 : index
    %c0_1 = arith.constant 0 : index
    %c0_2 = arith.constant 0 : index
    %0 = vector.load %arg3[%c0, %c0_0, %c0_1, %c0_2] : memref<1x15x16x8xbf16, #tpu.memory_space<vmem>>, vector<1x1x16x8xbf16>
    %1 = vector.shape_cast %0 : vector<1x1x16x8xbf16> to vector<16x8xbf16>
    %c0_3 = arith.constant 0 : index
    %c0_4 = arith.constant 0 : index
    %c0_5 = arith.constant 0 : index
    %c0_6 = arith.constant 0 : index
    %2 = vector.load %arg2[%c0_3, %c0_4, %c0_5, %c0_6] : memref<1x1x8x142xbf16, #tpu.memory_space<vmem>>, vector<1x1x8x128xbf16>
    %3 = vector.shape_cast %2 : vector<1x1x8x128xbf16> to vector<8x128xbf16>
    %cst = arith.constant dense<0.000000e+00> : vector<16x128xf32>
    %4 = tpu.matmul %1, %3, %cst {dimension_numbers = #tpu.dot_dimension_numbers<[1], [0], [0], [1], [0, 0, 1, 1], [], []>} : vector<16x8xbf16>, vector<8x128xbf16>, vector<16x128xf32> -> vector<16x128xf32>
    %c0_7 = arith.constant 0 : index
    %c1 = arith.constant 1 : index
    %c0_8 = arith.constant 0 : index
    %c0_9 = arith.constant 0 : index
    %5 = vector.load %arg3[%c0_7, %c1, %c0_8, %c0_9] : memref<1x15x16x8xbf16, #tpu.memory_space<vmem>>, vector<1x1x16x8xbf16>
    %6 = vector.shape_cast %5 : vector<1x1x16x8xbf16> to vector<16x8xbf16>
    %c0_10 = arith.constant 0 : index
    %c0_11 = arith.constant 0 : index
    %c0_12 = arith.constant 0 : index
    %c1_13 = arith.constant 1 : index
    %7 = vector.load %arg2[%c0_10, %c0_11, %c0_12, %c1_13] : memref<1x1x8x142xbf16, #tpu.memory_space<vmem>>, vector<1x1x8x128xbf16>
    %8 = vector.shape_cast %7 : vector<1x1x8x128xbf16> to vector<8x128xbf16>
    %cst_14 = arith.constant dense<0.000000e+00> : vector<16x128xf32>
    %9 = tpu.matmul %6, %8, %cst_14 {dimension_numbers = #tpu.dot_dimension_numbers<[1], [0], [0], [1], [0, 0, 1, 1], [], []>} : vector<16x8xbf16>, vector<8x128xbf16>, vector<16x128xf32> -> vector<16x128xf32>
    %10 = arith.addf %4, %9 : vector<16x128xf32>
    %c0_15 = arith.constant 0 : index
    %c2 = arith.constant 2 : index
    %c0_16 = arith.constant 0 : index
    %c0_17 = arith.constant 0 : index
    %11 = vector.load %arg3[%c0_15, %c2, %c0_16, %c0_17] : memref<1x15x16x8xbf16, #tpu.memory_space<vmem>>, vector<1x1x16x8xbf16>
    %12 = vector.shape_cast %11 : vector<1x1x16x8xbf16> to vector<16x8xbf16>
    %c0_18 = arith.constant 0 : index
    %c0_19 = arith.constant 0 : index
    %c0_20 = arith.constant 0 : index
    %c2_21 = arith.constant 2 : index
    %13 = vector.load %arg2[%c0_18, %c0_19, %c0_20, %c2_21] : memref<1x1x8x142xbf16, #tpu.memory_space<vmem>>, vector<1x1x8x128xbf16>
    %14 = vector.shape_cast %13 : vector<1x1x8x128xbf16> to vector<8x128xbf16>
    %cst_22 = arith.constant dense<0.000000e+00> : vector<16x128xf32>
    %15 = tpu.matmul %12, %14, %cst_22 {dimension_numbers = #tpu.dot_dimension_numbers<[1], [0], [0], [1], [0, 0, 1, 1], [], []>} : vector<16x8xbf16>, vector<8x128xbf16>, vector<16x128xf32> -> vector<16x128xf32>
    %16 = arith.addf %10, %15 : vector<16x128xf32>
    %c0_23 = arith.constant 0 : index
    %c3 = arith.constant 3 : index
    %c0_24 = arith.constant 0 : index
    %c0_25 = arith.constant 0 : index
    %17 = vector.load %arg3[%c0_23, %c3, %c0_24, %c0_25] : memref<1x15x16x8xbf16, #tpu.memory_space<vmem>>, vector<1x1x16x8xbf16>
    %18 = vector.shape_cast %17 : vector<1x1x16x8xbf16> to vector<16x8xbf16>
    %c0_26 = arith.constant 0 : index
    %c0_27 = arith.constant 0 : index
    %c0_28 = arith.constant 0 : index
    %c3_29 = arith.constant 3 : index
    %19 = vector.load %arg2[%c0_26, %c0_27, %c0_28, %c3_29] : memref<1x1x8x142xbf16, #tpu.memory_space<vmem>>, vector<1x1x8x128xbf16>
    %20 = vector.shape_cast %19 : vector<1x1x8x128xbf16> to vector<8x128xbf16>
    %cst_30 = arith.constant dense<0.000000e+00> : vector<16x128xf32>
    %21 = tpu.matmul %18, %20, %cst_30 {dimension_numbers = #tpu.dot_dimension_numbers<[1], [0], [0], [1], [0, 0, 1, 1], [], []>} : vector<16x8xbf16>, vector<8x128xbf16>, vector<16x128xf32> -> vector<16x128xf32>
    %22 = arith.addf %16, %21 : vector<16x128xf32>
    %c0_31 = arith.constant 0 : index
    %c4 = arith.constant 4 : index
    %c0_32 = arith.constant 0 : index
    %c0_33 = arith.constant 0 : index
    %23 = vector.load %arg3[%c0_31, %c4, %c0_32, %c0_33] : memref<1x15x16x8xbf16, #tpu.memory_space<vmem>>, vector<1x1x16x8xbf16>
    %24 = vector.shape_cast %23 : vector<1x1x16x8xbf16> to vector<16x8xbf16>
    %c0_34 = arith.constant 0 : index
    %c0_35 = arith.constant 0 : index
    %c0_36 = arith.constant 0 : index
    %c4_37 = arith.constant 4 : index
    %25 = vector.load %arg2[%c0_34, %c0_35, %c0_36, %c4_37] : memref<1x1x8x142xbf16, #tpu.memory_space<vmem>>, vector<1x1x8x128xbf16>
    %26 = vector.shape_cast %25 : vector<1x1x8x128xbf16> to vector<8x128xbf16>
    %cst_38 = arith.constant dense<0.000000e+00> : vector<16x128xf32>
    %27 = tpu.matmul %24, %26, %cst_38 {dimension_numbers = #tpu.dot_dimension_numbers<[1], [0], [0], [1], [0, 0, 1, 1], [], []>} : vector<16x8xbf16>, vector<8x128xbf16>, vector<16x128xf32> -> vector<16x128xf32>
    %28 = arith.addf %22, %27 : vector<16x128xf32>
    %c0_39 = arith.constant 0 : index
    %c5 = arith.constant 5 : index
    %c0_40 = arith.constant 0 : index
    %c0_41 = arith.constant 0 : index
    %29 = vector.load %arg3[%c0_39, %c5, %c0_40, %c0_41] : memref<1x15x16x8xbf16, #tpu.memory_space<vmem>>, vector<1x1x16x8xbf16>
    %30 = vector.shape_cast %29 : vector<1x1x16x8xbf16> to vector<16x8xbf16>
    %c0_42 = arith.constant 0 : index
    %c0_43 = arith.constant 0 : index
    %c0_44 = arith.constant 0 : index
    %c5_45 = arith.constant 5 : index
    %31 = vector.load %arg2[%c0_42, %c0_43, %c0_44, %c5_45] : memref<1x1x8x142xbf16, #tpu.memory_space<vmem>>, vector<1x1x8x128xbf16>
    %32 = vector.shape_cast %31 : vector<1x1x8x128xbf16> to vector<8x128xbf16>
    %cst_46 = arith.constant dense<0.000000e+00> : vector<16x128xf32>
    %33 = tpu.matmul %30, %32, %cst_46 {dimension_numbers = #tpu.dot_dimension_numbers<[1], [0], [0], [1], [0, 0, 1, 1], [], []>} : vector<16x8xbf16>, vector<8x128xbf16>, vector<16x128xf32> -> vector<16x128xf32>
    %34 = arith.addf %28, %33 : vector<16x128xf32>
    %c0_47 = arith.constant 0 : index
    %c6 = arith.constant 6 : index
    %c0_48 = arith.constant 0 : index
    %c0_49 = arith.constant 0 : index
    %35 = vector.load %arg3[%c0_47, %c6, %c0_48, %c0_49] : memref<1x15x16x8xbf16, #tpu.memory_space<vmem>>, vector<1x1x16x8xbf16>
    %36 = vector.shape_cast %35 : vector<1x1x16x8xbf16> to vector<16x8xbf16>
    %c0_50 = arith.constant 0 : index
    %c0_51 = arith.constant 0 : index
    %c0_52 = arith.constant 0 : index
    %c6_53 = arith.constant 6 : index
    %37 = vector.load %arg2[%c0_50, %c0_51, %c0_52, %c6_53] : memref<1x1x8x142xbf16, #tpu.memory_space<vmem>>, vector<1x1x8x128xbf16>
    %38 = vector.shape_cast %37 : vector<1x1x8x128xbf16> to vector<8x128xbf16>
    %cst_54 = arith.constant dense<0.000000e+00> : vector<16x128xf32>
    %39 = tpu.matmul %36, %38, %cst_54 {dimension_numbers = #tpu.dot_dimension_numbers<[1], [0], [0], [1], [0, 0, 1, 1], [], []>} : vector<16x8xbf16>, vector<8x128xbf16>, vector<16x128xf32> -> vector<16x128xf32>
    %40 = arith.addf %34, %39 : vector<16x128xf32>
    %c0_55 = arith.constant 0 : index
    %c7 = arith.constant 7 : index
    %c0_56 = arith.constant 0 : index
    %c0_57 = arith.constant 0 : index
    %41 = vector.load %arg3[%c0_55, %c7, %c0_56, %c0_57] : memref<1x15x16x8xbf16, #tpu.memory_space<vmem>>, vector<1x1x16x8xbf16>
    %42 = vector.shape_cast %41 : vector<1x1x16x8xbf16> to vector<16x8xbf16>
    %c0_58 = arith.constant 0 : index
    %c0_59 = arith.constant 0 : index
    %c0_60 = arith.constant 0 : index
    %c7_61 = arith.constant 7 : index
    %43 = vector.load %arg2[%c0_58, %c0_59, %c0_60, %c7_61] : memref<1x1x8x142xbf16, #tpu.memory_space<vmem>>, vector<1x1x8x128xbf16>
    %44 = vector.shape_cast %43 : vector<1x1x8x128xbf16> to vector<8x128xbf16>
    %cst_62 = arith.constant dense<0.000000e+00> : vector<16x128xf32>
    %45 = tpu.matmul %42, %44, %cst_62 {dimension_numbers = #tpu.dot_dimension_numbers<[1], [0], [0], [1], [0, 0, 1, 1], [], []>} : vector<16x8xbf16>, vector<8x128xbf16>, vector<16x128xf32> -> vector<16x128xf32>
    %46 = arith.addf %40, %45 : vector<16x128xf32>
    %c0_63 = arith.constant 0 : index
    %c8 = arith.constant 8 : index
    %c0_64 = arith.constant 0 : index
    %c0_65 = arith.constant 0 : index
    %47 = vector.load %arg3[%c0_63, %c8, %c0_64, %c0_65] : memref<1x15x16x8xbf16, #tpu.memory_space<vmem>>, vector<1x1x16x8xbf16>
    %48 = vector.shape_cast %47 : vector<1x1x16x8xbf16> to vector<16x8xbf16>
    %c0_66 = arith.constant 0 : index
    %c0_67 = arith.constant 0 : index
    %c0_68 = arith.constant 0 : index
    %c8_69 = arith.constant 8 : index
    %49 = vector.load %arg2[%c0_66, %c0_67, %c0_68, %c8_69] : memref<1x1x8x142xbf16, #tpu.memory_space<vmem>>, vector<1x1x8x128xbf16>
    %50 = vector.shape_cast %49 : vector<1x1x8x128xbf16> to vector<8x128xbf16>
    %cst_70 = arith.constant dense<0.000000e+00> : vector<16x128xf32>
    %51 = tpu.matmul %48, %50, %cst_70 {dimension_numbers = #tpu.dot_dimension_numbers<[1], [0], [0], [1], [0, 0, 1, 1], [], []>} : vector<16x8xbf16>, vector<8x128xbf16>, vector<16x128xf32> -> vector<16x128xf32>
    %52 = arith.addf %46, %51 : vector<16x128xf32>
    %c0_71 = arith.constant 0 : index
    %c9 = arith.constant 9 : index
    %c0_72 = arith.constant 0 : index
    %c0_73 = arith.constant 0 : index
    %53 = vector.load %arg3[%c0_71, %c9, %c0_72, %c0_73] : memref<1x15x16x8xbf16, #tpu.memory_space<vmem>>, vector<1x1x16x8xbf16>
    %54 = vector.shape_cast %53 : vector<1x1x16x8xbf16> to vector<16x8xbf16>
    %c0_74 = arith.constant 0 : index
    %c0_75 = arith.constant 0 : index
    %c0_76 = arith.constant 0 : index
    %c9_77 = arith.constant 9 : index
    %55 = vector.load %arg2[%c0_74, %c0_75, %c0_76, %c9_77] : memref<1x1x8x142xbf16, #tpu.memory_space<vmem>>, vector<1x1x8x128xbf16>
    %56 = vector.shape_cast %55 : vector<1x1x8x128xbf16> to vector<8x128xbf16>
    %cst_78 = arith.constant dense<0.000000e+00> : vector<16x128xf32>
    %57 = tpu.matmul %54, %56, %cst_78 {dimension_numbers = #tpu.dot_dimension_numbers<[1], [0], [0], [1], [0, 0, 1, 1], [], []>} : vector<16x8xbf16>, vector<8x128xbf16>, vector<16x128xf32> -> vector<16x128xf32>
    %58 = arith.addf %52, %57 : vector<16x128xf32>
    %c0_79 = arith.constant 0 : index
    %c10 = arith.constant 10 : index
    %c0_80 = arith.constant 0 : index
    %c0_81 = arith.constant 0 : index
    %59 = vector.load %arg3[%c0_79, %c10, %c0_80, %c0_81] : memref<1x15x16x8xbf16, #tpu.memory_space<vmem>>, vector<1x1x16x8xbf16>
    %60 = vector.shape_cast %59 : vector<1x1x16x8xbf16> to vector<16x8xbf16>
    %c0_82 = arith.constant 0 : index
    %c0_83 = arith.constant 0 : index
    %c0_84 = arith.constant 0 : index
    %c10_85 = arith.constant 10 : index
    %61 = vector.load %arg2[%c0_82, %c0_83, %c0_84, %c10_85] : memref<1x1x8x142xbf16, #tpu.memory_space<vmem>>, vector<1x1x8x128xbf16>
    %62 = vector.shape_cast %61 : vector<1x1x8x128xbf16> to vector<8x128xbf16>
    %cst_86 = arith.constant dense<0.000000e+00> : vector<16x128xf32>
    %63 = tpu.matmul %60, %62, %cst_86 {dimension_numbers = #tpu.dot_dimension_numbers<[1], [0], [0], [1], [0, 0, 1, 1], [], []>} : vector<16x8xbf16>, vector<8x128xbf16>, vector<16x128xf32> -> vector<16x128xf32>
    %64 = arith.addf %58, %63 : vector<16x128xf32>
    %c0_87 = arith.constant 0 : index
    %c11 = arith.constant 11 : index
    %c0_88 = arith.constant 0 : index
    %c0_89 = arith.constant 0 : index
    %65 = vector.load %arg3[%c0_87, %c11, %c0_88, %c0_89] : memref<1x15x16x8xbf16, #tpu.memory_space<vmem>>, vector<1x1x16x8xbf16>
    %66 = vector.shape_cast %65 : vector<1x1x16x8xbf16> to vector<16x8xbf16>
    %c0_90 = arith.constant 0 : index
    %c0_91 = arith.constant 0 : index
    %c0_92 = arith.constant 0 : index
    %c11_93 = arith.constant 11 : index
    %67 = vector.load %arg2[%c0_90, %c0_91, %c0_92, %c11_93] : memref<1x1x8x142xbf16, #tpu.memory_space<vmem>>, vector<1x1x8x128xbf16>
    %68 = vector.shape_cast %67 : vector<1x1x8x128xbf16> to vector<8x128xbf16>
    %cst_94 = arith.constant dense<0.000000e+00> : vector<16x128xf32>
    %69 = tpu.matmul %66, %68, %cst_94 {dimension_numbers = #tpu.dot_dimension_numbers<[1], [0], [0], [1], [0, 0, 1, 1], [], []>} : vector<16x8xbf16>, vector<8x128xbf16>, vector<16x128xf32> -> vector<16x128xf32>
    %70 = arith.addf %64, %69 : vector<16x128xf32>
    %c0_95 = arith.constant 0 : index
    %c12 = arith.constant 12 : index
    %c0_96 = arith.constant 0 : index
    %c0_97 = arith.constant 0 : index
    %71 = vector.load %arg3[%c0_95, %c12, %c0_96, %c0_97] : memref<1x15x16x8xbf16, #tpu.memory_space<vmem>>, vector<1x1x16x8xbf16>
    %72 = vector.shape_cast %71 : vector<1x1x16x8xbf16> to vector<16x8xbf16>
    %c0_98 = arith.constant 0 : index
    %c0_99 = arith.constant 0 : index
    %c0_100 = arith.constant 0 : index
    %c12_101 = arith.constant 12 : index
    %73 = vector.load %arg2[%c0_98, %c0_99, %c0_100, %c12_101] : memref<1x1x8x142xbf16, #tpu.memory_space<vmem>>, vector<1x1x8x128xbf16>
    %74 = vector.shape_cast %73 : vector<1x1x8x128xbf16> to vector<8x128xbf16>
    %cst_102 = arith.constant dense<0.000000e+00> : vector<16x128xf32>
    %75 = tpu.matmul %72, %74, %cst_102 {dimension_numbers = #tpu.dot_dimension_numbers<[1], [0], [0], [1], [0, 0, 1, 1], [], []>} : vector<16x8xbf16>, vector<8x128xbf16>, vector<16x128xf32> -> vector<16x128xf32>
    %76 = arith.addf %70, %75 : vector<16x128xf32>
    %c0_103 = arith.constant 0 : index
    %c13 = arith.constant 13 : index
    %c0_104 = arith.constant 0 : index
    %c0_105 = arith.constant 0 : index
    %77 = vector.load %arg3[%c0_103, %c13, %c0_104, %c0_105] : memref<1x15x16x8xbf16, #tpu.memory_space<vmem>>, vector<1x1x16x8xbf16>
    %78 = vector.shape_cast %77 : vector<1x1x16x8xbf16> to vector<16x8xbf16>
    %c0_106 = arith.constant 0 : index
    %c0_107 = arith.constant 0 : index
    %c0_108 = arith.constant 0 : index
    %c13_109 = arith.constant 13 : index
    %79 = vector.load %arg2[%c0_106, %c0_107, %c0_108, %c13_109] : memref<1x1x8x142xbf16, #tpu.memory_space<vmem>>, vector<1x1x8x128xbf16>
    %80 = vector.shape_cast %79 : vector<1x1x8x128xbf16> to vector<8x128xbf16>
    %cst_110 = arith.constant dense<0.000000e+00> : vector<16x128xf32>
    %81 = tpu.matmul %78, %80, %cst_110 {dimension_numbers = #tpu.dot_dimension_numbers<[1], [0], [0], [1], [0, 0, 1, 1], [], []>} : vector<16x8xbf16>, vector<8x128xbf16>, vector<16x128xf32> -> vector<16x128xf32>
    %82 = arith.addf %76, %81 : vector<16x128xf32>
    %c0_111 = arith.constant 0 : index
    %c14 = arith.constant 14 : index
    %c0_112 = arith.constant 0 : index
    %c0_113 = arith.constant 0 : index
    %83 = vector.load %arg3[%c0_111, %c14, %c0_112, %c0_113] : memref<1x15x16x8xbf16, #tpu.memory_space<vmem>>, vector<1x1x16x8xbf16>
    %84 = vector.shape_cast %83 : vector<1x1x16x8xbf16> to vector<16x8xbf16>
    %c0_114 = arith.constant 0 : index
    %c0_115 = arith.constant 0 : index
    %c0_116 = arith.constant 0 : index
    %c14_117 = arith.constant 14 : index
    %85 = vector.load %arg2[%c0_114, %c0_115, %c0_116, %c14_117] : memref<1x1x8x142xbf16, #tpu.memory_space<vmem>>, vector<1x1x8x128xbf16>
    %86 = vector.shape_cast %85 : vector<1x1x8x128xbf16> to vector<8x128xbf16>
    %cst_118 = arith.constant dense<0.000000e+00> : vector<16x128xf32>
    %87 = tpu.matmul %84, %86, %cst_118 {dimension_numbers = #tpu.dot_dimension_numbers<[1], [0], [0], [1], [0, 0, 1, 1], [], []>} : vector<16x8xbf16>, vector<8x128xbf16>, vector<16x128xf32> -> vector<16x128xf32>
    %88 = arith.addf %82, %87 : vector<16x128xf32>
    %c0_119 = arith.constant 0 : index
    %c0_120 = arith.constant 0 : index
    %c0_121 = arith.constant 0 : index
    %89 = vector.load %arg4[%c0_119, %c0_120, %c0_121] : memref<1x16x1xf32, #tpu.memory_space<vmem>>, vector<1x16x1xf32>
    %90 = vector.shape_cast %89 : vector<1x16x1xf32> to vector<16x1xf32>
    %91 = vector.broadcast %90 : vector<16x1xf32> to vector<16x128xf32>
    %92 = arith.addf %88, %91 : vector<16x128xf32>
    %cst_122 = arith.constant 0.000000e+00 : f32
    %93 = vector.broadcast %cst_122 : f32 to vector<16x128xf32>
    %94 = arith.cmpf oge, %92, %93 : vector<16x128xf32>
    %cst_123 = arith.constant 2.000000e-01 : f32
    %95 = vector.broadcast %cst_123 : f32 to vector<16x128xf32>
    %96 = arith.mulf %95, %92 : vector<16x128xf32>
    %97 = arith.select %94, %92, %96 : vector<16x128xi1>, vector<16x128xf32>
    %c0_124 = arith.constant 0 : index
    %c0_125 = arith.constant 0 : index
    %c0_126 = arith.constant 0 : index
    %c0_127 = arith.constant 0 : index
    %98 = vector.load %arg5[%c0_124, %c0_125, %c0_126, %c0_127] : memref<1x1x16x128xf32, #tpu.memory_space<vmem>>, vector<1x1x16x128xf32>
    %99 = vector.shape_cast %98 : vector<1x1x16x128xf32> to vector<16x128xf32>
    %100 = vector.shape_cast %97 : vector<16x128xf32> to vector<1x1x16x128xf32>
    tpu.vector_store %arg5[%c0_124, %c0_125, %c0_126, %c0_127], %100 {strides = array<i32>} : memref<1x1x16x128xf32, #tpu.memory_space<vmem>>, vector<1x1x16x128xf32>,
    return
  }
  func.func @transform_0(%arg0: i32, %arg1: i32) -> (i32, i32, i32, i32) {
    %c0_i32 = arith.constant 0 : i32
    %c0_i32_0 = arith.constant 0 : i32
    %c0_i32_1 = arith.constant 0 : i32
    return %arg1, %arg0, %c0_i32, %c0_i32_0 : i32, i32, i32, i32
  }
  func.func @transform_1(%arg0: i32, %arg1: i32) -> (i32, i32, i32, i32) {
    %c0_i32 = arith.constant 0 : i32
    %c0_i32_0 = arith.constant 0 : i32
    %c0_i32_1 = arith.constant 0 : i32
    %c0_i32_2 = arith.constant 0 : i32
    return %arg0, %c0_i32, %c0_i32_0, %c0_i32_1 : i32, i32, i32, i32
  }
  func.func @transform_2(%arg0: i32, %arg1: i32) -> (i32, i32, i32) {
    %c0_i32 = arith.constant 0 : i32
    %c0_i32_0 = arith.constant 0 : i32
    %c0_i32_1 = arith.constant 0 : i32
    return %arg0, %c0_i32, %c0_i32_0 : i32, i32, i32
  }
  func.func @transform_3(%arg0: i32, %arg1: i32) -> (i32, i32, i32, i32) {
    %c0_i32 = arith.constant 0 : i32
    %c0_i32_0 = arith.constant 0 : i32
    %c0_i32_1 = arith.constant 0 : i32
    return %arg1, %arg0, %c0_i32, %c0_i32_0 : i32, i32, i32, i32
  }
}

module attributes {stable_mosaic.version = 11 : i64} {
  func.func @kernel(%arg0: i32, %arg1: i32, %arg2: memref<1x1x32x138xbf16, #tpu.memory_space<vmem>>, %arg3: memref<1x11x32x32xbf16, #tpu.memory_space<vmem>>, %arg4: memref<1x32x1xf32, #tpu.memory_space<vmem>>, %arg5: memref<1x1x32x128xf32, #tpu.memory_space<vmem>>) attributes {dimension_semantics = [#tpu.dimension_semantics<parallel>, #tpu.dimension_semantics<parallel>], iteration_bounds = array<i64: 1, 2>, scalar_prefetch = 0 : i64, scratch_operands = 0 : i64, tpu.core_type = #tpu.core_type<tc>, window_params = [{transform_indices = @transform_0, window_bounds = array<i64: 1, 1, 32, 138>}, {transform_indices = @transform_1, window_bounds = array<i64: 1, 11, 32, 32>}, {transform_indices = @transform_2, window_bounds = array<i64: 1, 32, 1>}, {transform_indices = @transform_3, window_bounds = array<i64: 1, 1, 32, 128>}]} {
    %c0 = arith.constant 0 : index
    %c0_0 = arith.constant 0 : index
    %c0_1 = arith.constant 0 : index
    %c0_2 = arith.constant 0 : index
    %0 = vector.load %arg3[%c0, %c0_0, %c0_1, %c0_2] : memref<1x11x32x32xbf16, #tpu.memory_space<vmem>>, vector<1x1x32x32xbf16>
    %1 = vector.shape_cast %0 : vector<1x1x32x32xbf16> to vector<32x32xbf16>
    %c0_3 = arith.constant 0 : index
    %c0_4 = arith.constant 0 : index
    %c0_5 = arith.constant 0 : index
    %c0_6 = arith.constant 0 : index
    %2 = vector.load %arg2[%c0_3, %c0_4, %c0_5, %c0_6] : memref<1x1x32x138xbf16, #tpu.memory_space<vmem>>, vector<1x1x32x128xbf16>
    %3 = vector.shape_cast %2 : vector<1x1x32x128xbf16> to vector<32x128xbf16>
    %cst = arith.constant dense<0.000000e+00> : vector<32x128xf32>
    %4 = tpu.matmul %1, %3, %cst {dimension_numbers = #tpu.dot_dimension_numbers<[1], [0], [0], [1], [0, 0, 1, 1], [], []>} : vector<32x32xbf16>, vector<32x128xbf16>, vector<32x128xf32> -> vector<32x128xf32>
    %c0_7 = arith.constant 0 : index
    %c1 = arith.constant 1 : index
    %c0_8 = arith.constant 0 : index
    %c0_9 = arith.constant 0 : index
    %5 = vector.load %arg3[%c0_7, %c1, %c0_8, %c0_9] : memref<1x11x32x32xbf16, #tpu.memory_space<vmem>>, vector<1x1x32x32xbf16>
    %6 = vector.shape_cast %5 : vector<1x1x32x32xbf16> to vector<32x32xbf16>
    %c0_10 = arith.constant 0 : index
    %c0_11 = arith.constant 0 : index
    %c0_12 = arith.constant 0 : index
    %c1_13 = arith.constant 1 : index
    %7 = vector.load %arg2[%c0_10, %c0_11, %c0_12, %c1_13] : memref<1x1x32x138xbf16, #tpu.memory_space<vmem>>, vector<1x1x32x128xbf16>
    %8 = vector.shape_cast %7 : vector<1x1x32x128xbf16> to vector<32x128xbf16>
    %cst_14 = arith.constant dense<0.000000e+00> : vector<32x128xf32>
    %9 = tpu.matmul %6, %8, %cst_14 {dimension_numbers = #tpu.dot_dimension_numbers<[1], [0], [0], [1], [0, 0, 1, 1], [], []>} : vector<32x32xbf16>, vector<32x128xbf16>, vector<32x128xf32> -> vector<32x128xf32>
    %10 = arith.addf %4, %9 : vector<32x128xf32>
    %c0_15 = arith.constant 0 : index
    %c2 = arith.constant 2 : index
    %c0_16 = arith.constant 0 : index
    %c0_17 = arith.constant 0 : index
    %11 = vector.load %arg3[%c0_15, %c2, %c0_16, %c0_17] : memref<1x11x32x32xbf16, #tpu.memory_space<vmem>>, vector<1x1x32x32xbf16>
    %12 = vector.shape_cast %11 : vector<1x1x32x32xbf16> to vector<32x32xbf16>
    %c0_18 = arith.constant 0 : index
    %c0_19 = arith.constant 0 : index
    %c0_20 = arith.constant 0 : index
    %c2_21 = arith.constant 2 : index
    %13 = vector.load %arg2[%c0_18, %c0_19, %c0_20, %c2_21] : memref<1x1x32x138xbf16, #tpu.memory_space<vmem>>, vector<1x1x32x128xbf16>
    %14 = vector.shape_cast %13 : vector<1x1x32x128xbf16> to vector<32x128xbf16>
    %cst_22 = arith.constant dense<0.000000e+00> : vector<32x128xf32>
    %15 = tpu.matmul %12, %14, %cst_22 {dimension_numbers = #tpu.dot_dimension_numbers<[1], [0], [0], [1], [0, 0, 1, 1], [], []>} : vector<32x32xbf16>, vector<32x128xbf16>, vector<32x128xf32> -> vector<32x128xf32>
    %16 = arith.addf %10, %15 : vector<32x128xf32>
    %c0_23 = arith.constant 0 : index
    %c3 = arith.constant 3 : index
    %c0_24 = arith.constant 0 : index
    %c0_25 = arith.constant 0 : index
    %17 = vector.load %arg3[%c0_23, %c3, %c0_24, %c0_25] : memref<1x11x32x32xbf16, #tpu.memory_space<vmem>>, vector<1x1x32x32xbf16>
    %18 = vector.shape_cast %17 : vector<1x1x32x32xbf16> to vector<32x32xbf16>
    %c0_26 = arith.constant 0 : index
    %c0_27 = arith.constant 0 : index
    %c0_28 = arith.constant 0 : index
    %c3_29 = arith.constant 3 : index
    %19 = vector.load %arg2[%c0_26, %c0_27, %c0_28, %c3_29] : memref<1x1x32x138xbf16, #tpu.memory_space<vmem>>, vector<1x1x32x128xbf16>
    %20 = vector.shape_cast %19 : vector<1x1x32x128xbf16> to vector<32x128xbf16>
    %cst_30 = arith.constant dense<0.000000e+00> : vector<32x128xf32>
    %21 = tpu.matmul %18, %20, %cst_30 {dimension_numbers = #tpu.dot_dimension_numbers<[1], [0], [0], [1], [0, 0, 1, 1], [], []>} : vector<32x32xbf16>, vector<32x128xbf16>, vector<32x128xf32> -> vector<32x128xf32>
    %22 = arith.addf %16, %21 : vector<32x128xf32>
    %c0_31 = arith.constant 0 : index
    %c4 = arith.constant 4 : index
    %c0_32 = arith.constant 0 : index
    %c0_33 = arith.constant 0 : index
    %23 = vector.load %arg3[%c0_31, %c4, %c0_32, %c0_33] : memref<1x11x32x32xbf16, #tpu.memory_space<vmem>>, vector<1x1x32x32xbf16>
    %24 = vector.shape_cast %23 : vector<1x1x32x32xbf16> to vector<32x32xbf16>
    %c0_34 = arith.constant 0 : index
    %c0_35 = arith.constant 0 : index
    %c0_36 = arith.constant 0 : index
    %c4_37 = arith.constant 4 : index
    %25 = vector.load %arg2[%c0_34, %c0_35, %c0_36, %c4_37] : memref<1x1x32x138xbf16, #tpu.memory_space<vmem>>, vector<1x1x32x128xbf16>
    %26 = vector.shape_cast %25 : vector<1x1x32x128xbf16> to vector<32x128xbf16>
    %cst_38 = arith.constant dense<0.000000e+00> : vector<32x128xf32>
    %27 = tpu.matmul %24, %26, %cst_38 {dimension_numbers = #tpu.dot_dimension_numbers<[1], [0], [0], [1], [0, 0, 1, 1], [], []>} : vector<32x32xbf16>, vector<32x128xbf16>, vector<32x128xf32> -> vector<32x128xf32>
    %28 = arith.addf %22, %27 : vector<32x128xf32>
    %c0_39 = arith.constant 0 : index
    %c5 = arith.constant 5 : index
    %c0_40 = arith.constant 0 : index
    %c0_41 = arith.constant 0 : index
    %29 = vector.load %arg3[%c0_39, %c5, %c0_40, %c0_41] : memref<1x11x32x32xbf16, #tpu.memory_space<vmem>>, vector<1x1x32x32xbf16>
    %30 = vector.shape_cast %29 : vector<1x1x32x32xbf16> to vector<32x32xbf16>
    %c0_42 = arith.constant 0 : index
    %c0_43 = arith.constant 0 : index
    %c0_44 = arith.constant 0 : index
    %c5_45 = arith.constant 5 : index
    %31 = vector.load %arg2[%c0_42, %c0_43, %c0_44, %c5_45] : memref<1x1x32x138xbf16, #tpu.memory_space<vmem>>, vector<1x1x32x128xbf16>
    %32 = vector.shape_cast %31 : vector<1x1x32x128xbf16> to vector<32x128xbf16>
    %cst_46 = arith.constant dense<0.000000e+00> : vector<32x128xf32>
    %33 = tpu.matmul %30, %32, %cst_46 {dimension_numbers = #tpu.dot_dimension_numbers<[1], [0], [0], [1], [0, 0, 1, 1], [], []>} : vector<32x32xbf16>, vector<32x128xbf16>, vector<32x128xf32> -> vector<32x128xf32>
    %34 = arith.addf %28, %33 : vector<32x128xf32>
    %c0_47 = arith.constant 0 : index
    %c6 = arith.constant 6 : index
    %c0_48 = arith.constant 0 : index
    %c0_49 = arith.constant 0 : index
    %35 = vector.load %arg3[%c0_47, %c6, %c0_48, %c0_49] : memref<1x11x32x32xbf16, #tpu.memory_space<vmem>>, vector<1x1x32x32xbf16>
    %36 = vector.shape_cast %35 : vector<1x1x32x32xbf16> to vector<32x32xbf16>
    %c0_50 = arith.constant 0 : index
    %c0_51 = arith.constant 0 : index
    %c0_52 = arith.constant 0 : index
    %c6_53 = arith.constant 6 : index
    %37 = vector.load %arg2[%c0_50, %c0_51, %c0_52, %c6_53] : memref<1x1x32x138xbf16, #tpu.memory_space<vmem>>, vector<1x1x32x128xbf16>
    %38 = vector.shape_cast %37 : vector<1x1x32x128xbf16> to vector<32x128xbf16>
    %cst_54 = arith.constant dense<0.000000e+00> : vector<32x128xf32>
    %39 = tpu.matmul %36, %38, %cst_54 {dimension_numbers = #tpu.dot_dimension_numbers<[1], [0], [0], [1], [0, 0, 1, 1], [], []>} : vector<32x32xbf16>, vector<32x128xbf16>, vector<32x128xf32> -> vector<32x128xf32>
    %40 = arith.addf %34, %39 : vector<32x128xf32>
    %c0_55 = arith.constant 0 : index
    %c7 = arith.constant 7 : index
    %c0_56 = arith.constant 0 : index
    %c0_57 = arith.constant 0 : index
    %41 = vector.load %arg3[%c0_55, %c7, %c0_56, %c0_57] : memref<1x11x32x32xbf16, #tpu.memory_space<vmem>>, vector<1x1x32x32xbf16>
    %42 = vector.shape_cast %41 : vector<1x1x32x32xbf16> to vector<32x32xbf16>
    %c0_58 = arith.constant 0 : index
    %c0_59 = arith.constant 0 : index
    %c0_60 = arith.constant 0 : index
    %c7_61 = arith.constant 7 : index
    %43 = vector.load %arg2[%c0_58, %c0_59, %c0_60, %c7_61] : memref<1x1x32x138xbf16, #tpu.memory_space<vmem>>, vector<1x1x32x128xbf16>
    %44 = vector.shape_cast %43 : vector<1x1x32x128xbf16> to vector<32x128xbf16>
    %cst_62 = arith.constant dense<0.000000e+00> : vector<32x128xf32>
    %45 = tpu.matmul %42, %44, %cst_62 {dimension_numbers = #tpu.dot_dimension_numbers<[1], [0], [0], [1], [0, 0, 1, 1], [], []>} : vector<32x32xbf16>, vector<32x128xbf16>, vector<32x128xf32> -> vector<32x128xf32>
    %46 = arith.addf %40, %45 : vector<32x128xf32>
    %c0_63 = arith.constant 0 : index
    %c8 = arith.constant 8 : index
    %c0_64 = arith.constant 0 : index
    %c0_65 = arith.constant 0 : index
    %47 = vector.load %arg3[%c0_63, %c8, %c0_64, %c0_65] : memref<1x11x32x32xbf16, #tpu.memory_space<vmem>>, vector<1x1x32x32xbf16>
    %48 = vector.shape_cast %47 : vector<1x1x32x32xbf16> to vector<32x32xbf16>
    %c0_66 = arith.constant 0 : index
    %c0_67 = arith.constant 0 : index
    %c0_68 = arith.constant 0 : index
    %c8_69 = arith.constant 8 : index
    %49 = vector.load %arg2[%c0_66, %c0_67, %c0_68, %c8_69] : memref<1x1x32x138xbf16, #tpu.memory_space<vmem>>, vector<1x1x32x128xbf16>
    %50 = vector.shape_cast %49 : vector<1x1x32x128xbf16> to vector<32x128xbf16>
    %cst_70 = arith.constant dense<0.000000e+00> : vector<32x128xf32>
    %51 = tpu.matmul %48, %50, %cst_70 {dimension_numbers = #tpu.dot_dimension_numbers<[1], [0], [0], [1], [0, 0, 1, 1], [], []>} : vector<32x32xbf16>, vector<32x128xbf16>, vector<32x128xf32> -> vector<32x128xf32>
    %52 = arith.addf %46, %51 : vector<32x128xf32>
    %c0_71 = arith.constant 0 : index
    %c9 = arith.constant 9 : index
    %c0_72 = arith.constant 0 : index
    %c0_73 = arith.constant 0 : index
    %53 = vector.load %arg3[%c0_71, %c9, %c0_72, %c0_73] : memref<1x11x32x32xbf16, #tpu.memory_space<vmem>>, vector<1x1x32x32xbf16>
    %54 = vector.shape_cast %53 : vector<1x1x32x32xbf16> to vector<32x32xbf16>
    %c0_74 = arith.constant 0 : index
    %c0_75 = arith.constant 0 : index
    %c0_76 = arith.constant 0 : index
    %c9_77 = arith.constant 9 : index
    %55 = vector.load %arg2[%c0_74, %c0_75, %c0_76, %c9_77] : memref<1x1x32x138xbf16, #tpu.memory_space<vmem>>, vector<1x1x32x128xbf16>
    %56 = vector.shape_cast %55 : vector<1x1x32x128xbf16> to vector<32x128xbf16>
    %cst_78 = arith.constant dense<0.000000e+00> : vector<32x128xf32>
    %57 = tpu.matmul %54, %56, %cst_78 {dimension_numbers = #tpu.dot_dimension_numbers<[1], [0], [0], [1], [0, 0, 1, 1], [], []>} : vector<32x32xbf16>, vector<32x128xbf16>, vector<32x128xf32> -> vector<32x128xf32>
    %58 = arith.addf %52, %57 : vector<32x128xf32>
    %c0_79 = arith.constant 0 : index
    %c10 = arith.constant 10 : index
    %c0_80 = arith.constant 0 : index
    %c0_81 = arith.constant 0 : index
    %59 = vector.load %arg3[%c0_79, %c10, %c0_80, %c0_81] : memref<1x11x32x32xbf16, #tpu.memory_space<vmem>>, vector<1x1x32x32xbf16>
    %60 = vector.shape_cast %59 : vector<1x1x32x32xbf16> to vector<32x32xbf16>
    %c0_82 = arith.constant 0 : index
    %c0_83 = arith.constant 0 : index
    %c0_84 = arith.constant 0 : index
    %c10_85 = arith.constant 10 : index
    %61 = vector.load %arg2[%c0_82, %c0_83, %c0_84, %c10_85] : memref<1x1x32x138xbf16, #tpu.memory_space<vmem>>, vector<1x1x32x128xbf16>
    %62 = vector.shape_cast %61 : vector<1x1x32x128xbf16> to vector<32x128xbf16>
    %cst_86 = arith.constant dense<0.000000e+00> : vector<32x128xf32>
    %63 = tpu.matmul %60, %62, %cst_86 {dimension_numbers = #tpu.dot_dimension_numbers<[1], [0], [0], [1], [0, 0, 1, 1], [], []>} : vector<32x32xbf16>, vector<32x128xbf16>, vector<32x128xf32> -> vector<32x128xf32>
    %64 = arith.addf %58, %63 : vector<32x128xf32>
    %c0_87 = arith.constant 0 : index
    %c0_88 = arith.constant 0 : index
    %c0_89 = arith.constant 0 : index
    %65 = vector.load %arg4[%c0_87, %c0_88, %c0_89] : memref<1x32x1xf32, #tpu.memory_space<vmem>>, vector<1x32x1xf32>
    %66 = vector.shape_cast %65 : vector<1x32x1xf32> to vector<32x1xf32>
    %67 = vector.broadcast %66 : vector<32x1xf32> to vector<32x128xf32>
    %68 = arith.addf %64, %67 : vector<32x128xf32>
    %cst_90 = arith.constant 0.000000e+00 : f32
    %69 = vector.broadcast %cst_90 : f32 to vector<32x128xf32>
    %70 = arith.cmpf oge, %68, %69 : vector<32x128xf32>
    %cst_91 = arith.constant 2.000000e-01 : f32
    %71 = vector.broadcast %cst_91 : f32 to vector<32x128xf32>
    %72 = arith.mulf %71, %68 : vector<32x128xf32>
    %73 = arith.select %70, %68, %72 : vector<32x128xi1>, vector<32x128xf32>
    %c0_92 = arith.constant 0 : index
    %c0_93 = arith.constant 0 : index
    %c0_94 = arith.constant 0 : index
    %c0_95 = arith.constant 0 : index
    %74 = vector.load %arg5[%c0_92, %c0_93, %c0_94, %c0_95] : memref<1x1x32x128xf32, #tpu.memory_space<vmem>>, vector<1x1x32x128xf32>
    %75 = vector.shape_cast %74 : vector<1x1x32x128xf32> to vector<32x128xf32>
    %76 = vector.shape_cast %73 : vector<32x128xf32> to vector<1x1x32x128xf32>
    tpu.vector_store %arg5[%c0_92, %c0_93, %c0_94, %c0_95], %76 {strides = array<i32>} : memref<1x1x32x128xf32, #tpu.memory_space<vmem>>, vector<1x1x32x128xf32>,
    return
  }
  func.func @transform_0(%arg0: i32, %arg1: i32) -> (i32, i32, i32, i32) {
    %c0_i32 = arith.constant 0 : i32
    %c0_i32_0 = arith.constant 0 : i32
    %c0_i32_1 = arith.constant 0 : i32
    return %arg1, %arg0, %c0_i32, %c0_i32_0 : i32, i32, i32, i32
  }
  func.func @transform_1(%arg0: i32, %arg1: i32) -> (i32, i32, i32, i32) {
    %c0_i32 = arith.constant 0 : i32
    %c0_i32_0 = arith.constant 0 : i32
    %c0_i32_1 = arith.constant 0 : i32
    %c0_i32_2 = arith.constant 0 : i32
    return %arg0, %c0_i32, %c0_i32_0, %c0_i32_1 : i32, i32, i32, i32
  }
  func.func @transform_2(%arg0: i32, %arg1: i32) -> (i32, i32, i32) {
    %c0_i32 = arith.constant 0 : i32
    %c0_i32_0 = arith.constant 0 : i32
    %c0_i32_1 = arith.constant 0 : i32
    return %arg0, %c0_i32, %c0_i32_0 : i32, i32, i32
  }
  func.func @transform_3(%arg0: i32, %arg1: i32) -> (i32, i32, i32, i32) {
    %c0_i32 = arith.constant 0 : i32
    %c0_i32_0 = arith.constant 0 : i32
    %c0_i32_1 = arith.constant 0 : i32
    return %arg1, %arg0, %c0_i32, %c0_i32_0 : i32, i32, i32, i32
  }
}

module attributes {stable_mosaic.version = 11 : i64} {
  func.func @kernel(%arg0: i32, %arg1: i32, %arg2: memref<1x1x64x138xbf16, #tpu.memory_space<vmem>>, %arg3: memref<1x11x64x64xbf16, #tpu.memory_space<vmem>>, %arg4: memref<1x64x1xf32, #tpu.memory_space<vmem>>, %arg5: memref<1x1x64x128xf32, #tpu.memory_space<vmem>>) attributes {dimension_semantics = [#tpu.dimension_semantics<parallel>, #tpu.dimension_semantics<parallel>], iteration_bounds = array<i64: 1, 2>, scalar_prefetch = 0 : i64, scratch_operands = 0 : i64, tpu.core_type = #tpu.core_type<tc>, window_params = [{transform_indices = @transform_0, window_bounds = array<i64: 1, 1, 64, 138>}, {transform_indices = @transform_1, window_bounds = array<i64: 1, 11, 64, 64>}, {transform_indices = @transform_2, window_bounds = array<i64: 1, 64, 1>}, {transform_indices = @transform_3, window_bounds = array<i64: 1, 1, 64, 128>}]} {
    %c0 = arith.constant 0 : index
    %c0_0 = arith.constant 0 : index
    %c0_1 = arith.constant 0 : index
    %c0_2 = arith.constant 0 : index
    %0 = vector.load %arg3[%c0, %c0_0, %c0_1, %c0_2] : memref<1x11x64x64xbf16, #tpu.memory_space<vmem>>, vector<1x1x64x64xbf16>
    %1 = vector.shape_cast %0 : vector<1x1x64x64xbf16> to vector<64x64xbf16>
    %c0_3 = arith.constant 0 : index
    %c0_4 = arith.constant 0 : index
    %c0_5 = arith.constant 0 : index
    %c0_6 = arith.constant 0 : index
    %2 = vector.load %arg2[%c0_3, %c0_4, %c0_5, %c0_6] : memref<1x1x64x138xbf16, #tpu.memory_space<vmem>>, vector<1x1x64x128xbf16>
    %3 = vector.shape_cast %2 : vector<1x1x64x128xbf16> to vector<64x128xbf16>
    %cst = arith.constant dense<0.000000e+00> : vector<64x128xf32>
    %4 = tpu.matmul %1, %3, %cst {dimension_numbers = #tpu.dot_dimension_numbers<[1], [0], [0], [1], [0, 0, 1, 1], [], []>} : vector<64x64xbf16>, vector<64x128xbf16>, vector<64x128xf32> -> vector<64x128xf32>
    %c0_7 = arith.constant 0 : index
    %c1 = arith.constant 1 : index
    %c0_8 = arith.constant 0 : index
    %c0_9 = arith.constant 0 : index
    %5 = vector.load %arg3[%c0_7, %c1, %c0_8, %c0_9] : memref<1x11x64x64xbf16, #tpu.memory_space<vmem>>, vector<1x1x64x64xbf16>
    %6 = vector.shape_cast %5 : vector<1x1x64x64xbf16> to vector<64x64xbf16>
    %c0_10 = arith.constant 0 : index
    %c0_11 = arith.constant 0 : index
    %c0_12 = arith.constant 0 : index
    %c1_13 = arith.constant 1 : index
    %7 = vector.load %arg2[%c0_10, %c0_11, %c0_12, %c1_13] : memref<1x1x64x138xbf16, #tpu.memory_space<vmem>>, vector<1x1x64x128xbf16>
    %8 = vector.shape_cast %7 : vector<1x1x64x128xbf16> to vector<64x128xbf16>
    %cst_14 = arith.constant dense<0.000000e+00> : vector<64x128xf32>
    %9 = tpu.matmul %6, %8, %cst_14 {dimension_numbers = #tpu.dot_dimension_numbers<[1], [0], [0], [1], [0, 0, 1, 1], [], []>} : vector<64x64xbf16>, vector<64x128xbf16>, vector<64x128xf32> -> vector<64x128xf32>
    %10 = arith.addf %4, %9 : vector<64x128xf32>
    %c0_15 = arith.constant 0 : index
    %c2 = arith.constant 2 : index
    %c0_16 = arith.constant 0 : index
    %c0_17 = arith.constant 0 : index
    %11 = vector.load %arg3[%c0_15, %c2, %c0_16, %c0_17] : memref<1x11x64x64xbf16, #tpu.memory_space<vmem>>, vector<1x1x64x64xbf16>
    %12 = vector.shape_cast %11 : vector<1x1x64x64xbf16> to vector<64x64xbf16>
    %c0_18 = arith.constant 0 : index
    %c0_19 = arith.constant 0 : index
    %c0_20 = arith.constant 0 : index
    %c2_21 = arith.constant 2 : index
    %13 = vector.load %arg2[%c0_18, %c0_19, %c0_20, %c2_21] : memref<1x1x64x138xbf16, #tpu.memory_space<vmem>>, vector<1x1x64x128xbf16>
    %14 = vector.shape_cast %13 : vector<1x1x64x128xbf16> to vector<64x128xbf16>
    %cst_22 = arith.constant dense<0.000000e+00> : vector<64x128xf32>
    %15 = tpu.matmul %12, %14, %cst_22 {dimension_numbers = #tpu.dot_dimension_numbers<[1], [0], [0], [1], [0, 0, 1, 1], [], []>} : vector<64x64xbf16>, vector<64x128xbf16>, vector<64x128xf32> -> vector<64x128xf32>
    %16 = arith.addf %10, %15 : vector<64x128xf32>
    %c0_23 = arith.constant 0 : index
    %c3 = arith.constant 3 : index
    %c0_24 = arith.constant 0 : index
    %c0_25 = arith.constant 0 : index
    %17 = vector.load %arg3[%c0_23, %c3, %c0_24, %c0_25] : memref<1x11x64x64xbf16, #tpu.memory_space<vmem>>, vector<1x1x64x64xbf16>
    %18 = vector.shape_cast %17 : vector<1x1x64x64xbf16> to vector<64x64xbf16>
    %c0_26 = arith.constant 0 : index
    %c0_27 = arith.constant 0 : index
    %c0_28 = arith.constant 0 : index
    %c3_29 = arith.constant 3 : index
    %19 = vector.load %arg2[%c0_26, %c0_27, %c0_28, %c3_29] : memref<1x1x64x138xbf16, #tpu.memory_space<vmem>>, vector<1x1x64x128xbf16>
    %20 = vector.shape_cast %19 : vector<1x1x64x128xbf16> to vector<64x128xbf16>
    %cst_30 = arith.constant dense<0.000000e+00> : vector<64x128xf32>
    %21 = tpu.matmul %18, %20, %cst_30 {dimension_numbers = #tpu.dot_dimension_numbers<[1], [0], [0], [1], [0, 0, 1, 1], [], []>} : vector<64x64xbf16>, vector<64x128xbf16>, vector<64x128xf32> -> vector<64x128xf32>
    %22 = arith.addf %16, %21 : vector<64x128xf32>
    %c0_31 = arith.constant 0 : index
    %c4 = arith.constant 4 : index
    %c0_32 = arith.constant 0 : index
    %c0_33 = arith.constant 0 : index
    %23 = vector.load %arg3[%c0_31, %c4, %c0_32, %c0_33] : memref<1x11x64x64xbf16, #tpu.memory_space<vmem>>, vector<1x1x64x64xbf16>
    %24 = vector.shape_cast %23 : vector<1x1x64x64xbf16> to vector<64x64xbf16>
    %c0_34 = arith.constant 0 : index
    %c0_35 = arith.constant 0 : index
    %c0_36 = arith.constant 0 : index
    %c4_37 = arith.constant 4 : index
    %25 = vector.load %arg2[%c0_34, %c0_35, %c0_36, %c4_37] : memref<1x1x64x138xbf16, #tpu.memory_space<vmem>>, vector<1x1x64x128xbf16>
    %26 = vector.shape_cast %25 : vector<1x1x64x128xbf16> to vector<64x128xbf16>
    %cst_38 = arith.constant dense<0.000000e+00> : vector<64x128xf32>
    %27 = tpu.matmul %24, %26, %cst_38 {dimension_numbers = #tpu.dot_dimension_numbers<[1], [0], [0], [1], [0, 0, 1, 1], [], []>} : vector<64x64xbf16>, vector<64x128xbf16>, vector<64x128xf32> -> vector<64x128xf32>
    %28 = arith.addf %22, %27 : vector<64x128xf32>
    %c0_39 = arith.constant 0 : index
    %c5 = arith.constant 5 : index
    %c0_40 = arith.constant 0 : index
    %c0_41 = arith.constant 0 : index
    %29 = vector.load %arg3[%c0_39, %c5, %c0_40, %c0_41] : memref<1x11x64x64xbf16, #tpu.memory_space<vmem>>, vector<1x1x64x64xbf16>
    %30 = vector.shape_cast %29 : vector<1x1x64x64xbf16> to vector<64x64xbf16>
    %c0_42 = arith.constant 0 : index
    %c0_43 = arith.constant 0 : index
    %c0_44 = arith.constant 0 : index
    %c5_45 = arith.constant 5 : index
    %31 = vector.load %arg2[%c0_42, %c0_43, %c0_44, %c5_45] : memref<1x1x64x138xbf16, #tpu.memory_space<vmem>>, vector<1x1x64x128xbf16>
    %32 = vector.shape_cast %31 : vector<1x1x64x128xbf16> to vector<64x128xbf16>
    %cst_46 = arith.constant dense<0.000000e+00> : vector<64x128xf32>
    %33 = tpu.matmul %30, %32, %cst_46 {dimension_numbers = #tpu.dot_dimension_numbers<[1], [0], [0], [1], [0, 0, 1, 1], [], []>} : vector<64x64xbf16>, vector<64x128xbf16>, vector<64x128xf32> -> vector<64x128xf32>
    %34 = arith.addf %28, %33 : vector<64x128xf32>
    %c0_47 = arith.constant 0 : index
    %c6 = arith.constant 6 : index
    %c0_48 = arith.constant 0 : index
    %c0_49 = arith.constant 0 : index
    %35 = vector.load %arg3[%c0_47, %c6, %c0_48, %c0_49] : memref<1x11x64x64xbf16, #tpu.memory_space<vmem>>, vector<1x1x64x64xbf16>
    %36 = vector.shape_cast %35 : vector<1x1x64x64xbf16> to vector<64x64xbf16>
    %c0_50 = arith.constant 0 : index
    %c0_51 = arith.constant 0 : index
    %c0_52 = arith.constant 0 : index
    %c6_53 = arith.constant 6 : index
    %37 = vector.load %arg2[%c0_50, %c0_51, %c0_52, %c6_53] : memref<1x1x64x138xbf16, #tpu.memory_space<vmem>>, vector<1x1x64x128xbf16>
    %38 = vector.shape_cast %37 : vector<1x1x64x128xbf16> to vector<64x128xbf16>
    %cst_54 = arith.constant dense<0.000000e+00> : vector<64x128xf32>
    %39 = tpu.matmul %36, %38, %cst_54 {dimension_numbers = #tpu.dot_dimension_numbers<[1], [0], [0], [1], [0, 0, 1, 1], [], []>} : vector<64x64xbf16>, vector<64x128xbf16>, vector<64x128xf32> -> vector<64x128xf32>
    %40 = arith.addf %34, %39 : vector<64x128xf32>
    %c0_55 = arith.constant 0 : index
    %c7 = arith.constant 7 : index
    %c0_56 = arith.constant 0 : index
    %c0_57 = arith.constant 0 : index
    %41 = vector.load %arg3[%c0_55, %c7, %c0_56, %c0_57] : memref<1x11x64x64xbf16, #tpu.memory_space<vmem>>, vector<1x1x64x64xbf16>
    %42 = vector.shape_cast %41 : vector<1x1x64x64xbf16> to vector<64x64xbf16>
    %c0_58 = arith.constant 0 : index
    %c0_59 = arith.constant 0 : index
    %c0_60 = arith.constant 0 : index
    %c7_61 = arith.constant 7 : index
    %43 = vector.load %arg2[%c0_58, %c0_59, %c0_60, %c7_61] : memref<1x1x64x138xbf16, #tpu.memory_space<vmem>>, vector<1x1x64x128xbf16>
    %44 = vector.shape_cast %43 : vector<1x1x64x128xbf16> to vector<64x128xbf16>
    %cst_62 = arith.constant dense<0.000000e+00> : vector<64x128xf32>
    %45 = tpu.matmul %42, %44, %cst_62 {dimension_numbers = #tpu.dot_dimension_numbers<[1], [0], [0], [1], [0, 0, 1, 1], [], []>} : vector<64x64xbf16>, vector<64x128xbf16>, vector<64x128xf32> -> vector<64x128xf32>
    %46 = arith.addf %40, %45 : vector<64x128xf32>
    %c0_63 = arith.constant 0 : index
    %c8 = arith.constant 8 : index
    %c0_64 = arith.constant 0 : index
    %c0_65 = arith.constant 0 : index
    %47 = vector.load %arg3[%c0_63, %c8, %c0_64, %c0_65] : memref<1x11x64x64xbf16, #tpu.memory_space<vmem>>, vector<1x1x64x64xbf16>
    %48 = vector.shape_cast %47 : vector<1x1x64x64xbf16> to vector<64x64xbf16>
    %c0_66 = arith.constant 0 : index
    %c0_67 = arith.constant 0 : index
    %c0_68 = arith.constant 0 : index
    %c8_69 = arith.constant 8 : index
    %49 = vector.load %arg2[%c0_66, %c0_67, %c0_68, %c8_69] : memref<1x1x64x138xbf16, #tpu.memory_space<vmem>>, vector<1x1x64x128xbf16>
    %50 = vector.shape_cast %49 : vector<1x1x64x128xbf16> to vector<64x128xbf16>
    %cst_70 = arith.constant dense<0.000000e+00> : vector<64x128xf32>
    %51 = tpu.matmul %48, %50, %cst_70 {dimension_numbers = #tpu.dot_dimension_numbers<[1], [0], [0], [1], [0, 0, 1, 1], [], []>} : vector<64x64xbf16>, vector<64x128xbf16>, vector<64x128xf32> -> vector<64x128xf32>
    %52 = arith.addf %46, %51 : vector<64x128xf32>
    %c0_71 = arith.constant 0 : index
    %c9 = arith.constant 9 : index
    %c0_72 = arith.constant 0 : index
    %c0_73 = arith.constant 0 : index
    %53 = vector.load %arg3[%c0_71, %c9, %c0_72, %c0_73] : memref<1x11x64x64xbf16, #tpu.memory_space<vmem>>, vector<1x1x64x64xbf16>
    %54 = vector.shape_cast %53 : vector<1x1x64x64xbf16> to vector<64x64xbf16>
    %c0_74 = arith.constant 0 : index
    %c0_75 = arith.constant 0 : index
    %c0_76 = arith.constant 0 : index
    %c9_77 = arith.constant 9 : index
    %55 = vector.load %arg2[%c0_74, %c0_75, %c0_76, %c9_77] : memref<1x1x64x138xbf16, #tpu.memory_space<vmem>>, vector<1x1x64x128xbf16>
    %56 = vector.shape_cast %55 : vector<1x1x64x128xbf16> to vector<64x128xbf16>
    %cst_78 = arith.constant dense<0.000000e+00> : vector<64x128xf32>
    %57 = tpu.matmul %54, %56, %cst_78 {dimension_numbers = #tpu.dot_dimension_numbers<[1], [0], [0], [1], [0, 0, 1, 1], [], []>} : vector<64x64xbf16>, vector<64x128xbf16>, vector<64x128xf32> -> vector<64x128xf32>
    %58 = arith.addf %52, %57 : vector<64x128xf32>
    %c0_79 = arith.constant 0 : index
    %c10 = arith.constant 10 : index
    %c0_80 = arith.constant 0 : index
    %c0_81 = arith.constant 0 : index
    %59 = vector.load %arg3[%c0_79, %c10, %c0_80, %c0_81] : memref<1x11x64x64xbf16, #tpu.memory_space<vmem>>, vector<1x1x64x64xbf16>
    %60 = vector.shape_cast %59 : vector<1x1x64x64xbf16> to vector<64x64xbf16>
    %c0_82 = arith.constant 0 : index
    %c0_83 = arith.constant 0 : index
    %c0_84 = arith.constant 0 : index
    %c10_85 = arith.constant 10 : index
    %61 = vector.load %arg2[%c0_82, %c0_83, %c0_84, %c10_85] : memref<1x1x64x138xbf16, #tpu.memory_space<vmem>>, vector<1x1x64x128xbf16>
    %62 = vector.shape_cast %61 : vector<1x1x64x128xbf16> to vector<64x128xbf16>
    %cst_86 = arith.constant dense<0.000000e+00> : vector<64x128xf32>
    %63 = tpu.matmul %60, %62, %cst_86 {dimension_numbers = #tpu.dot_dimension_numbers<[1], [0], [0], [1], [0, 0, 1, 1], [], []>} : vector<64x64xbf16>, vector<64x128xbf16>, vector<64x128xf32> -> vector<64x128xf32>
    %64 = arith.addf %58, %63 : vector<64x128xf32>
    %c0_87 = arith.constant 0 : index
    %c0_88 = arith.constant 0 : index
    %c0_89 = arith.constant 0 : index
    %65 = vector.load %arg4[%c0_87, %c0_88, %c0_89] : memref<1x64x1xf32, #tpu.memory_space<vmem>>, vector<1x64x1xf32>
    %66 = vector.shape_cast %65 : vector<1x64x1xf32> to vector<64x1xf32>
    %67 = vector.broadcast %66 : vector<64x1xf32> to vector<64x128xf32>
    %68 = arith.addf %64, %67 : vector<64x128xf32>
    %cst_90 = arith.constant 0.000000e+00 : f32
    %69 = vector.broadcast %cst_90 : f32 to vector<64x128xf32>
    %70 = arith.cmpf oge, %68, %69 : vector<64x128xf32>
    %cst_91 = arith.constant 2.000000e-01 : f32
    %71 = vector.broadcast %cst_91 : f32 to vector<64x128xf32>
    %72 = arith.mulf %71, %68 : vector<64x128xf32>
    %73 = arith.select %70, %68, %72 : vector<64x128xi1>, vector<64x128xf32>
    %c0_92 = arith.constant 0 : index
    %c0_93 = arith.constant 0 : index
    %c0_94 = arith.constant 0 : index
    %c0_95 = arith.constant 0 : index
    %74 = vector.load %arg5[%c0_92, %c0_93, %c0_94, %c0_95] : memref<1x1x64x128xf32, #tpu.memory_space<vmem>>, vector<1x1x64x128xf32>
    %75 = vector.shape_cast %74 : vector<1x1x64x128xf32> to vector<64x128xf32>
    %76 = vector.shape_cast %73 : vector<64x128xf32> to vector<1x1x64x128xf32>
    tpu.vector_store %arg5[%c0_92, %c0_93, %c0_94, %c0_95], %76 {strides = array<i32>} : memref<1x1x64x128xf32, #tpu.memory_space<vmem>>, vector<1x1x64x128xf32>,
    return
  }
  func.func @transform_0(%arg0: i32, %arg1: i32) -> (i32, i32, i32, i32) {
    %c0_i32 = arith.constant 0 : i32
    %c0_i32_0 = arith.constant 0 : i32
    %c0_i32_1 = arith.constant 0 : i32
    return %arg1, %arg0, %c0_i32, %c0_i32_0 : i32, i32, i32, i32
  }
  func.func @transform_1(%arg0: i32, %arg1: i32) -> (i32, i32, i32, i32) {
    %c0_i32 = arith.constant 0 : i32
    %c0_i32_0 = arith.constant 0 : i32
    %c0_i32_1 = arith.constant 0 : i32
    %c0_i32_2 = arith.constant 0 : i32
    return %arg0, %c0_i32, %c0_i32_0, %c0_i32_1 : i32, i32, i32, i32
  }
  func.func @transform_2(%arg0: i32, %arg1: i32) -> (i32, i32, i32) {
    %c0_i32 = arith.constant 0 : i32
    %c0_i32_0 = arith.constant 0 : i32
    %c0_i32_1 = arith.constant 0 : i32
    return %arg0, %c0_i32, %c0_i32_0 : i32, i32, i32
  }
  func.func @transform_3(%arg0: i32, %arg1: i32) -> (i32, i32, i32, i32) {
    %c0_i32 = arith.constant 0 : i32
    %c0_i32_0 = arith.constant 0 : i32
    %c0_i32_1 = arith.constant 0 : i32
    return %arg1, %arg0, %c0_i32, %c0_i32_0 : i32, i32, i32, i32
  }
}

module attributes {stable_mosaic.version = 11 : i64} {
  func.func @kernel(%arg0: i32, %arg1: i32, %arg2: memref<1x1x64x132xbf16, #tpu.memory_space<vmem>>, %arg3: memref<1x5x128x64xbf16, #tpu.memory_space<vmem>>, %arg4: memref<1x128x1xf32, #tpu.memory_space<vmem>>, %arg5: memref<1x1x128x128xf32, #tpu.memory_space<vmem>>) attributes {dimension_semantics = [#tpu.dimension_semantics<parallel>, #tpu.dimension_semantics<parallel>], iteration_bounds = array<i64: 1, 2>, scalar_prefetch = 0 : i64, scratch_operands = 0 : i64, tpu.core_type = #tpu.core_type<tc>, window_params = [{transform_indices = @transform_0, window_bounds = array<i64: 1, 1, 64, 132>}, {transform_indices = @transform_1, window_bounds = array<i64: 1, 5, 128, 64>}, {transform_indices = @transform_2, window_bounds = array<i64: 1, 128, 1>}, {transform_indices = @transform_3, window_bounds = array<i64: 1, 1, 128, 128>}]} {
    %c0 = arith.constant 0 : index
    %c0_0 = arith.constant 0 : index
    %c0_1 = arith.constant 0 : index
    %c0_2 = arith.constant 0 : index
    %0 = vector.load %arg3[%c0, %c0_0, %c0_1, %c0_2] : memref<1x5x128x64xbf16, #tpu.memory_space<vmem>>, vector<1x1x128x64xbf16>
    %1 = vector.shape_cast %0 : vector<1x1x128x64xbf16> to vector<128x64xbf16>
    %c0_3 = arith.constant 0 : index
    %c0_4 = arith.constant 0 : index
    %c0_5 = arith.constant 0 : index
    %c0_6 = arith.constant 0 : index
    %2 = vector.load %arg2[%c0_3, %c0_4, %c0_5, %c0_6] : memref<1x1x64x132xbf16, #tpu.memory_space<vmem>>, vector<1x1x64x128xbf16>
    %3 = vector.shape_cast %2 : vector<1x1x64x128xbf16> to vector<64x128xbf16>
    %cst = arith.constant dense<0.000000e+00> : vector<128x128xf32>
    %4 = tpu.matmul %1, %3, %cst {dimension_numbers = #tpu.dot_dimension_numbers<[1], [0], [0], [1], [0, 0, 1, 1], [], []>} : vector<128x64xbf16>, vector<64x128xbf16>, vector<128x128xf32> -> vector<128x128xf32>
    %c0_7 = arith.constant 0 : index
    %c1 = arith.constant 1 : index
    %c0_8 = arith.constant 0 : index
    %c0_9 = arith.constant 0 : index
    %5 = vector.load %arg3[%c0_7, %c1, %c0_8, %c0_9] : memref<1x5x128x64xbf16, #tpu.memory_space<vmem>>, vector<1x1x128x64xbf16>
    %6 = vector.shape_cast %5 : vector<1x1x128x64xbf16> to vector<128x64xbf16>
    %c0_10 = arith.constant 0 : index
    %c0_11 = arith.constant 0 : index
    %c0_12 = arith.constant 0 : index
    %c1_13 = arith.constant 1 : index
    %7 = vector.load %arg2[%c0_10, %c0_11, %c0_12, %c1_13] : memref<1x1x64x132xbf16, #tpu.memory_space<vmem>>, vector<1x1x64x128xbf16>
    %8 = vector.shape_cast %7 : vector<1x1x64x128xbf16> to vector<64x128xbf16>
    %cst_14 = arith.constant dense<0.000000e+00> : vector<128x128xf32>
    %9 = tpu.matmul %6, %8, %cst_14 {dimension_numbers = #tpu.dot_dimension_numbers<[1], [0], [0], [1], [0, 0, 1, 1], [], []>} : vector<128x64xbf16>, vector<64x128xbf16>, vector<128x128xf32> -> vector<128x128xf32>
    %10 = arith.addf %4, %9 : vector<128x128xf32>
    %c0_15 = arith.constant 0 : index
    %c2 = arith.constant 2 : index
    %c0_16 = arith.constant 0 : index
    %c0_17 = arith.constant 0 : index
    %11 = vector.load %arg3[%c0_15, %c2, %c0_16, %c0_17] : memref<1x5x128x64xbf16, #tpu.memory_space<vmem>>, vector<1x1x128x64xbf16>
    %12 = vector.shape_cast %11 : vector<1x1x128x64xbf16> to vector<128x64xbf16>
    %c0_18 = arith.constant 0 : index
    %c0_19 = arith.constant 0 : index
    %c0_20 = arith.constant 0 : index
    %c2_21 = arith.constant 2 : index
    %13 = vector.load %arg2[%c0_18, %c0_19, %c0_20, %c2_21] : memref<1x1x64x132xbf16, #tpu.memory_space<vmem>>, vector<1x1x64x128xbf16>
    %14 = vector.shape_cast %13 : vector<1x1x64x128xbf16> to vector<64x128xbf16>
    %cst_22 = arith.constant dense<0.000000e+00> : vector<128x128xf32>
    %15 = tpu.matmul %12, %14, %cst_22 {dimension_numbers = #tpu.dot_dimension_numbers<[1], [0], [0], [1], [0, 0, 1, 1], [], []>} : vector<128x64xbf16>, vector<64x128xbf16>, vector<128x128xf32> -> vector<128x128xf32>
    %16 = arith.addf %10, %15 : vector<128x128xf32>
    %c0_23 = arith.constant 0 : index
    %c3 = arith.constant 3 : index
    %c0_24 = arith.constant 0 : index
    %c0_25 = arith.constant 0 : index
    %17 = vector.load %arg3[%c0_23, %c3, %c0_24, %c0_25] : memref<1x5x128x64xbf16, #tpu.memory_space<vmem>>, vector<1x1x128x64xbf16>
    %18 = vector.shape_cast %17 : vector<1x1x128x64xbf16> to vector<128x64xbf16>
    %c0_26 = arith.constant 0 : index
    %c0_27 = arith.constant 0 : index
    %c0_28 = arith.constant 0 : index
    %c3_29 = arith.constant 3 : index
    %19 = vector.load %arg2[%c0_26, %c0_27, %c0_28, %c3_29] : memref<1x1x64x132xbf16, #tpu.memory_space<vmem>>, vector<1x1x64x128xbf16>
    %20 = vector.shape_cast %19 : vector<1x1x64x128xbf16> to vector<64x128xbf16>
    %cst_30 = arith.constant dense<0.000000e+00> : vector<128x128xf32>
    %21 = tpu.matmul %18, %20, %cst_30 {dimension_numbers = #tpu.dot_dimension_numbers<[1], [0], [0], [1], [0, 0, 1, 1], [], []>} : vector<128x64xbf16>, vector<64x128xbf16>, vector<128x128xf32> -> vector<128x128xf32>
    %22 = arith.addf %16, %21 : vector<128x128xf32>
    %c0_31 = arith.constant 0 : index
    %c4 = arith.constant 4 : index
    %c0_32 = arith.constant 0 : index
    %c0_33 = arith.constant 0 : index
    %23 = vector.load %arg3[%c0_31, %c4, %c0_32, %c0_33] : memref<1x5x128x64xbf16, #tpu.memory_space<vmem>>, vector<1x1x128x64xbf16>
    %24 = vector.shape_cast %23 : vector<1x1x128x64xbf16> to vector<128x64xbf16>
    %c0_34 = arith.constant 0 : index
    %c0_35 = arith.constant 0 : index
    %c0_36 = arith.constant 0 : index
    %c4_37 = arith.constant 4 : index
    %25 = vector.load %arg2[%c0_34, %c0_35, %c0_36, %c4_37] : memref<1x1x64x132xbf16, #tpu.memory_space<vmem>>, vector<1x1x64x128xbf16>
    %26 = vector.shape_cast %25 : vector<1x1x64x128xbf16> to vector<64x128xbf16>
    %cst_38 = arith.constant dense<0.000000e+00> : vector<128x128xf32>
    %27 = tpu.matmul %24, %26, %cst_38 {dimension_numbers = #tpu.dot_dimension_numbers<[1], [0], [0], [1], [0, 0, 1, 1], [], []>} : vector<128x64xbf16>, vector<64x128xbf16>, vector<128x128xf32> -> vector<128x128xf32>
    %28 = arith.addf %22, %27 : vector<128x128xf32>
    %c0_39 = arith.constant 0 : index
    %c0_40 = arith.constant 0 : index
    %c0_41 = arith.constant 0 : index
    %29 = vector.load %arg4[%c0_39, %c0_40, %c0_41] : memref<1x128x1xf32, #tpu.memory_space<vmem>>, vector<1x128x1xf32>
    %30 = vector.shape_cast %29 : vector<1x128x1xf32> to vector<128x1xf32>
    %31 = vector.broadcast %30 : vector<128x1xf32> to vector<128x128xf32>
    %32 = arith.addf %28, %31 : vector<128x128xf32>
    %cst_42 = arith.constant 0.000000e+00 : f32
    %33 = vector.broadcast %cst_42 : f32 to vector<128x128xf32>
    %34 = arith.cmpf oge, %32, %33 : vector<128x128xf32>
    %cst_43 = arith.constant 2.000000e-01 : f32
    %35 = vector.broadcast %cst_43 : f32 to vector<128x128xf32>
    %36 = arith.mulf %35, %32 : vector<128x128xf32>
    %37 = arith.select %34, %32, %36 : vector<128x128xi1>, vector<128x128xf32>
    %c0_44 = arith.constant 0 : index
    %c0_45 = arith.constant 0 : index
    %c0_46 = arith.constant 0 : index
    %c0_47 = arith.constant 0 : index
    %38 = vector.load %arg5[%c0_44, %c0_45, %c0_46, %c0_47] : memref<1x1x128x128xf32, #tpu.memory_space<vmem>>, vector<1x1x128x128xf32>
    %39 = vector.shape_cast %38 : vector<1x1x128x128xf32> to vector<128x128xf32>
    %40 = vector.shape_cast %37 : vector<128x128xf32> to vector<1x1x128x128xf32>
    tpu.vector_store %arg5[%c0_44, %c0_45, %c0_46, %c0_47], %40 {strides = array<i32>} : memref<1x1x128x128xf32, #tpu.memory_space<vmem>>, vector<1x1x128x128xf32>,
    return
  }
  func.func @transform_0(%arg0: i32, %arg1: i32) -> (i32, i32, i32, i32) {
    %c0_i32 = arith.constant 0 : i32
    %c0_i32_0 = arith.constant 0 : i32
    %c0_i32_1 = arith.constant 0 : i32
    return %arg1, %arg0, %c0_i32, %c0_i32_0 : i32, i32, i32, i32
  }
  func.func @transform_1(%arg0: i32, %arg1: i32) -> (i32, i32, i32, i32) {
    %c0_i32 = arith.constant 0 : i32
    %c0_i32_0 = arith.constant 0 : i32
    %c0_i32_1 = arith.constant 0 : i32
    %c0_i32_2 = arith.constant 0 : i32
    return %arg0, %c0_i32, %c0_i32_0, %c0_i32_1 : i32, i32, i32, i32
  }
  func.func @transform_2(%arg0: i32, %arg1: i32) -> (i32, i32, i32) {
    %c0_i32 = arith.constant 0 : i32
    %c0_i32_0 = arith.constant 0 : i32
    %c0_i32_1 = arith.constant 0 : i32
    return %arg0, %c0_i32, %c0_i32_0 : i32, i32, i32
  }
  func.func @transform_3(%arg0: i32, %arg1: i32) -> (i32, i32, i32, i32) {
    %c0_i32 = arith.constant 0 : i32
    %c0_i32_0 = arith.constant 0 : i32
    %c0_i32_1 = arith.constant 0 : i32
    return %arg1, %arg0, %c0_i32, %c0_i32_0 : i32, i32, i32, i32
  }
}

module attributes {stable_mosaic.version = 11 : i64} {
  func.func @kernel(%arg0: i32, %arg1: i32, %arg2: memref<1x1x128x130xbf16, #tpu.memory_space<vmem>>, %arg3: memref<1x3x8x128xbf16, #tpu.memory_space<vmem>>, %arg4: memref<1x8x1xf32, #tpu.memory_space<vmem>>, %arg5: memref<1x1x8x128xf32, #tpu.memory_space<vmem>>) attributes {dimension_semantics = [#tpu.dimension_semantics<parallel>, #tpu.dimension_semantics<parallel>], iteration_bounds = array<i64: 1, 2>, scalar_prefetch = 0 : i64, scratch_operands = 0 : i64, tpu.core_type = #tpu.core_type<tc>, window_params = [{transform_indices = @transform_0, window_bounds = array<i64: 1, 1, 128, 130>}, {transform_indices = @transform_1, window_bounds = array<i64: 1, 3, 8, 128>}, {transform_indices = @transform_2, window_bounds = array<i64: 1, 8, 1>}, {transform_indices = @transform_3, window_bounds = array<i64: 1, 1, 8, 128>}]} {
    %c0 = arith.constant 0 : index
    %c0_0 = arith.constant 0 : index
    %c0_1 = arith.constant 0 : index
    %c0_2 = arith.constant 0 : index
    %0 = vector.load %arg3[%c0, %c0_0, %c0_1, %c0_2] : memref<1x3x8x128xbf16, #tpu.memory_space<vmem>>, vector<1x1x8x128xbf16>
    %1 = vector.shape_cast %0 : vector<1x1x8x128xbf16> to vector<8x128xbf16>
    %c0_3 = arith.constant 0 : index
    %c0_4 = arith.constant 0 : index
    %c0_5 = arith.constant 0 : index
    %c0_6 = arith.constant 0 : index
    %2 = vector.load %arg2[%c0_3, %c0_4, %c0_5, %c0_6] : memref<1x1x128x130xbf16, #tpu.memory_space<vmem>>, vector<1x1x128x128xbf16>
    %3 = vector.shape_cast %2 : vector<1x1x128x128xbf16> to vector<128x128xbf16>
    %cst = arith.constant dense<0.000000e+00> : vector<8x128xf32>
    %4 = tpu.matmul %1, %3, %cst {dimension_numbers = #tpu.dot_dimension_numbers<[1], [0], [0], [1], [0, 0, 1, 1], [], []>} : vector<8x128xbf16>, vector<128x128xbf16>, vector<8x128xf32> -> vector<8x128xf32>
    %c0_7 = arith.constant 0 : index
    %c1 = arith.constant 1 : index
    %c0_8 = arith.constant 0 : index
    %c0_9 = arith.constant 0 : index
    %5 = vector.load %arg3[%c0_7, %c1, %c0_8, %c0_9] : memref<1x3x8x128xbf16, #tpu.memory_space<vmem>>, vector<1x1x8x128xbf16>
    %6 = vector.shape_cast %5 : vector<1x1x8x128xbf16> to vector<8x128xbf16>
    %c0_10 = arith.constant 0 : index
    %c0_11 = arith.constant 0 : index
    %c0_12 = arith.constant 0 : index
    %c1_13 = arith.constant 1 : index
    %7 = vector.load %arg2[%c0_10, %c0_11, %c0_12, %c1_13] : memref<1x1x128x130xbf16, #tpu.memory_space<vmem>>, vector<1x1x128x128xbf16>
    %8 = vector.shape_cast %7 : vector<1x1x128x128xbf16> to vector<128x128xbf16>
    %cst_14 = arith.constant dense<0.000000e+00> : vector<8x128xf32>
    %9 = tpu.matmul %6, %8, %cst_14 {dimension_numbers = #tpu.dot_dimension_numbers<[1], [0], [0], [1], [0, 0, 1, 1], [], []>} : vector<8x128xbf16>, vector<128x128xbf16>, vector<8x128xf32> -> vector<8x128xf32>
    %10 = arith.addf %4, %9 : vector<8x128xf32>
    %c0_15 = arith.constant 0 : index
    %c2 = arith.constant 2 : index
    %c0_16 = arith.constant 0 : index
    %c0_17 = arith.constant 0 : index
    %11 = vector.load %arg3[%c0_15, %c2, %c0_16, %c0_17] : memref<1x3x8x128xbf16, #tpu.memory_space<vmem>>, vector<1x1x8x128xbf16>
    %12 = vector.shape_cast %11 : vector<1x1x8x128xbf16> to vector<8x128xbf16>
    %c0_18 = arith.constant 0 : index
    %c0_19 = arith.constant 0 : index
    %c0_20 = arith.constant 0 : index
    %c2_21 = arith.constant 2 : index
    %13 = vector.load %arg2[%c0_18, %c0_19, %c0_20, %c2_21] : memref<1x1x128x130xbf16, #tpu.memory_space<vmem>>, vector<1x1x128x128xbf16>
    %14 = vector.shape_cast %13 : vector<1x1x128x128xbf16> to vector<128x128xbf16>
    %cst_22 = arith.constant dense<0.000000e+00> : vector<8x128xf32>
    %15 = tpu.matmul %12, %14, %cst_22 {dimension_numbers = #tpu.dot_dimension_numbers<[1], [0], [0], [1], [0, 0, 1, 1], [], []>} : vector<8x128xbf16>, vector<128x128xbf16>, vector<8x128xf32> -> vector<8x128xf32>
    %16 = arith.addf %10, %15 : vector<8x128xf32>
    %c0_23 = arith.constant 0 : index
    %c0_24 = arith.constant 0 : index
    %c0_25 = arith.constant 0 : index
    %17 = vector.load %arg4[%c0_23, %c0_24, %c0_25] : memref<1x8x1xf32, #tpu.memory_space<vmem>>, vector<1x8x1xf32>
    %18 = vector.shape_cast %17 : vector<1x8x1xf32> to vector<8x1xf32>
    %19 = vector.broadcast %18 : vector<8x1xf32> to vector<8x128xf32>
    %20 = arith.addf %16, %19 : vector<8x128xf32>
    %cst_26 = arith.constant 0.000000e+00 : f32
    %21 = vector.broadcast %cst_26 : f32 to vector<8x128xf32>
    %22 = arith.cmpf oge, %20, %21 : vector<8x128xf32>
    %cst_27 = arith.constant 2.000000e-01 : f32
    %23 = vector.broadcast %cst_27 : f32 to vector<8x128xf32>
    %24 = arith.mulf %23, %20 : vector<8x128xf32>
    %25 = arith.select %22, %20, %24 : vector<8x128xi1>, vector<8x128xf32>
    %c0_28 = arith.constant 0 : index
    %c0_29 = arith.constant 0 : index
    %c0_30 = arith.constant 0 : index
    %c0_31 = arith.constant 0 : index
    %26 = vector.load %arg5[%c0_28, %c0_29, %c0_30, %c0_31] : memref<1x1x8x128xf32, #tpu.memory_space<vmem>>, vector<1x1x8x128xf32>
    %27 = vector.shape_cast %26 : vector<1x1x8x128xf32> to vector<8x128xf32>
    %28 = vector.shape_cast %25 : vector<8x128xf32> to vector<1x1x8x128xf32>
    tpu.vector_store %arg5[%c0_28, %c0_29, %c0_30, %c0_31], %28 {strides = array<i32>} : memref<1x1x8x128xf32, #tpu.memory_space<vmem>>, vector<1x1x8x128xf32>,
    return
  }
  func.func @transform_0(%arg0: i32, %arg1: i32) -> (i32, i32, i32, i32) {
    %c0_i32 = arith.constant 0 : i32
    %c0_i32_0 = arith.constant 0 : i32
    %c0_i32_1 = arith.constant 0 : i32
    return %arg1, %arg0, %c0_i32, %c0_i32_0 : i32, i32, i32, i32
  }
  func.func @transform_1(%arg0: i32, %arg1: i32) -> (i32, i32, i32, i32) {
    %c0_i32 = arith.constant 0 : i32
    %c0_i32_0 = arith.constant 0 : i32
    %c0_i32_1 = arith.constant 0 : i32
    %c0_i32_2 = arith.constant 0 : i32
    return %arg0, %c0_i32, %c0_i32_0, %c0_i32_1 : i32, i32, i32, i32
  }
  func.func @transform_2(%arg0: i32, %arg1: i32) -> (i32, i32, i32) {
    %c0_i32 = arith.constant 0 : i32
    %c0_i32_0 = arith.constant 0 : i32
    %c0_i32_1 = arith.constant 0 : i32
    return %arg0, %c0_i32, %c0_i32_0 : i32, i32, i32
  }
  func.func @transform_3(%arg0: i32, %arg1: i32) -> (i32, i32, i32, i32) {
    %c0_i32 = arith.constant 0 : i32
    %c0_i32_0 = arith.constant 0 : i32
    %c0_i32_1 = arith.constant 0 : i32
    return %arg1, %arg0, %c0_i32, %c0_i32_0 : i32, i32, i32, i32
  }
}

module attributes {stable_mosaic.version = 11 : i64} {
  func.func @kernel(%arg0: i32, %arg1: i32, %arg2: memref<1x1x8x270xbf16, #tpu.memory_space<vmem>>, %arg3: memref<1x15x16x8xbf16, #tpu.memory_space<vmem>>, %arg4: memref<1x16x1xf32, #tpu.memory_space<vmem>>, %arg5: memref<1x1x16x256xf32, #tpu.memory_space<vmem>>) attributes {dimension_semantics = [#tpu.dimension_semantics<parallel>, #tpu.dimension_semantics<parallel>], iteration_bounds = array<i64: 1, 2>, scalar_prefetch = 0 : i64, scratch_operands = 0 : i64, tpu.core_type = #tpu.core_type<tc>, window_params = [{transform_indices = @transform_0, window_bounds = array<i64: 1, 1, 8, 270>}, {transform_indices = @transform_1, window_bounds = array<i64: 1, 15, 16, 8>}, {transform_indices = @transform_2, window_bounds = array<i64: 1, 16, 1>}, {transform_indices = @transform_3, window_bounds = array<i64: 1, 1, 16, 256>}]} {
    %c0 = arith.constant 0 : index
    %c0_0 = arith.constant 0 : index
    %c0_1 = arith.constant 0 : index
    %c0_2 = arith.constant 0 : index
    %0 = vector.load %arg3[%c0, %c0_0, %c0_1, %c0_2] : memref<1x15x16x8xbf16, #tpu.memory_space<vmem>>, vector<1x1x16x8xbf16>
    %1 = vector.shape_cast %0 : vector<1x1x16x8xbf16> to vector<16x8xbf16>
    %c0_3 = arith.constant 0 : index
    %c0_4 = arith.constant 0 : index
    %c0_5 = arith.constant 0 : index
    %c0_6 = arith.constant 0 : index
    %2 = vector.load %arg2[%c0_3, %c0_4, %c0_5, %c0_6] : memref<1x1x8x270xbf16, #tpu.memory_space<vmem>>, vector<1x1x8x256xbf16>
    %3 = vector.shape_cast %2 : vector<1x1x8x256xbf16> to vector<8x256xbf16>
    %cst = arith.constant dense<0.000000e+00> : vector<16x256xf32>
    %4 = tpu.matmul %1, %3, %cst {dimension_numbers = #tpu.dot_dimension_numbers<[1], [0], [0], [1], [0, 0, 1, 1], [], []>} : vector<16x8xbf16>, vector<8x256xbf16>, vector<16x256xf32> -> vector<16x256xf32>
    %c0_7 = arith.constant 0 : index
    %c1 = arith.constant 1 : index
    %c0_8 = arith.constant 0 : index
    %c0_9 = arith.constant 0 : index
    %5 = vector.load %arg3[%c0_7, %c1, %c0_8, %c0_9] : memref<1x15x16x8xbf16, #tpu.memory_space<vmem>>, vector<1x1x16x8xbf16>
    %6 = vector.shape_cast %5 : vector<1x1x16x8xbf16> to vector<16x8xbf16>
    %c0_10 = arith.constant 0 : index
    %c0_11 = arith.constant 0 : index
    %c0_12 = arith.constant 0 : index
    %c1_13 = arith.constant 1 : index
    %7 = vector.load %arg2[%c0_10, %c0_11, %c0_12, %c1_13] : memref<1x1x8x270xbf16, #tpu.memory_space<vmem>>, vector<1x1x8x256xbf16>
    %8 = vector.shape_cast %7 : vector<1x1x8x256xbf16> to vector<8x256xbf16>
    %cst_14 = arith.constant dense<0.000000e+00> : vector<16x256xf32>
    %9 = tpu.matmul %6, %8, %cst_14 {dimension_numbers = #tpu.dot_dimension_numbers<[1], [0], [0], [1], [0, 0, 1, 1], [], []>} : vector<16x8xbf16>, vector<8x256xbf16>, vector<16x256xf32> -> vector<16x256xf32>
    %10 = arith.addf %4, %9 : vector<16x256xf32>
    %c0_15 = arith.constant 0 : index
    %c2 = arith.constant 2 : index
    %c0_16 = arith.constant 0 : index
    %c0_17 = arith.constant 0 : index
    %11 = vector.load %arg3[%c0_15, %c2, %c0_16, %c0_17] : memref<1x15x16x8xbf16, #tpu.memory_space<vmem>>, vector<1x1x16x8xbf16>
    %12 = vector.shape_cast %11 : vector<1x1x16x8xbf16> to vector<16x8xbf16>
    %c0_18 = arith.constant 0 : index
    %c0_19 = arith.constant 0 : index
    %c0_20 = arith.constant 0 : index
    %c2_21 = arith.constant 2 : index
    %13 = vector.load %arg2[%c0_18, %c0_19, %c0_20, %c2_21] : memref<1x1x8x270xbf16, #tpu.memory_space<vmem>>, vector<1x1x8x256xbf16>
    %14 = vector.shape_cast %13 : vector<1x1x8x256xbf16> to vector<8x256xbf16>
    %cst_22 = arith.constant dense<0.000000e+00> : vector<16x256xf32>
    %15 = tpu.matmul %12, %14, %cst_22 {dimension_numbers = #tpu.dot_dimension_numbers<[1], [0], [0], [1], [0, 0, 1, 1], [], []>} : vector<16x8xbf16>, vector<8x256xbf16>, vector<16x256xf32> -> vector<16x256xf32>
    %16 = arith.addf %10, %15 : vector<16x256xf32>
    %c0_23 = arith.constant 0 : index
    %c3 = arith.constant 3 : index
    %c0_24 = arith.constant 0 : index
    %c0_25 = arith.constant 0 : index
    %17 = vector.load %arg3[%c0_23, %c3, %c0_24, %c0_25] : memref<1x15x16x8xbf16, #tpu.memory_space<vmem>>, vector<1x1x16x8xbf16>
    %18 = vector.shape_cast %17 : vector<1x1x16x8xbf16> to vector<16x8xbf16>
    %c0_26 = arith.constant 0 : index
    %c0_27 = arith.constant 0 : index
    %c0_28 = arith.constant 0 : index
    %c3_29 = arith.constant 3 : index
    %19 = vector.load %arg2[%c0_26, %c0_27, %c0_28, %c3_29] : memref<1x1x8x270xbf16, #tpu.memory_space<vmem>>, vector<1x1x8x256xbf16>
    %20 = vector.shape_cast %19 : vector<1x1x8x256xbf16> to vector<8x256xbf16>
    %cst_30 = arith.constant dense<0.000000e+00> : vector<16x256xf32>
    %21 = tpu.matmul %18, %20, %cst_30 {dimension_numbers = #tpu.dot_dimension_numbers<[1], [0], [0], [1], [0, 0, 1, 1], [], []>} : vector<16x8xbf16>, vector<8x256xbf16>, vector<16x256xf32> -> vector<16x256xf32>
    %22 = arith.addf %16, %21 : vector<16x256xf32>
    %c0_31 = arith.constant 0 : index
    %c4 = arith.constant 4 : index
    %c0_32 = arith.constant 0 : index
    %c0_33 = arith.constant 0 : index
    %23 = vector.load %arg3[%c0_31, %c4, %c0_32, %c0_33] : memref<1x15x16x8xbf16, #tpu.memory_space<vmem>>, vector<1x1x16x8xbf16>
    %24 = vector.shape_cast %23 : vector<1x1x16x8xbf16> to vector<16x8xbf16>
    %c0_34 = arith.constant 0 : index
    %c0_35 = arith.constant 0 : index
    %c0_36 = arith.constant 0 : index
    %c4_37 = arith.constant 4 : index
    %25 = vector.load %arg2[%c0_34, %c0_35, %c0_36, %c4_37] : memref<1x1x8x270xbf16, #tpu.memory_space<vmem>>, vector<1x1x8x256xbf16>
    %26 = vector.shape_cast %25 : vector<1x1x8x256xbf16> to vector<8x256xbf16>
    %cst_38 = arith.constant dense<0.000000e+00> : vector<16x256xf32>
    %27 = tpu.matmul %24, %26, %cst_38 {dimension_numbers = #tpu.dot_dimension_numbers<[1], [0], [0], [1], [0, 0, 1, 1], [], []>} : vector<16x8xbf16>, vector<8x256xbf16>, vector<16x256xf32> -> vector<16x256xf32>
    %28 = arith.addf %22, %27 : vector<16x256xf32>
    %c0_39 = arith.constant 0 : index
    %c5 = arith.constant 5 : index
    %c0_40 = arith.constant 0 : index
    %c0_41 = arith.constant 0 : index
    %29 = vector.load %arg3[%c0_39, %c5, %c0_40, %c0_41] : memref<1x15x16x8xbf16, #tpu.memory_space<vmem>>, vector<1x1x16x8xbf16>
    %30 = vector.shape_cast %29 : vector<1x1x16x8xbf16> to vector<16x8xbf16>
    %c0_42 = arith.constant 0 : index
    %c0_43 = arith.constant 0 : index
    %c0_44 = arith.constant 0 : index
    %c5_45 = arith.constant 5 : index
    %31 = vector.load %arg2[%c0_42, %c0_43, %c0_44, %c5_45] : memref<1x1x8x270xbf16, #tpu.memory_space<vmem>>, vector<1x1x8x256xbf16>
    %32 = vector.shape_cast %31 : vector<1x1x8x256xbf16> to vector<8x256xbf16>
    %cst_46 = arith.constant dense<0.000000e+00> : vector<16x256xf32>
    %33 = tpu.matmul %30, %32, %cst_46 {dimension_numbers = #tpu.dot_dimension_numbers<[1], [0], [0], [1], [0, 0, 1, 1], [], []>} : vector<16x8xbf16>, vector<8x256xbf16>, vector<16x256xf32> -> vector<16x256xf32>
    %34 = arith.addf %28, %33 : vector<16x256xf32>
    %c0_47 = arith.constant 0 : index
    %c6 = arith.constant 6 : index
    %c0_48 = arith.constant 0 : index
    %c0_49 = arith.constant 0 : index
    %35 = vector.load %arg3[%c0_47, %c6, %c0_48, %c0_49] : memref<1x15x16x8xbf16, #tpu.memory_space<vmem>>, vector<1x1x16x8xbf16>
    %36 = vector.shape_cast %35 : vector<1x1x16x8xbf16> to vector<16x8xbf16>
    %c0_50 = arith.constant 0 : index
    %c0_51 = arith.constant 0 : index
    %c0_52 = arith.constant 0 : index
    %c6_53 = arith.constant 6 : index
    %37 = vector.load %arg2[%c0_50, %c0_51, %c0_52, %c6_53] : memref<1x1x8x270xbf16, #tpu.memory_space<vmem>>, vector<1x1x8x256xbf16>
    %38 = vector.shape_cast %37 : vector<1x1x8x256xbf16> to vector<8x256xbf16>
    %cst_54 = arith.constant dense<0.000000e+00> : vector<16x256xf32>
    %39 = tpu.matmul %36, %38, %cst_54 {dimension_numbers = #tpu.dot_dimension_numbers<[1], [0], [0], [1], [0, 0, 1, 1], [], []>} : vector<16x8xbf16>, vector<8x256xbf16>, vector<16x256xf32> -> vector<16x256xf32>
    %40 = arith.addf %34, %39 : vector<16x256xf32>
    %c0_55 = arith.constant 0 : index
    %c7 = arith.constant 7 : index
    %c0_56 = arith.constant 0 : index
    %c0_57 = arith.constant 0 : index
    %41 = vector.load %arg3[%c0_55, %c7, %c0_56, %c0_57] : memref<1x15x16x8xbf16, #tpu.memory_space<vmem>>, vector<1x1x16x8xbf16>
    %42 = vector.shape_cast %41 : vector<1x1x16x8xbf16> to vector<16x8xbf16>
    %c0_58 = arith.constant 0 : index
    %c0_59 = arith.constant 0 : index
    %c0_60 = arith.constant 0 : index
    %c7_61 = arith.constant 7 : index
    %43 = vector.load %arg2[%c0_58, %c0_59, %c0_60, %c7_61] : memref<1x1x8x270xbf16, #tpu.memory_space<vmem>>, vector<1x1x8x256xbf16>
    %44 = vector.shape_cast %43 : vector<1x1x8x256xbf16> to vector<8x256xbf16>
    %cst_62 = arith.constant dense<0.000000e+00> : vector<16x256xf32>
    %45 = tpu.matmul %42, %44, %cst_62 {dimension_numbers = #tpu.dot_dimension_numbers<[1], [0], [0], [1], [0, 0, 1, 1], [], []>} : vector<16x8xbf16>, vector<8x256xbf16>, vector<16x256xf32> -> vector<16x256xf32>
    %46 = arith.addf %40, %45 : vector<16x256xf32>
    %c0_63 = arith.constant 0 : index
    %c8 = arith.constant 8 : index
    %c0_64 = arith.constant 0 : index
    %c0_65 = arith.constant 0 : index
    %47 = vector.load %arg3[%c0_63, %c8, %c0_64, %c0_65] : memref<1x15x16x8xbf16, #tpu.memory_space<vmem>>, vector<1x1x16x8xbf16>
    %48 = vector.shape_cast %47 : vector<1x1x16x8xbf16> to vector<16x8xbf16>
    %c0_66 = arith.constant 0 : index
    %c0_67 = arith.constant 0 : index
    %c0_68 = arith.constant 0 : index
    %c8_69 = arith.constant 8 : index
    %49 = vector.load %arg2[%c0_66, %c0_67, %c0_68, %c8_69] : memref<1x1x8x270xbf16, #tpu.memory_space<vmem>>, vector<1x1x8x256xbf16>
    %50 = vector.shape_cast %49 : vector<1x1x8x256xbf16> to vector<8x256xbf16>
    %cst_70 = arith.constant dense<0.000000e+00> : vector<16x256xf32>
    %51 = tpu.matmul %48, %50, %cst_70 {dimension_numbers = #tpu.dot_dimension_numbers<[1], [0], [0], [1], [0, 0, 1, 1], [], []>} : vector<16x8xbf16>, vector<8x256xbf16>, vector<16x256xf32> -> vector<16x256xf32>
    %52 = arith.addf %46, %51 : vector<16x256xf32>
    %c0_71 = arith.constant 0 : index
    %c9 = arith.constant 9 : index
    %c0_72 = arith.constant 0 : index
    %c0_73 = arith.constant 0 : index
    %53 = vector.load %arg3[%c0_71, %c9, %c0_72, %c0_73] : memref<1x15x16x8xbf16, #tpu.memory_space<vmem>>, vector<1x1x16x8xbf16>
    %54 = vector.shape_cast %53 : vector<1x1x16x8xbf16> to vector<16x8xbf16>
    %c0_74 = arith.constant 0 : index
    %c0_75 = arith.constant 0 : index
    %c0_76 = arith.constant 0 : index
    %c9_77 = arith.constant 9 : index
    %55 = vector.load %arg2[%c0_74, %c0_75, %c0_76, %c9_77] : memref<1x1x8x270xbf16, #tpu.memory_space<vmem>>, vector<1x1x8x256xbf16>
    %56 = vector.shape_cast %55 : vector<1x1x8x256xbf16> to vector<8x256xbf16>
    %cst_78 = arith.constant dense<0.000000e+00> : vector<16x256xf32>
    %57 = tpu.matmul %54, %56, %cst_78 {dimension_numbers = #tpu.dot_dimension_numbers<[1], [0], [0], [1], [0, 0, 1, 1], [], []>} : vector<16x8xbf16>, vector<8x256xbf16>, vector<16x256xf32> -> vector<16x256xf32>
    %58 = arith.addf %52, %57 : vector<16x256xf32>
    %c0_79 = arith.constant 0 : index
    %c10 = arith.constant 10 : index
    %c0_80 = arith.constant 0 : index
    %c0_81 = arith.constant 0 : index
    %59 = vector.load %arg3[%c0_79, %c10, %c0_80, %c0_81] : memref<1x15x16x8xbf16, #tpu.memory_space<vmem>>, vector<1x1x16x8xbf16>
    %60 = vector.shape_cast %59 : vector<1x1x16x8xbf16> to vector<16x8xbf16>
    %c0_82 = arith.constant 0 : index
    %c0_83 = arith.constant 0 : index
    %c0_84 = arith.constant 0 : index
    %c10_85 = arith.constant 10 : index
    %61 = vector.load %arg2[%c0_82, %c0_83, %c0_84, %c10_85] : memref<1x1x8x270xbf16, #tpu.memory_space<vmem>>, vector<1x1x8x256xbf16>
    %62 = vector.shape_cast %61 : vector<1x1x8x256xbf16> to vector<8x256xbf16>
    %cst_86 = arith.constant dense<0.000000e+00> : vector<16x256xf32>
    %63 = tpu.matmul %60, %62, %cst_86 {dimension_numbers = #tpu.dot_dimension_numbers<[1], [0], [0], [1], [0, 0, 1, 1], [], []>} : vector<16x8xbf16>, vector<8x256xbf16>, vector<16x256xf32> -> vector<16x256xf32>
    %64 = arith.addf %58, %63 : vector<16x256xf32>
    %c0_87 = arith.constant 0 : index
    %c11 = arith.constant 11 : index
    %c0_88 = arith.constant 0 : index
    %c0_89 = arith.constant 0 : index
    %65 = vector.load %arg3[%c0_87, %c11, %c0_88, %c0_89] : memref<1x15x16x8xbf16, #tpu.memory_space<vmem>>, vector<1x1x16x8xbf16>
    %66 = vector.shape_cast %65 : vector<1x1x16x8xbf16> to vector<16x8xbf16>
    %c0_90 = arith.constant 0 : index
    %c0_91 = arith.constant 0 : index
    %c0_92 = arith.constant 0 : index
    %c11_93 = arith.constant 11 : index
    %67 = vector.load %arg2[%c0_90, %c0_91, %c0_92, %c11_93] : memref<1x1x8x270xbf16, #tpu.memory_space<vmem>>, vector<1x1x8x256xbf16>
    %68 = vector.shape_cast %67 : vector<1x1x8x256xbf16> to vector<8x256xbf16>
    %cst_94 = arith.constant dense<0.000000e+00> : vector<16x256xf32>
    %69 = tpu.matmul %66, %68, %cst_94 {dimension_numbers = #tpu.dot_dimension_numbers<[1], [0], [0], [1], [0, 0, 1, 1], [], []>} : vector<16x8xbf16>, vector<8x256xbf16>, vector<16x256xf32> -> vector<16x256xf32>
    %70 = arith.addf %64, %69 : vector<16x256xf32>
    %c0_95 = arith.constant 0 : index
    %c12 = arith.constant 12 : index
    %c0_96 = arith.constant 0 : index
    %c0_97 = arith.constant 0 : index
    %71 = vector.load %arg3[%c0_95, %c12, %c0_96, %c0_97] : memref<1x15x16x8xbf16, #tpu.memory_space<vmem>>, vector<1x1x16x8xbf16>
    %72 = vector.shape_cast %71 : vector<1x1x16x8xbf16> to vector<16x8xbf16>
    %c0_98 = arith.constant 0 : index
    %c0_99 = arith.constant 0 : index
    %c0_100 = arith.constant 0 : index
    %c12_101 = arith.constant 12 : index
    %73 = vector.load %arg2[%c0_98, %c0_99, %c0_100, %c12_101] : memref<1x1x8x270xbf16, #tpu.memory_space<vmem>>, vector<1x1x8x256xbf16>
    %74 = vector.shape_cast %73 : vector<1x1x8x256xbf16> to vector<8x256xbf16>
    %cst_102 = arith.constant dense<0.000000e+00> : vector<16x256xf32>
    %75 = tpu.matmul %72, %74, %cst_102 {dimension_numbers = #tpu.dot_dimension_numbers<[1], [0], [0], [1], [0, 0, 1, 1], [], []>} : vector<16x8xbf16>, vector<8x256xbf16>, vector<16x256xf32> -> vector<16x256xf32>
    %76 = arith.addf %70, %75 : vector<16x256xf32>
    %c0_103 = arith.constant 0 : index
    %c13 = arith.constant 13 : index
    %c0_104 = arith.constant 0 : index
    %c0_105 = arith.constant 0 : index
    %77 = vector.load %arg3[%c0_103, %c13, %c0_104, %c0_105] : memref<1x15x16x8xbf16, #tpu.memory_space<vmem>>, vector<1x1x16x8xbf16>
    %78 = vector.shape_cast %77 : vector<1x1x16x8xbf16> to vector<16x8xbf16>
    %c0_106 = arith.constant 0 : index
    %c0_107 = arith.constant 0 : index
    %c0_108 = arith.constant 0 : index
    %c13_109 = arith.constant 13 : index
    %79 = vector.load %arg2[%c0_106, %c0_107, %c0_108, %c13_109] : memref<1x1x8x270xbf16, #tpu.memory_space<vmem>>, vector<1x1x8x256xbf16>
    %80 = vector.shape_cast %79 : vector<1x1x8x256xbf16> to vector<8x256xbf16>
    %cst_110 = arith.constant dense<0.000000e+00> : vector<16x256xf32>
    %81 = tpu.matmul %78, %80, %cst_110 {dimension_numbers = #tpu.dot_dimension_numbers<[1], [0], [0], [1], [0, 0, 1, 1], [], []>} : vector<16x8xbf16>, vector<8x256xbf16>, vector<16x256xf32> -> vector<16x256xf32>
    %82 = arith.addf %76, %81 : vector<16x256xf32>
    %c0_111 = arith.constant 0 : index
    %c14 = arith.constant 14 : index
    %c0_112 = arith.constant 0 : index
    %c0_113 = arith.constant 0 : index
    %83 = vector.load %arg3[%c0_111, %c14, %c0_112, %c0_113] : memref<1x15x16x8xbf16, #tpu.memory_space<vmem>>, vector<1x1x16x8xbf16>
    %84 = vector.shape_cast %83 : vector<1x1x16x8xbf16> to vector<16x8xbf16>
    %c0_114 = arith.constant 0 : index
    %c0_115 = arith.constant 0 : index
    %c0_116 = arith.constant 0 : index
    %c14_117 = arith.constant 14 : index
    %85 = vector.load %arg2[%c0_114, %c0_115, %c0_116, %c14_117] : memref<1x1x8x270xbf16, #tpu.memory_space<vmem>>, vector<1x1x8x256xbf16>
    %86 = vector.shape_cast %85 : vector<1x1x8x256xbf16> to vector<8x256xbf16>
    %cst_118 = arith.constant dense<0.000000e+00> : vector<16x256xf32>
    %87 = tpu.matmul %84, %86, %cst_118 {dimension_numbers = #tpu.dot_dimension_numbers<[1], [0], [0], [1], [0, 0, 1, 1], [], []>} : vector<16x8xbf16>, vector<8x256xbf16>, vector<16x256xf32> -> vector<16x256xf32>
    %88 = arith.addf %82, %87 : vector<16x256xf32>
    %c0_119 = arith.constant 0 : index
    %c0_120 = arith.constant 0 : index
    %c0_121 = arith.constant 0 : index
    %89 = vector.load %arg4[%c0_119, %c0_120, %c0_121] : memref<1x16x1xf32, #tpu.memory_space<vmem>>, vector<1x16x1xf32>
    %90 = vector.shape_cast %89 : vector<1x16x1xf32> to vector<16x1xf32>
    %91 = vector.broadcast %90 : vector<16x1xf32> to vector<16x256xf32>
    %92 = arith.addf %88, %91 : vector<16x256xf32>
    %cst_122 = arith.constant 0.000000e+00 : f32
    %93 = vector.broadcast %cst_122 : f32 to vector<16x256xf32>
    %94 = arith.cmpf oge, %92, %93 : vector<16x256xf32>
    %cst_123 = arith.constant 2.000000e-01 : f32
    %95 = vector.broadcast %cst_123 : f32 to vector<16x256xf32>
    %96 = arith.mulf %95, %92 : vector<16x256xf32>
    %97 = arith.select %94, %92, %96 : vector<16x256xi1>, vector<16x256xf32>
    %c0_124 = arith.constant 0 : index
    %c0_125 = arith.constant 0 : index
    %c0_126 = arith.constant 0 : index
    %c0_127 = arith.constant 0 : index
    %98 = vector.load %arg5[%c0_124, %c0_125, %c0_126, %c0_127] : memref<1x1x16x256xf32, #tpu.memory_space<vmem>>, vector<1x1x16x256xf32>
    %99 = vector.shape_cast %98 : vector<1x1x16x256xf32> to vector<16x256xf32>
    %100 = vector.shape_cast %97 : vector<16x256xf32> to vector<1x1x16x256xf32>
    tpu.vector_store %arg5[%c0_124, %c0_125, %c0_126, %c0_127], %100 {strides = array<i32>} : memref<1x1x16x256xf32, #tpu.memory_space<vmem>>, vector<1x1x16x256xf32>,
    return
  }
  func.func @transform_0(%arg0: i32, %arg1: i32) -> (i32, i32, i32, i32) {
    %c0_i32 = arith.constant 0 : i32
    %c0_i32_0 = arith.constant 0 : i32
    %c0_i32_1 = arith.constant 0 : i32
    return %arg1, %arg0, %c0_i32, %c0_i32_0 : i32, i32, i32, i32
  }
  func.func @transform_1(%arg0: i32, %arg1: i32) -> (i32, i32, i32, i32) {
    %c0_i32 = arith.constant 0 : i32
    %c0_i32_0 = arith.constant 0 : i32
    %c0_i32_1 = arith.constant 0 : i32
    %c0_i32_2 = arith.constant 0 : i32
    return %arg0, %c0_i32, %c0_i32_0, %c0_i32_1 : i32, i32, i32, i32
  }
  func.func @transform_2(%arg0: i32, %arg1: i32) -> (i32, i32, i32) {
    %c0_i32 = arith.constant 0 : i32
    %c0_i32_0 = arith.constant 0 : i32
    %c0_i32_1 = arith.constant 0 : i32
    return %arg0, %c0_i32, %c0_i32_0 : i32, i32, i32
  }
  func.func @transform_3(%arg0: i32, %arg1: i32) -> (i32, i32, i32, i32) {
    %c0_i32 = arith.constant 0 : i32
    %c0_i32_0 = arith.constant 0 : i32
    %c0_i32_1 = arith.constant 0 : i32
    return %arg1, %arg0, %c0_i32, %c0_i32_0 : i32, i32, i32, i32
  }
}

</mosaic_0001>

<llo_original>
// kernel: forward.16
$region0: #{forward.16}
  #allocation0 [shape = 'u32[]', space=smem, size = 0x4, offset = 0x4, fixed_abs, tag = 'smem constant byte address 0x4 - core index']
  #allocation1 [shape = 'u32[144,128]{1,0:T(1,128)}', space=vmem, size = 0x12000, scoped, tag = 'internal scratch']
  %s0 = inlined_call_operand.vmem [shape: bf16[2,1,8,129], index: 0, kind: input, shape index: {}]
  %s1 = inlined_call_operand.vmem [shape: bf16[1,2,8,8], index: 1, kind: input, shape index: {}]
  %s2 = inlined_call_operand.vmem [shape: f32[1,8,1], index: 2, kind: input, shape index: {}]
  %s3 = inlined_call_operand.vmem [shape: f32[2,1,8,128], index: 3, kind: output, shape index: {}]
  %s4 = sld [smem:[#allocation0]]
  $region45: #{forward.16} parent=0
    _
  %s6 = ssub.s32 1, %s4
  %s7 = scalar_select 0, %s6, %s4
  loop: start=0, step=1, limit=4
  $region2: #{forward.16} parent=0 // loop_pre_header
    _
  $region3: #{forward.16} parent=0 // loop_header
    %s9 = sphi 0, %s13
    %p10 = scmp.ge.s32.totalorder %s9, 4
    %s16 = sphi 0, %s28
    %s17 = sphi 0, %s24
    %s18 = sphi 0, %s16
    %s19 = sphi 0, %s17
    %s20 = sphi 0, %s18
    %s21 = sphi 0, %s19
    %s33 = sphi 0, %s35
    %s36 = sphi 0, %s33
    %s37 = sphi 0, %s36
    %s53 = sphi 0, %s37
    %s59 = sphi 0, %s61
    %s62 = sphi 0, %s59
    %s63 = sphi 0, %s62
    %s79 = sphi 0, %s63
    %s85 = sphi 0, %s87
    %s88 = sphi 0, %s85
    %s89 = sphi 0, %s88
    %s105 = sphi 0, %s89
    %s113 = sphi 0, %s115
    %s116 = sphi 0, %s113
    %s117 = sphi 0, %s116
    %s133 = sphi 0, %s117
  $region4: #{forward.16} parent=0 // loop_header_branch
    %12 = sbr.rel (%p10) target = $region8
  $region5: #{forward.16} parent=0 // loop_body
    %s14 = ssub.s32 %s9, 1
    %s15 = ssub.s32 %s9, 2
    %s22 = sadd.s32 1, %s17
    %p23 = scmp.ge.s32.totalorder %s22, 2
    %s24 = scalar_select %p23, 0, %s22
    %s25 = sadd.s32 1, %s16
    %s26 = scalar_select %p23, %s25, %s16
    %p27 = scmp.ge.s32.totalorder %s26, 1
    %s28 = scalar_select %p27, 0, %s26
    %s29 = ssub.s32 %s17, %s24
    %s30 = ssub.s32 %s16, %s28
    %s31 = sor.u32 %s29, %s30
    %p32 = scmp.eq.s32.totalorder %s31, 0
    %s34 = sadd.s32 %s33, 1
    %s35 = scalar_select %p32, %s33, %s34
    %p38 = pneg %p32
    %p39 = scmp.eq.s32.totalorder %s9, 1
    %p40 = por %p38, %p39
    %p41 = scmp.ne.s32.totalorder %s33, %s36
    %p42 = scmp.eq.s32.totalorder %s9, 0
    %p43 = por %p41, %p42
    %p44 = scmp.ne.s32.totalorder %s33, %s36
    %p45 = scmp.eq.s32.totalorder %s14, 1
    %p46 = por %p44, %p45
    %p47 = scmp.ne.s32.totalorder %s36, %s37
    %p48 = scmp.eq.s32.totalorder %s14, 0
    %p49 = por %p47, %p48
    %p50 = scmp.ne.s32.totalorder %s36, %s37
    %p51 = scmp.eq.s32.totalorder %s15, 1
    %p52 = por %p50, %p51
    %p54 = scmp.ne.s32.totalorder %s37, %s53
    %p55 = scmp.eq.s32.totalorder %s15, 0
    %p56 = por %p54, %p55
    %s57 = ssub.s32 %s16, %s28
    %p58 = scmp.eq.s32.totalorder %s57, 0
    %s60 = sadd.s32 %s59, 1
    %s61 = scalar_select %p58, %s59, %s60
    %p64 = pneg %p58
    %p65 = scmp.eq.s32.totalorder %s9, 1
    %p66 = por %p64, %p65
    %p67 = scmp.ne.s32.totalorder %s59, %s62
    %p68 = scmp.eq.s32.totalorder %s9, 0
    %p69 = por %p67, %p68
    %p70 = scmp.ne.s32.totalorder %s59, %s62
    %p71 = scmp.eq.s32.totalorder %s14, 1
    %p72 = por %p70, %p71
    %p73 = scmp.ne.s32.totalorder %s62, %s63
    %p74 = scmp.eq.s32.totalorder %s14, 0
    %p75 = por %p73, %p74
    %p76 = scmp.ne.s32.totalorder %s62, %s63
    %p77 = scmp.eq.s32.totalorder %s15, 1
    %p78 = por %p76, %p77
    %p80 = scmp.ne.s32.totalorder %s63, %s79
    %p81 = scmp.eq.s32.totalorder %s15, 0
    %p82 = por %p80, %p81
    %s83 = ssub.s32 %s16, %s28
    %p84 = scmp.eq.s32.totalorder %s83, 0
    %s86 = sadd.s32 %s85, 1
    %s87 = scalar_select %p84, %s85, %s86
    %p90 = pneg %p84
    %p91 = scmp.eq.s32.totalorder %s9, 1
    %p92 = por %p90, %p91
    %p93 = scmp.ne.s32.totalorder %s85, %s88
    %p94 = scmp.eq.s32.totalorder %s9, 0
    %p95 = por %p93, %p94
    %p96 = scmp.ne.s32.totalorder %s85, %s88
    %p97 = scmp.eq.s32.totalorder %s14, 1
    %p98 = por %p96, %p97
    %p99 = scmp.ne.s32.totalorder %s88, %s89
    %p100 = scmp.eq.s32.totalorder %s14, 0
    %p101 = por %p99, %p100
    %p102 = scmp.ne.s32.totalorder %s88, %s89
    %p103 = scmp.eq.s32.totalorder %s15, 1
    %p104 = por %p102, %p103
    %p106 = scmp.ne.s32.totalorder %s89, %s105
    %p107 = scmp.eq.s32.totalorder %s15, 0
    %p108 = por %p106, %p107
    %s109 = ssub.s32 %s17, %s24
    %s110 = ssub.s32 %s16, %s28
    %s111 = sor.u32 %s109, %s110
    %p112 = scmp.eq.s32.totalorder %s111, 0
    %s114 = sadd.s32 %s113, 1
    %s115 = scalar_select %p112, %s113, %s114
    %p118 = pneg %p112
    %p119 = scmp.eq.s32.totalorder %s9, 1
    %p120 = por %p118, %p119
    %p121 = scmp.ne.s32.totalorder %s113, %s116
    %p122 = scmp.eq.s32.totalorder %s9, 0
    %p123 = por %p121, %p122
    %p124 = scmp.ne.s32.totalorder %s113, %s116
    %p125 = scmp.eq.s32.totalorder %s14, 1
    %p126 = por %p124, %p125
    %p127 = scmp.ne.s32.totalorder %s116, %s117
    %p128 = scmp.eq.s32.totalorder %s14, 0
    %p129 = por %p127, %p128
    %p130 = scmp.ne.s32.totalorder %s116, %s117
    %p131 = scmp.eq.s32.totalorder %s15, 1
    %p132 = por %p130, %p131
    %p134 = scmp.ne.s32.totalorder %s117, %s133
    %p135 = scmp.eq.s32.totalorder %s15, 0
    %p136 = por %p134, %p135
    %p137 = scmp.le.s32.totalorder 1, %s9
    %p138 = scmp.lt.s32.totalorder %s9, 3
    %p139 = pnand %p137, %p138
    %p140 = pneg %p139
    // Predicated region
    $region9: #{forward.16} parent=5 // pred_check
      _
    $region10: #{forward.16} parent=5 // pred_check_branch
      %142 = sbr.rel (%p139) target = $region12
    $region11: #{forward.16} parent=5 // pred_region
      %s143 = ssub.s32 %s9, 1
      // Predicated region
      $region13: #{forward.16} parent=11 // pred_check
        %p144 = pneg %p75
      $region14: #{forward.16} parent=11 // pred_check_branch
        %146 = sbr.rel (%p144) target = $region16
      $region15: #{forward.16} parent=11 // pred_region
        %p147 = scmp.lt.s32.totalorder %s18, 0
        %s148 = scalar_select %p147, %s18, 0
        %s149 = smul.addr %s148, 2
        %s150 = smul.addr %s149, 4
        %s151 = scalar_lea.vmem %s1, %s150
      $region16: #{forward.16} parent=11 // pred_fallthru
        _
      // Predicated region
      $region17: #{forward.16} parent=11 // pred_check
        %p152 = pneg %p101
      $region18: #{forward.16} parent=11 // pred_check_branch
        %154 = sbr.rel (%p152) target = $region20
      $region19: #{forward.16} parent=11 // pred_region
        %p155 = scmp.lt.s32.totalorder %s18, 0
        %s156 = scalar_select %p155, %s18, 0
        %s157 = smul.addr %s156, 8
        %s158 = scalar_lea.vmem %s2, %s157
      $region20: #{forward.16} parent=11 // pred_fallthru
        _
    $region12: #{forward.16} parent=5 // pred_fallthru
      _
    %p159 = scmp.lt.s32.totalorder %s9, 2
    // Predicated region
    $region21: #{forward.16} parent=5 // pred_check
      %p160 = pneg %p159
    $region22: #{forward.16} parent=5 // pred_check_branch
      %162 = sbr.rel (%p160) target = $region24
    $region23: #{forward.16} parent=5 // pred_region
      // Predicated region
      $region25: #{forward.16} parent=23 // pred_check
        %p163 = pneg %p43
      $region26: #{forward.16} parent=23 // pred_check_branch
        %165 = sbr.rel (%p163) target = $region28
      $region27: #{forward.16} parent=23 // pred_region
        %p166 = scmp.lt.s32.totalorder %s17, 1
        %s167 = scalar_select %p166, %s17, 1
        %p168 = scmp.lt.s32.totalorder %s16, 0
        %s169 = scalar_select %p168, %s16, 0
        %s170 = smul.addr %s169, 2
        %s171 = smul.addr %s167, 2
        %s172 = sadd.s32 %s170, %s171
        %s173 = smul.addr %s172, 4
        %s174 = scalar_lea.vmem %s0, %s173
      $region28: #{forward.16} parent=23 // pred_fallthru
        _
    $region24: #{forward.16} parent=5 // pred_fallthru
      _
    %p175 = scmp.le.s32.totalorder 1, %s9
    %p176 = scmp.lt.s32.totalorder %s9, 3
    %p177 = pnand %p175, %p176
    %p178 = pneg %p177
    // Predicated region
    $region29: #{forward.16} parent=5 // pred_check
      _
    $region30: #{forward.16} parent=5 // pred_check_branch
      %180 = sbr.rel (%p177) target = $region32
    $region31: #{forward.16} parent=5 // pred_region
      %s181 = ssub.s32 %s9, 1
      %p182 = scmp.lt.s32.totalorder %s19, 1
      %s183 = scalar_select %p182, %s19, 1
      %p184 = scmp.lt.s32.totalorder %s18, 0
      %s185 = scalar_select %p184, %s18, 0
      %s186 = smul.addr %s185, 2
      %s187 = smul.addr %s183, 2
      %s188 = sadd.s32 %s186, %s187
      %s189 = smul.addr %s188, 4
      %s190 = scalar_lea.vmem %s0, %s189
      %p191 = pneg %p49
      %p192 = pneg %p46
      %p193 = scmp.lt.s32.totalorder %s18, 0
      %s194 = scalar_select %p193, %s18, 0
      %s195 = smul.addr %s194, 2
      %s196 = smul.addr %s195, 4
      %s197 = scalar_lea.vmem %s1, %s196
      %p198 = pneg %p75
      %p199 = pneg %p72
      %p200 = scmp.lt.s32.totalorder %s18, 0
      %s201 = scalar_select %p200, %s18, 0
      %s202 = smul.addr %s201, 8
      %s203 = scalar_lea.vmem %s2, %s202
      %p204 = pneg %p101
      %p205 = pneg %p98
      %p206 = pneg %p129
      %p207 = pneg %p126
      %p208 = scmp.lt.s32.totalorder %s19, 1
      %s209 = scalar_select %p208, %s19, 1
      %p210 = scmp.lt.s32.totalorder %s18, 0
      %s211 = scalar_select %p210, %s18, 0
      %s212 = sadd.s32 %s211, %s209
      %s213 = smul.addr %s212, 8
      %s214 = scalar_lea.vmem %s3, %s213
      %p215 = scmp.lt.s32.totalorder %s19, 1
      %s216 = scalar_select %p215, %s19, 1
      %p217 = scmp.lt.s32.totalorder %s18, 0
      %s218 = scalar_select %p217, %s18, 0
      %s219 = smul.addr %s218, 2
      %s220 = smul.addr %s216, 2
      %s221 = sadd.s32 %s219, %s220
      %s222 = smul.addr %s221, 4
      %s223 = scalar_lea.vmem %s0, %s222
      %p224 = scmp.lt.s32.totalorder %s18, 0
      %s225 = scalar_select %p224, %s18, 0
      %s226 = smul.addr %s225, 2
      %s227 = smul.addr %s226, 4
      %s228 = scalar_lea.vmem %s1, %s227
      %p229 = scmp.lt.s32.totalorder %s18, 0
      %s230 = scalar_select %p229, %s18, 0
      %s231 = smul.addr %s230, 8
      %s232 = scalar_lea.vmem %s2, %s231
      %p233 = scmp.lt.s32.totalorder %s19, 1
      %s234 = scalar_select %p233, %s19, 1
      %p235 = scmp.lt.s32.totalorder %s18, 0
      %s236 = scalar_select %p235, %s18, 0
      %s237 = sadd.s32 %s236, %s234
      %s238 = smul.addr %s237, 8
      %s239 = scalar_lea.vmem %s3, %s238
      %v241 = vld [vmem:[%s228] sm:$0xf]
      %v242 = vld [vmem:[%s223] sm:$0xf]
      %s243 = scalar_lea.vmem %s228, 4
      %v244 = vld [vmem:[%s243] sm:$0xf]
      %v245 = vld [vmem:[%s223] sm:$0xff]
      %v247 = vunpack.c.l.b16 %v245
      %v248 = vunpack.c.h.b16 %v245
      %v249 = vpack.c.b16 %v247, %v247
      %v250 = vpack.c.b16 %v248, %v248
      %251 = vrot.lane.b32.xlu0 %v249, 127
      %v252 = vpop.permute.xlu0 %251
      %253 = vrot.lane.b32.xlu0 %v250, 127
      %v254 = vpop.permute.xlu0 %253
      %vm255 = vcmask 1039360
      %v256 = vsel %vm255, %v252, %v254
      %vm257 = vcmask 64512
      %v259 = vsel %vm257, %v244, 0
      %vm261 = vcmask 1043456
      %v263 = vsel %vm261, %v256, 0
      %265 = vmatprep.subr.bf16.mxu0 0
      %266 = vmatpush1.bf16.msra.mxu0 %v263
      %267 = vmatprep.subr.bf16.mxu0 0
      %268 = vmatpush1.bf16.msra.mxu0 0
      %269 = vmatprep.subr.bf16.mxu0 0
      %270 = vmatpush1.bf16.msra.mxu0 0
      %271 = vmatprep.subr.bf16.mxu0 0
      %272 = vmatpush1.bf16.msra.mxu0 0
      %273 = vmatprep.subr.bf16.mxu0 0
      %274 = vmatpush1.bf16.msra.mxu0 0
      %275 = vmatprep.subr.bf16.mxu0 0
      %276 = vmatpush1.bf16.msra.mxu0 0
      %277 = vmatprep.subr.bf16.mxu0 0
      %278 = vmatpush1.bf16.msra.mxu0 0
      %279 = vmatprep.subr.bf16.mxu0 0
      %280 = vmatpush1.bf16.msra.mxu0 0
      %281 = vmatprep.subr.bf16.mxu0 0
      %282 = vmatpush1.bf16.msra.mxu0 0
      %283 = vmatprep.subr.bf16.mxu0 0
      %284 = vmatpush1.bf16.msra.mxu0 0
      %285 = vmatprep.subr.bf16.mxu0 0
      %286 = vmatpush1.bf16.msra.mxu0 0
      %287 = vmatprep.subr.bf16.mxu0 0
      %288 = vmatpush1.bf16.msra.mxu0 0
      %289 = vmatprep.subr.bf16.mxu0 0
      %290 = vmatpush1.bf16.msra.mxu0 0
      %291 = vmatprep.subr.bf16.mxu0 0
      %292 = vmatpush1.bf16.msra.mxu0 0
      %293 = vmatprep.subr.bf16.mxu0 0
      %294 = vmatpush1.bf16.msra.mxu0 0
      %295 = vmatprep.subr.bf16.mxu0 0
      %296 = vmatpush1.bf16.msra.mxu0 0
      %297 = vmatprep.mubr.bf16.mxu0 0
      %298 = vmatmul.mubr.bf16.gmra.mrb[0].mxu0 %v259
      %v299 = vpop.f32.mrb[0].mxu0
      %v300 = vadd.f32 0.0, %v299
      %v301 = vpop.f32.mrb[0].mxu0
      %v302 = vpop.f32.mrb[0].mxu0
      %v303 = vpop.f32.mrb[0].mxu0
      %304 = vdwg.mxu0
      %v306 = vsel %vm257, %v241, 0
      %v309 = vsel %vm261, %v242, 0
      %311 = vmatprep.subr.bf16.mxu0 0
      %312 = vmatpush1.bf16.msra.mxu0 %v309
      %313 = vmatprep.subr.bf16.mxu0 0
      %314 = vmatpush1.bf16.msra.mxu0 0
      %315 = vmatprep.subr.bf16.mxu0 0
      %316 = vmatpush1.bf16.msra.mxu0 0
      %317 = vmatprep.subr.bf16.mxu0 0
      %318 = vmatpush1.bf16.msra.mxu0 0
      %319 = vmatprep.subr.bf16.mxu0 0
      %320 = vmatpush1.bf16.msra.mxu0 0
      %321 = vmatprep.subr.bf16.mxu0 0
      %322 = vmatpush1.bf16.msra.mxu0 0
      %323 = vmatprep.subr.bf16.mxu0 0
      %324 = vmatpush1.bf16.msra.mxu0 0
      %325 = vmatprep.subr.bf16.mxu0 0
      %326 = vmatpush1.bf16.msra.mxu0 0
      %327 = vmatprep.subr.bf16.mxu0 0
      %328 = vmatpush1.bf16.msra.mxu0 0
      %329 = vmatprep.subr.bf16.mxu0 0
      %330 = vmatpush1.bf16.msra.mxu0 0
      %331 = vmatprep.subr.bf16.mxu0 0
      %332 = vmatpush1.bf16.msra.mxu0 0
      %333 = vmatprep.subr.bf16.mxu0 0
      %334 = vmatpush1.bf16.msra.mxu0 0
      %335 = vmatprep.subr.bf16.mxu0 0
      %336 = vmatpush1.bf16.msra.mxu0 0
      %337 = vmatprep.subr.bf16.mxu0 0
      %338 = vmatpush1.bf16.msra.mxu0 0
      %339 = vmatprep.subr.bf16.mxu0 0
      %340 = vmatpush1.bf16.msra.mxu0 0
      %341 = vmatprep.subr.bf16.mxu0 0
      %342 = vmatpush1.bf16.msra.mxu0 0
      %343 = vmatprep.mubr.bf16.mxu0 0
      %344 = vmatmul.mubr.bf16.gmra.mrb[0].mxu0 %v306
      %v345 = vpop.f32.mrb[0].mxu0
      %v346 = vadd.f32 %v300, %v345
      %v347 = vpop.f32.mrb[0].mxu0
      %v348 = vpop.f32.mrb[0].mxu0
      %v349 = vpop.f32.mrb[0].mxu0
      %350 = vdwg.mxu0
      %v351 = vld [vmem:[%s232] sm:$0xff]
      %353 = vset.pattern.permute.xlu0 0
      %354 = vperm.xlu0 %353, %v351
      %v355 = vpop.permute.xlu0 %354
      %v357 = vadd.f32 %v346, %v355
      %358 = vst [vmem:[%s239] sm:$0xff] %v357
      %p359 = scmp.lt.s32.totalorder %s19, 1
      %s360 = scalar_select %p359, %s19, 1
      %p361 = scmp.lt.s32.totalorder %s18, 0
      %s362 = scalar_select %p361, %s18, 0
      %s363 = sadd.s32 %s362, %s360
      %s364 = smul.addr %s363, 8
      %s365 = scalar_lea.vmem %s3, %s364
      // Predicated region
      $region33: #{forward.16} parent=31 // pred_check
        %p366 = pneg %p126
      $region34: #{forward.16} parent=31 // pred_check_branch
        %368 = sbr.rel (%p366) target = $region36
      $region35: #{forward.16} parent=31 // pred_region
        _
      $region36: #{forward.16} parent=31 // pred_fallthru
        _
    $region32: #{forward.16} parent=5 // pred_fallthru
      _
    %p369 = scmp.le.s32.totalorder 2, %s9
    // Predicated region
    $region37: #{forward.16} parent=5 // pred_check
      %p370 = pneg %p369
    $region38: #{forward.16} parent=5 // pred_check_branch
      %372 = sbr.rel (%p370) target = $region40
    $region39: #{forward.16} parent=5 // pred_region
      %s373 = ssub.s32 %s9, 2
      // Predicated region
      $region41: #{forward.16} parent=39 // pred_check
        %p374 = pneg %p132
      $region42: #{forward.16} parent=39 // pred_check_branch
        %376 = sbr.rel (%p374) target = $region44
      $region43: #{forward.16} parent=39 // pred_region
        %p377 = scmp.lt.s32.totalorder %s21, 1
        %s378 = scalar_select %p377, %s21, 1
        %p379 = scmp.lt.s32.totalorder %s20, 0
        %s380 = scalar_select %p379, %s20, 0
        %s381 = sadd.s32 %s380, %s378
        %s382 = smul.addr %s381, 8
        %s383 = scalar_lea.vmem %s3, %s382
      $region44: #{forward.16} parent=39 // pred_fallthru
        _
    $region40: #{forward.16} parent=5 // pred_fallthru
      _
  $region6: #{forward.16} parent=0 // loop_footer
    %s13 = sadd.s32 1, %s9
  $region7: #{forward.16} parent=0 // loop_footer_branch
    %8 = sbr.rel target = $region3
  $region8: #{forward.16} parent=0 // loop_exit
    _

// kernel: forward.17
$region0: #{forward.17}
  #allocation0 [shape = 'u32[]', space=smem, size = 0x4, offset = 0x4, fixed_abs, tag = 'smem constant byte address 0x4 - core index']
  #allocation1 [shape = 'u32[144,128]{1,0:T(1,128)}', space=vmem, size = 0x12000, scoped, tag = 'internal scratch']
  %s0 = inlined_call_operand.vmem [shape: bf16[2,1,8,142], index: 0, kind: input, shape index: {}]
  %s1 = inlined_call_operand.vmem [shape: bf16[1,15,16,8], index: 1, kind: input, shape index: {}]
  %s2 = inlined_call_operand.vmem [shape: f32[1,16,1], index: 2, kind: input, shape index: {}]
  %s3 = inlined_call_operand.vmem [shape: f32[2,1,16,128], index: 3, kind: output, shape index: {}]
  %s4 = sld [smem:[#allocation0]]
  $region45: #{forward.17} parent=0
    _
  %s6 = ssub.s32 1, %s4
  %s7 = scalar_select 0, %s6, %s4
  loop: start=0, step=1, limit=4
  $region2: #{forward.17} parent=0 // loop_pre_header
    _
  $region3: #{forward.17} parent=0 // loop_header
    %s9 = sphi 0, %s13
    %p10 = scmp.ge.s32.totalorder %s9, 4
    %s16 = sphi 0, %s28
    %s17 = sphi 0, %s24
    %s18 = sphi 0, %s16
    %s19 = sphi 0, %s17
    %s20 = sphi 0, %s18
    %s21 = sphi 0, %s19
    %s33 = sphi 0, %s35
    %s36 = sphi 0, %s33
    %s37 = sphi 0, %s36
    %s53 = sphi 0, %s37
    %s59 = sphi 0, %s61
    %s62 = sphi 0, %s59
    %s63 = sphi 0, %s62
    %s79 = sphi 0, %s63
    %s85 = sphi 0, %s87
    %s88 = sphi 0, %s85
    %s89 = sphi 0, %s88
    %s105 = sphi 0, %s89
    %s113 = sphi 0, %s115
    %s116 = sphi 0, %s113
    %s117 = sphi 0, %s116
    %s133 = sphi 0, %s117
  $region4: #{forward.17} parent=0 // loop_header_branch
    %12 = sbr.rel (%p10) target = $region8
  $region5: #{forward.17} parent=0 // loop_body
    %s14 = ssub.s32 %s9, 1
    %s15 = ssub.s32 %s9, 2
    %s22 = sadd.s32 1, %s17
    %p23 = scmp.ge.s32.totalorder %s22, 2
    %s24 = scalar_select %p23, 0, %s22
    %s25 = sadd.s32 1, %s16
    %s26 = scalar_select %p23, %s25, %s16
    %p27 = scmp.ge.s32.totalorder %s26, 1
    %s28 = scalar_select %p27, 0, %s26
    %s29 = ssub.s32 %s17, %s24
    %s30 = ssub.s32 %s16, %s28
    %s31 = sor.u32 %s29, %s30
    %p32 = scmp.eq.s32.totalorder %s31, 0
    %s34 = sadd.s32 %s33, 1
    %s35 = scalar_select %p32, %s33, %s34
    %p38 = pneg %p32
    %p39 = scmp.eq.s32.totalorder %s9, 1
    %p40 = por %p38, %p39
    %p41 = scmp.ne.s32.totalorder %s33, %s36
    %p42 = scmp.eq.s32.totalorder %s9, 0
    %p43 = por %p41, %p42
    %p44 = scmp.ne.s32.totalorder %s33, %s36
    %p45 = scmp.eq.s32.totalorder %s14, 1
    %p46 = por %p44, %p45
    %p47 = scmp.ne.s32.totalorder %s36, %s37
    %p48 = scmp.eq.s32.totalorder %s14, 0
    %p49 = por %p47, %p48
    %p50 = scmp.ne.s32.totalorder %s36, %s37
    %p51 = scmp.eq.s32.totalorder %s15, 1
    %p52 = por %p50, %p51
    %p54 = scmp.ne.s32.totalorder %s37, %s53
    %p55 = scmp.eq.s32.totalorder %s15, 0
    %p56 = por %p54, %p55
    %s57 = ssub.s32 %s16, %s28
    %p58 = scmp.eq.s32.totalorder %s57, 0
    %s60 = sadd.s32 %s59, 1
    %s61 = scalar_select %p58, %s59, %s60
    %p64 = pneg %p58
    %p65 = scmp.eq.s32.totalorder %s9, 1
    %p66 = por %p64, %p65
    %p67 = scmp.ne.s32.totalorder %s59, %s62
    %p68 = scmp.eq.s32.totalorder %s9, 0
    %p69 = por %p67, %p68
    %p70 = scmp.ne.s32.totalorder %s59, %s62
    %p71 = scmp.eq.s32.totalorder %s14, 1
    %p72 = por %p70, %p71
    %p73 = scmp.ne.s32.totalorder %s62, %s63
    %p74 = scmp.eq.s32.totalorder %s14, 0
    %p75 = por %p73, %p74
    %p76 = scmp.ne.s32.totalorder %s62, %s63
    %p77 = scmp.eq.s32.totalorder %s15, 1
    %p78 = por %p76, %p77
    %p80 = scmp.ne.s32.totalorder %s63, %s79
    %p81 = scmp.eq.s32.totalorder %s15, 0
    %p82 = por %p80, %p81
    %s83 = ssub.s32 %s16, %s28
    %p84 = scmp.eq.s32.totalorder %s83, 0
    %s86 = sadd.s32 %s85, 1
    %s87 = scalar_select %p84, %s85, %s86
    %p90 = pneg %p84
    %p91 = scmp.eq.s32.totalorder %s9, 1
    %p92 = por %p90, %p91
    %p93 = scmp.ne.s32.totalorder %s85, %s88
    %p94 = scmp.eq.s32.totalorder %s9, 0
    %p95 = por %p93, %p94
    %p96 = scmp.ne.s32.totalorder %s85, %s88
    %p97 = scmp.eq.s32.totalorder %s14, 1
    %p98 = por %p96, %p97
    %p99 = scmp.ne.s32.totalorder %s88, %s89
    %p100 = scmp.eq.s32.totalorder %s14, 0
    %p101 = por %p99, %p100
    %p102 = scmp.ne.s32.totalorder %s88, %s89
    %p103 = scmp.eq.s32.totalorder %s15, 1
    %p104 = por %p102, %p103
    %p106 = scmp.ne.s32.totalorder %s89, %s105
    %p107 = scmp.eq.s32.totalorder %s15, 0
    %p108 = por %p106, %p107
    %s109 = ssub.s32 %s17, %s24
    %s110 = ssub.s32 %s16, %s28
    %s111 = sor.u32 %s109, %s110
    %p112 = scmp.eq.s32.totalorder %s111, 0
    %s114 = sadd.s32 %s113, 1
    %s115 = scalar_select %p112, %s113, %s114
    %p118 = pneg %p112
    %p119 = scmp.eq.s32.totalorder %s9, 1
    %p120 = por %p118, %p119
    %p121 = scmp.ne.s32.totalorder %s113, %s116
    %p122 = scmp.eq.s32.totalorder %s9, 0
    %p123 = por %p121, %p122
    %p124 = scmp.ne.s32.totalorder %s113, %s116
    %p125 = scmp.eq.s32.totalorder %s14, 1
    %p126 = por %p124, %p125
    %p127 = scmp.ne.s32.totalorder %s116, %s117
    %p128 = scmp.eq.s32.totalorder %s14, 0
    %p129 = por %p127, %p128
    %p130 = scmp.ne.s32.totalorder %s116, %s117
    %p131 = scmp.eq.s32.totalorder %s15, 1
    %p132 = por %p130, %p131
    %p134 = scmp.ne.s32.totalorder %s117, %s133
    %p135 = scmp.eq.s32.totalorder %s15, 0
    %p136 = por %p134, %p135
    %p137 = scmp.le.s32.totalorder 1, %s9
    %p138 = scmp.lt.s32.totalorder %s9, 3
    %p139 = pnand %p137, %p138
    %p140 = pneg %p139
    // Predicated region
    $region9: #{forward.17} parent=5 // pred_check
      _
    $region10: #{forward.17} parent=5 // pred_check_branch
      %142 = sbr.rel (%p139) target = $region12
    $region11: #{forward.17} parent=5 // pred_region
      %s143 = ssub.s32 %s9, 1
      // Predicated region
      $region13: #{forward.17} parent=11 // pred_check
        %p144 = pneg %p75
      $region14: #{forward.17} parent=11 // pred_check_branch
        %146 = sbr.rel (%p144) target = $region16
      $region15: #{forward.17} parent=11 // pred_region
        %p147 = scmp.lt.s32.totalorder %s18, 0
        %s148 = scalar_select %p147, %s18, 0
        %s149 = smul.addr %s148, 30
        %s150 = smul.addr %s149, 4
        %s151 = scalar_lea.vmem %s1, %s150
      $region16: #{forward.17} parent=11 // pred_fallthru
        _
      // Predicated region
      $region17: #{forward.17} parent=11 // pred_check
        %p152 = pneg %p101
      $region18: #{forward.17} parent=11 // pred_check_branch
        %154 = sbr.rel (%p152) target = $region20
      $region19: #{forward.17} parent=11 // pred_region
        %p155 = scmp.lt.s32.totalorder %s18, 0
        %s156 = scalar_select %p155, %s18, 0
        %s157 = smul.addr %s156, 2
        %s158 = smul.addr %s157, 8
        %s159 = scalar_lea.vmem %s2, %s158
      $region20: #{forward.17} parent=11 // pred_fallthru
        _
    $region12: #{forward.17} parent=5 // pred_fallthru
      _
    %p160 = scmp.lt.s32.totalorder %s9, 2
    // Predicated region
    $region21: #{forward.17} parent=5 // pred_check
      %p161 = pneg %p160
    $region22: #{forward.17} parent=5 // pred_check_branch
      %163 = sbr.rel (%p161) target = $region24
    $region23: #{forward.17} parent=5 // pred_region
      // Predicated region
      $region25: #{forward.17} parent=23 // pred_check
        %p164 = pneg %p43
      $region26: #{forward.17} parent=23 // pred_check_branch
        %166 = sbr.rel (%p164) target = $region28
      $region27: #{forward.17} parent=23 // pred_region
        %p167 = scmp.lt.s32.totalorder %s17, 1
        %s168 = scalar_select %p167, %s17, 1
        %p169 = scmp.lt.s32.totalorder %s16, 0
        %s170 = scalar_select %p169, %s16, 0
        %s171 = smul.addr %s170, 2
        %s172 = smul.addr %s168, 2
        %s173 = sadd.s32 %s171, %s172
        %s174 = smul.addr %s173, 4
        %s175 = scalar_lea.vmem %s0, %s174
      $region28: #{forward.17} parent=23 // pred_fallthru
        _
    $region24: #{forward.17} parent=5 // pred_fallthru
      _
    %p176 = scmp.le.s32.totalorder 1, %s9
    %p177 = scmp.lt.s32.totalorder %s9, 3
    %p178 = pnand %p176, %p177
    %p179 = pneg %p178
    // Predicated region
    $region29: #{forward.17} parent=5 // pred_check
      _
    $region30: #{forward.17} parent=5 // pred_check_branch
      %181 = sbr.rel (%p178) target = $region32
    $region31: #{forward.17} parent=5 // pred_region
      %s182 = ssub.s32 %s9, 1
      %p183 = scmp.lt.s32.totalorder %s19, 1
      %s184 = scalar_select %p183, %s19, 1
      %p185 = scmp.lt.s32.totalorder %s18, 0
      %s186 = scalar_select %p185, %s18, 0
      %s187 = smul.addr %s186, 2
      %s188 = smul.addr %s184, 2
      %s189 = sadd.s32 %s187, %s188
      %s190 = smul.addr %s189, 4
      %s191 = scalar_lea.vmem %s0, %s190
      %p192 = pneg %p49
      %p193 = pneg %p46
      %p194 = scmp.lt.s32.totalorder %s18, 0
      %s195 = scalar_select %p194, %s18, 0
      %s196 = smul.addr %s195, 30
      %s197 = smul.addr %s196, 4
      %s198 = scalar_lea.vmem %s1, %s197
      %p199 = pneg %p75
      %p200 = pneg %p72
      %p201 = scmp.lt.s32.totalorder %s18, 0
      %s202 = scalar_select %p201, %s18, 0
      %s203 = smul.addr %s202, 2
      %s204 = smul.addr %s203, 8
      %s205 = scalar_lea.vmem %s2, %s204
      %p206 = pneg %p101
      %p207 = pneg %p98
      %p208 = pneg %p129
      %p209 = pneg %p126
      %p210 = scmp.lt.s32.totalorder %s19, 1
      %s211 = scalar_select %p210, %s19, 1
      %p212 = scmp.lt.s32.totalorder %s18, 0
      %s213 = scalar_select %p212, %s18, 0
      %s214 = smul.addr %s213, 2
      %s215 = smul.addr %s211, 2
      %s216 = sadd.s32 %s214, %s215
      %s217 = smul.addr %s216, 8
      %s218 = scalar_lea.vmem %s3, %s217
      %p219 = scmp.lt.s32.totalorder %s19, 1
      %s220 = scalar_select %p219, %s19, 1
      %p221 = scmp.lt.s32.totalorder %s18, 0
      %s222 = scalar_select %p221, %s18, 0
      %s223 = smul.addr %s222, 2
      %s224 = smul.addr %s220, 2
      %s225 = sadd.s32 %s223, %s224
      %s226 = smul.addr %s225, 4
      %s227 = scalar_lea.vmem %s0, %s226
      %p228 = scmp.lt.s32.totalorder %s18, 0
      %s229 = scalar_select %p228, %s18, 0
      %s230 = smul.addr %s229, 30
      %s231 = smul.addr %s230, 4
      %s232 = scalar_lea.vmem %s1, %s231
      %p233 = scmp.lt.s32.totalorder %s18, 0
      %s234 = scalar_select %p233, %s18, 0
      %s235 = smul.addr %s234, 2
      %s236 = smul.addr %s235, 8
      %s237 = scalar_lea.vmem %s2, %s236
      %p238 = scmp.lt.s32.totalorder %s19, 1
      %s239 = scalar_select %p238, %s19, 1
      %p240 = scmp.lt.s32.totalorder %s18, 0
      %s241 = scalar_select %p240, %s18, 0
      %s242 = smul.addr %s241, 2
      %s243 = smul.addr %s239, 2
      %s244 = sadd.s32 %s242, %s243
      %s245 = smul.addr %s244, 8
      %s246 = scalar_lea.vmem %s3, %s245
      %v248 = vld [vmem:[%s232] sm:$0xf]
      %v249 = vld [vmem:[%s232 + $0x4] sm:$0xf]
      %v250 = vld [vmem:[%s227] sm:$0xf]
      %s251 = scalar_lea.vmem %s232, 8
      %v252 = vld [vmem:[%s251] sm:$0xf]
      %v253 = vld [vmem:[%s251 + $0x4] sm:$0xf]
      %v254 = vld [vmem:[%s227] sm:$0xff]
      %v257 = vunpack.c.l.b16 %v252
      %v258 = vunpack.c.l.b16 %v253
      %v259 = vpack.c.b16 %v258, %v257
      %v261 = vunpack.c.l.b16 %v254
      %v262 = vunpack.c.h.b16 %v254
      %v263 = vpack.c.b16 %v261, %v261
      %v264 = vpack.c.b16 %v262, %v262
      %265 = vrot.lane.b32.xlu0 %v263, 127
      %v266 = vpop.permute.xlu0 %265
      %267 = vrot.lane.b32.xlu0 %v264, 127
      %v268 = vpop.permute.xlu0 %267
      %vm269 = vcmask 1039360
      %v270 = vsel %vm269, %v266, %v268
      %vm271 = vcmask 64512
      %v273 = vsel %vm271, %v259, 0
      %vm275 = vcmask 1043456
      %v277 = vsel %vm275, %v270, 0
      %279 = vmatprep.subr.bf16.mxu0 0
      %280 = vmatpush1.bf16.msra.mxu0 %v277
      %281 = vmatprep.subr.bf16.mxu0 0
      %282 = vmatpush1.bf16.msra.mxu0 0
      %283 = vmatprep.subr.bf16.mxu0 0
      %284 = vmatpush1.bf16.msra.mxu0 0
      %285 = vmatprep.subr.bf16.mxu0 0
      %286 = vmatpush1.bf16.msra.mxu0 0
      %287 = vmatprep.subr.bf16.mxu0 0
      %288 = vmatpush1.bf16.msra.mxu0 0
      %289 = vmatprep.subr.bf16.mxu0 0
      %290 = vmatpush1.bf16.msra.mxu0 0
      %291 = vmatprep.subr.bf16.mxu0 0
      %292 = vmatpush1.bf16.msra.mxu0 0
      %293 = vmatprep.subr.bf16.mxu0 0
      %294 = vmatpush1.bf16.msra.mxu0 0
      %295 = vmatprep.subr.bf16.mxu0 0
      %296 = vmatpush1.bf16.msra.mxu0 0
      %297 = vmatprep.subr.bf16.mxu0 0
      %298 = vmatpush1.bf16.msra.mxu0 0
      %299 = vmatprep.subr.bf16.mxu0 0
      %300 = vmatpush1.bf16.msra.mxu0 0
      %301 = vmatprep.subr.bf16.mxu0 0
      %302 = vmatpush1.bf16.msra.mxu0 0
      %303 = vmatprep.subr.bf16.mxu0 0
      %304 = vmatpush1.bf16.msra.mxu0 0
      %305 = vmatprep.subr.bf16.mxu0 0
      %306 = vmatpush1.bf16.msra.mxu0 0
      %307 = vmatprep.subr.bf16.mxu0 0
      %308 = vmatpush1.bf16.msra.mxu0 0
      %309 = vmatprep.subr.bf16.mxu0 0
      %310 = vmatpush1.bf16.msra.mxu0 0
      %311 = vmatprep.mubr.bf16.mxu0 0
      %312 = vmatmul.mubr.bf16.gmra.mrb[0].mxu0 %v273
      %v313 = vpop.f32.mrb[0].mxu0
      %v314 = vadd.f32 0.0, %v313
      %v315 = vpop.f32.mrb[0].mxu0
      %v316 = vpop.f32.mrb[0].mxu0
      %v317 = vadd.f32 0.0, %v316
      %v318 = vpop.f32.mrb[0].mxu0
      %319 = vdwg.mxu0
      %v322 = vunpack.c.l.b16 %v248
      %v323 = vunpack.c.l.b16 %v249
      %v324 = vpack.c.b16 %v323, %v322
      %v326 = vsel %vm271, %v324, 0
      %v329 = vsel %vm275, %v250, 0
      %331 = vmatprep.subr.bf16.mxu0 0
      %332 = vmatpush1.bf16.msra.mxu0 %v329
      %333 = vmatprep.subr.bf16.mxu0 0
      %334 = vmatpush1.bf16.msra.mxu0 0
      %335 = vmatprep.subr.bf16.mxu0 0
      %336 = vmatpush1.bf16.msra.mxu0 0
      %337 = vmatprep.subr.bf16.mxu0 0
      %338 = vmatpush1.bf16.msra.mxu0 0
      %339 = vmatprep.subr.bf16.mxu0 0
      %340 = vmatpush1.bf16.msra.mxu0 0
      %341 = vmatprep.subr.bf16.mxu0 0
      %342 = vmatpush1.bf16.msra.mxu0 0
      %343 = vmatprep.subr.bf16.mxu0 0
      %344 = vmatpush1.bf16.msra.mxu0 0
      %345 = vmatprep.subr.bf16.mxu0 0
      %346 = vmatpush1.bf16.msra.mxu0 0
      %347 = vmatprep.subr.bf16.mxu0 0
      %348 = vmatpush1.bf16.msra.mxu0 0
      %349 = vmatprep.subr.bf16.mxu0 0
      %350 = vmatpush1.bf16.msra.mxu0 0
      %351 = vmatprep.subr.bf16.mxu0 0
      %352 = vmatpush1.bf16.msra.mxu0 0
      %353 = vmatprep.subr.bf16.mxu0 0
      %354 = vmatpush1.bf16.msra.mxu0 0
      %355 = vmatprep.subr.bf16.mxu0 0
      %356 = vmatpush1.bf16.msra.mxu0 0
      %357 = vmatprep.subr.bf16.mxu0 0
      %358 = vmatpush1.bf16.msra.mxu0 0
      %359 = vmatprep.subr.bf16.mxu0 0
      %360 = vmatpush1.bf16.msra.mxu0 0
      %361 = vmatprep.subr.bf16.mxu0 0
      %362 = vmatpush1.bf16.msra.mxu0 0
      %363 = vmatprep.mubr.bf16.mxu0 0
      %364 = vmatmul.mubr.bf16.gmra.mrb[0].mxu0 %v326
      %v365 = vpop.f32.mrb[0].mxu0
      %v366 = vadd.f32 %v314, %v365
      %v367 = vpop.f32.mrb[0].mxu0
      %v368 = vpop.f32.mrb[0].mxu0
      %v369 = vadd.f32 %v317, %v368
      %v370 = vpop.f32.mrb[0].mxu0
      %371 = vdwg.mxu0
      %s372 = scalar_lea.vmem %s232, 16
      %v373 = vld [vmem:[%s372] sm:$0xf]
      %v374 = vld [vmem:[%s372 + $0x4] sm:$0xf]
      %v377 = vunpack.c.l.b16 %v373
      %v378 = vunpack.c.l.b16 %v374
      %v379 = vpack.c.b16 %v378, %v377
      %380 = vrot.lane.b32.xlu0 %v263, 126
      %v381 = vpop.permute.xlu0 %380
      %382 = vrot.lane.b32.xlu0 %v264, 126
      %v383 = vpop.permute.xlu0 %382
      %vm384 = vcmask 1031168
      %v385 = vsel %vm384, %v381, %v383
      %v387 = vsel %vm271, %v379, 0
      %v390 = vsel %vm275, %v385, 0
      %392 = vmatprep.subr.bf16.mxu0 0
      %393 = vmatpush1.bf16.msra.mxu0 %v390
      %394 = vmatprep.subr.bf16.mxu0 0
      %395 = vmatpush1.bf16.msra.mxu0 0
      %396 = vmatprep.subr.bf16.mxu0 0
      %397 = vmatpush1.bf16.msra.mxu0 0
      %398 = vmatprep.subr.bf16.mxu0 0
      %399 = vmatpush1.bf16.msra.mxu0 0
      %400 = vmatprep.subr.bf16.mxu0 0
      %401 = vmatpush1.bf16.msra.mxu0 0
      %402 = vmatprep.subr.bf16.mxu0 0
      %403 = vmatpush1.bf16.msra.mxu0 0
      %404 = vmatprep.subr.bf16.mxu0 0
      %405 = vmatpush1.bf16.msra.mxu0 0
      %406 = vmatprep.subr.bf16.mxu0 0
      %407 = vmatpush1.bf16.msra.mxu0 0
      %408 = vmatprep.subr.bf16.mxu0 0
      %409 = vmatpush1.bf16.msra.mxu0 0
      %410 = vmatprep.subr.bf16.mxu0 0
      %411 = vmatpush1.bf16.msra.mxu0 0
      %412 = vmatprep.subr.bf16.mxu0 0
      %413 = vmatpush1.bf16.msra.mxu0 0
      %414 = vmatprep.subr.bf16.mxu0 0
      %415 = vmatpush1.bf16.msra.mxu0 0
      %416 = vmatprep.subr.bf16.mxu0 0
      %417 = vmatpush1.bf16.msra.mxu0 0
      %418 = vmatprep.subr.bf16.mxu0 0
      %419 = vmatpush1.bf16.msra.mxu0 0
      %420 = vmatprep.subr.bf16.mxu0 0
      %421 = vmatpush1.bf16.msra.mxu0 0
      %422 = vmatprep.subr.bf16.mxu0 0
      %423 = vmatpush1.bf16.msra.mxu0 0
      %424 = vmatprep.mubr.bf16.mxu0 0
      %425 = vmatmul.mubr.bf16.gmra.mrb[0].mxu0 %v387
      %v426 = vpop.f32.mrb[0].mxu0
      %v427 = vadd.f32 0.0, %v426
      %v428 = vpop.f32.mrb[0].mxu0
      %v429 = vpop.f32.mrb[0].mxu0
      %v430 = vadd.f32 0.0, %v429
      %v431 = vpop.f32.mrb[0].mxu0
      %432 = vdwg.mxu0
      %v433 = vadd.f32 %v366, %v427
      %v434 = vadd.f32 %v369, %v430
      %s435 = scalar_lea.vmem %s232, 24
      %v436 = vld [vmem:[%s435] sm:$0xf]
      %v437 = vld [vmem:[%s435 + $0x4] sm:$0xf]
      %v440 = vunpack.c.l.b16 %v436
      %v441 = vunpack.c.l.b16 %v437
      %v442 = vpack.c.b16 %v441, %v440
      %443 = vrot.lane.b32.xlu0 %v263, 125
      %v444 = vpop.permute.xlu0 %443
      %445 = vrot.lane.b32.xlu0 %v264, 125
      %v446 = vpop.permute.xlu0 %445
      %vm447 = vcmask 1022976
      %v448 = vsel %vm447, %v444, %v446
      %v450 = vsel %vm271, %v442, 0
      %v453 = vsel %vm275, %v448, 0
      %455 = vmatprep.subr.bf16.mxu0 0
      %456 = vmatpush1.bf16.msra.mxu0 %v453
      %457 = vmatprep.subr.bf16.mxu0 0
      %458 = vmatpush1.bf16.msra.mxu0 0
      %459 = vmatprep.subr.bf16.mxu0 0
      %460 = vmatpush1.bf16.msra.mxu0 0
      %461 = vmatprep.subr.bf16.mxu0 0
      %462 = vmatpush1.bf16.msra.mxu0 0
      %463 = vmatprep.subr.bf16.mxu0 0
      %464 = vmatpush1.bf16.msra.mxu0 0
      %465 = vmatprep.subr.bf16.mxu0 0
      %466 = vmatpush1.bf16.msra.mxu0 0
      %467 = vmatprep.subr.bf16.mxu0 0
      %468 = vmatpush1.bf16.msra.mxu0 0
      %469 = vmatprep.subr.bf16.mxu0 0
      %470 = vmatpush1.bf16.msra.mxu0 0
      %471 = vmatprep.subr.bf16.mxu0 0
      %472 = vmatpush1.bf16.msra.mxu0 0
      %473 = vmatprep.subr.bf16.mxu0 0
      %474 = vmatpush1.bf16.msra.mxu0 0
      %475 = vmatprep.subr.bf16.mxu0 0
      %476 = vmatpush1.bf16.msra.mxu0 0
      %477 = vmatprep.subr.bf16.mxu0 0
      %478 = vmatpush1.bf16.msra.mxu0 0
      %479 = vmatprep.subr.bf16.mxu0 0
      %480 = vmatpush1.bf16.msra.mxu0 0
      %481 = vmatprep.subr.bf16.mxu0 0
      %482 = vmatpush1.bf16.msra.mxu0 0
      %483 = vmatprep.subr.bf16.mxu0 0
      %484 = vmatpush1.bf16.msra.mxu0 0
      %485 = vmatprep.subr.bf16.mxu0 0
      %486 = vmatpush1.bf16.msra.mxu0 0
      %487 = vmatprep.mubr.bf16.mxu0 0
      %488 = vmatmul.mubr.bf16.gmra.mrb[0].mxu0 %v450
      %v489 = vpop.f32.mrb[0].mxu0
      %v490 = vadd.f32 0.0, %v489
      %v491 = vpop.f32.mrb[0].mxu0
      %v492 = vpop.f32.mrb[0].mxu0
      %v493 = vadd.f32 0.0, %v492
      %v494 = vpop.f32.mrb[0].mxu0
      %495 = vdwg.mxu0
      %v496 = vadd.f32 %v433, %v490
      %v497 = vadd.f32 %v434, %v493
      %s498 = scalar_lea.vmem %s232, 32
      %v499 = vld [vmem:[%s498] sm:$0xf]
      %v500 = vld [vmem:[%s498 + $0x4] sm:$0xf]
      %v503 = vunpack.c.l.b16 %v499
      %v504 = vunpack.c.l.b16 %v500
      %v505 = vpack.c.b16 %v504, %v503
      %506 = vrot.lane.b32.xlu0 %v263, 124
      %v507 = vpop.permute.xlu0 %506
      %508 = vrot.lane.b32.xlu0 %v264, 124
      %v509 = vpop.permute.xlu0 %508
      %vm510 = vcmask 1014784
      %v511 = vsel %vm510, %v507, %v509
      %v513 = vsel %vm271, %v505, 0
      %v516 = vsel %vm275, %v511, 0
      %518 = vmatprep.subr.bf16.mxu0 0
      %519 = vmatpush1.bf16.msra.mxu0 %v516
      %520 = vmatprep.subr.bf16.mxu0 0
      %521 = vmatpush1.bf16.msra.mxu0 0
      %522 = vmatprep.subr.bf16.mxu0 0
      %523 = vmatpush1.bf16.msra.mxu0 0
      %524 = vmatprep.subr.bf16.mxu0 0
      %525 = vmatpush1.bf16.msra.mxu0 0
      %526 = vmatprep.subr.bf16.mxu0 0
      %527 = vmatpush1.bf16.msra.mxu0 0
      %528 = vmatprep.subr.bf16.mxu0 0
      %529 = vmatpush1.bf16.msra.mxu0 0
      %530 = vmatprep.subr.bf16.mxu0 0
      %531 = vmatpush1.bf16.msra.mxu0 0
      %532 = vmatprep.subr.bf16.mxu0 0
      %533 = vmatpush1.bf16.msra.mxu0 0
      %534 = vmatprep.subr.bf16.mxu0 0
      %535 = vmatpush1.bf16.msra.mxu0 0
      %536 = vmatprep.subr.bf16.mxu0 0
      %537 = vmatpush1.bf16.msra.mxu0 0
      %538 = vmatprep.subr.bf16.mxu0 0
      %539 = vmatpush1.bf16.msra.mxu0 0
      %540 = vmatprep.subr.bf16.mxu0 0
      %541 = vmatpush1.bf16.msra.mxu0 0
      %542 = vmatprep.subr.bf16.mxu0 0
      %543 = vmatpush1.bf16.msra.mxu0 0
      %544 = vmatprep.subr.bf16.mxu0 0
      %545 = vmatpush1.bf16.msra.mxu0 0
      %546 = vmatprep.subr.bf16.mxu0 0
      %547 = vmatpush1.bf16.msra.mxu0 0
      %548 = vmatprep.subr.bf16.mxu0 0
      %549 = vmatpush1.bf16.msra.mxu0 0
      %550 = vmatprep.mubr.bf16.mxu0 0
      %551 = vmatmul.mubr.bf16.gmra.mrb[0].mxu0 %v513
      %v552 = vpop.f32.mrb[0].mxu0
      %v553 = vadd.f32 0.0, %v552
      %v554 = vpop.f32.mrb[0].mxu0
      %v555 = vpop.f32.mrb[0].mxu0
      %v556 = vadd.f32 0.0, %v555
      %v557 = vpop.f32.mrb[0].mxu0
      %558 = vdwg.mxu0
      %v559 = vadd.f32 %v496, %v553
      %v560 = vadd.f32 %v497, %v556
      %s561 = scalar_lea.vmem %s232, 40
      %v562 = vld [vmem:[%s561] sm:$0xf]
      %v563 = vld [vmem:[%s561 + $0x4] sm:$0xf]
      %v566 = vunpack.c.l.b16 %v562
      %v567 = vunpack.c.l.b16 %v563
      %v568 = vpack.c.b16 %v567, %v566
      %569 = vrot.lane.b32.xlu0 %v263, 123
      %v570 = vpop.permute.xlu0 %569
      %571 = vrot.lane.b32.xlu0 %v264, 123
      %v572 = vpop.permute.xlu0 %571
      %vm573 = vcmask 1006592
      %v574 = vsel %vm573, %v570, %v572
      %v576 = vsel %vm271, %v568, 0
      %v579 = vsel %vm275, %v574, 0
      %581 = vmatprep.subr.bf16.mxu0 0
      %582 = vmatpush1.bf16.msra.mxu0 %v579
      %583 = vmatprep.subr.bf16.mxu0 0
      %584 = vmatpush1.bf16.msra.mxu0 0
      %585 = vmatprep.subr.bf16.mxu0 0
      %586 = vmatpush1.bf16.msra.mxu0 0
      %587 = vmatprep.subr.bf16.mxu0 0
      %588 = vmatpush1.bf16.msra.mxu0 0
      %589 = vmatprep.subr.bf16.mxu0 0
      %590 = vmatpush1.bf16.msra.mxu0 0
      %591 = vmatprep.subr.bf16.mxu0 0
      %592 = vmatpush1.bf16.msra.mxu0 0
      %593 = vmatprep.subr.bf16.mxu0 0
      %594 = vmatpush1.bf16.msra.mxu0 0
      %595 = vmatprep.subr.bf16.mxu0 0
      %596 = vmatpush1.bf16.msra.mxu0 0
      %597 = vmatprep.subr.bf16.mxu0 0
      %598 = vmatpush1.bf16.msra.mxu0 0
      %599 = vmatprep.subr.bf16.mxu0 0
      %600 = vmatpush1.bf16.msra.mxu0 0
      %601 = vmatprep.subr.bf16.mxu0 0
      %602 = vmatpush1.bf16.msra.mxu0 0
      %603 = vmatprep.subr.bf16.mxu0 0
      %604 = vmatpush1.bf16.msra.mxu0 0
      %605 = vmatprep.subr.bf16.mxu0 0
      %606 = vmatpush1.bf16.msra.mxu0 0
      %607 = vmatprep.subr.bf16.mxu0 0
      %608 = vmatpush1.bf16.msra.mxu0 0
      %609 = vmatprep.subr.bf16.mxu0 0
      %610 = vmatpush1.bf16.msra.mxu0 0
      %611 = vmatprep.subr.bf16.mxu0 0
      %612 = vmatpush1.bf16.msra.mxu0 0
      %613 = vmatprep.mubr.bf16.mxu0 0
      %614 = vmatmul.mubr.bf16.gmra.mrb[0].mxu0 %v576
      %v615 = vpop.f32.mrb[0].mxu0
      %v616 = vadd.f32 0.0, %v615
      %v617 = vpop.f32.mrb[0].mxu0
      %v618 = vpop.f32.mrb[0].mxu0
      %v619 = vadd.f32 0.0, %v618
      %v620 = vpop.f32.mrb[0].mxu0
      %621 = vdwg.mxu0
      %v622 = vadd.f32 %v559, %v616
      %v623 = vadd.f32 %v560, %v619
      %s624 = scalar_lea.vmem %s232, 48
      %v625 = vld [vmem:[%s624] sm:$0xf]
      %v626 = vld [vmem:[%s624 + $0x4] sm:$0xf]
      %v629 = vunpack.c.l.b16 %v625
      %v630 = vunpack.c.l.b16 %v626
      %v631 = vpack.c.b16 %v630, %v629
      %632 = vrot.lane.b32.xlu0 %v263, 122
      %v633 = vpop.permute.xlu0 %632
      %634 = vrot.lane.b32.xlu0 %v264, 122
      %v635 = vpop.permute.xlu0 %634
      %vm636 = vcmask 998400
      %v637 = vsel %vm636, %v633, %v635
      %v639 = vsel %vm271, %v631, 0
      %v642 = vsel %vm275, %v637, 0
      %644 = vmatprep.subr.bf16.mxu0 0
      %645 = vmatpush1.bf16.msra.mxu0 %v642
      %646 = vmatprep.subr.bf16.mxu0 0
      %647 = vmatpush1.bf16.msra.mxu0 0
      %648 = vmatprep.subr.bf16.mxu0 0
      %649 = vmatpush1.bf16.msra.mxu0 0
      %650 = vmatprep.subr.bf16.mxu0 0
      %651 = vmatpush1.bf16.msra.mxu0 0
      %652 = vmatprep.subr.bf16.mxu0 0
      %653 = vmatpush1.bf16.msra.mxu0 0
      %654 = vmatprep.subr.bf16.mxu0 0
      %655 = vmatpush1.bf16.msra.mxu0 0
      %656 = vmatprep.subr.bf16.mxu0 0
      %657 = vmatpush1.bf16.msra.mxu0 0
      %658 = vmatprep.subr.bf16.mxu0 0
      %659 = vmatpush1.bf16.msra.mxu0 0
      %660 = vmatprep.subr.bf16.mxu0 0
      %661 = vmatpush1.bf16.msra.mxu0 0
      %662 = vmatprep.subr.bf16.mxu0 0
      %663 = vmatpush1.bf16.msra.mxu0 0
      %664 = vmatprep.subr.bf16.mxu0 0
      %665 = vmatpush1.bf16.msra.mxu0 0
      %666 = vmatprep.subr.bf16.mxu0 0
      %667 = vmatpush1.bf16.msra.mxu0 0
      %668 = vmatprep.subr.bf16.mxu0 0
      %669 = vmatpush1.bf16.msra.mxu0 0
      %670 = vmatprep.subr.bf16.mxu0 0
      %671 = vmatpush1.bf16.msra.mxu0 0
      %672 = vmatprep.subr.bf16.mxu0 0
      %673 = vmatpush1.bf16.msra.mxu0 0
      %674 = vmatprep.subr.bf16.mxu0 0
      %675 = vmatpush1.bf16.msra.mxu0 0
      %676 = vmatprep.mubr.bf16.mxu0 0
      %677 = vmatmul.mubr.bf16.gmra.mrb[0].mxu0 %v639
      %v678 = vpop.f32.mrb[0].mxu0
      %v679 = vadd.f32 0.0, %v678
      %v680 = vpop.f32.mrb[0].mxu0
      %v681 = vpop.f32.mrb[0].mxu0
      %v682 = vadd.f32 0.0, %v681
      %v683 = vpop.f32.mrb[0].mxu0
      %684 = vdwg.mxu0
      %v685 = vadd.f32 %v622, %v679
      %v686 = vadd.f32 %v623, %v682
      %s687 = scalar_lea.vmem %s232, 56
      %v688 = vld [vmem:[%s687] sm:$0xf]
      %v689 = vld [vmem:[%s687 + $0x4] sm:$0xf]
      %v692 = vunpack.c.l.b16 %v688
      %v693 = vunpack.c.l.b16 %v689
      %v694 = vpack.c.b16 %v693, %v692
      %695 = vrot.lane.b32.xlu0 %v263, 121
      %v696 = vpop.permute.xlu0 %695
      %697 = vrot.lane.b32.xlu0 %v264, 121
      %v698 = vpop.permute.xlu0 %697
      %vm699 = vcmask 990208
      %v700 = vsel %vm699, %v696, %v698
      %v702 = vsel %vm271, %v694, 0
      %v705 = vsel %vm275, %v700, 0
      %707 = vmatprep.subr.bf16.mxu0 0
      %708 = vmatpush1.bf16.msra.mxu0 %v705
      %709 = vmatprep.subr.bf16.mxu0 0
      %710 = vmatpush1.bf16.msra.mxu0 0
      %711 = vmatprep.subr.bf16.mxu0 0
      %712 = vmatpush1.bf16.msra.mxu0 0
      %713 = vmatprep.subr.bf16.mxu0 0
      %714 = vmatpush1.bf16.msra.mxu0 0
      %715 = vmatprep.subr.bf16.mxu0 0
      %716 = vmatpush1.bf16.msra.mxu0 0
      %717 = vmatprep.subr.bf16.mxu0 0
      %718 = vmatpush1.bf16.msra.mxu0 0
      %719 = vmatprep.subr.bf16.mxu0 0
      %720 = vmatpush1.bf16.msra.mxu0 0
      %721 = vmatprep.subr.bf16.mxu0 0
      %722 = vmatpush1.bf16.msra.mxu0 0
      %723 = vmatprep.subr.bf16.mxu0 0
      %724 = vmatpush1.bf16.msra.mxu0 0
      %725 = vmatprep.subr.bf16.mxu0 0
      %726 = vmatpush1.bf16.msra.mxu0 0
      %727 = vmatprep.subr.bf16.mxu0 0
      %728 = vmatpush1.bf16.msra.mxu0 0
      %729 = vmatprep.subr.bf16.mxu0 0
      %730 = vmatpush1.bf16.msra.mxu0 0
      %731 = vmatprep.subr.bf16.mxu0 0
      %732 = vmatpush1.bf16.msra.mxu0 0
      %733 = vmatprep.subr.bf16.mxu0 0
      %734 = vmatpush1.bf16.msra.mxu0 0
      %735 = vmatprep.subr.bf16.mxu0 0
      %736 = vmatpush1.bf16.msra.mxu0 0
      %737 = vmatprep.subr.bf16.mxu0 0
      %738 = vmatpush1.bf16.msra.mxu0 0
      %739 = vmatprep.mubr.bf16.mxu0 0
      %740 = vmatmul.mubr.bf16.gmra.mrb[0].mxu0 %v702
      %v741 = vpop.f32.mrb[0].mxu0
      %v742 = vadd.f32 0.0, %v741
      %v743 = vpop.f32.mrb[0].mxu0
      %v744 = vpop.f32.mrb[0].mxu0
      %v745 = vadd.f32 0.0, %v744
      %v746 = vpop.f32.mrb[0].mxu0
      %747 = vdwg.mxu0
      %v748 = vadd.f32 %v685, %v742
      %v749 = vadd.f32 %v686, %v745
      %s750 = scalar_lea.vmem %s232, 64
      %v751 = vld [vmem:[%s750] sm:$0xf]
      %v752 = vld [vmem:[%s750 + $0x4] sm:$0xf]
      %v755 = vunpack.c.l.b16 %v751
      %v756 = vunpack.c.l.b16 %v752
      %v757 = vpack.c.b16 %v756, %v755
      %758 = vrot.lane.b32.xlu0 %v263, 120
      %v759 = vpop.permute.xlu0 %758
      %760 = vrot.lane.b32.xlu0 %v264, 120
      %v761 = vpop.permute.xlu0 %760
      %vm762 = vcmask 982016
      %v763 = vsel %vm762, %v759, %v761
      %v765 = vsel %vm271, %v757, 0
      %v768 = vsel %vm275, %v763, 0
      %770 = vmatprep.subr.bf16.mxu0 0
      %771 = vmatpush1.bf16.msra.mxu0 %v768
      %772 = vmatprep.subr.bf16.mxu0 0
      %773 = vmatpush1.bf16.msra.mxu0 0
      %774 = vmatprep.subr.bf16.mxu0 0
      %775 = vmatpush1.bf16.msra.mxu0 0
      %776 = vmatprep.subr.bf16.mxu0 0
      %777 = vmatpush1.bf16.msra.mxu0 0
      %778 = vmatprep.subr.bf16.mxu0 0
      %779 = vmatpush1.bf16.msra.mxu0 0
      %780 = vmatprep.subr.bf16.mxu0 0
      %781 = vmatpush1.bf16.msra.mxu0 0
      %782 = vmatprep.subr.bf16.mxu0 0
      %783 = vmatpush1.bf16.msra.mxu0 0
      %784 = vmatprep.subr.bf16.mxu0 0
      %785 = vmatpush1.bf16.msra.mxu0 0
      %786 = vmatprep.subr.bf16.mxu0 0
      %787 = vmatpush1.bf16.msra.mxu0 0
      %788 = vmatprep.subr.bf16.mxu0 0
      %789 = vmatpush1.bf16.msra.mxu0 0
      %790 = vmatprep.subr.bf16.mxu0 0
      %791 = vmatpush1.bf16.msra.mxu0 0
      %792 = vmatprep.subr.bf16.mxu0 0
      %793 = vmatpush1.bf16.msra.mxu0 0
      %794 = vmatprep.subr.bf16.mxu0 0
      %795 = vmatpush1.bf16.msra.mxu0 0
      %796 = vmatprep.subr.bf16.mxu0 0
      %797 = vmatpush1.bf16.msra.mxu0 0
      %798 = vmatprep.subr.bf16.mxu0 0
      %799 = vmatpush1.bf16.msra.mxu0 0
      %800 = vmatprep.subr.bf16.mxu0 0
      %801 = vmatpush1.bf16.msra.mxu0 0
      %802 = vmatprep.mubr.bf16.mxu0 0
      %803 = vmatmul.mubr.bf16.gmra.mrb[0].mxu0 %v765
      %v804 = vpop.f32.mrb[0].mxu0
      %v805 = vadd.f32 0.0, %v804
      %v806 = vpop.f32.mrb[0].mxu0
      %v807 = vpop.f32.mrb[0].mxu0
      %v808 = vadd.f32 0.0, %v807
      %v809 = vpop.f32.mrb[0].mxu0
      %810 = vdwg.mxu0
      %v811 = vadd.f32 %v748, %v805
      %v812 = vadd.f32 %v749, %v808
      %s813 = scalar_lea.vmem %s232, 72
      %v814 = vld [vmem:[%s813] sm:$0xf]
      %v815 = vld [vmem:[%s813 + $0x4] sm:$0xf]
      %v818 = vunpack.c.l.b16 %v814
      %v819 = vunpack.c.l.b16 %v815
      %v820 = vpack.c.b16 %v819, %v818
      %821 = vrot.lane.b32.xlu0 %v263, 119
      %v822 = vpop.permute.xlu0 %821
      %823 = vrot.lane.b32.xlu0 %v264, 119
      %v824 = vpop.permute.xlu0 %823
      %vm825 = vcmask 973824
      %v826 = vsel %vm825, %v822, %v824
      %v828 = vsel %vm271, %v820, 0
      %v831 = vsel %vm275, %v826, 0
      %833 = vmatprep.subr.bf16.mxu0 0
      %834 = vmatpush1.bf16.msra.mxu0 %v831
      %835 = vmatprep.subr.bf16.mxu0 0
      %836 = vmatpush1.bf16.msra.mxu0 0
      %837 = vmatprep.subr.bf16.mxu0 0
      %838 = vmatpush1.bf16.msra.mxu0 0
      %839 = vmatprep.subr.bf16.mxu0 0
      %840 = vmatpush1.bf16.msra.mxu0 0
      %841 = vmatprep.subr.bf16.mxu0 0
      %842 = vmatpush1.bf16.msra.mxu0 0
      %843 = vmatprep.subr.bf16.mxu0 0
      %844 = vmatpush1.bf16.msra.mxu0 0
      %845 = vmatprep.subr.bf16.mxu0 0
      %846 = vmatpush1.bf16.msra.mxu0 0
      %847 = vmatprep.subr.bf16.mxu0 0
      %848 = vmatpush1.bf16.msra.mxu0 0
      %849 = vmatprep.subr.bf16.mxu0 0
      %850 = vmatpush1.bf16.msra.mxu0 0
      %851 = vmatprep.subr.bf16.mxu0 0
      %852 = vmatpush1.bf16.msra.mxu0 0
      %853 = vmatprep.subr.bf16.mxu0 0
      %854 = vmatpush1.bf16.msra.mxu0 0
      %855 = vmatprep.subr.bf16.mxu0 0
      %856 = vmatpush1.bf16.msra.mxu0 0
      %857 = vmatprep.subr.bf16.mxu0 0
      %858 = vmatpush1.bf16.msra.mxu0 0
      %859 = vmatprep.subr.bf16.mxu0 0
      %860 = vmatpush1.bf16.msra.mxu0 0
      %861 = vmatprep.subr.bf16.mxu0 0
      %862 = vmatpush1.bf16.msra.mxu0 0
      %863 = vmatprep.subr.bf16.mxu0 0
      %864 = vmatpush1.bf16.msra.mxu0 0
      %865 = vmatprep.mubr.bf16.mxu0 0
      %866 = vmatmul.mubr.bf16.gmra.mrb[0].mxu0 %v828
      %v867 = vpop.f32.mrb[0].mxu0
      %v868 = vadd.f32 0.0, %v867
      %v869 = vpop.f32.mrb[0].mxu0
      %v870 = vpop.f32.mrb[0].mxu0
      %v871 = vadd.f32 0.0, %v870
      %v872 = vpop.f32.mrb[0].mxu0
      %873 = vdwg.mxu0
      %v874 = vadd.f32 %v811, %v868
      %v875 = vadd.f32 %v812, %v871
      %s876 = scalar_lea.vmem %s232, 80
      %v877 = vld [vmem:[%s876] sm:$0xf]
      %v878 = vld [vmem:[%s876 + $0x4] sm:$0xf]
      %v881 = vunpack.c.l.b16 %v877
      %v882 = vunpack.c.l.b16 %v878
      %v883 = vpack.c.b16 %v882, %v881
      %884 = vrot.lane.b32.xlu0 %v263, 118
      %v885 = vpop.permute.xlu0 %884
      %886 = vrot.lane.b32.xlu0 %v264, 118
      %v887 = vpop.permute.xlu0 %886
      %vm888 = vcmask 965632
      %v889 = vsel %vm888, %v885, %v887
      %v891 = vsel %vm271, %v883, 0
      %v894 = vsel %vm275, %v889, 0
      %896 = vmatprep.subr.bf16.mxu0 0
      %897 = vmatpush1.bf16.msra.mxu0 %v894
      %898 = vmatprep.subr.bf16.mxu0 0
      %899 = vmatpush1.bf16.msra.mxu0 0
      %900 = vmatprep.subr.bf16.mxu0 0
      %901 = vmatpush1.bf16.msra.mxu0 0
      %902 = vmatprep.subr.bf16.mxu0 0
      %903 = vmatpush1.bf16.msra.mxu0 0
      %904 = vmatprep.subr.bf16.mxu0 0
      %905 = vmatpush1.bf16.msra.mxu0 0
      %906 = vmatprep.subr.bf16.mxu0 0
      %907 = vmatpush1.bf16.msra.mxu0 0
      %908 = vmatprep.subr.bf16.mxu0 0
      %909 = vmatpush1.bf16.msra.mxu0 0
      %910 = vmatprep.subr.bf16.mxu0 0
      %911 = vmatpush1.bf16.msra.mxu0 0
      %912 = vmatprep.subr.bf16.mxu0 0
      %913 = vmatpush1.bf16.msra.mxu0 0
      %914 = vmatprep.subr.bf16.mxu0 0
      %915 = vmatpush1.bf16.msra.mxu0 0
      %916 = vmatprep.subr.bf16.mxu0 0
      %917 = vmatpush1.bf16.msra.mxu0 0
      %918 = vmatprep.subr.bf16.mxu0 0
      %919 = vmatpush1.bf16.msra.mxu0 0
      %920 = vmatprep.subr.bf16.mxu0 0
      %921 = vmatpush1.bf16.msra.mxu0 0
      %922 = vmatprep.subr.bf16.mxu0 0
      %923 = vmatpush1.bf16.msra.mxu0 0
      %924 = vmatprep.subr.bf16.mxu0 0
      %925 = vmatpush1.bf16.msra.mxu0 0
      %926 = vmatprep.subr.bf16.mxu0 0
      %927 = vmatpush1.bf16.msra.mxu0 0
      %928 = vmatprep.mubr.bf16.mxu0 0
      %929 = vmatmul.mubr.bf16.gmra.mrb[0].mxu0 %v891
      %v930 = vpop.f32.mrb[0].mxu0
      %v931 = vadd.f32 0.0, %v930
      %v932 = vpop.f32.mrb[0].mxu0
      %v933 = vpop.f32.mrb[0].mxu0
      %v934 = vadd.f32 0.0, %v933
      %v935 = vpop.f32.mrb[0].mxu0
      %936 = vdwg.mxu0
      %v937 = vadd.f32 %v874, %v931
      %v938 = vadd.f32 %v875, %v934
      %s939 = scalar_lea.vmem %s232, 88
      %v940 = vld [vmem:[%s939] sm:$0xf]
      %v941 = vld [vmem:[%s939 + $0x4] sm:$0xf]
      %v944 = vunpack.c.l.b16 %v940
      %v945 = vunpack.c.l.b16 %v941
      %v946 = vpack.c.b16 %v945, %v944
      %947 = vrot.lane.b32.xlu0 %v263, 117
      %v948 = vpop.permute.xlu0 %947
      %949 = vrot.lane.b32.xlu0 %v264, 117
      %v950 = vpop.permute.xlu0 %949
      %vm951 = vcmask 957440
      %v952 = vsel %vm951, %v948, %v950
      %v954 = vsel %vm271, %v946, 0
      %v957 = vsel %vm275, %v952, 0
      %959 = vmatprep.subr.bf16.mxu0 0
      %960 = vmatpush1.bf16.msra.mxu0 %v957
      %961 = vmatprep.subr.bf16.mxu0 0
      %962 = vmatpush1.bf16.msra.mxu0 0
      %963 = vmatprep.subr.bf16.mxu0 0
      %964 = vmatpush1.bf16.msra.mxu0 0
      %965 = vmatprep.subr.bf16.mxu0 0
      %966 = vmatpush1.bf16.msra.mxu0 0
      %967 = vmatprep.subr.bf16.mxu0 0
      %968 = vmatpush1.bf16.msra.mxu0 0
      %969 = vmatprep.subr.bf16.mxu0 0
      %970 = vmatpush1.bf16.msra.mxu0 0
      %971 = vmatprep.subr.bf16.mxu0 0
      %972 = vmatpush1.bf16.msra.mxu0 0
      %973 = vmatprep.subr.bf16.mxu0 0
      %974 = vmatpush1.bf16.msra.mxu0 0
      %975 = vmatprep.subr.bf16.mxu0 0
      %976 = vmatpush1.bf16.msra.mxu0 0
      %977 = vmatprep.subr.bf16.mxu0 0
      %978 = vmatpush1.bf16.msra.mxu0 0
      %979 = vmatprep.subr.bf16.mxu0 0
      %980 = vmatpush1.bf16.msra.mxu0 0
      %981 = vmatprep.subr.bf16.mxu0 0
      %982 = vmatpush1.bf16.msra.mxu0 0
      %983 = vmatprep.subr.bf16.mxu0 0
      %984 = vmatpush1.bf16.msra.mxu0 0
      %985 = vmatprep.subr.bf16.mxu0 0
      %986 = vmatpush1.bf16.msra.mxu0 0
      %987 = vmatprep.subr.bf16.mxu0 0
      %988 = vmatpush1.bf16.msra.mxu0 0
      %989 = vmatprep.subr.bf16.mxu0 0
      %990 = vmatpush1.bf16.msra.mxu0 0
      %991 = vmatprep.mubr.bf16.mxu0 0
      %992 = vmatmul.mubr.bf16.gmra.mrb[0].mxu0 %v954
      %v993 = vpop.f32.mrb[0].mxu0
      %v994 = vadd.f32 0.0, %v993
      %v995 = vpop.f32.mrb[0].mxu0
      %v996 = vpop.f32.mrb[0].mxu0
      %v997 = vadd.f32 0.0, %v996
      %v998 = vpop.f32.mrb[0].mxu0
      %999 = vdwg.mxu0
      %v1000 = vadd.f32 %v937, %v994
      %v1001 = vadd.f32 %v938, %v997
      %s1002 = scalar_lea.vmem %s232, 96
      %v1003 = vld [vmem:[%s1002] sm:$0xf]
      %v1004 = vld [vmem:[%s1002 + $0x4] sm:$0xf]
      %v1007 = vunpack.c.l.b16 %v1003
      %v1008 = vunpack.c.l.b16 %v1004
      %v1009 = vpack.c.b16 %v1008, %v1007
      %1010 = vrot.lane.b32.xlu0 %v263, 116
      %v1011 = vpop.permute.xlu0 %1010
      %1012 = vrot.lane.b32.xlu0 %v264, 116
      %v1013 = vpop.permute.xlu0 %1012
      %vm1014 = vcmask 949248
      %v1015 = vsel %vm1014, %v1011, %v1013
      %v1017 = vsel %vm271, %v1009, 0
      %v1020 = vsel %vm275, %v1015, 0
      %1022 = vmatprep.subr.bf16.mxu0 0
      %1023 = vmatpush1.bf16.msra.mxu0 %v1020
      %1024 = vmatprep.subr.bf16.mxu0 0
      %1025 = vmatpush1.bf16.msra.mxu0 0
      %1026 = vmatprep.subr.bf16.mxu0 0
      %1027 = vmatpush1.bf16.msra.mxu0 0
      %1028 = vmatprep.subr.bf16.mxu0 0
      %1029 = vmatpush1.bf16.msra.mxu0 0
      %1030 = vmatprep.subr.bf16.mxu0 0
      %1031 = vmatpush1.bf16.msra.mxu0 0
      %1032 = vmatprep.subr.bf16.mxu0 0
      %1033 = vmatpush1.bf16.msra.mxu0 0
      %1034 = vmatprep.subr.bf16.mxu0 0
      %1035 = vmatpush1.bf16.msra.mxu0 0
      %1036 = vmatprep.subr.bf16.mxu0 0
      %1037 = vmatpush1.bf16.msra.mxu0 0
      %1038 = vmatprep.subr.bf16.mxu0 0
      %1039 = vmatpush1.bf16.msra.mxu0 0
      %1040 = vmatprep.subr.bf16.mxu0 0
      %1041 = vmatpush1.bf16.msra.mxu0 0
      %1042 = vmatprep.subr.bf16.mxu0 0
      %1043 = vmatpush1.bf16.msra.mxu0 0
      %1044 = vmatprep.subr.bf16.mxu0 0
      %1045 = vmatpush1.bf16.msra.mxu0 0
      %1046 = vmatprep.subr.bf16.mxu0 0
      %1047 = vmatpush1.bf16.msra.mxu0 0
      %1048 = vmatprep.subr.bf16.mxu0 0
      %1049 = vmatpush1.bf16.msra.mxu0 0
      %1050 = vmatprep.subr.bf16.mxu0 0
      %1051 = vmatpush1.bf16.msra.mxu0 0
      %1052 = vmatprep.subr.bf16.mxu0 0
      %1053 = vmatpush1.bf16.msra.mxu0 0
      %1054 = vmatprep.mubr.bf16.mxu0 0
      %1055 = vmatmul.mubr.bf16.gmra.mrb[0].mxu0 %v1017
      %v1056 = vpop.f32.mrb[0].mxu0
      %v1057 = vadd.f32 0.0, %v1056
      %v1058 = vpop.f32.mrb[0].mxu0
      %v1059 = vpop.f32.mrb[0].mxu0
      %v1060 = vadd.f32 0.0, %v1059
      %v1061 = vpop.f32.mrb[0].mxu0
      %1062 = vdwg.mxu0
      %v1063 = vadd.f32 %v1000, %v1057
      %v1064 = vadd.f32 %v1001, %v1060
      %s1065 = scalar_lea.vmem %s232, 104
      %v1066 = vld [vmem:[%s1065] sm:$0xf]
      %v1067 = vld [vmem:[%s1065 + $0x4] sm:$0xf]
      %v1070 = vunpack.c.l.b16 %v1066
      %v1071 = vunpack.c.l.b16 %v1067
      %v1072 = vpack.c.b16 %v1071, %v1070
      %1073 = vrot.lane.b32.xlu0 %v263, 115
      %v1074 = vpop.permute.xlu0 %1073
      %1075 = vrot.lane.b32.xlu0 %v264, 115
      %v1076 = vpop.permute.xlu0 %1075
      %vm1077 = vcmask 941056
      %v1078 = vsel %vm1077, %v1074, %v1076
      %v1080 = vsel %vm271, %v1072, 0
      %v1083 = vsel %vm275, %v1078, 0
      %1085 = vmatprep.subr.bf16.mxu0 0
      %1086 = vmatpush1.bf16.msra.mxu0 %v1083
      %1087 = vmatprep.subr.bf16.mxu0 0
      %1088 = vmatpush1.bf16.msra.mxu0 0
      %1089 = vmatprep.subr.bf16.mxu0 0
      %1090 = vmatpush1.bf16.msra.mxu0 0
      %1091 = vmatprep.subr.bf16.mxu0 0
      %1092 = vmatpush1.bf16.msra.mxu0 0
      %1093 = vmatprep.subr.bf16.mxu0 0
      %1094 = vmatpush1.bf16.msra.mxu0 0
      %1095 = vmatprep.subr.bf16.mxu0 0
      %1096 = vmatpush1.bf16.msra.mxu0 0
      %1097 = vmatprep.subr.bf16.mxu0 0
      %1098 = vmatpush1.bf16.msra.mxu0 0
      %1099 = vmatprep.subr.bf16.mxu0 0
      %1100 = vmatpush1.bf16.msra.mxu0 0
      %1101 = vmatprep.subr.bf16.mxu0 0
      %1102 = vmatpush1.bf16.msra.mxu0 0
      %1103 = vmatprep.subr.bf16.mxu0 0
      %1104 = vmatpush1.bf16.msra.mxu0 0
      %1105 = vmatprep.subr.bf16.mxu0 0
      %1106 = vmatpush1.bf16.msra.mxu0 0
      %1107 = vmatprep.subr.bf16.mxu0 0
      %1108 = vmatpush1.bf16.msra.mxu0 0
      %1109 = vmatprep.subr.bf16.mxu0 0
      %1110 = vmatpush1.bf16.msra.mxu0 0
      %1111 = vmatprep.subr.bf16.mxu0 0
      %1112 = vmatpush1.bf16.msra.mxu0 0
      %1113 = vmatprep.subr.bf16.mxu0 0
      %1114 = vmatpush1.bf16.msra.mxu0 0
      %1115 = vmatprep.subr.bf16.mxu0 0
      %1116 = vmatpush1.bf16.msra.mxu0 0
      %1117 = vmatprep.mubr.bf16.mxu0 0
      %1118 = vmatmul.mubr.bf16.gmra.mrb[0].mxu0 %v1080
      %v1119 = vpop.f32.mrb[0].mxu0
      %v1120 = vadd.f32 0.0, %v1119
      %v1121 = vpop.f32.mrb[0].mxu0
      %v1122 = vpop.f32.mrb[0].mxu0
      %v1123 = vadd.f32 0.0, %v1122
      %v1124 = vpop.f32.mrb[0].mxu0
      %1125 = vdwg.mxu0
      %v1126 = vadd.f32 %v1063, %v1120
      %v1127 = vadd.f32 %v1064, %v1123
      %s1128 = scalar_lea.vmem %s232, 112
      %v1129 = vld [vmem:[%s1128] sm:$0xf]
      %v1130 = vld [vmem:[%s1128 + $0x4] sm:$0xf]
      %v1133 = vunpack.c.l.b16 %v1129
      %v1134 = vunpack.c.l.b16 %v1130
      %v1135 = vpack.c.b16 %v1134, %v1133
      %1136 = vrot.lane.b32.xlu0 %v263, 114
      %v1137 = vpop.permute.xlu0 %1136
      %1138 = vrot.lane.b32.xlu0 %v264, 114
      %v1139 = vpop.permute.xlu0 %1138
      %vm1140 = vcmask 932864
      %v1141 = vsel %vm1140, %v1137, %v1139
      %v1143 = vsel %vm271, %v1135, 0
      %v1146 = vsel %vm275, %v1141, 0
      %1148 = vmatprep.subr.bf16.mxu0 0
      %1149 = vmatpush1.bf16.msra.mxu0 %v1146
      %1150 = vmatprep.subr.bf16.mxu0 0
      %1151 = vmatpush1.bf16.msra.mxu0 0
      %1152 = vmatprep.subr.bf16.mxu0 0
      %1153 = vmatpush1.bf16.msra.mxu0 0
      %1154 = vmatprep.subr.bf16.mxu0 0
      %1155 = vmatpush1.bf16.msra.mxu0 0
      %1156 = vmatprep.subr.bf16.mxu0 0
      %1157 = vmatpush1.bf16.msra.mxu0 0
      %1158 = vmatprep.subr.bf16.mxu0 0
      %1159 = vmatpush1.bf16.msra.mxu0 0
      %1160 = vmatprep.subr.bf16.mxu0 0
      %1161 = vmatpush1.bf16.msra.mxu0 0
      %1162 = vmatprep.subr.bf16.mxu0 0
      %1163 = vmatpush1.bf16.msra.mxu0 0
      %1164 = vmatprep.subr.bf16.mxu0 0
      %1165 = vmatpush1.bf16.msra.mxu0 0
      %1166 = vmatprep.subr.bf16.mxu0 0
      %1167 = vmatpush1.bf16.msra.mxu0 0
      %1168 = vmatprep.subr.bf16.mxu0 0
      %1169 = vmatpush1.bf16.msra.mxu0 0
      %1170 = vmatprep.subr.bf16.mxu0 0
      %1171 = vmatpush1.bf16.msra.mxu0 0
      %1172 = vmatprep.subr.bf16.mxu0 0
      %1173 = vmatpush1.bf16.msra.mxu0 0
      %1174 = vmatprep.subr.bf16.mxu0 0
      %1175 = vmatpush1.bf16.msra.mxu0 0
      %1176 = vmatprep.subr.bf16.mxu0 0
      %1177 = vmatpush1.bf16.msra.mxu0 0
      %1178 = vmatprep.subr.bf16.mxu0 0
      %1179 = vmatpush1.bf16.msra.mxu0 0
      %1180 = vmatprep.mubr.bf16.mxu0 0
      %1181 = vmatmul.mubr.bf16.gmra.mrb[0].mxu0 %v1143
      %v1182 = vpop.f32.mrb[0].mxu0
      %v1183 = vadd.f32 0.0, %v1182
      %v1184 = vpop.f32.mrb[0].mxu0
      %v1185 = vpop.f32.mrb[0].mxu0
      %v1186 = vadd.f32 0.0, %v1185
      %v1187 = vpop.f32.mrb[0].mxu0
      %1188 = vdwg.mxu0
      %v1189 = vadd.f32 %v1126, %v1183
      %v1190 = vadd.f32 %v1127, %v1186
      %v1191 = vld [vmem:[%s237] sm:$0xff]
      %v1192 = vld [vmem:[%s237 + $0x8] sm:$0xff]
      %1194 = vset.pattern.permute.xlu0 0
      %1195 = vperm.xlu0 %1194, %v1191
      %v1196 = vpop.permute.xlu0 %1195
      %1199 = vset.pattern.permute.xlu0 0
      %1200 = vperm.xlu0 %1199, %v1192
      %v1201 = vpop.permute.xlu0 %1200
      %v1203 = vadd.f32 %v1189, %v1196
      %v1204 = vadd.f32 %v1190, %v1201
      %vm1205 = vcmp.ge.f32.partialorder %v1203, 0.0
      %vm1206 = vcmp.ge.f32.partialorder %v1204, 0.0
      %v1207 = vmul.f32 %v1203, 0.2
      %v1208 = vmul.f32 %v1204, 0.2
      %v1209 = vsel %vm1205, %v1203, %v1207
      %v1210 = vsel %vm1206, %v1204, %v1208
      %1211 = vst [vmem:[%s246] sm:$0xff] %v1209
      %1212 = vst [vmem:[%s246 + $0x8] sm:$0xff] %v1210
      %p1213 = scmp.lt.s32.totalorder %s19, 1
      %s1214 = scalar_select %p1213, %s19, 1
      %p1215 = scmp.lt.s32.totalorder %s18, 0
      %s1216 = scalar_select %p1215, %s18, 0
      %s1217 = smul.addr %s1216, 2
      %s1218 = smul.addr %s1214, 2
      %s1219 = sadd.s32 %s1217, %s1218
      %s1220 = smul.addr %s1219, 8
      %s1221 = scalar_lea.vmem %s3, %s1220
      // Predicated region
      $region33: #{forward.17} parent=31 // pred_check
        %p1222 = pneg %p126
      $region34: #{forward.17} parent=31 // pred_check_branch
        %1224 = sbr.rel (%p1222) target = $region36
      $region35: #{forward.17} parent=31 // pred_region
        _
      $region36: #{forward.17} parent=31 // pred_fallthru
        _
    $region32: #{forward.17} parent=5 // pred_fallthru
      _
    %p1225 = scmp.le.s32.totalorder 2, %s9
    // Predicated region
    $region37: #{forward.17} parent=5 // pred_check
      %p1226 = pneg %p1225
    $region38: #{forward.17} parent=5 // pred_check_branch
      %1228 = sbr.rel (%p1226) target = $region40
    $region39: #{forward.17} parent=5 // pred_region
      %s1229 = ssub.s32 %s9, 2
      // Predicated region
      $region41: #{forward.17} parent=39 // pred_check
        %p1230 = pneg %p132
      $region42: #{forward.17} parent=39 // pred_check_branch
        %1232 = sbr.rel (%p1230) target = $region44
      $region43: #{forward.17} parent=39 // pred_region
        %p1233 = scmp.lt.s32.totalorder %s21, 1
        %s1234 = scalar_select %p1233, %s21, 1
        %p1235 = scmp.lt.s32.totalorder %s20, 0
        %s1236 = scalar_select %p1235, %s20, 0
        %s1237 = smul.addr %s1236, 2
        %s1238 = smul.addr %s1234, 2
        %s1239 = sadd.s32 %s1237, %s1238
        %s1240 = smul.addr %s1239, 8
        %s1241 = scalar_lea.vmem %s3, %s1240
      $region44: #{forward.17} parent=39 // pred_fallthru
        _
    $region40: #{forward.17} parent=5 // pred_fallthru
      _
  $region6: #{forward.17} parent=0 // loop_footer
    %s13 = sadd.s32 1, %s9
  $region7: #{forward.17} parent=0 // loop_footer_branch
    %8 = sbr.rel target = $region3
  $region8: #{forward.17} parent=0 // loop_exit
    _

// kernel: forward.18
$region0: #{forward.18}
  #allocation0 [shape = 'u32[]', space=smem, size = 0x4, offset = 0x4, fixed_abs, tag = 'smem constant byte address 0x4 - core index']
  #allocation1 [shape = 'u32[144,128]{1,0:T(1,128)}', space=vmem, size = 0x12000, scoped, tag = 'internal scratch']
  %s0 = inlined_call_operand.vmem [shape: bf16[2,1,32,138], index: 0, kind: input, shape index: {}]
  %s1 = inlined_call_operand.vmem [shape: bf16[1,11,32,32], index: 1, kind: input, shape index: {}]
  %s2 = inlined_call_operand.vmem [shape: f32[1,32,1], index: 2, kind: input, shape index: {}]
  %s3 = inlined_call_operand.vmem [shape: f32[2,1,32,128], index: 3, kind: output, shape index: {}]
  %s4 = sld [smem:[#allocation0]]
  $region45: #{forward.18} parent=0
    _
  %s6 = ssub.s32 1, %s4
  %s7 = scalar_select 0, %s6, %s4
  loop: start=0, step=1, limit=4
  $region2: #{forward.18} parent=0 // loop_pre_header
    _
  $region3: #{forward.18} parent=0 // loop_header
    %s9 = sphi 0, %s13
    %p10 = scmp.ge.s32.totalorder %s9, 4
    %s16 = sphi 0, %s28
    %s17 = sphi 0, %s24
    %s18 = sphi 0, %s16
    %s19 = sphi 0, %s17
    %s20 = sphi 0, %s18
    %s21 = sphi 0, %s19
    %s33 = sphi 0, %s35
    %s36 = sphi 0, %s33
    %s37 = sphi 0, %s36
    %s53 = sphi 0, %s37
    %s59 = sphi 0, %s61
    %s62 = sphi 0, %s59
    %s63 = sphi 0, %s62
    %s79 = sphi 0, %s63
    %s85 = sphi 0, %s87
    %s88 = sphi 0, %s85
    %s89 = sphi 0, %s88
    %s105 = sphi 0, %s89
    %s113 = sphi 0, %s115
    %s116 = sphi 0, %s113
    %s117 = sphi 0, %s116
    %s133 = sphi 0, %s117
  $region4: #{forward.18} parent=0 // loop_header_branch
    %12 = sbr.rel (%p10) target = $region8
  $region5: #{forward.18} parent=0 // loop_body
    %s14 = ssub.s32 %s9, 1
    %s15 = ssub.s32 %s9, 2
    %s22 = sadd.s32 1, %s17
    %p23 = scmp.ge.s32.totalorder %s22, 2
    %s24 = scalar_select %p23, 0, %s22
    %s25 = sadd.s32 1, %s16
    %s26 = scalar_select %p23, %s25, %s16
    %p27 = scmp.ge.s32.totalorder %s26, 1
    %s28 = scalar_select %p27, 0, %s26
    %s29 = ssub.s32 %s17, %s24
    %s30 = ssub.s32 %s16, %s28
    %s31 = sor.u32 %s29, %s30
    %p32 = scmp.eq.s32.totalorder %s31, 0
    %s34 = sadd.s32 %s33, 1
    %s35 = scalar_select %p32, %s33, %s34
    %p38 = pneg %p32
    %p39 = scmp.eq.s32.totalorder %s9, 1
    %p40 = por %p38, %p39
    %p41 = scmp.ne.s32.totalorder %s33, %s36
    %p42 = scmp.eq.s32.totalorder %s9, 0
    %p43 = por %p41, %p42
    %p44 = scmp.ne.s32.totalorder %s33, %s36
    %p45 = scmp.eq.s32.totalorder %s14, 1
    %p46 = por %p44, %p45
    %p47 = scmp.ne.s32.totalorder %s36, %s37
    %p48 = scmp.eq.s32.totalorder %s14, 0
    %p49 = por %p47, %p48
    %p50 = scmp.ne.s32.totalorder %s36, %s37
    %p51 = scmp.eq.s32.totalorder %s15, 1
    %p52 = por %p50, %p51
    %p54 = scmp.ne.s32.totalorder %s37, %s53
    %p55 = scmp.eq.s32.totalorder %s15, 0
    %p56 = por %p54, %p55
    %s57 = ssub.s32 %s16, %s28
    %p58 = scmp.eq.s32.totalorder %s57, 0
    %s60 = sadd.s32 %s59, 1
    %s61 = scalar_select %p58, %s59, %s60
    %p64 = pneg %p58
    %p65 = scmp.eq.s32.totalorder %s9, 1
    %p66 = por %p64, %p65
    %p67 = scmp.ne.s32.totalorder %s59, %s62
    %p68 = scmp.eq.s32.totalorder %s9, 0
    %p69 = por %p67, %p68
    %p70 = scmp.ne.s32.totalorder %s59, %s62
    %p71 = scmp.eq.s32.totalorder %s14, 1
    %p72 = por %p70, %p71
    %p73 = scmp.ne.s32.totalorder %s62, %s63
    %p74 = scmp.eq.s32.totalorder %s14, 0
    %p75 = por %p73, %p74
    %p76 = scmp.ne.s32.totalorder %s62, %s63
    %p77 = scmp.eq.s32.totalorder %s15, 1
    %p78 = por %p76, %p77
    %p80 = scmp.ne.s32.totalorder %s63, %s79
    %p81 = scmp.eq.s32.totalorder %s15, 0
    %p82 = por %p80, %p81
    %s83 = ssub.s32 %s16, %s28
    %p84 = scmp.eq.s32.totalorder %s83, 0
    %s86 = sadd.s32 %s85, 1
    %s87 = scalar_select %p84, %s85, %s86
    %p90 = pneg %p84
    %p91 = scmp.eq.s32.totalorder %s9, 1
    %p92 = por %p90, %p91
    %p93 = scmp.ne.s32.totalorder %s85, %s88
    %p94 = scmp.eq.s32.totalorder %s9, 0
    %p95 = por %p93, %p94
    %p96 = scmp.ne.s32.totalorder %s85, %s88
    %p97 = scmp.eq.s32.totalorder %s14, 1
    %p98 = por %p96, %p97
    %p99 = scmp.ne.s32.totalorder %s88, %s89
    %p100 = scmp.eq.s32.totalorder %s14, 0
    %p101 = por %p99, %p100
    %p102 = scmp.ne.s32.totalorder %s88, %s89
    %p103 = scmp.eq.s32.totalorder %s15, 1
    %p104 = por %p102, %p103
    %p106 = scmp.ne.s32.totalorder %s89, %s105
    %p107 = scmp.eq.s32.totalorder %s15, 0
    %p108 = por %p106, %p107
    %s109 = ssub.s32 %s17, %s24
    %s110 = ssub.s32 %s16, %s28
    %s111 = sor.u32 %s109, %s110
    %p112 = scmp.eq.s32.totalorder %s111, 0
    %s114 = sadd.s32 %s113, 1
    %s115 = scalar_select %p112, %s113, %s114
    %p118 = pneg %p112
    %p119 = scmp.eq.s32.totalorder %s9, 1
    %p120 = por %p118, %p119
    %p121 = scmp.ne.s32.totalorder %s113, %s116
    %p122 = scmp.eq.s32.totalorder %s9, 0
    %p123 = por %p121, %p122
    %p124 = scmp.ne.s32.totalorder %s113, %s116
    %p125 = scmp.eq.s32.totalorder %s14, 1
    %p126 = por %p124, %p125
    %p127 = scmp.ne.s32.totalorder %s116, %s117
    %p128 = scmp.eq.s32.totalorder %s14, 0
    %p129 = por %p127, %p128
    %p130 = scmp.ne.s32.totalorder %s116, %s117
    %p131 = scmp.eq.s32.totalorder %s15, 1
    %p132 = por %p130, %p131
    %p134 = scmp.ne.s32.totalorder %s117, %s133
    %p135 = scmp.eq.s32.totalorder %s15, 0
    %p136 = por %p134, %p135
    %p137 = scmp.le.s32.totalorder 1, %s9
    %p138 = scmp.lt.s32.totalorder %s9, 3
    %p139 = pnand %p137, %p138
    %p140 = pneg %p139
    // Predicated region
    $region9: #{forward.18} parent=5 // pred_check
      _
    $region10: #{forward.18} parent=5 // pred_check_branch
      %142 = sbr.rel (%p139) target = $region12
    $region11: #{forward.18} parent=5 // pred_region
      %s143 = ssub.s32 %s9, 1
      // Predicated region
      $region13: #{forward.18} parent=11 // pred_check
        %p144 = pneg %p75
      $region14: #{forward.18} parent=11 // pred_check_branch
        %146 = sbr.rel (%p144) target = $region16
      $region15: #{forward.18} parent=11 // pred_region
        %p147 = scmp.lt.s32.totalorder %s18, 0
        %s148 = scalar_select %p147, %s18, 0
        %s149 = smul.addr %s148, 44
        %s150 = smul.addr %s149, 4
        %s151 = scalar_lea.vmem %s1, %s150
      $region16: #{forward.18} parent=11 // pred_fallthru
        _
      // Predicated region
      $region17: #{forward.18} parent=11 // pred_check
        %p152 = pneg %p101
      $region18: #{forward.18} parent=11 // pred_check_branch
        %154 = sbr.rel (%p152) target = $region20
      $region19: #{forward.18} parent=11 // pred_region
        %p155 = scmp.lt.s32.totalorder %s18, 0
        %s156 = scalar_select %p155, %s18, 0
        %s157 = smul.addr %s156, 4
        %s158 = smul.addr %s157, 8
        %s159 = scalar_lea.vmem %s2, %s158
      $region20: #{forward.18} parent=11 // pred_fallthru
        _
    $region12: #{forward.18} parent=5 // pred_fallthru
      _
    %p160 = scmp.lt.s32.totalorder %s9, 2
    // Predicated region
    $region21: #{forward.18} parent=5 // pred_check
      %p161 = pneg %p160
    $region22: #{forward.18} parent=5 // pred_check_branch
      %163 = sbr.rel (%p161) target = $region24
    $region23: #{forward.18} parent=5 // pred_region
      // Predicated region
      $region25: #{forward.18} parent=23 // pred_check
        %p164 = pneg %p43
      $region26: #{forward.18} parent=23 // pred_check_branch
        %166 = sbr.rel (%p164) target = $region28
      $region27: #{forward.18} parent=23 // pred_region
        %p167 = scmp.lt.s32.totalorder %s17, 1
        %s168 = scalar_select %p167, %s17, 1
        %p169 = scmp.lt.s32.totalorder %s16, 0
        %s170 = scalar_select %p169, %s16, 0
        %s171 = smul.addr %s170, 8
        %s172 = smul.addr %s168, 8
        %s173 = sadd.s32 %s171, %s172
        %s174 = smul.addr %s173, 4
        %s175 = scalar_lea.vmem %s0, %s174
      $region28: #{forward.18} parent=23 // pred_fallthru
        _
    $region24: #{forward.18} parent=5 // pred_fallthru
      _
    %p176 = scmp.le.s32.totalorder 1, %s9
    %p177 = scmp.lt.s32.totalorder %s9, 3
    %p178 = pnand %p176, %p177
    %p179 = pneg %p178
    // Predicated region
    $region29: #{forward.18} parent=5 // pred_check
      _
    $region30: #{forward.18} parent=5 // pred_check_branch
      %181 = sbr.rel (%p178) target = $region32
    $region31: #{forward.18} parent=5 // pred_region
      %s182 = ssub.s32 %s9, 1
      %p183 = scmp.lt.s32.totalorder %s19, 1
      %s184 = scalar_select %p183, %s19, 1
      %p185 = scmp.lt.s32.totalorder %s18, 0
      %s186 = scalar_select %p185, %s18, 0
      %s187 = smul.addr %s186, 8
      %s188 = smul.addr %s184, 8
      %s189 = sadd.s32 %s187, %s188
      %s190 = smul.addr %s189, 4
      %s191 = scalar_lea.vmem %s0, %s190
      %p192 = pneg %p49
      %p193 = pneg %p46
      %p194 = scmp.lt.s32.totalorder %s18, 0
      %s195 = scalar_select %p194, %s18, 0
      %s196 = smul.addr %s195, 44
      %s197 = smul.addr %s196, 4
      %s198 = scalar_lea.vmem %s1, %s197
      %p199 = pneg %p75
      %p200 = pneg %p72
      %p201 = scmp.lt.s32.totalorder %s18, 0
      %s202 = scalar_select %p201, %s18, 0
      %s203 = smul.addr %s202, 4
      %s204 = smul.addr %s203, 8
      %s205 = scalar_lea.vmem %s2, %s204
      %p206 = pneg %p101
      %p207 = pneg %p98
      %p208 = pneg %p129
      %p209 = pneg %p126
      %p210 = scmp.lt.s32.totalorder %s19, 1
      %s211 = scalar_select %p210, %s19, 1
      %p212 = scmp.lt.s32.totalorder %s18, 0
      %s213 = scalar_select %p212, %s18, 0
      %s214 = smul.addr %s213, 4
      %s215 = smul.addr %s211, 4
      %s216 = sadd.s32 %s214, %s215
      %s217 = smul.addr %s216, 8
      %s218 = scalar_lea.vmem %s3, %s217
      %p219 = scmp.lt.s32.totalorder %s19, 1
      %s220 = scalar_select %p219, %s19, 1
      %p221 = scmp.lt.s32.totalorder %s18, 0
      %s222 = scalar_select %p221, %s18, 0
      %s223 = smul.addr %s222, 8
      %s224 = smul.addr %s220, 8
      %s225 = sadd.s32 %s223, %s224
      %s226 = smul.addr %s225, 4
      %s227 = scalar_lea.vmem %s0, %s226
      %p228 = scmp.lt.s32.totalorder %s18, 0
      %s229 = scalar_select %p228, %s18, 0
      %s230 = smul.addr %s229, 44
      %s231 = smul.addr %s230, 4
      %s232 = scalar_lea.vmem %s1, %s231
      %p233 = scmp.lt.s32.totalorder %s18, 0
      %s234 = scalar_select %p233, %s18, 0
      %s235 = smul.addr %s234, 4
      %s236 = smul.addr %s235, 8
      %s237 = scalar_lea.vmem %s2, %s236
      %p238 = scmp.lt.s32.totalorder %s19, 1
      %s239 = scalar_select %p238, %s19, 1
      %p240 = scmp.lt.s32.totalorder %s18, 0
      %s241 = scalar_select %p240, %s18, 0
      %s242 = smul.addr %s241, 4
      %s243 = smul.addr %s239, 4
      %s244 = sadd.s32 %s242, %s243
      %s245 = smul.addr %s244, 8
      %s246 = scalar_lea.vmem %s3, %s245
      %v248 = vld [vmem:[%s232] sm:$0xf]
      %v249 = vld [vmem:[%s232 + $0x4] sm:$0xf]
      %v250 = vld [vmem:[%s232 + $0x8] sm:$0xf]
      %v251 = vld [vmem:[%s232 + $0xc] sm:$0xf]
      %v252 = vld [vmem:[%s227] sm:$0xf]
      %v253 = vld [vmem:[%s227 + $0x8] sm:$0xf]
      %v254 = vld [vmem:[%s227 + $0x10] sm:$0xf]
      %v255 = vld [vmem:[%s227 + $0x18] sm:$0xf]
      %s256 = scalar_lea.vmem %s232, 16
      %v257 = vld [vmem:[%s256] sm:$0xf]
      %v258 = vld [vmem:[%s256 + $0x4] sm:$0xf]
      %v259 = vld [vmem:[%s256 + $0x8] sm:$0xf]
      %v260 = vld [vmem:[%s256 + $0xc] sm:$0xf]
      %v261 = vld [vmem:[%s227] sm:$0xff]
      %v262 = vld [vmem:[%s227 + $0x8] sm:$0xff]
      %v263 = vld [vmem:[%s227 + $0x10] sm:$0xff]
      %v264 = vld [vmem:[%s227 + $0x18] sm:$0xff]
      %v269 = vunpack.c.l.b16 %v257
      %v270 = vunpack.c.l.b16 %v258
      %v271 = vunpack.c.l.b16 %v259
      %v272 = vunpack.c.l.b16 %v260
      %v273 = vpack.c.b16 %v270, %v269
      %v274 = vpack.c.b16 %v272, %v271
      %v279 = vunpack.c.l.b16 %v261
      %v280 = vunpack.c.h.b16 %v261
      %v281 = vunpack.c.l.b16 %v262
      %v282 = vunpack.c.h.b16 %v262
      %v283 = vunpack.c.l.b16 %v263
      %v284 = vunpack.c.h.b16 %v263
      %v285 = vunpack.c.l.b16 %v264
      %v286 = vunpack.c.h.b16 %v264
      %v287 = vpack.c.b16 %v281, %v279
      %v288 = vpack.c.b16 %v282, %v280
      %v289 = vpack.c.b16 %v285, %v283
      %v290 = vpack.c.b16 %v286, %v284
      %291 = vrot.lane.b32.xlu0 %v287, 127
      %v292 = vpop.permute.xlu0 %291
      %293 = vrot.lane.b32.xlu0 %v288, 127
      %v294 = vpop.permute.xlu0 %293
      %295 = vrot.lane.b32.xlu0 %v289, 127
      %v296 = vpop.permute.xlu0 %295
      %297 = vrot.lane.b32.xlu0 %v290, 127
      %v298 = vpop.permute.xlu0 %297
      %vm299 = vcmask 1039360
      %v300 = vsel %vm299, %v292, %v294
      %v301 = vsel %vm299, %v296, %v298
      %vm304 = vcmask 261120
      %v306 = vsel %vm304, %v273, 0
      %v309 = vsel %vm304, %v274, 0
      %311 = vmatprep.subr.bf16.mxu0 0
      %312 = vmatpush1.bf16.msra.mxu0 %v300
      %313 = vmatprep.subr.bf16.mxu0 0
      %314 = vmatpush1.bf16.msra.mxu0 %v301
      %315 = vmatprep.subr.bf16.mxu0 0
      %316 = vmatpush1.bf16.msra.mxu0 0
      %317 = vmatprep.subr.bf16.mxu0 0
      %318 = vmatpush1.bf16.msra.mxu0 0
      %319 = vmatprep.subr.bf16.mxu0 0
      %320 = vmatpush1.bf16.msra.mxu0 0
      %321 = vmatprep.subr.bf16.mxu0 0
      %322 = vmatpush1.bf16.msra.mxu0 0
      %323 = vmatprep.subr.bf16.mxu0 0
      %324 = vmatpush1.bf16.msra.mxu0 0
      %325 = vmatprep.subr.bf16.mxu0 0
      %326 = vmatpush1.bf16.msra.mxu0 0
      %327 = vmatprep.subr.bf16.mxu0 0
      %328 = vmatpush1.bf16.msra.mxu0 0
      %329 = vmatprep.subr.bf16.mxu0 0
      %330 = vmatpush1.bf16.msra.mxu0 0
      %331 = vmatprep.subr.bf16.mxu0 0
      %332 = vmatpush1.bf16.msra.mxu0 0
      %333 = vmatprep.subr.bf16.mxu0 0
      %334 = vmatpush1.bf16.msra.mxu0 0
      %335 = vmatprep.subr.bf16.mxu0 0
      %336 = vmatpush1.bf16.msra.mxu0 0
      %337 = vmatprep.subr.bf16.mxu0 0
      %338 = vmatpush1.bf16.msra.mxu0 0
      %339 = vmatprep.subr.bf16.mxu0 0
      %340 = vmatpush1.bf16.msra.mxu0 0
      %341 = vmatprep.subr.bf16.mxu0 0
      %342 = vmatpush1.bf16.msra.mxu0 0
      %343 = vmatprep.mubr.bf16.mxu0 0
      %344 = vmatmul.mubr.bf16.gmra.mrb[0].mxu0 %v306
      %v345 = vpop.f32.mrb[0].mxu0
      %v346 = vadd.f32 0.0, %v345
      %v347 = vpop.f32.mrb[0].mxu0
      %v348 = vpop.f32.mrb[0].mxu0
      %v349 = vadd.f32 0.0, %v348
      %v350 = vpop.f32.mrb[0].mxu0
      %351 = vmatprep.mubr.bf16.mxu0 0
      %352 = vmatmul.mubr.bf16.gmra.mrb[0].mxu0 %v309
      %v353 = vpop.f32.mrb[0].mxu0
      %v354 = vadd.f32 0.0, %v353
      %v355 = vpop.f32.mrb[0].mxu0
      %v356 = vpop.f32.mrb[0].mxu0
      %v357 = vadd.f32 0.0, %v356
      %v358 = vpop.f32.mrb[0].mxu0
      %359 = vdwg.mxu0
      %v364 = vunpack.c.l.b16 %v248
      %v365 = vunpack.c.l.b16 %v249
      %v366 = vunpack.c.l.b16 %v250
      %v367 = vunpack.c.l.b16 %v251
      %v368 = vpack.c.b16 %v365, %v364
      %v369 = vpack.c.b16 %v367, %v366
      %v374 = vunpack.c.l.b16 %v252
      %v375 = vunpack.c.l.b16 %v253
      %v376 = vunpack.c.l.b16 %v254
      %v377 = vunpack.c.l.b16 %v255
      %v378 = vpack.c.b16 %v375, %v374
      %v379 = vpack.c.b16 %v377, %v376
      %v383 = vsel %vm304, %v368, 0
      %v386 = vsel %vm304, %v369, 0
      %388 = vmatprep.subr.bf16.mxu0 0
      %389 = vmatpush1.bf16.msra.mxu0 %v378
      %390 = vmatprep.subr.bf16.mxu0 0
      %391 = vmatpush1.bf16.msra.mxu0 %v379
      %392 = vmatprep.subr.bf16.mxu0 0
      %393 = vmatpush1.bf16.msra.mxu0 0
      %394 = vmatprep.subr.bf16.mxu0 0
      %395 = vmatpush1.bf16.msra.mxu0 0
      %396 = vmatprep.subr.bf16.mxu0 0
      %397 = vmatpush1.bf16.msra.mxu0 0
      %398 = vmatprep.subr.bf16.mxu0 0
      %399 = vmatpush1.bf16.msra.mxu0 0
      %400 = vmatprep.subr.bf16.mxu0 0
      %401 = vmatpush1.bf16.msra.mxu0 0
      %402 = vmatprep.subr.bf16.mxu0 0
      %403 = vmatpush1.bf16.msra.mxu0 0
      %404 = vmatprep.subr.bf16.mxu0 0
      %405 = vmatpush1.bf16.msra.mxu0 0
      %406 = vmatprep.subr.bf16.mxu0 0
      %407 = vmatpush1.bf16.msra.mxu0 0
      %408 = vmatprep.subr.bf16.mxu0 0
      %409 = vmatpush1.bf16.msra.mxu0 0
      %410 = vmatprep.subr.bf16.mxu0 0
      %411 = vmatpush1.bf16.msra.mxu0 0
      %412 = vmatprep.subr.bf16.mxu0 0
      %413 = vmatpush1.bf16.msra.mxu0 0
      %414 = vmatprep.subr.bf16.mxu0 0
      %415 = vmatpush1.bf16.msra.mxu0 0
      %416 = vmatprep.subr.bf16.mxu0 0
      %417 = vmatpush1.bf16.msra.mxu0 0
      %418 = vmatprep.subr.bf16.mxu0 0
      %419 = vmatpush1.bf16.msra.mxu0 0
      %420 = vmatprep.mubr.bf16.mxu0 0
      %421 = vmatmul.mubr.bf16.gmra.mrb[0].mxu0 %v383
      %v422 = vpop.f32.mrb[0].mxu0
      %v423 = vadd.f32 %v346, %v422
      %v424 = vpop.f32.mrb[0].mxu0
      %v425 = vpop.f32.mrb[0].mxu0
      %v426 = vadd.f32 %v349, %v425
      %v427 = vpop.f32.mrb[0].mxu0
      %428 = vmatprep.mubr.bf16.mxu0 0
      %429 = vmatmul.mubr.bf16.gmra.mrb[0].mxu0 %v386
      %v430 = vpop.f32.mrb[0].mxu0
      %v431 = vadd.f32 %v354, %v430
      %v432 = vpop.f32.mrb[0].mxu0
      %v433 = vpop.f32.mrb[0].mxu0
      %v434 = vadd.f32 %v357, %v433
      %v435 = vpop.f32.mrb[0].mxu0
      %436 = vdwg.mxu0
      %s437 = scalar_lea.vmem %s232, 32
      %v438 = vld [vmem:[%s437] sm:$0xf]
      %v439 = vld [vmem:[%s437 + $0x4] sm:$0xf]
      %v440 = vld [vmem:[%s437 + $0x8] sm:$0xf]
      %v441 = vld [vmem:[%s437 + $0xc] sm:$0xf]
      %v446 = vunpack.c.l.b16 %v438
      %v447 = vunpack.c.l.b16 %v439
      %v448 = vunpack.c.l.b16 %v440
      %v449 = vunpack.c.l.b16 %v441
      %v450 = vpack.c.b16 %v447, %v446
      %v451 = vpack.c.b16 %v449, %v448
      %452 = vrot.lane.b32.xlu0 %v287, 126
      %v453 = vpop.permute.xlu0 %452
      %454 = vrot.lane.b32.xlu0 %v288, 126
      %v455 = vpop.permute.xlu0 %454
      %456 = vrot.lane.b32.xlu0 %v289, 126
      %v457 = vpop.permute.xlu0 %456
      %458 = vrot.lane.b32.xlu0 %v290, 126
      %v459 = vpop.permute.xlu0 %458
      %vm460 = vcmask 1031168
      %v461 = vsel %vm460, %v453, %v455
      %v462 = vsel %vm460, %v457, %v459
      %v466 = vsel %vm304, %v450, 0
      %v469 = vsel %vm304, %v451, 0
      %471 = vmatprep.subr.bf16.mxu0 0
      %472 = vmatpush1.bf16.msra.mxu0 %v461
      %473 = vmatprep.subr.bf16.mxu0 0
      %474 = vmatpush1.bf16.msra.mxu0 %v462
      %475 = vmatprep.subr.bf16.mxu0 0
      %476 = vmatpush1.bf16.msra.mxu0 0
      %477 = vmatprep.subr.bf16.mxu0 0
      %478 = vmatpush1.bf16.msra.mxu0 0
      %479 = vmatprep.subr.bf16.mxu0 0
      %480 = vmatpush1.bf16.msra.mxu0 0
      %481 = vmatprep.subr.bf16.mxu0 0
      %482 = vmatpush1.bf16.msra.mxu0 0
      %483 = vmatprep.subr.bf16.mxu0 0
      %484 = vmatpush1.bf16.msra.mxu0 0
      %485 = vmatprep.subr.bf16.mxu0 0
      %486 = vmatpush1.bf16.msra.mxu0 0
      %487 = vmatprep.subr.bf16.mxu0 0
      %488 = vmatpush1.bf16.msra.mxu0 0
      %489 = vmatprep.subr.bf16.mxu0 0
      %490 = vmatpush1.bf16.msra.mxu0 0
      %491 = vmatprep.subr.bf16.mxu0 0
      %492 = vmatpush1.bf16.msra.mxu0 0
      %493 = vmatprep.subr.bf16.mxu0 0
      %494 = vmatpush1.bf16.msra.mxu0 0
      %495 = vmatprep.subr.bf16.mxu0 0
      %496 = vmatpush1.bf16.msra.mxu0 0
      %497 = vmatprep.subr.bf16.mxu0 0
      %498 = vmatpush1.bf16.msra.mxu0 0
      %499 = vmatprep.subr.bf16.mxu0 0
      %500 = vmatpush1.bf16.msra.mxu0 0
      %501 = vmatprep.subr.bf16.mxu0 0
      %502 = vmatpush1.bf16.msra.mxu0 0
      %503 = vmatprep.mubr.bf16.mxu0 0
      %504 = vmatmul.mubr.bf16.gmra.mrb[0].mxu0 %v466
      %v505 = vpop.f32.mrb[0].mxu0
      %v506 = vadd.f32 0.0, %v505
      %v507 = vpop.f32.mrb[0].mxu0
      %v508 = vpop.f32.mrb[0].mxu0
      %v509 = vadd.f32 0.0, %v508
      %v510 = vpop.f32.mrb[0].mxu0
      %511 = vmatprep.mubr.bf16.mxu0 0
      %512 = vmatmul.mubr.bf16.gmra.mrb[0].mxu0 %v469
      %v513 = vpop.f32.mrb[0].mxu0
      %v514 = vadd.f32 0.0, %v513
      %v515 = vpop.f32.mrb[0].mxu0
      %v516 = vpop.f32.mrb[0].mxu0
      %v517 = vadd.f32 0.0, %v516
      %v518 = vpop.f32.mrb[0].mxu0
      %519 = vdwg.mxu0
      %v520 = vadd.f32 %v423, %v506
      %v521 = vadd.f32 %v426, %v509
      %v522 = vadd.f32 %v431, %v514
      %v523 = vadd.f32 %v434, %v517
      %s524 = scalar_lea.vmem %s232, 48
      %v525 = vld [vmem:[%s524] sm:$0xf]
      %v526 = vld [vmem:[%s524 + $0x4] sm:$0xf]
      %v527 = vld [vmem:[%s524 + $0x8] sm:$0xf]
      %v528 = vld [vmem:[%s524 + $0xc] sm:$0xf]
      %v533 = vunpack.c.l.b16 %v525
      %v534 = vunpack.c.l.b16 %v526
      %v535 = vunpack.c.l.b16 %v527
      %v536 = vunpack.c.l.b16 %v528
      %v537 = vpack.c.b16 %v534, %v533
      %v538 = vpack.c.b16 %v536, %v535
      %539 = vrot.lane.b32.xlu0 %v287, 125
      %v540 = vpop.permute.xlu0 %539
      %541 = vrot.lane.b32.xlu0 %v288, 125
      %v542 = vpop.permute.xlu0 %541
      %543 = vrot.lane.b32.xlu0 %v289, 125
      %v544 = vpop.permute.xlu0 %543
      %545 = vrot.lane.b32.xlu0 %v290, 125
      %v546 = vpop.permute.xlu0 %545
      %vm547 = vcmask 1022976
      %v548 = vsel %vm547, %v540, %v542
      %v549 = vsel %vm547, %v544, %v546
      %v553 = vsel %vm304, %v537, 0
      %v556 = vsel %vm304, %v538, 0
      %558 = vmatprep.subr.bf16.mxu0 0
      %559 = vmatpush1.bf16.msra.mxu0 %v548
      %560 = vmatprep.subr.bf16.mxu0 0
      %561 = vmatpush1.bf16.msra.mxu0 %v549
      %562 = vmatprep.subr.bf16.mxu0 0
      %563 = vmatpush1.bf16.msra.mxu0 0
      %564 = vmatprep.subr.bf16.mxu0 0
      %565 = vmatpush1.bf16.msra.mxu0 0
      %566 = vmatprep.subr.bf16.mxu0 0
      %567 = vmatpush1.bf16.msra.mxu0 0
      %568 = vmatprep.subr.bf16.mxu0 0
      %569 = vmatpush1.bf16.msra.mxu0 0
      %570 = vmatprep.subr.bf16.mxu0 0
      %571 = vmatpush1.bf16.msra.mxu0 0
      %572 = vmatprep.subr.bf16.mxu0 0
      %573 = vmatpush1.bf16.msra.mxu0 0
      %574 = vmatprep.subr.bf16.mxu0 0
      %575 = vmatpush1.bf16.msra.mxu0 0
      %576 = vmatprep.subr.bf16.mxu0 0
      %577 = vmatpush1.bf16.msra.mxu0 0
      %578 = vmatprep.subr.bf16.mxu0 0
      %579 = vmatpush1.bf16.msra.mxu0 0
      %580 = vmatprep.subr.bf16.mxu0 0
      %581 = vmatpush1.bf16.msra.mxu0 0
      %582 = vmatprep.subr.bf16.mxu0 0
      %583 = vmatpush1.bf16.msra.mxu0 0
      %584 = vmatprep.subr.bf16.mxu0 0
      %585 = vmatpush1.bf16.msra.mxu0 0
      %586 = vmatprep.subr.bf16.mxu0 0
      %587 = vmatpush1.bf16.msra.mxu0 0
      %588 = vmatprep.subr.bf16.mxu0 0
      %589 = vmatpush1.bf16.msra.mxu0 0
      %590 = vmatprep.mubr.bf16.mxu0 0
      %591 = vmatmul.mubr.bf16.gmra.mrb[0].mxu0 %v553
      %v592 = vpop.f32.mrb[0].mxu0
      %v593 = vadd.f32 0.0, %v592
      %v594 = vpop.f32.mrb[0].mxu0
      %v595 = vpop.f32.mrb[0].mxu0
      %v596 = vadd.f32 0.0, %v595
      %v597 = vpop.f32.mrb[0].mxu0
      %598 = vmatprep.mubr.bf16.mxu0 0
      %599 = vmatmul.mubr.bf16.gmra.mrb[0].mxu0 %v556
      %v600 = vpop.f32.mrb[0].mxu0
      %v601 = vadd.f32 0.0, %v600
      %v602 = vpop.f32.mrb[0].mxu0
      %v603 = vpop.f32.mrb[0].mxu0
      %v604 = vadd.f32 0.0, %v603
      %v605 = vpop.f32.mrb[0].mxu0
      %606 = vdwg.mxu0
      %v607 = vadd.f32 %v520, %v593
      %v608 = vadd.f32 %v521, %v596
      %v609 = vadd.f32 %v522, %v601
      %v610 = vadd.f32 %v523, %v604
      %s611 = scalar_lea.vmem %s232, 64
      %v612 = vld [vmem:[%s611] sm:$0xf]
      %v613 = vld [vmem:[%s611 + $0x4] sm:$0xf]
      %v614 = vld [vmem:[%s611 + $0x8] sm:$0xf]
      %v615 = vld [vmem:[%s611 + $0xc] sm:$0xf]
      %v620 = vunpack.c.l.b16 %v612
      %v621 = vunpack.c.l.b16 %v613
      %v622 = vunpack.c.l.b16 %v614
      %v623 = vunpack.c.l.b16 %v615
      %v624 = vpack.c.b16 %v621, %v620
      %v625 = vpack.c.b16 %v623, %v622
      %626 = vrot.lane.b32.xlu0 %v287, 124
      %v627 = vpop.permute.xlu0 %626
      %628 = vrot.lane.b32.xlu0 %v288, 124
      %v629 = vpop.permute.xlu0 %628
      %630 = vrot.lane.b32.xlu0 %v289, 124
      %v631 = vpop.permute.xlu0 %630
      %632 = vrot.lane.b32.xlu0 %v290, 124
      %v633 = vpop.permute.xlu0 %632
      %vm634 = vcmask 1014784
      %v635 = vsel %vm634, %v627, %v629
      %v636 = vsel %vm634, %v631, %v633
      %v640 = vsel %vm304, %v624, 0
      %v643 = vsel %vm304, %v625, 0
      %645 = vmatprep.subr.bf16.mxu0 0
      %646 = vmatpush1.bf16.msra.mxu0 %v635
      %647 = vmatprep.subr.bf16.mxu0 0
      %648 = vmatpush1.bf16.msra.mxu0 %v636
      %649 = vmatprep.subr.bf16.mxu0 0
      %650 = vmatpush1.bf16.msra.mxu0 0
      %651 = vmatprep.subr.bf16.mxu0 0
      %652 = vmatpush1.bf16.msra.mxu0 0
      %653 = vmatprep.subr.bf16.mxu0 0
      %654 = vmatpush1.bf16.msra.mxu0 0
      %655 = vmatprep.subr.bf16.mxu0 0
      %656 = vmatpush1.bf16.msra.mxu0 0
      %657 = vmatprep.subr.bf16.mxu0 0
      %658 = vmatpush1.bf16.msra.mxu0 0
      %659 = vmatprep.subr.bf16.mxu0 0
      %660 = vmatpush1.bf16.msra.mxu0 0
      %661 = vmatprep.subr.bf16.mxu0 0
      %662 = vmatpush1.bf16.msra.mxu0 0
      %663 = vmatprep.subr.bf16.mxu0 0
      %664 = vmatpush1.bf16.msra.mxu0 0
      %665 = vmatprep.subr.bf16.mxu0 0
      %666 = vmatpush1.bf16.msra.mxu0 0
      %667 = vmatprep.subr.bf16.mxu0 0
      %668 = vmatpush1.bf16.msra.mxu0 0
      %669 = vmatprep.subr.bf16.mxu0 0
      %670 = vmatpush1.bf16.msra.mxu0 0
      %671 = vmatprep.subr.bf16.mxu0 0
      %672 = vmatpush1.bf16.msra.mxu0 0
      %673 = vmatprep.subr.bf16.mxu0 0
      %674 = vmatpush1.bf16.msra.mxu0 0
      %675 = vmatprep.subr.bf16.mxu0 0
      %676 = vmatpush1.bf16.msra.mxu0 0
      %677 = vmatprep.mubr.bf16.mxu0 0
      %678 = vmatmul.mubr.bf16.gmra.mrb[0].mxu0 %v640
      %v679 = vpop.f32.mrb[0].mxu0
      %v680 = vadd.f32 0.0, %v679
      %v681 = vpop.f32.mrb[0].mxu0
      %v682 = vpop.f32.mrb[0].mxu0
      %v683 = vadd.f32 0.0, %v682
      %v684 = vpop.f32.mrb[0].mxu0
      %685 = vmatprep.mubr.bf16.mxu0 0
      %686 = vmatmul.mubr.bf16.gmra.mrb[0].mxu0 %v643
      %v687 = vpop.f32.mrb[0].mxu0
      %v688 = vadd.f32 0.0, %v687
      %v689 = vpop.f32.mrb[0].mxu0
      %v690 = vpop.f32.mrb[0].mxu0
      %v691 = vadd.f32 0.0, %v690
      %v692 = vpop.f32.mrb[0].mxu0
      %693 = vdwg.mxu0
      %v694 = vadd.f32 %v607, %v680
      %v695 = vadd.f32 %v608, %v683
      %v696 = vadd.f32 %v609, %v688
      %v697 = vadd.f32 %v610, %v691
      %s698 = scalar_lea.vmem %s232, 80
      %v699 = vld [vmem:[%s698] sm:$0xf]
      %v700 = vld [vmem:[%s698 + $0x4] sm:$0xf]
      %v701 = vld [vmem:[%s698 + $0x8] sm:$0xf]
      %v702 = vld [vmem:[%s698 + $0xc] sm:$0xf]
      %v707 = vunpack.c.l.b16 %v699
      %v708 = vunpack.c.l.b16 %v700
      %v709 = vunpack.c.l.b16 %v701
      %v710 = vunpack.c.l.b16 %v702
      %v711 = vpack.c.b16 %v708, %v707
      %v712 = vpack.c.b16 %v710, %v709
      %713 = vrot.lane.b32.xlu0 %v287, 123
      %v714 = vpop.permute.xlu0 %713
      %715 = vrot.lane.b32.xlu0 %v288, 123
      %v716 = vpop.permute.xlu0 %715
      %717 = vrot.lane.b32.xlu0 %v289, 123
      %v718 = vpop.permute.xlu0 %717
      %719 = vrot.lane.b32.xlu0 %v290, 123
      %v720 = vpop.permute.xlu0 %719
      %vm721 = vcmask 1006592
      %v722 = vsel %vm721, %v714, %v716
      %v723 = vsel %vm721, %v718, %v720
      %v727 = vsel %vm304, %v711, 0
      %v730 = vsel %vm304, %v712, 0
      %732 = vmatprep.subr.bf16.mxu0 0
      %733 = vmatpush1.bf16.msra.mxu0 %v722
      %734 = vmatprep.subr.bf16.mxu0 0
      %735 = vmatpush1.bf16.msra.mxu0 %v723
      %736 = vmatprep.subr.bf16.mxu0 0
      %737 = vmatpush1.bf16.msra.mxu0 0
      %738 = vmatprep.subr.bf16.mxu0 0
      %739 = vmatpush1.bf16.msra.mxu0 0
      %740 = vmatprep.subr.bf16.mxu0 0
      %741 = vmatpush1.bf16.msra.mxu0 0
      %742 = vmatprep.subr.bf16.mxu0 0
      %743 = vmatpush1.bf16.msra.mxu0 0
      %744 = vmatprep.subr.bf16.mxu0 0
      %745 = vmatpush1.bf16.msra.mxu0 0
      %746 = vmatprep.subr.bf16.mxu0 0
      %747 = vmatpush1.bf16.msra.mxu0 0
      %748 = vmatprep.subr.bf16.mxu0 0
      %749 = vmatpush1.bf16.msra.mxu0 0
      %750 = vmatprep.subr.bf16.mxu0 0
      %751 = vmatpush1.bf16.msra.mxu0 0
      %752 = vmatprep.subr.bf16.mxu0 0
      %753 = vmatpush1.bf16.msra.mxu0 0
      %754 = vmatprep.subr.bf16.mxu0 0
      %755 = vmatpush1.bf16.msra.mxu0 0
      %756 = vmatprep.subr.bf16.mxu0 0
      %757 = vmatpush1.bf16.msra.mxu0 0
      %758 = vmatprep.subr.bf16.mxu0 0
      %759 = vmatpush1.bf16.msra.mxu0 0
      %760 = vmatprep.subr.bf16.mxu0 0
      %761 = vmatpush1.bf16.msra.mxu0 0
      %762 = vmatprep.subr.bf16.mxu0 0
      %763 = vmatpush1.bf16.msra.mxu0 0
      %764 = vmatprep.mubr.bf16.mxu0 0
      %765 = vmatmul.mubr.bf16.gmra.mrb[0].mxu0 %v727
      %v766 = vpop.f32.mrb[0].mxu0
      %v767 = vadd.f32 0.0, %v766
      %v768 = vpop.f32.mrb[0].mxu0
      %v769 = vpop.f32.mrb[0].mxu0
      %v770 = vadd.f32 0.0, %v769
      %v771 = vpop.f32.mrb[0].mxu0
      %772 = vmatprep.mubr.bf16.mxu0 0
      %773 = vmatmul.mubr.bf16.gmra.mrb[0].mxu0 %v730
      %v774 = vpop.f32.mrb[0].mxu0
      %v775 = vadd.f32 0.0, %v774
      %v776 = vpop.f32.mrb[0].mxu0
      %v777 = vpop.f32.mrb[0].mxu0
      %v778 = vadd.f32 0.0, %v777
      %v779 = vpop.f32.mrb[0].mxu0
      %780 = vdwg.mxu0
      %v781 = vadd.f32 %v694, %v767
      %v782 = vadd.f32 %v695, %v770
      %v783 = vadd.f32 %v696, %v775
      %v784 = vadd.f32 %v697, %v778
      %s785 = scalar_lea.vmem %s232, 96
      %v786 = vld [vmem:[%s785] sm:$0xf]
      %v787 = vld [vmem:[%s785 + $0x4] sm:$0xf]
      %v788 = vld [vmem:[%s785 + $0x8] sm:$0xf]
      %v789 = vld [vmem:[%s785 + $0xc] sm:$0xf]
      %v794 = vunpack.c.l.b16 %v786
      %v795 = vunpack.c.l.b16 %v787
      %v796 = vunpack.c.l.b16 %v788
      %v797 = vunpack.c.l.b16 %v789
      %v798 = vpack.c.b16 %v795, %v794
      %v799 = vpack.c.b16 %v797, %v796
      %800 = vrot.lane.b32.xlu0 %v287, 122
      %v801 = vpop.permute.xlu0 %800
      %802 = vrot.lane.b32.xlu0 %v288, 122
      %v803 = vpop.permute.xlu0 %802
      %804 = vrot.lane.b32.xlu0 %v289, 122
      %v805 = vpop.permute.xlu0 %804
      %806 = vrot.lane.b32.xlu0 %v290, 122
      %v807 = vpop.permute.xlu0 %806
      %vm808 = vcmask 998400
      %v809 = vsel %vm808, %v801, %v803
      %v810 = vsel %vm808, %v805, %v807
      %v814 = vsel %vm304, %v798, 0
      %v817 = vsel %vm304, %v799, 0
      %819 = vmatprep.subr.bf16.mxu0 0
      %820 = vmatpush1.bf16.msra.mxu0 %v809
      %821 = vmatprep.subr.bf16.mxu0 0
      %822 = vmatpush1.bf16.msra.mxu0 %v810
      %823 = vmatprep.subr.bf16.mxu0 0
      %824 = vmatpush1.bf16.msra.mxu0 0
      %825 = vmatprep.subr.bf16.mxu0 0
      %826 = vmatpush1.bf16.msra.mxu0 0
      %827 = vmatprep.subr.bf16.mxu0 0
      %828 = vmatpush1.bf16.msra.mxu0 0
      %829 = vmatprep.subr.bf16.mxu0 0
      %830 = vmatpush1.bf16.msra.mxu0 0
      %831 = vmatprep.subr.bf16.mxu0 0
      %832 = vmatpush1.bf16.msra.mxu0 0
      %833 = vmatprep.subr.bf16.mxu0 0
      %834 = vmatpush1.bf16.msra.mxu0 0
      %835 = vmatprep.subr.bf16.mxu0 0
      %836 = vmatpush1.bf16.msra.mxu0 0
      %837 = vmatprep.subr.bf16.mxu0 0
      %838 = vmatpush1.bf16.msra.mxu0 0
      %839 = vmatprep.subr.bf16.mxu0 0
      %840 = vmatpush1.bf16.msra.mxu0 0
      %841 = vmatprep.subr.bf16.mxu0 0
      %842 = vmatpush1.bf16.msra.mxu0 0
      %843 = vmatprep.subr.bf16.mxu0 0
      %844 = vmatpush1.bf16.msra.mxu0 0
      %845 = vmatprep.subr.bf16.mxu0 0
      %846 = vmatpush1.bf16.msra.mxu0 0
      %847 = vmatprep.subr.bf16.mxu0 0
      %848 = vmatpush1.bf16.msra.mxu0 0
      %849 = vmatprep.subr.bf16.mxu0 0
      %850 = vmatpush1.bf16.msra.mxu0 0
      %851 = vmatprep.mubr.bf16.mxu0 0
      %852 = vmatmul.mubr.bf16.gmra.mrb[0].mxu0 %v814
      %v853 = vpop.f32.mrb[0].mxu0
      %v854 = vadd.f32 0.0, %v853
      %v855 = vpop.f32.mrb[0].mxu0
      %v856 = vpop.f32.mrb[0].mxu0
      %v857 = vadd.f32 0.0, %v856
      %v858 = vpop.f32.mrb[0].mxu0
      %859 = vmatprep.mubr.bf16.mxu0 0
      %860 = vmatmul.mubr.bf16.gmra.mrb[0].mxu0 %v817
      %v861 = vpop.f32.mrb[0].mxu0
      %v862 = vadd.f32 0.0, %v861
      %v863 = vpop.f32.mrb[0].mxu0
      %v864 = vpop.f32.mrb[0].mxu0
      %v865 = vadd.f32 0.0, %v864
      %v866 = vpop.f32.mrb[0].mxu0
      %867 = vdwg.mxu0
      %v868 = vadd.f32 %v781, %v854
      %v869 = vadd.f32 %v782, %v857
      %v870 = vadd.f32 %v783, %v862
      %v871 = vadd.f32 %v784, %v865
      %s872 = scalar_lea.vmem %s232, 112
      %v873 = vld [vmem:[%s872] sm:$0xf]
      %v874 = vld [vmem:[%s872 + $0x4] sm:$0xf]
      %v875 = vld [vmem:[%s872 + $0x8] sm:$0xf]
      %v876 = vld [vmem:[%s872 + $0xc] sm:$0xf]
      %v881 = vunpack.c.l.b16 %v873
      %v882 = vunpack.c.l.b16 %v874
      %v883 = vunpack.c.l.b16 %v875
      %v884 = vunpack.c.l.b16 %v876
      %v885 = vpack.c.b16 %v882, %v881
      %v886 = vpack.c.b16 %v884, %v883
      %887 = vrot.lane.b32.xlu0 %v287, 121
      %v888 = vpop.permute.xlu0 %887
      %889 = vrot.lane.b32.xlu0 %v288, 121
      %v890 = vpop.permute.xlu0 %889
      %891 = vrot.lane.b32.xlu0 %v289, 121
      %v892 = vpop.permute.xlu0 %891
      %893 = vrot.lane.b32.xlu0 %v290, 121
      %v894 = vpop.permute.xlu0 %893
      %vm895 = vcmask 990208
      %v896 = vsel %vm895, %v888, %v890
      %v897 = vsel %vm895, %v892, %v894
      %v901 = vsel %vm304, %v885, 0
      %v904 = vsel %vm304, %v886, 0
      %906 = vmatprep.subr.bf16.mxu0 0
      %907 = vmatpush1.bf16.msra.mxu0 %v896
      %908 = vmatprep.subr.bf16.mxu0 0
      %909 = vmatpush1.bf16.msra.mxu0 %v897
      %910 = vmatprep.subr.bf16.mxu0 0
      %911 = vmatpush1.bf16.msra.mxu0 0
      %912 = vmatprep.subr.bf16.mxu0 0
      %913 = vmatpush1.bf16.msra.mxu0 0
      %914 = vmatprep.subr.bf16.mxu0 0
      %915 = vmatpush1.bf16.msra.mxu0 0
      %916 = vmatprep.subr.bf16.mxu0 0
      %917 = vmatpush1.bf16.msra.mxu0 0
      %918 = vmatprep.subr.bf16.mxu0 0
      %919 = vmatpush1.bf16.msra.mxu0 0
      %920 = vmatprep.subr.bf16.mxu0 0
      %921 = vmatpush1.bf16.msra.mxu0 0
      %922 = vmatprep.subr.bf16.mxu0 0
      %923 = vmatpush1.bf16.msra.mxu0 0
      %924 = vmatprep.subr.bf16.mxu0 0
      %925 = vmatpush1.bf16.msra.mxu0 0
      %926 = vmatprep.subr.bf16.mxu0 0
      %927 = vmatpush1.bf16.msra.mxu0 0
      %928 = vmatprep.subr.bf16.mxu0 0
      %929 = vmatpush1.bf16.msra.mxu0 0
      %930 = vmatprep.subr.bf16.mxu0 0
      %931 = vmatpush1.bf16.msra.mxu0 0
      %932 = vmatprep.subr.bf16.mxu0 0
      %933 = vmatpush1.bf16.msra.mxu0 0
      %934 = vmatprep.subr.bf16.mxu0 0
      %935 = vmatpush1.bf16.msra.mxu0 0
      %936 = vmatprep.subr.bf16.mxu0 0
      %937 = vmatpush1.bf16.msra.mxu0 0
      %938 = vmatprep.mubr.bf16.mxu0 0
      %939 = vmatmul.mubr.bf16.gmra.mrb[0].mxu0 %v901
      %v940 = vpop.f32.mrb[0].mxu0
      %v941 = vadd.f32 0.0, %v940
      %v942 = vpop.f32.mrb[0].mxu0
      %v943 = vpop.f32.mrb[0].mxu0
      %v944 = vadd.f32 0.0, %v943
      %v945 = vpop.f32.mrb[0].mxu0
      %946 = vmatprep.mubr.bf16.mxu0 0
      %947 = vmatmul.mubr.bf16.gmra.mrb[0].mxu0 %v904
      %v948 = vpop.f32.mrb[0].mxu0
      %v949 = vadd.f32 0.0, %v948
      %v950 = vpop.f32.mrb[0].mxu0
      %v951 = vpop.f32.mrb[0].mxu0
      %v952 = vadd.f32 0.0, %v951
      %v953 = vpop.f32.mrb[0].mxu0
      %954 = vdwg.mxu0
      %v955 = vadd.f32 %v868, %v941
      %v956 = vadd.f32 %v869, %v944
      %v957 = vadd.f32 %v870, %v949
      %v958 = vadd.f32 %v871, %v952
      %s959 = scalar_lea.vmem %s232, 128
      %v960 = vld [vmem:[%s959] sm:$0xf]
      %v961 = vld [vmem:[%s959 + $0x4] sm:$0xf]
      %v962 = vld [vmem:[%s959 + $0x8] sm:$0xf]
      %v963 = vld [vmem:[%s959 + $0xc] sm:$0xf]
      %v968 = vunpack.c.l.b16 %v960
      %v969 = vunpack.c.l.b16 %v961
      %v970 = vunpack.c.l.b16 %v962
      %v971 = vunpack.c.l.b16 %v963
      %v972 = vpack.c.b16 %v969, %v968
      %v973 = vpack.c.b16 %v971, %v970
      %974 = vrot.lane.b32.xlu0 %v287, 120
      %v975 = vpop.permute.xlu0 %974
      %976 = vrot.lane.b32.xlu0 %v288, 120
      %v977 = vpop.permute.xlu0 %976
      %978 = vrot.lane.b32.xlu0 %v289, 120
      %v979 = vpop.permute.xlu0 %978
      %980 = vrot.lane.b32.xlu0 %v290, 120
      %v981 = vpop.permute.xlu0 %980
      %vm982 = vcmask 982016
      %v983 = vsel %vm982, %v975, %v977
      %v984 = vsel %vm982, %v979, %v981
      %v988 = vsel %vm304, %v972, 0
      %v991 = vsel %vm304, %v973, 0
      %993 = vmatprep.subr.bf16.mxu0 0
      %994 = vmatpush1.bf16.msra.mxu0 %v983
      %995 = vmatprep.subr.bf16.mxu0 0
      %996 = vmatpush1.bf16.msra.mxu0 %v984
      %997 = vmatprep.subr.bf16.mxu0 0
      %998 = vmatpush1.bf16.msra.mxu0 0
      %999 = vmatprep.subr.bf16.mxu0 0
      %1000 = vmatpush1.bf16.msra.mxu0 0
      %1001 = vmatprep.subr.bf16.mxu0 0
      %1002 = vmatpush1.bf16.msra.mxu0 0
      %1003 = vmatprep.subr.bf16.mxu0 0
      %1004 = vmatpush1.bf16.msra.mxu0 0
      %1005 = vmatprep.subr.bf16.mxu0 0
      %1006 = vmatpush1.bf16.msra.mxu0 0
      %1007 = vmatprep.subr.bf16.mxu0 0
      %1008 = vmatpush1.bf16.msra.mxu0 0
      %1009 = vmatprep.subr.bf16.mxu0 0
      %1010 = vmatpush1.bf16.msra.mxu0 0
      %1011 = vmatprep.subr.bf16.mxu0 0
      %1012 = vmatpush1.bf16.msra.mxu0 0
      %1013 = vmatprep.subr.bf16.mxu0 0
      %1014 = vmatpush1.bf16.msra.mxu0 0
      %1015 = vmatprep.subr.bf16.mxu0 0
      %1016 = vmatpush1.bf16.msra.mxu0 0
      %1017 = vmatprep.subr.bf16.mxu0 0
      %1018 = vmatpush1.bf16.msra.mxu0 0
      %1019 = vmatprep.subr.bf16.mxu0 0
      %1020 = vmatpush1.bf16.msra.mxu0 0
      %1021 = vmatprep.subr.bf16.mxu0 0
      %1022 = vmatpush1.bf16.msra.mxu0 0
      %1023 = vmatprep.subr.bf16.mxu0 0
      %1024 = vmatpush1.bf16.msra.mxu0 0
      %1025 = vmatprep.mubr.bf16.mxu0 0
      %1026 = vmatmul.mubr.bf16.gmra.mrb[0].mxu0 %v988
      %v1027 = vpop.f32.mrb[0].mxu0
      %v1028 = vadd.f32 0.0, %v1027
      %v1029 = vpop.f32.mrb[0].mxu0
      %v1030 = vpop.f32.mrb[0].mxu0
      %v1031 = vadd.f32 0.0, %v1030
      %v1032 = vpop.f32.mrb[0].mxu0
      %1033 = vmatprep.mubr.bf16.mxu0 0
      %1034 = vmatmul.mubr.bf16.gmra.mrb[0].mxu0 %v991
      %v1035 = vpop.f32.mrb[0].mxu0
      %v1036 = vadd.f32 0.0, %v1035
      %v1037 = vpop.f32.mrb[0].mxu0
      %v1038 = vpop.f32.mrb[0].mxu0
      %v1039 = vadd.f32 0.0, %v1038
      %v1040 = vpop.f32.mrb[0].mxu0
      %1041 = vdwg.mxu0
      %v1042 = vadd.f32 %v955, %v1028
      %v1043 = vadd.f32 %v956, %v1031
      %v1044 = vadd.f32 %v957, %v1036
      %v1045 = vadd.f32 %v958, %v1039
      %s1046 = scalar_lea.vmem %s232, 144
      %v1047 = vld [vmem:[%s1046] sm:$0xf]
      %v1048 = vld [vmem:[%s1046 + $0x4] sm:$0xf]
      %v1049 = vld [vmem:[%s1046 + $0x8] sm:$0xf]
      %v1050 = vld [vmem:[%s1046 + $0xc] sm:$0xf]
      %v1055 = vunpack.c.l.b16 %v1047
      %v1056 = vunpack.c.l.b16 %v1048
      %v1057 = vunpack.c.l.b16 %v1049
      %v1058 = vunpack.c.l.b16 %v1050
      %v1059 = vpack.c.b16 %v1056, %v1055
      %v1060 = vpack.c.b16 %v1058, %v1057
      %1061 = vrot.lane.b32.xlu0 %v287, 119
      %v1062 = vpop.permute.xlu0 %1061
      %1063 = vrot.lane.b32.xlu0 %v288, 119
      %v1064 = vpop.permute.xlu0 %1063
      %1065 = vrot.lane.b32.xlu0 %v289, 119
      %v1066 = vpop.permute.xlu0 %1065
      %1067 = vrot.lane.b32.xlu0 %v290, 119
      %v1068 = vpop.permute.xlu0 %1067
      %vm1069 = vcmask 973824
      %v1070 = vsel %vm1069, %v1062, %v1064
      %v1071 = vsel %vm1069, %v1066, %v1068
      %v1075 = vsel %vm304, %v1059, 0
      %v1078 = vsel %vm304, %v1060, 0
      %1080 = vmatprep.subr.bf16.mxu0 0
      %1081 = vmatpush1.bf16.msra.mxu0 %v1070
      %1082 = vmatprep.subr.bf16.mxu0 0
      %1083 = vmatpush1.bf16.msra.mxu0 %v1071
      %1084 = vmatprep.subr.bf16.mxu0 0
      %1085 = vmatpush1.bf16.msra.mxu0 0
      %1086 = vmatprep.subr.bf16.mxu0 0
      %1087 = vmatpush1.bf16.msra.mxu0 0
      %1088 = vmatprep.subr.bf16.mxu0 0
      %1089 = vmatpush1.bf16.msra.mxu0 0
      %1090 = vmatprep.subr.bf16.mxu0 0
      %1091 = vmatpush1.bf16.msra.mxu0 0
      %1092 = vmatprep.subr.bf16.mxu0 0
      %1093 = vmatpush1.bf16.msra.mxu0 0
      %1094 = vmatprep.subr.bf16.mxu0 0
      %1095 = vmatpush1.bf16.msra.mxu0 0
      %1096 = vmatprep.subr.bf16.mxu0 0
      %1097 = vmatpush1.bf16.msra.mxu0 0
      %1098 = vmatprep.subr.bf16.mxu0 0
      %1099 = vmatpush1.bf16.msra.mxu0 0
      %1100 = vmatprep.subr.bf16.mxu0 0
      %1101 = vmatpush1.bf16.msra.mxu0 0
      %1102 = vmatprep.subr.bf16.mxu0 0
      %1103 = vmatpush1.bf16.msra.mxu0 0
      %1104 = vmatprep.subr.bf16.mxu0 0
      %1105 = vmatpush1.bf16.msra.mxu0 0
      %1106 = vmatprep.subr.bf16.mxu0 0
      %1107 = vmatpush1.bf16.msra.mxu0 0
      %1108 = vmatprep.subr.bf16.mxu0 0
      %1109 = vmatpush1.bf16.msra.mxu0 0
      %1110 = vmatprep.subr.bf16.mxu0 0
      %1111 = vmatpush1.bf16.msra.mxu0 0
      %1112 = vmatprep.mubr.bf16.mxu0 0
      %1113 = vmatmul.mubr.bf16.gmra.mrb[0].mxu0 %v1075
      %v1114 = vpop.f32.mrb[0].mxu0
      %v1115 = vadd.f32 0.0, %v1114
      %v1116 = vpop.f32.mrb[0].mxu0
      %v1117 = vpop.f32.mrb[0].mxu0
      %v1118 = vadd.f32 0.0, %v1117
      %v1119 = vpop.f32.mrb[0].mxu0
      %1120 = vmatprep.mubr.bf16.mxu0 0
      %1121 = vmatmul.mubr.bf16.gmra.mrb[0].mxu0 %v1078
      %v1122 = vpop.f32.mrb[0].mxu0
      %v1123 = vadd.f32 0.0, %v1122
      %v1124 = vpop.f32.mrb[0].mxu0
      %v1125 = vpop.f32.mrb[0].mxu0
      %v1126 = vadd.f32 0.0, %v1125
      %v1127 = vpop.f32.mrb[0].mxu0
      %1128 = vdwg.mxu0
      %v1129 = vadd.f32 %v1042, %v1115
      %v1130 = vadd.f32 %v1043, %v1118
      %v1131 = vadd.f32 %v1044, %v1123
      %v1132 = vadd.f32 %v1045, %v1126
      %s1133 = scalar_lea.vmem %s232, 160
      %v1134 = vld [vmem:[%s1133] sm:$0xf]
      %v1135 = vld [vmem:[%s1133 + $0x4] sm:$0xf]
      %v1136 = vld [vmem:[%s1133 + $0x8] sm:$0xf]
      %v1137 = vld [vmem:[%s1133 + $0xc] sm:$0xf]
      %v1142 = vunpack.c.l.b16 %v1134
      %v1143 = vunpack.c.l.b16 %v1135
      %v1144 = vunpack.c.l.b16 %v1136
      %v1145 = vunpack.c.l.b16 %v1137
      %v1146 = vpack.c.b16 %v1143, %v1142
      %v1147 = vpack.c.b16 %v1145, %v1144
      %1148 = vrot.lane.b32.xlu0 %v287, 118
      %v1149 = vpop.permute.xlu0 %1148
      %1150 = vrot.lane.b32.xlu0 %v288, 118
      %v1151 = vpop.permute.xlu0 %1150
      %1152 = vrot.lane.b32.xlu0 %v289, 118
      %v1153 = vpop.permute.xlu0 %1152
      %1154 = vrot.lane.b32.xlu0 %v290, 118
      %v1155 = vpop.permute.xlu0 %1154
      %vm1156 = vcmask 965632
      %v1157 = vsel %vm1156, %v1149, %v1151
      %v1158 = vsel %vm1156, %v1153, %v1155
      %v1162 = vsel %vm304, %v1146, 0
      %v1165 = vsel %vm304, %v1147, 0
      %1167 = vmatprep.subr.bf16.mxu0 0
      %1168 = vmatpush1.bf16.msra.mxu0 %v1157
      %1169 = vmatprep.subr.bf16.mxu0 0
      %1170 = vmatpush1.bf16.msra.mxu0 %v1158
      %1171 = vmatprep.subr.bf16.mxu0 0
      %1172 = vmatpush1.bf16.msra.mxu0 0
      %1173 = vmatprep.subr.bf16.mxu0 0
      %1174 = vmatpush1.bf16.msra.mxu0 0
      %1175 = vmatprep.subr.bf16.mxu0 0
      %1176 = vmatpush1.bf16.msra.mxu0 0
      %1177 = vmatprep.subr.bf16.mxu0 0
      %1178 = vmatpush1.bf16.msra.mxu0 0
      %1179 = vmatprep.subr.bf16.mxu0 0
      %1180 = vmatpush1.bf16.msra.mxu0 0
      %1181 = vmatprep.subr.bf16.mxu0 0
      %1182 = vmatpush1.bf16.msra.mxu0 0
      %1183 = vmatprep.subr.bf16.mxu0 0
      %1184 = vmatpush1.bf16.msra.mxu0 0
      %1185 = vmatprep.subr.bf16.mxu0 0
      %1186 = vmatpush1.bf16.msra.mxu0 0
      %1187 = vmatprep.subr.bf16.mxu0 0
      %1188 = vmatpush1.bf16.msra.mxu0 0
      %1189 = vmatprep.subr.bf16.mxu0 0
      %1190 = vmatpush1.bf16.msra.mxu0 0
      %1191 = vmatprep.subr.bf16.mxu0 0
      %1192 = vmatpush1.bf16.msra.mxu0 0
      %1193 = vmatprep.subr.bf16.mxu0 0
      %1194 = vmatpush1.bf16.msra.mxu0 0
      %1195 = vmatprep.subr.bf16.mxu0 0
      %1196 = vmatpush1.bf16.msra.mxu0 0
      %1197 = vmatprep.subr.bf16.mxu0 0
      %1198 = vmatpush1.bf16.msra.mxu0 0
      %1199 = vmatprep.mubr.bf16.mxu0 0
      %1200 = vmatmul.mubr.bf16.gmra.mrb[0].mxu0 %v1162
      %v1201 = vpop.f32.mrb[0].mxu0
      %v1202 = vadd.f32 0.0, %v1201
      %v1203 = vpop.f32.mrb[0].mxu0
      %v1204 = vpop.f32.mrb[0].mxu0
      %v1205 = vadd.f32 0.0, %v1204
      %v1206 = vpop.f32.mrb[0].mxu0
      %1207 = vmatprep.mubr.bf16.mxu0 0
      %1208 = vmatmul.mubr.bf16.gmra.mrb[0].mxu0 %v1165
      %v1209 = vpop.f32.mrb[0].mxu0
      %v1210 = vadd.f32 0.0, %v1209
      %v1211 = vpop.f32.mrb[0].mxu0
      %v1212 = vpop.f32.mrb[0].mxu0
      %v1213 = vadd.f32 0.0, %v1212
      %v1214 = vpop.f32.mrb[0].mxu0
      %1215 = vdwg.mxu0
      %v1216 = vadd.f32 %v1129, %v1202
      %v1217 = vadd.f32 %v1130, %v1205
      %v1218 = vadd.f32 %v1131, %v1210
      %v1219 = vadd.f32 %v1132, %v1213
      %v1220 = vld [vmem:[%s237] sm:$0xff]
      %v1221 = vld [vmem:[%s237 + $0x8] sm:$0xff]
      %v1222 = vld [vmem:[%s237 + $0x10] sm:$0xff]
      %v1223 = vld [vmem:[%s237 + $0x18] sm:$0xff]
      %1225 = vset.pattern.permute.xlu0 0
      %1226 = vperm.xlu0 %1225, %v1220
      %v1227 = vpop.permute.xlu0 %1226
      %1230 = vset.pattern.permute.xlu0 0
      %1231 = vperm.xlu0 %1230, %v1221
      %v1232 = vpop.permute.xlu0 %1231
      %1235 = vset.pattern.permute.xlu0 0
      %1236 = vperm.xlu0 %1235, %v1222
      %v1237 = vpop.permute.xlu0 %1236
      %1240 = vset.pattern.permute.xlu0 0
      %1241 = vperm.xlu0 %1240, %v1223
      %v1242 = vpop.permute.xlu0 %1241
      %v1244 = vadd.f32 %v1216, %v1227
      %v1245 = vadd.f32 %v1217, %v1232
      %v1246 = vadd.f32 %v1218, %v1237
      %v1247 = vadd.f32 %v1219, %v1242
      %vm1248 = vcmp.ge.f32.partialorder %v1244, 0.0
      %vm1249 = vcmp.ge.f32.partialorder %v1245, 0.0
      %vm1250 = vcmp.ge.f32.partialorder %v1246, 0.0
      %vm1251 = vcmp.ge.f32.partialorder %v1247, 0.0
      %v1252 = vmul.f32 %v1244, 0.2
      %v1253 = vmul.f32 %v1245, 0.2
      %v1254 = vmul.f32 %v1246, 0.2
      %v1255 = vmul.f32 %v1247, 0.2
      %v1256 = vsel %vm1248, %v1244, %v1252
      %v1257 = vsel %vm1249, %v1245, %v1253
      %v1258 = vsel %vm1250, %v1246, %v1254
      %v1259 = vsel %vm1251, %v1247, %v1255
      %1260 = vst [vmem:[%s246] sm:$0xff] %v1256
      %1261 = vst [vmem:[%s246 + $0x8] sm:$0xff] %v1257
      %1262 = vst [vmem:[%s246 + $0x10] sm:$0xff] %v1258
      %1263 = vst [vmem:[%s246 + $0x18] sm:$0xff] %v1259
      %p1264 = scmp.lt.s32.totalorder %s19, 1
      %s1265 = scalar_select %p1264, %s19, 1
      %p1266 = scmp.lt.s32.totalorder %s18, 0
      %s1267 = scalar_select %p1266, %s18, 0
      %s1268 = smul.addr %s1267, 4
      %s1269 = smul.addr %s1265, 4
      %s1270 = sadd.s32 %s1268, %s1269
      %s1271 = smul.addr %s1270, 8
      %s1272 = scalar_lea.vmem %s3, %s1271
      // Predicated region
      $region33: #{forward.18} parent=31 // pred_check
        %p1273 = pneg %p126
      $region34: #{forward.18} parent=31 // pred_check_branch
        %1275 = sbr.rel (%p1273) target = $region36
      $region35: #{forward.18} parent=31 // pred_region
        _
      $region36: #{forward.18} parent=31 // pred_fallthru
        _
    $region32: #{forward.18} parent=5 // pred_fallthru
      _
    %p1276 = scmp.le.s32.totalorder 2, %s9
    // Predicated region
    $region37: #{forward.18} parent=5 // pred_check
      %p1277 = pneg %p1276
    $region38: #{forward.18} parent=5 // pred_check_branch
      %1279 = sbr.rel (%p1277) target = $region40
    $region39: #{forward.18} parent=5 // pred_region
      %s1280 = ssub.s32 %s9, 2
      // Predicated region
      $region41: #{forward.18} parent=39 // pred_check
        %p1281 = pneg %p132
      $region42: #{forward.18} parent=39 // pred_check_branch
        %1283 = sbr.rel (%p1281) target = $region44
      $region43: #{forward.18} parent=39 // pred_region
        %p1284 = scmp.lt.s32.totalorder %s21, 1
        %s1285 = scalar_select %p1284, %s21, 1
        %p1286 = scmp.lt.s32.totalorder %s20, 0
        %s1287 = scalar_select %p1286, %s20, 0
        %s1288 = smul.addr %s1287, 4
        %s1289 = smul.addr %s1285, 4
        %s1290 = sadd.s32 %s1288, %s1289
        %s1291 = smul.addr %s1290, 8
        %s1292 = scalar_lea.vmem %s3, %s1291
      $region44: #{forward.18} parent=39 // pred_fallthru
        _
    $region40: #{forward.18} parent=5 // pred_fallthru
      _
  $region6: #{forward.18} parent=0 // loop_footer
    %s13 = sadd.s32 1, %s9
  $region7: #{forward.18} parent=0 // loop_footer_branch
    %8 = sbr.rel target = $region3
  $region8: #{forward.18} parent=0 // loop_exit
    _

// kernel: forward.19
$region0: #{forward.19}
  #allocation0 [shape = 'u32[]', space=smem, size = 0x4, offset = 0x4, fixed_abs, tag = 'smem constant byte address 0x4 - core index']
  #allocation1 [shape = 'u32[144,128]{1,0:T(1,128)}', space=vmem, size = 0x12000, scoped, tag = 'internal scratch']
  %s0 = inlined_call_operand.vmem [shape: bf16[2,1,64,138], index: 0, kind: input, shape index: {}]
  %s1 = inlined_call_operand.vmem [shape: bf16[1,11,64,64], index: 1, kind: input, shape index: {}]
  %s2 = inlined_call_operand.vmem [shape: f32[1,64,1], index: 2, kind: input, shape index: {}]
  %s3 = inlined_call_operand.vmem [shape: f32[2,1,64,128], index: 3, kind: output, shape index: {}]
  %s4 = sld [smem:[#allocation0]]
  $region45: #{forward.19} parent=0
    _
  %s6 = ssub.s32 1, %s4
  %s7 = scalar_select 0, %s6, %s4
  loop: start=0, step=1, limit=4
  $region2: #{forward.19} parent=0 // loop_pre_header
    _
  $region3: #{forward.19} parent=0 // loop_header
    %s9 = sphi 0, %s13
    %p10 = scmp.ge.s32.totalorder %s9, 4
    %s16 = sphi 0, %s28
    %s17 = sphi 0, %s24
    %s18 = sphi 0, %s16
    %s19 = sphi 0, %s17
    %s20 = sphi 0, %s18
    %s21 = sphi 0, %s19
    %s33 = sphi 0, %s35
    %s36 = sphi 0, %s33
    %s37 = sphi 0, %s36
    %s53 = sphi 0, %s37
    %s59 = sphi 0, %s61
    %s62 = sphi 0, %s59
    %s63 = sphi 0, %s62
    %s79 = sphi 0, %s63
    %s85 = sphi 0, %s87
    %s88 = sphi 0, %s85
    %s89 = sphi 0, %s88
    %s105 = sphi 0, %s89
    %s113 = sphi 0, %s115
    %s116 = sphi 0, %s113
    %s117 = sphi 0, %s116
    %s133 = sphi 0, %s117
  $region4: #{forward.19} parent=0 // loop_header_branch
    %12 = sbr.rel (%p10) target = $region8
  $region5: #{forward.19} parent=0 // loop_body
    %s14 = ssub.s32 %s9, 1
    %s15 = ssub.s32 %s9, 2
    %s22 = sadd.s32 1, %s17
    %p23 = scmp.ge.s32.totalorder %s22, 2
    %s24 = scalar_select %p23, 0, %s22
    %s25 = sadd.s32 1, %s16
    %s26 = scalar_select %p23, %s25, %s16
    %p27 = scmp.ge.s32.totalorder %s26, 1
    %s28 = scalar_select %p27, 0, %s26
    %s29 = ssub.s32 %s17, %s24
    %s30 = ssub.s32 %s16, %s28
    %s31 = sor.u32 %s29, %s30
    %p32 = scmp.eq.s32.totalorder %s31, 0
    %s34 = sadd.s32 %s33, 1
    %s35 = scalar_select %p32, %s33, %s34
    %p38 = pneg %p32
    %p39 = scmp.eq.s32.totalorder %s9, 1
    %p40 = por %p38, %p39
    %p41 = scmp.ne.s32.totalorder %s33, %s36
    %p42 = scmp.eq.s32.totalorder %s9, 0
    %p43 = por %p41, %p42
    %p44 = scmp.ne.s32.totalorder %s33, %s36
    %p45 = scmp.eq.s32.totalorder %s14, 1
    %p46 = por %p44, %p45
    %p47 = scmp.ne.s32.totalorder %s36, %s37
    %p48 = scmp.eq.s32.totalorder %s14, 0
    %p49 = por %p47, %p48
    %p50 = scmp.ne.s32.totalorder %s36, %s37
    %p51 = scmp.eq.s32.totalorder %s15, 1
    %p52 = por %p50, %p51
    %p54 = scmp.ne.s32.totalorder %s37, %s53
    %p55 = scmp.eq.s32.totalorder %s15, 0
    %p56 = por %p54, %p55
    %s57 = ssub.s32 %s16, %s28
    %p58 = scmp.eq.s32.totalorder %s57, 0
    %s60 = sadd.s32 %s59, 1
    %s61 = scalar_select %p58, %s59, %s60
    %p64 = pneg %p58
    %p65 = scmp.eq.s32.totalorder %s9, 1
    %p66 = por %p64, %p65
    %p67 = scmp.ne.s32.totalorder %s59, %s62
    %p68 = scmp.eq.s32.totalorder %s9, 0
    %p69 = por %p67, %p68
    %p70 = scmp.ne.s32.totalorder %s59, %s62
    %p71 = scmp.eq.s32.totalorder %s14, 1
    %p72 = por %p70, %p71
    %p73 = scmp.ne.s32.totalorder %s62, %s63
    %p74 = scmp.eq.s32.totalorder %s14, 0
    %p75 = por %p73, %p74
    %p76 = scmp.ne.s32.totalorder %s62, %s63
    %p77 = scmp.eq.s32.totalorder %s15, 1
    %p78 = por %p76, %p77
    %p80 = scmp.ne.s32.totalorder %s63, %s79
    %p81 = scmp.eq.s32.totalorder %s15, 0
    %p82 = por %p80, %p81
    %s83 = ssub.s32 %s16, %s28
    %p84 = scmp.eq.s32.totalorder %s83, 0
    %s86 = sadd.s32 %s85, 1
    %s87 = scalar_select %p84, %s85, %s86
    %p90 = pneg %p84
    %p91 = scmp.eq.s32.totalorder %s9, 1
    %p92 = por %p90, %p91
    %p93 = scmp.ne.s32.totalorder %s85, %s88
    %p94 = scmp.eq.s32.totalorder %s9, 0
    %p95 = por %p93, %p94
    %p96 = scmp.ne.s32.totalorder %s85, %s88
    %p97 = scmp.eq.s32.totalorder %s14, 1
    %p98 = por %p96, %p97
    %p99 = scmp.ne.s32.totalorder %s88, %s89
    %p100 = scmp.eq.s32.totalorder %s14, 0
    %p101 = por %p99, %p100
    %p102 = scmp.ne.s32.totalorder %s88, %s89
    %p103 = scmp.eq.s32.totalorder %s15, 1
    %p104 = por %p102, %p103
    %p106 = scmp.ne.s32.totalorder %s89, %s105
    %p107 = scmp.eq.s32.totalorder %s15, 0
    %p108 = por %p106, %p107
    %s109 = ssub.s32 %s17, %s24
    %s110 = ssub.s32 %s16, %s28
    %s111 = sor.u32 %s109, %s110
    %p112 = scmp.eq.s32.totalorder %s111, 0
    %s114 = sadd.s32 %s113, 1
    %s115 = scalar_select %p112, %s113, %s114
    %p118 = pneg %p112
    %p119 = scmp.eq.s32.totalorder %s9, 1
    %p120 = por %p118, %p119
    %p121 = scmp.ne.s32.totalorder %s113, %s116
    %p122 = scmp.eq.s32.totalorder %s9, 0
    %p123 = por %p121, %p122
    %p124 = scmp.ne.s32.totalorder %s113, %s116
    %p125 = scmp.eq.s32.totalorder %s14, 1
    %p126 = por %p124, %p125
    %p127 = scmp.ne.s32.totalorder %s116, %s117
    %p128 = scmp.eq.s32.totalorder %s14, 0
    %p129 = por %p127, %p128
    %p130 = scmp.ne.s32.totalorder %s116, %s117
    %p131 = scmp.eq.s32.totalorder %s15, 1
    %p132 = por %p130, %p131
    %p134 = scmp.ne.s32.totalorder %s117, %s133
    %p135 = scmp.eq.s32.totalorder %s15, 0
    %p136 = por %p134, %p135
    %p137 = scmp.le.s32.totalorder 1, %s9
    %p138 = scmp.lt.s32.totalorder %s9, 3
    %p139 = pnand %p137, %p138
    %p140 = pneg %p139
    // Predicated region
    $region9: #{forward.19} parent=5 // pred_check
      _
    $region10: #{forward.19} parent=5 // pred_check_branch
      %142 = sbr.rel (%p139) target = $region12
    $region11: #{forward.19} parent=5 // pred_region
      %s143 = ssub.s32 %s9, 1
      // Predicated region
      $region13: #{forward.19} parent=11 // pred_check
        %p144 = pneg %p75
      $region14: #{forward.19} parent=11 // pred_check_branch
        %146 = sbr.rel (%p144) target = $region16
      $region15: #{forward.19} parent=11 // pred_region
        %p147 = scmp.lt.s32.totalorder %s18, 0
        %s148 = scalar_select %p147, %s18, 0
        %s149 = smul.addr %s148, 88
        %s150 = smul.addr %s149, 4
        %s151 = scalar_lea.vmem %s1, %s150
      $region16: #{forward.19} parent=11 // pred_fallthru
        _
      // Predicated region
      $region17: #{forward.19} parent=11 // pred_check
        %p152 = pneg %p101
      $region18: #{forward.19} parent=11 // pred_check_branch
        %154 = sbr.rel (%p152) target = $region20
      $region19: #{forward.19} parent=11 // pred_region
        %p155 = scmp.lt.s32.totalorder %s18, 0
        %s156 = scalar_select %p155, %s18, 0
        %s157 = smul.addr %s156, 8
        %s158 = smul.addr %s157, 8
        %s159 = scalar_lea.vmem %s2, %s158
      $region20: #{forward.19} parent=11 // pred_fallthru
        _
    $region12: #{forward.19} parent=5 // pred_fallthru
      _
    %p160 = scmp.lt.s32.totalorder %s9, 2
    // Predicated region
    $region21: #{forward.19} parent=5 // pred_check
      %p161 = pneg %p160
    $region22: #{forward.19} parent=5 // pred_check_branch
      %163 = sbr.rel (%p161) target = $region24
    $region23: #{forward.19} parent=5 // pred_region
      // Predicated region
      $region25: #{forward.19} parent=23 // pred_check
        %p164 = pneg %p43
      $region26: #{forward.19} parent=23 // pred_check_branch
        %166 = sbr.rel (%p164) target = $region28
      $region27: #{forward.19} parent=23 // pred_region
        %p167 = scmp.lt.s32.totalorder %s17, 1
        %s168 = scalar_select %p167, %s17, 1
        %p169 = scmp.lt.s32.totalorder %s16, 0
        %s170 = scalar_select %p169, %s16, 0
        %s171 = smul.addr %s170, 16
        %s172 = smul.addr %s168, 16
        %s173 = sadd.s32 %s171, %s172
        %s174 = smul.addr %s173, 4
        %s175 = scalar_lea.vmem %s0, %s174
      $region28: #{forward.19} parent=23 // pred_fallthru
        _
    $region24: #{forward.19} parent=5 // pred_fallthru
      _
    %p176 = scmp.le.s32.totalorder 1, %s9
    %p177 = scmp.lt.s32.totalorder %s9, 3
    %p178 = pnand %p176, %p177
    %p179 = pneg %p178
    // Predicated region
    $region29: #{forward.19} parent=5 // pred_check
      _
    $region30: #{forward.19} parent=5 // pred_check_branch
      %181 = sbr.rel (%p178) target = $region32
    $region31: #{forward.19} parent=5 // pred_region
      %s182 = ssub.s32 %s9, 1
      %p183 = scmp.lt.s32.totalorder %s19, 1
      %s184 = scalar_select %p183, %s19, 1
      %p185 = scmp.lt.s32.totalorder %s18, 0
      %s186 = scalar_select %p185, %s18, 0
      %s187 = smul.addr %s186, 16
      %s188 = smul.addr %s184, 16
      %s189 = sadd.s32 %s187, %s188
      %s190 = smul.addr %s189, 4
      %s191 = scalar_lea.vmem %s0, %s190
      %p192 = pneg %p49
      %p193 = pneg %p46
      %p194 = scmp.lt.s32.totalorder %s18, 0
      %s195 = scalar_select %p194, %s18, 0
      %s196 = smul.addr %s195, 88
      %s197 = smul.addr %s196, 4
      %s198 = scalar_lea.vmem %s1, %s197
      %p199 = pneg %p75
      %p200 = pneg %p72
      %p201 = scmp.lt.s32.totalorder %s18, 0
      %s202 = scalar_select %p201, %s18, 0
      %s203 = smul.addr %s202, 8
      %s204 = smul.addr %s203, 8
      %s205 = scalar_lea.vmem %s2, %s204
      %p206 = pneg %p101
      %p207 = pneg %p98
      %p208 = pneg %p129
      %p209 = pneg %p126
      %p210 = scmp.lt.s32.totalorder %s19, 1
      %s211 = scalar_select %p210, %s19, 1
      %p212 = scmp.lt.s32.totalorder %s18, 0
      %s213 = scalar_select %p212, %s18, 0
      %s214 = smul.addr %s213, 8
      %s215 = smul.addr %s211, 8
      %s216 = sadd.s32 %s214, %s215
      %s217 = smul.addr %s216, 8
      %s218 = scalar_lea.vmem %s3, %s217
      %p219 = scmp.lt.s32.totalorder %s19, 1
      %s220 = scalar_select %p219, %s19, 1
      %p221 = scmp.lt.s32.totalorder %s18, 0
      %s222 = scalar_select %p221, %s18, 0
      %s223 = smul.addr %s222, 16
      %s224 = smul.addr %s220, 16
      %s225 = sadd.s32 %s223, %s224
      %s226 = smul.addr %s225, 4
      %s227 = scalar_lea.vmem %s0, %s226
      %p228 = scmp.lt.s32.totalorder %s18, 0
      %s229 = scalar_select %p228, %s18, 0
      %s230 = smul.addr %s229, 88
      %s231 = smul.addr %s230, 4
      %s232 = scalar_lea.vmem %s1, %s231
      %p233 = scmp.lt.s32.totalorder %s18, 0
      %s234 = scalar_select %p233, %s18, 0
      %s235 = smul.addr %s234, 8
      %s236 = smul.addr %s235, 8
      %s237 = scalar_lea.vmem %s2, %s236
      %p238 = scmp.lt.s32.totalorder %s19, 1
      %s239 = scalar_select %p238, %s19, 1
      %p240 = scmp.lt.s32.totalorder %s18, 0
      %s241 = scalar_select %p240, %s18, 0
      %s242 = smul.addr %s241, 8
      %s243 = smul.addr %s239, 8
      %s244 = sadd.s32 %s242, %s243
      %s245 = smul.addr %s244, 8
      %s246 = scalar_lea.vmem %s3, %s245
      %v248 = vld [vmem:[%s232] sm:$0xf]
      %v249 = vld [vmem:[%s232 + $0x4] sm:$0xf]
      %v250 = vld [vmem:[%s232 + $0x8] sm:$0xf]
      %v251 = vld [vmem:[%s232 + $0xc] sm:$0xf]
      %v252 = vld [vmem:[%s232 + $0x10] sm:$0xf]
      %v253 = vld [vmem:[%s232 + $0x14] sm:$0xf]
      %v254 = vld [vmem:[%s232 + $0x18] sm:$0xf]
      %v255 = vld [vmem:[%s232 + $0x1c] sm:$0xf]
      %v256 = vld [vmem:[%s227] sm:$0xf]
      %v257 = vld [vmem:[%s227 + $0x8] sm:$0xf]
      %v258 = vld [vmem:[%s227 + $0x10] sm:$0xf]
      %v259 = vld [vmem:[%s227 + $0x18] sm:$0xf]
      %v260 = vld [vmem:[%s227 + $0x20] sm:$0xf]
      %v261 = vld [vmem:[%s227 + $0x28] sm:$0xf]
      %v262 = vld [vmem:[%s227 + $0x30] sm:$0xf]
      %v263 = vld [vmem:[%s227 + $0x38] sm:$0xf]
      %s264 = scalar_lea.vmem %s232, 32
      %v265 = vld [vmem:[%s264] sm:$0xf]
      %v266 = vld [vmem:[%s264 + $0x4] sm:$0xf]
      %v267 = vld [vmem:[%s264 + $0x8] sm:$0xf]
      %v268 = vld [vmem:[%s264 + $0xc] sm:$0xf]
      %v269 = vld [vmem:[%s264 + $0x10] sm:$0xf]
      %v270 = vld [vmem:[%s264 + $0x14] sm:$0xf]
      %v271 = vld [vmem:[%s264 + $0x18] sm:$0xf]
      %v272 = vld [vmem:[%s264 + $0x1c] sm:$0xf]
      %v273 = vld [vmem:[%s227] sm:$0xff]
      %v274 = vld [vmem:[%s227 + $0x8] sm:$0xff]
      %v275 = vld [vmem:[%s227 + $0x10] sm:$0xff]
      %v276 = vld [vmem:[%s227 + $0x18] sm:$0xff]
      %v277 = vld [vmem:[%s227 + $0x20] sm:$0xff]
      %v278 = vld [vmem:[%s227 + $0x28] sm:$0xff]
      %v279 = vld [vmem:[%s227 + $0x30] sm:$0xff]
      %v280 = vld [vmem:[%s227 + $0x38] sm:$0xff]
      %v289 = vunpack.c.l.b16 %v265
      %v290 = vunpack.c.l.b16 %v266
      %v291 = vunpack.c.l.b16 %v267
      %v292 = vunpack.c.l.b16 %v268
      %v293 = vunpack.c.l.b16 %v269
      %v294 = vunpack.c.l.b16 %v270
      %v295 = vunpack.c.l.b16 %v271
      %v296 = vunpack.c.l.b16 %v272
      %v297 = vpack.c.b16 %v290, %v289
      %v298 = vpack.c.b16 %v292, %v291
      %v299 = vpack.c.b16 %v294, %v293
      %v300 = vpack.c.b16 %v296, %v295
      %v309 = vunpack.c.l.b16 %v273
      %v310 = vunpack.c.h.b16 %v273
      %v311 = vunpack.c.l.b16 %v274
      %v312 = vunpack.c.h.b16 %v274
      %v313 = vunpack.c.l.b16 %v275
      %v314 = vunpack.c.h.b16 %v275
      %v315 = vunpack.c.l.b16 %v276
      %v316 = vunpack.c.h.b16 %v276
      %v317 = vunpack.c.l.b16 %v277
      %v318 = vunpack.c.h.b16 %v277
      %v319 = vunpack.c.l.b16 %v278
      %v320 = vunpack.c.h.b16 %v278
      %v321 = vunpack.c.l.b16 %v279
      %v322 = vunpack.c.h.b16 %v279
      %v323 = vunpack.c.l.b16 %v280
      %v324 = vunpack.c.h.b16 %v280
      %v325 = vpack.c.b16 %v311, %v309
      %v326 = vpack.c.b16 %v312, %v310
      %v327 = vpack.c.b16 %v315, %v313
      %v328 = vpack.c.b16 %v316, %v314
      %v329 = vpack.c.b16 %v319, %v317
      %v330 = vpack.c.b16 %v320, %v318
      %v331 = vpack.c.b16 %v323, %v321
      %v332 = vpack.c.b16 %v324, %v322
      %333 = vrot.lane.b32.xlu0 %v325, 127
      %v334 = vpop.permute.xlu0 %333
      %335 = vrot.lane.b32.xlu0 %v326, 127
      %v336 = vpop.permute.xlu0 %335
      %337 = vrot.lane.b32.xlu0 %v327, 127
      %v338 = vpop.permute.xlu0 %337
      %339 = vrot.lane.b32.xlu0 %v328, 127
      %v340 = vpop.permute.xlu0 %339
      %341 = vrot.lane.b32.xlu0 %v329, 127
      %v342 = vpop.permute.xlu0 %341
      %343 = vrot.lane.b32.xlu0 %v330, 127
      %v344 = vpop.permute.xlu0 %343
      %345 = vrot.lane.b32.xlu0 %v331, 127
      %v346 = vpop.permute.xlu0 %345
      %347 = vrot.lane.b32.xlu0 %v332, 127
      %v348 = vpop.permute.xlu0 %347
      %vm349 = vcmask 1039360
      %v350 = vsel %vm349, %v334, %v336
      %v351 = vsel %vm349, %v338, %v340
      %v352 = vsel %vm349, %v342, %v344
      %v353 = vsel %vm349, %v346, %v348
      %vm358 = vcmask 523264
      %v360 = vsel %vm358, %v297, 0
      %v363 = vsel %vm358, %v298, 0
      %v366 = vsel %vm358, %v299, 0
      %v369 = vsel %vm358, %v300, 0
      %371 = vmatprep.subr.bf16.mxu0 0
      %372 = vmatpush1.bf16.msra.mxu0 %v350
      %373 = vmatprep.subr.bf16.mxu0 0
      %374 = vmatpush1.bf16.msra.mxu0 %v351
      %375 = vmatprep.subr.bf16.mxu0 0
      %376 = vmatpush1.bf16.msra.mxu0 %v352
      %377 = vmatprep.subr.bf16.mxu0 0
      %378 = vmatpush1.bf16.msra.mxu0 %v353
      %379 = vmatprep.subr.bf16.mxu0 0
      %380 = vmatpush1.bf16.msra.mxu0 0
      %381 = vmatprep.subr.bf16.mxu0 0
      %382 = vmatpush1.bf16.msra.mxu0 0
      %383 = vmatprep.subr.bf16.mxu0 0
      %384 = vmatpush1.bf16.msra.mxu0 0
      %385 = vmatprep.subr.bf16.mxu0 0
      %386 = vmatpush1.bf16.msra.mxu0 0
      %387 = vmatprep.subr.bf16.mxu0 0
      %388 = vmatpush1.bf16.msra.mxu0 0
      %389 = vmatprep.subr.bf16.mxu0 0
      %390 = vmatpush1.bf16.msra.mxu0 0
      %391 = vmatprep.subr.bf16.mxu0 0
      %392 = vmatpush1.bf16.msra.mxu0 0
      %393 = vmatprep.subr.bf16.mxu0 0
      %394 = vmatpush1.bf16.msra.mxu0 0
      %395 = vmatprep.subr.bf16.mxu0 0
      %396 = vmatpush1.bf16.msra.mxu0 0
      %397 = vmatprep.subr.bf16.mxu0 0
      %398 = vmatpush1.bf16.msra.mxu0 0
      %399 = vmatprep.subr.bf16.mxu0 0
      %400 = vmatpush1.bf16.msra.mxu0 0
      %401 = vmatprep.subr.bf16.mxu0 0
      %402 = vmatpush1.bf16.msra.mxu0 0
      %403 = vmatprep.mubr.bf16.mxu0 0
      %404 = vmatmul.mubr.bf16.gmra.mrb[0].mxu0 %v360
      %v405 = vpop.f32.mrb[0].mxu0
      %v406 = vadd.f32 0.0, %v405
      %v407 = vpop.f32.mrb[0].mxu0
      %v408 = vpop.f32.mrb[0].mxu0
      %v409 = vadd.f32 0.0, %v408
      %v410 = vpop.f32.mrb[0].mxu0
      %411 = vmatprep.mubr.bf16.mxu0 0
      %412 = vmatmul.mubr.bf16.gmra.mrb[0].mxu0 %v363
      %v413 = vpop.f32.mrb[0].mxu0
      %v414 = vadd.f32 0.0, %v413
      %v415 = vpop.f32.mrb[0].mxu0
      %v416 = vpop.f32.mrb[0].mxu0
      %v417 = vadd.f32 0.0, %v416
      %v418 = vpop.f32.mrb[0].mxu0
      %419 = vmatprep.mubr.bf16.mxu0 0
      %420 = vmatmul.mubr.bf16.gmra.mrb[0].mxu0 %v366
      %v421 = vpop.f32.mrb[0].mxu0
      %v422 = vadd.f32 0.0, %v421
      %v423 = vpop.f32.mrb[0].mxu0
      %v424 = vpop.f32.mrb[0].mxu0
      %v425 = vadd.f32 0.0, %v424
      %v426 = vpop.f32.mrb[0].mxu0
      %427 = vmatprep.mubr.bf16.mxu0 0
      %428 = vmatmul.mubr.bf16.gmra.mrb[0].mxu0 %v369
      %v429 = vpop.f32.mrb[0].mxu0
      %v430 = vadd.f32 0.0, %v429
      %v431 = vpop.f32.mrb[0].mxu0
      %v432 = vpop.f32.mrb[0].mxu0
      %v433 = vadd.f32 0.0, %v432
      %v434 = vpop.f32.mrb[0].mxu0
      %435 = vdwg.mxu0
      %v444 = vunpack.c.l.b16 %v248
      %v445 = vunpack.c.l.b16 %v249
      %v446 = vunpack.c.l.b16 %v250
      %v447 = vunpack.c.l.b16 %v251
      %v448 = vunpack.c.l.b16 %v252
      %v449 = vunpack.c.l.b16 %v253
      %v450 = vunpack.c.l.b16 %v254
      %v451 = vunpack.c.l.b16 %v255
      %v452 = vpack.c.b16 %v445, %v444
      %v453 = vpack.c.b16 %v447, %v446
      %v454 = vpack.c.b16 %v449, %v448
      %v455 = vpack.c.b16 %v451, %v450
      %v464 = vunpack.c.l.b16 %v256
      %v465 = vunpack.c.l.b16 %v257
      %v466 = vunpack.c.l.b16 %v258
      %v467 = vunpack.c.l.b16 %v259
      %v468 = vunpack.c.l.b16 %v260
      %v469 = vunpack.c.l.b16 %v261
      %v470 = vunpack.c.l.b16 %v262
      %v471 = vunpack.c.l.b16 %v263
      %v472 = vpack.c.b16 %v465, %v464
      %v473 = vpack.c.b16 %v467, %v466
      %v474 = vpack.c.b16 %v469, %v468
      %v475 = vpack.c.b16 %v471, %v470
      %v481 = vsel %vm358, %v452, 0
      %v484 = vsel %vm358, %v453, 0
      %v487 = vsel %vm358, %v454, 0
      %v490 = vsel %vm358, %v455, 0
      %492 = vmatprep.subr.bf16.mxu0 0
      %493 = vmatpush1.bf16.msra.mxu0 %v472
      %494 = vmatprep.subr.bf16.mxu0 0
      %495 = vmatpush1.bf16.msra.mxu0 %v473
      %496 = vmatprep.subr.bf16.mxu0 0
      %497 = vmatpush1.bf16.msra.mxu0 %v474
      %498 = vmatprep.subr.bf16.mxu0 0
      %499 = vmatpush1.bf16.msra.mxu0 %v475
      %500 = vmatprep.subr.bf16.mxu0 0
      %501 = vmatpush1.bf16.msra.mxu0 0
      %502 = vmatprep.subr.bf16.mxu0 0
      %503 = vmatpush1.bf16.msra.mxu0 0
      %504 = vmatprep.subr.bf16.mxu0 0
      %505 = vmatpush1.bf16.msra.mxu0 0
      %506 = vmatprep.subr.bf16.mxu0 0
      %507 = vmatpush1.bf16.msra.mxu0 0
      %508 = vmatprep.subr.bf16.mxu0 0
      %509 = vmatpush1.bf16.msra.mxu0 0
      %510 = vmatprep.subr.bf16.mxu0 0
      %511 = vmatpush1.bf16.msra.mxu0 0
      %512 = vmatprep.subr.bf16.mxu0 0
      %513 = vmatpush1.bf16.msra.mxu0 0
      %514 = vmatprep.subr.bf16.mxu0 0
      %515 = vmatpush1.bf16.msra.mxu0 0
      %516 = vmatprep.subr.bf16.mxu0 0
      %517 = vmatpush1.bf16.msra.mxu0 0
      %518 = vmatprep.subr.bf16.mxu0 0
      %519 = vmatpush1.bf16.msra.mxu0 0
      %520 = vmatprep.subr.bf16.mxu0 0
      %521 = vmatpush1.bf16.msra.mxu0 0
      %522 = vmatprep.subr.bf16.mxu0 0
      %523 = vmatpush1.bf16.msra.mxu0 0
      %524 = vmatprep.mubr.bf16.mxu0 0
      %525 = vmatmul.mubr.bf16.gmra.mrb[0].mxu0 %v481
      %v526 = vpop.f32.mrb[0].mxu0
      %v527 = vadd.f32 %v406, %v526
      %v528 = vpop.f32.mrb[0].mxu0
      %v529 = vpop.f32.mrb[0].mxu0
      %v530 = vadd.f32 %v409, %v529
      %v531 = vpop.f32.mrb[0].mxu0
      %532 = vmatprep.mubr.bf16.mxu0 0
      %533 = vmatmul.mubr.bf16.gmra.mrb[0].mxu0 %v484
      %v534 = vpop.f32.mrb[0].mxu0
      %v535 = vadd.f32 %v414, %v534
      %v536 = vpop.f32.mrb[0].mxu0
      %v537 = vpop.f32.mrb[0].mxu0
      %v538 = vadd.f32 %v417, %v537
      %v539 = vpop.f32.mrb[0].mxu0
      %540 = vmatprep.mubr.bf16.mxu0 0
      %541 = vmatmul.mubr.bf16.gmra.mrb[0].mxu0 %v487
      %v542 = vpop.f32.mrb[0].mxu0
      %v543 = vadd.f32 %v422, %v542
      %v544 = vpop.f32.mrb[0].mxu0
      %v545 = vpop.f32.mrb[0].mxu0
      %v546 = vadd.f32 %v425, %v545
      %v547 = vpop.f32.mrb[0].mxu0
      %548 = vmatprep.mubr.bf16.mxu0 0
      %549 = vmatmul.mubr.bf16.gmra.mrb[0].mxu0 %v490
      %v550 = vpop.f32.mrb[0].mxu0
      %v551 = vadd.f32 %v430, %v550
      %v552 = vpop.f32.mrb[0].mxu0
      %v553 = vpop.f32.mrb[0].mxu0
      %v554 = vadd.f32 %v433, %v553
      %v555 = vpop.f32.mrb[0].mxu0
      %556 = vdwg.mxu0
      %s557 = scalar_lea.vmem %s232, 64
      %v558 = vld [vmem:[%s557] sm:$0xf]
      %v559 = vld [vmem:[%s557 + $0x4] sm:$0xf]
      %v560 = vld [vmem:[%s557 + $0x8] sm:$0xf]
      %v561 = vld [vmem:[%s557 + $0xc] sm:$0xf]
      %v562 = vld [vmem:[%s557 + $0x10] sm:$0xf]
      %v563 = vld [vmem:[%s557 + $0x14] sm:$0xf]
      %v564 = vld [vmem:[%s557 + $0x18] sm:$0xf]
      %v565 = vld [vmem:[%s557 + $0x1c] sm:$0xf]
      %v574 = vunpack.c.l.b16 %v558
      %v575 = vunpack.c.l.b16 %v559
      %v576 = vunpack.c.l.b16 %v560
      %v577 = vunpack.c.l.b16 %v561
      %v578 = vunpack.c.l.b16 %v562
      %v579 = vunpack.c.l.b16 %v563
      %v580 = vunpack.c.l.b16 %v564
      %v581 = vunpack.c.l.b16 %v565
      %v582 = vpack.c.b16 %v575, %v574
      %v583 = vpack.c.b16 %v577, %v576
      %v584 = vpack.c.b16 %v579, %v578
      %v585 = vpack.c.b16 %v581, %v580
      %586 = vrot.lane.b32.xlu0 %v325, 126
      %v587 = vpop.permute.xlu0 %586
      %588 = vrot.lane.b32.xlu0 %v326, 126
      %v589 = vpop.permute.xlu0 %588
      %590 = vrot.lane.b32.xlu0 %v327, 126
      %v591 = vpop.permute.xlu0 %590
      %592 = vrot.lane.b32.xlu0 %v328, 126
      %v593 = vpop.permute.xlu0 %592
      %594 = vrot.lane.b32.xlu0 %v329, 126
      %v595 = vpop.permute.xlu0 %594
      %596 = vrot.lane.b32.xlu0 %v330, 126
      %v597 = vpop.permute.xlu0 %596
      %598 = vrot.lane.b32.xlu0 %v331, 126
      %v599 = vpop.permute.xlu0 %598
      %600 = vrot.lane.b32.xlu0 %v332, 126
      %v601 = vpop.permute.xlu0 %600
      %vm602 = vcmask 1031168
      %v603 = vsel %vm602, %v587, %v589
      %v604 = vsel %vm602, %v591, %v593
      %v605 = vsel %vm602, %v595, %v597
      %v606 = vsel %vm602, %v599, %v601
      %v612 = vsel %vm358, %v582, 0
      %v615 = vsel %vm358, %v583, 0
      %v618 = vsel %vm358, %v584, 0
      %v621 = vsel %vm358, %v585, 0
      %623 = vmatprep.subr.bf16.mxu0 0
      %624 = vmatpush1.bf16.msra.mxu0 %v603
      %625 = vmatprep.subr.bf16.mxu0 0
      %626 = vmatpush1.bf16.msra.mxu0 %v604
      %627 = vmatprep.subr.bf16.mxu0 0
      %628 = vmatpush1.bf16.msra.mxu0 %v605
      %629 = vmatprep.subr.bf16.mxu0 0
      %630 = vmatpush1.bf16.msra.mxu0 %v606
      %631 = vmatprep.subr.bf16.mxu0 0
      %632 = vmatpush1.bf16.msra.mxu0 0
      %633 = vmatprep.subr.bf16.mxu0 0
      %634 = vmatpush1.bf16.msra.mxu0 0
      %635 = vmatprep.subr.bf16.mxu0 0
      %636 = vmatpush1.bf16.msra.mxu0 0
      %637 = vmatprep.subr.bf16.mxu0 0
      %638 = vmatpush1.bf16.msra.mxu0 0
      %639 = vmatprep.subr.bf16.mxu0 0
      %640 = vmatpush1.bf16.msra.mxu0 0
      %641 = vmatprep.subr.bf16.mxu0 0
      %642 = vmatpush1.bf16.msra.mxu0 0
      %643 = vmatprep.subr.bf16.mxu0 0
      %644 = vmatpush1.bf16.msra.mxu0 0
      %645 = vmatprep.subr.bf16.mxu0 0
      %646 = vmatpush1.bf16.msra.mxu0 0
      %647 = vmatprep.subr.bf16.mxu0 0
      %648 = vmatpush1.bf16.msra.mxu0 0
      %649 = vmatprep.subr.bf16.mxu0 0
      %650 = vmatpush1.bf16.msra.mxu0 0
      %651 = vmatprep.subr.bf16.mxu0 0
      %652 = vmatpush1.bf16.msra.mxu0 0
      %653 = vmatprep.subr.bf16.mxu0 0
      %654 = vmatpush1.bf16.msra.mxu0 0
      %655 = vmatprep.mubr.bf16.mxu0 0
      %656 = vmatmul.mubr.bf16.gmra.mrb[0].mxu0 %v612
      %v657 = vpop.f32.mrb[0].mxu0
      %v658 = vadd.f32 0.0, %v657
      %v659 = vpop.f32.mrb[0].mxu0
      %v660 = vpop.f32.mrb[0].mxu0
      %v661 = vadd.f32 0.0, %v660
      %v662 = vpop.f32.mrb[0].mxu0
      %663 = vmatprep.mubr.bf16.mxu0 0
      %664 = vmatmul.mubr.bf16.gmra.mrb[0].mxu0 %v615
      %v665 = vpop.f32.mrb[0].mxu0
      %v666 = vadd.f32 0.0, %v665
      %v667 = vpop.f32.mrb[0].mxu0
      %v668 = vpop.f32.mrb[0].mxu0
      %v669 = vadd.f32 0.0, %v668
      %v670 = vpop.f32.mrb[0].mxu0
      %671 = vmatprep.mubr.bf16.mxu0 0
      %672 = vmatmul.mubr.bf16.gmra.mrb[0].mxu0 %v618
      %v673 = vpop.f32.mrb[0].mxu0
      %v674 = vadd.f32 0.0, %v673
      %v675 = vpop.f32.mrb[0].mxu0
      %v676 = vpop.f32.mrb[0].mxu0
      %v677 = vadd.f32 0.0, %v676
      %v678 = vpop.f32.mrb[0].mxu0
      %679 = vmatprep.mubr.bf16.mxu0 0
      %680 = vmatmul.mubr.bf16.gmra.mrb[0].mxu0 %v621
      %v681 = vpop.f32.mrb[0].mxu0
      %v682 = vadd.f32 0.0, %v681
      %v683 = vpop.f32.mrb[0].mxu0
      %v684 = vpop.f32.mrb[0].mxu0
      %v685 = vadd.f32 0.0, %v684
      %v686 = vpop.f32.mrb[0].mxu0
      %687 = vdwg.mxu0
      %v688 = vadd.f32 %v527, %v658
      %v689 = vadd.f32 %v530, %v661
      %v690 = vadd.f32 %v535, %v666
      %v691 = vadd.f32 %v538, %v669
      %v692 = vadd.f32 %v543, %v674
      %v693 = vadd.f32 %v546, %v677
      %v694 = vadd.f32 %v551, %v682
      %v695 = vadd.f32 %v554, %v685
      %s696 = scalar_lea.vmem %s232, 96
      %v697 = vld [vmem:[%s696] sm:$0xf]
      %v698 = vld [vmem:[%s696 + $0x4] sm:$0xf]
      %v699 = vld [vmem:[%s696 + $0x8] sm:$0xf]
      %v700 = vld [vmem:[%s696 + $0xc] sm:$0xf]
      %v701 = vld [vmem:[%s696 + $0x10] sm:$0xf]
      %v702 = vld [vmem:[%s696 + $0x14] sm:$0xf]
      %v703 = vld [vmem:[%s696 + $0x18] sm:$0xf]
      %v704 = vld [vmem:[%s696 + $0x1c] sm:$0xf]
      %v713 = vunpack.c.l.b16 %v697
      %v714 = vunpack.c.l.b16 %v698
      %v715 = vunpack.c.l.b16 %v699
      %v716 = vunpack.c.l.b16 %v700
      %v717 = vunpack.c.l.b16 %v701
      %v718 = vunpack.c.l.b16 %v702
      %v719 = vunpack.c.l.b16 %v703
      %v720 = vunpack.c.l.b16 %v704
      %v721 = vpack.c.b16 %v714, %v713
      %v722 = vpack.c.b16 %v716, %v715
      %v723 = vpack.c.b16 %v718, %v717
      %v724 = vpack.c.b16 %v720, %v719
      %725 = vrot.lane.b32.xlu0 %v325, 125
      %v726 = vpop.permute.xlu0 %725
      %727 = vrot.lane.b32.xlu0 %v326, 125
      %v728 = vpop.permute.xlu0 %727
      %729 = vrot.lane.b32.xlu0 %v327, 125
      %v730 = vpop.permute.xlu0 %729
      %731 = vrot.lane.b32.xlu0 %v328, 125
      %v732 = vpop.permute.xlu0 %731
      %733 = vrot.lane.b32.xlu0 %v329, 125
      %v734 = vpop.permute.xlu0 %733
      %735 = vrot.lane.b32.xlu0 %v330, 125
      %v736 = vpop.permute.xlu0 %735
      %737 = vrot.lane.b32.xlu0 %v331, 125
      %v738 = vpop.permute.xlu0 %737
      %739 = vrot.lane.b32.xlu0 %v332, 125
      %v740 = vpop.permute.xlu0 %739
      %vm741 = vcmask 1022976
      %v742 = vsel %vm741, %v726, %v728
      %v743 = vsel %vm741, %v730, %v732
      %v744 = vsel %vm741, %v734, %v736
      %v745 = vsel %vm741, %v738, %v740
      %v751 = vsel %vm358, %v721, 0
      %v754 = vsel %vm358, %v722, 0
      %v757 = vsel %vm358, %v723, 0
      %v760 = vsel %vm358, %v724, 0
      %762 = vmatprep.subr.bf16.mxu0 0
      %763 = vmatpush1.bf16.msra.mxu0 %v742
      %764 = vmatprep.subr.bf16.mxu0 0
      %765 = vmatpush1.bf16.msra.mxu0 %v743
      %766 = vmatprep.subr.bf16.mxu0 0
      %767 = vmatpush1.bf16.msra.mxu0 %v744
      %768 = vmatprep.subr.bf16.mxu0 0
      %769 = vmatpush1.bf16.msra.mxu0 %v745
      %770 = vmatprep.subr.bf16.mxu0 0
      %771 = vmatpush1.bf16.msra.mxu0 0
      %772 = vmatprep.subr.bf16.mxu0 0
      %773 = vmatpush1.bf16.msra.mxu0 0
      %774 = vmatprep.subr.bf16.mxu0 0
      %775 = vmatpush1.bf16.msra.mxu0 0
      %776 = vmatprep.subr.bf16.mxu0 0
      %777 = vmatpush1.bf16.msra.mxu0 0
      %778 = vmatprep.subr.bf16.mxu0 0
      %779 = vmatpush1.bf16.msra.mxu0 0
      %780 = vmatprep.subr.bf16.mxu0 0
      %781 = vmatpush1.bf16.msra.mxu0 0
      %782 = vmatprep.subr.bf16.mxu0 0
      %783 = vmatpush1.bf16.msra.mxu0 0
      %784 = vmatprep.subr.bf16.mxu0 0
      %785 = vmatpush1.bf16.msra.mxu0 0
      %786 = vmatprep.subr.bf16.mxu0 0
      %787 = vmatpush1.bf16.msra.mxu0 0
      %788 = vmatprep.subr.bf16.mxu0 0
      %789 = vmatpush1.bf16.msra.mxu0 0
      %790 = vmatprep.subr.bf16.mxu0 0
      %791 = vmatpush1.bf16.msra.mxu0 0
      %792 = vmatprep.subr.bf16.mxu0 0
      %793 = vmatpush1.bf16.msra.mxu0 0
      %794 = vmatprep.mubr.bf16.mxu0 0
      %795 = vmatmul.mubr.bf16.gmra.mrb[0].mxu0 %v751
      %v796 = vpop.f32.mrb[0].mxu0
      %v797 = vadd.f32 0.0, %v796
      %v798 = vpop.f32.mrb[0].mxu0
      %v799 = vpop.f32.mrb[0].mxu0
      %v800 = vadd.f32 0.0, %v799
      %v801 = vpop.f32.mrb[0].mxu0
      %802 = vmatprep.mubr.bf16.mxu0 0
      %803 = vmatmul.mubr.bf16.gmra.mrb[0].mxu0 %v754
      %v804 = vpop.f32.mrb[0].mxu0
      %v805 = vadd.f32 0.0, %v804
      %v806 = vpop.f32.mrb[0].mxu0
      %v807 = vpop.f32.mrb[0].mxu0
      %v808 = vadd.f32 0.0, %v807
      %v809 = vpop.f32.mrb[0].mxu0
      %810 = vmatprep.mubr.bf16.mxu0 0
      %811 = vmatmul.mubr.bf16.gmra.mrb[0].mxu0 %v757
      %v812 = vpop.f32.mrb[0].mxu0
      %v813 = vadd.f32 0.0, %v812
      %v814 = vpop.f32.mrb[0].mxu0
      %v815 = vpop.f32.mrb[0].mxu0
      %v816 = vadd.f32 0.0, %v815
      %v817 = vpop.f32.mrb[0].mxu0
      %818 = vmatprep.mubr.bf16.mxu0 0
      %819 = vmatmul.mubr.bf16.gmra.mrb[0].mxu0 %v760
      %v820 = vpop.f32.mrb[0].mxu0
      %v821 = vadd.f32 0.0, %v820
      %v822 = vpop.f32.mrb[0].mxu0
      %v823 = vpop.f32.mrb[0].mxu0
      %v824 = vadd.f32 0.0, %v823
      %v825 = vpop.f32.mrb[0].mxu0
      %826 = vdwg.mxu0
      %v827 = vadd.f32 %v688, %v797
      %v828 = vadd.f32 %v689, %v800
      %v829 = vadd.f32 %v690, %v805
      %v830 = vadd.f32 %v691, %v808
      %v831 = vadd.f32 %v692, %v813
      %v832 = vadd.f32 %v693, %v816
      %v833 = vadd.f32 %v694, %v821
      %v834 = vadd.f32 %v695, %v824
      %s835 = scalar_lea.vmem %s232, 128
      %v836 = vld [vmem:[%s835] sm:$0xf]
      %v837 = vld [vmem:[%s835 + $0x4] sm:$0xf]
      %v838 = vld [vmem:[%s835 + $0x8] sm:$0xf]
      %v839 = vld [vmem:[%s835 + $0xc] sm:$0xf]
      %v840 = vld [vmem:[%s835 + $0x10] sm:$0xf]
      %v841 = vld [vmem:[%s835 + $0x14] sm:$0xf]
      %v842 = vld [vmem:[%s835 + $0x18] sm:$0xf]
      %v843 = vld [vmem:[%s835 + $0x1c] sm:$0xf]
      %v852 = vunpack.c.l.b16 %v836
      %v853 = vunpack.c.l.b16 %v837
      %v854 = vunpack.c.l.b16 %v838
      %v855 = vunpack.c.l.b16 %v839
      %v856 = vunpack.c.l.b16 %v840
      %v857 = vunpack.c.l.b16 %v841
      %v858 = vunpack.c.l.b16 %v842
      %v859 = vunpack.c.l.b16 %v843
      %v860 = vpack.c.b16 %v853, %v852
      %v861 = vpack.c.b16 %v855, %v854
      %v862 = vpack.c.b16 %v857, %v856
      %v863 = vpack.c.b16 %v859, %v858
      %864 = vrot.lane.b32.xlu0 %v325, 124
      %v865 = vpop.permute.xlu0 %864
      %866 = vrot.lane.b32.xlu0 %v326, 124
      %v867 = vpop.permute.xlu0 %866
      %868 = vrot.lane.b32.xlu0 %v327, 124
      %v869 = vpop.permute.xlu0 %868
      %870 = vrot.lane.b32.xlu0 %v328, 124
      %v871 = vpop.permute.xlu0 %870
      %872 = vrot.lane.b32.xlu0 %v329, 124
      %v873 = vpop.permute.xlu0 %872
      %874 = vrot.lane.b32.xlu0 %v330, 124
      %v875 = vpop.permute.xlu0 %874
      %876 = vrot.lane.b32.xlu0 %v331, 124
      %v877 = vpop.permute.xlu0 %876
      %878 = vrot.lane.b32.xlu0 %v332, 124
      %v879 = vpop.permute.xlu0 %878
      %vm880 = vcmask 1014784
      %v881 = vsel %vm880, %v865, %v867
      %v882 = vsel %vm880, %v869, %v871
      %v883 = vsel %vm880, %v873, %v875
      %v884 = vsel %vm880, %v877, %v879
      %v890 = vsel %vm358, %v860, 0
      %v893 = vsel %vm358, %v861, 0
      %v896 = vsel %vm358, %v862, 0
      %v899 = vsel %vm358, %v863, 0
      %901 = vmatprep.subr.bf16.mxu0 0
      %902 = vmatpush1.bf16.msra.mxu0 %v881
      %903 = vmatprep.subr.bf16.mxu0 0
      %904 = vmatpush1.bf16.msra.mxu0 %v882
      %905 = vmatprep.subr.bf16.mxu0 0
      %906 = vmatpush1.bf16.msra.mxu0 %v883
      %907 = vmatprep.subr.bf16.mxu0 0
      %908 = vmatpush1.bf16.msra.mxu0 %v884
      %909 = vmatprep.subr.bf16.mxu0 0
      %910 = vmatpush1.bf16.msra.mxu0 0
      %911 = vmatprep.subr.bf16.mxu0 0
      %912 = vmatpush1.bf16.msra.mxu0 0
      %913 = vmatprep.subr.bf16.mxu0 0
      %914 = vmatpush1.bf16.msra.mxu0 0
      %915 = vmatprep.subr.bf16.mxu0 0
      %916 = vmatpush1.bf16.msra.mxu0 0
      %917 = vmatprep.subr.bf16.mxu0 0
      %918 = vmatpush1.bf16.msra.mxu0 0
      %919 = vmatprep.subr.bf16.mxu0 0
      %920 = vmatpush1.bf16.msra.mxu0 0
      %921 = vmatprep.subr.bf16.mxu0 0
      %922 = vmatpush1.bf16.msra.mxu0 0
      %923 = vmatprep.subr.bf16.mxu0 0
      %924 = vmatpush1.bf16.msra.mxu0 0
      %925 = vmatprep.subr.bf16.mxu0 0
      %926 = vmatpush1.bf16.msra.mxu0 0
      %927 = vmatprep.subr.bf16.mxu0 0
      %928 = vmatpush1.bf16.msra.mxu0 0
      %929 = vmatprep.subr.bf16.mxu0 0
      %930 = vmatpush1.bf16.msra.mxu0 0
      %931 = vmatprep.subr.bf16.mxu0 0
      %932 = vmatpush1.bf16.msra.mxu0 0
      %933 = vmatprep.mubr.bf16.mxu0 0
      %934 = vmatmul.mubr.bf16.gmra.mrb[0].mxu0 %v890
      %v935 = vpop.f32.mrb[0].mxu0
      %v936 = vadd.f32 0.0, %v935
      %v937 = vpop.f32.mrb[0].mxu0
      %v938 = vpop.f32.mrb[0].mxu0
      %v939 = vadd.f32 0.0, %v938
      %v940 = vpop.f32.mrb[0].mxu0
      %941 = vmatprep.mubr.bf16.mxu0 0
      %942 = vmatmul.mubr.bf16.gmra.mrb[0].mxu0 %v893
      %v943 = vpop.f32.mrb[0].mxu0
      %v944 = vadd.f32 0.0, %v943
      %v945 = vpop.f32.mrb[0].mxu0
      %v946 = vpop.f32.mrb[0].mxu0
      %v947 = vadd.f32 0.0, %v946
      %v948 = vpop.f32.mrb[0].mxu0
      %949 = vmatprep.mubr.bf16.mxu0 0
      %950 = vmatmul.mubr.bf16.gmra.mrb[0].mxu0 %v896
      %v951 = vpop.f32.mrb[0].mxu0
      %v952 = vadd.f32 0.0, %v951
      %v953 = vpop.f32.mrb[0].mxu0
      %v954 = vpop.f32.mrb[0].mxu0
      %v955 = vadd.f32 0.0, %v954
      %v956 = vpop.f32.mrb[0].mxu0
      %957 = vmatprep.mubr.bf16.mxu0 0
      %958 = vmatmul.mubr.bf16.gmra.mrb[0].mxu0 %v899
      %v959 = vpop.f32.mrb[0].mxu0
      %v960 = vadd.f32 0.0, %v959
      %v961 = vpop.f32.mrb[0].mxu0
      %v962 = vpop.f32.mrb[0].mxu0
      %v963 = vadd.f32 0.0, %v962
      %v964 = vpop.f32.mrb[0].mxu0
      %965 = vdwg.mxu0
      %v966 = vadd.f32 %v827, %v936
      %v967 = vadd.f32 %v828, %v939
      %v968 = vadd.f32 %v829, %v944
      %v969 = vadd.f32 %v830, %v947
      %v970 = vadd.f32 %v831, %v952
      %v971 = vadd.f32 %v832, %v955
      %v972 = vadd.f32 %v833, %v960
      %v973 = vadd.f32 %v834, %v963
      %s974 = scalar_lea.vmem %s232, 160
      %v975 = vld [vmem:[%s974] sm:$0xf]
      %v976 = vld [vmem:[%s974 + $0x4] sm:$0xf]
      %v977 = vld [vmem:[%s974 + $0x8] sm:$0xf]
      %v978 = vld [vmem:[%s974 + $0xc] sm:$0xf]
      %v979 = vld [vmem:[%s974 + $0x10] sm:$0xf]
      %v980 = vld [vmem:[%s974 + $0x14] sm:$0xf]
      %v981 = vld [vmem:[%s974 + $0x18] sm:$0xf]
      %v982 = vld [vmem:[%s974 + $0x1c] sm:$0xf]
      %v991 = vunpack.c.l.b16 %v975
      %v992 = vunpack.c.l.b16 %v976
      %v993 = vunpack.c.l.b16 %v977
      %v994 = vunpack.c.l.b16 %v978
      %v995 = vunpack.c.l.b16 %v979
      %v996 = vunpack.c.l.b16 %v980
      %v997 = vunpack.c.l.b16 %v981
      %v998 = vunpack.c.l.b16 %v982
      %v999 = vpack.c.b16 %v992, %v991
      %v1000 = vpack.c.b16 %v994, %v993
      %v1001 = vpack.c.b16 %v996, %v995
      %v1002 = vpack.c.b16 %v998, %v997
      %1003 = vrot.lane.b32.xlu0 %v325, 123
      %v1004 = vpop.permute.xlu0 %1003
      %1005 = vrot.lane.b32.xlu0 %v326, 123
      %v1006 = vpop.permute.xlu0 %1005
      %1007 = vrot.lane.b32.xlu0 %v327, 123
      %v1008 = vpop.permute.xlu0 %1007
      %1009 = vrot.lane.b32.xlu0 %v328, 123
      %v1010 = vpop.permute.xlu0 %1009
      %1011 = vrot.lane.b32.xlu0 %v329, 123
      %v1012 = vpop.permute.xlu0 %1011
      %1013 = vrot.lane.b32.xlu0 %v330, 123
      %v1014 = vpop.permute.xlu0 %1013
      %1015 = vrot.lane.b32.xlu0 %v331, 123
      %v1016 = vpop.permute.xlu0 %1015
      %1017 = vrot.lane.b32.xlu0 %v332, 123
      %v1018 = vpop.permute.xlu0 %1017
      %vm1019 = vcmask 1006592
      %v1020 = vsel %vm1019, %v1004, %v1006
      %v1021 = vsel %vm1019, %v1008, %v1010
      %v1022 = vsel %vm1019, %v1012, %v1014
      %v1023 = vsel %vm1019, %v1016, %v1018
      %v1029 = vsel %vm358, %v999, 0
      %v1032 = vsel %vm358, %v1000, 0
      %v1035 = vsel %vm358, %v1001, 0
      %v1038 = vsel %vm358, %v1002, 0
      %1040 = vmatprep.subr.bf16.mxu0 0
      %1041 = vmatpush1.bf16.msra.mxu0 %v1020
      %1042 = vmatprep.subr.bf16.mxu0 0
      %1043 = vmatpush1.bf16.msra.mxu0 %v1021
      %1044 = vmatprep.subr.bf16.mxu0 0
      %1045 = vmatpush1.bf16.msra.mxu0 %v1022
      %1046 = vmatprep.subr.bf16.mxu0 0
      %1047 = vmatpush1.bf16.msra.mxu0 %v1023
      %1048 = vmatprep.subr.bf16.mxu0 0
      %1049 = vmatpush1.bf16.msra.mxu0 0
      %1050 = vmatprep.subr.bf16.mxu0 0
      %1051 = vmatpush1.bf16.msra.mxu0 0
      %1052 = vmatprep.subr.bf16.mxu0 0
      %1053 = vmatpush1.bf16.msra.mxu0 0
      %1054 = vmatprep.subr.bf16.mxu0 0
      %1055 = vmatpush1.bf16.msra.mxu0 0
      %1056 = vmatprep.subr.bf16.mxu0 0
      %1057 = vmatpush1.bf16.msra.mxu0 0
      %1058 = vmatprep.subr.bf16.mxu0 0
      %1059 = vmatpush1.bf16.msra.mxu0 0
      %1060 = vmatprep.subr.bf16.mxu0 0
      %1061 = vmatpush1.bf16.msra.mxu0 0
      %1062 = vmatprep.subr.bf16.mxu0 0
      %1063 = vmatpush1.bf16.msra.mxu0 0
      %1064 = vmatprep.subr.bf16.mxu0 0
      %1065 = vmatpush1.bf16.msra.mxu0 0
      %1066 = vmatprep.subr.bf16.mxu0 0
      %1067 = vmatpush1.bf16.msra.mxu0 0
      %1068 = vmatprep.subr.bf16.mxu0 0
      %1069 = vmatpush1.bf16.msra.mxu0 0
      %1070 = vmatprep.subr.bf16.mxu0 0
      %1071 = vmatpush1.bf16.msra.mxu0 0
      %1072 = vmatprep.mubr.bf16.mxu0 0
      %1073 = vmatmul.mubr.bf16.gmra.mrb[0].mxu0 %v1029
      %v1074 = vpop.f32.mrb[0].mxu0
      %v1075 = vadd.f32 0.0, %v1074
      %v1076 = vpop.f32.mrb[0].mxu0
      %v1077 = vpop.f32.mrb[0].mxu0
      %v1078 = vadd.f32 0.0, %v1077
      %v1079 = vpop.f32.mrb[0].mxu0
      %1080 = vmatprep.mubr.bf16.mxu0 0
      %1081 = vmatmul.mubr.bf16.gmra.mrb[0].mxu0 %v1032
      %v1082 = vpop.f32.mrb[0].mxu0
      %v1083 = vadd.f32 0.0, %v1082
      %v1084 = vpop.f32.mrb[0].mxu0
      %v1085 = vpop.f32.mrb[0].mxu0
      %v1086 = vadd.f32 0.0, %v1085
      %v1087 = vpop.f32.mrb[0].mxu0
      %1088 = vmatprep.mubr.bf16.mxu0 0
      %1089 = vmatmul.mubr.bf16.gmra.mrb[0].mxu0 %v1035
      %v1090 = vpop.f32.mrb[0].mxu0
      %v1091 = vadd.f32 0.0, %v1090
      %v1092 = vpop.f32.mrb[0].mxu0
      %v1093 = vpop.f32.mrb[0].mxu0
      %v1094 = vadd.f32 0.0, %v1093
      %v1095 = vpop.f32.mrb[0].mxu0
      %1096 = vmatprep.mubr.bf16.mxu0 0
      %1097 = vmatmul.mubr.bf16.gmra.mrb[0].mxu0 %v1038
      %v1098 = vpop.f32.mrb[0].mxu0
      %v1099 = vadd.f32 0.0, %v1098
      %v1100 = vpop.f32.mrb[0].mxu0
      %v1101 = vpop.f32.mrb[0].mxu0
      %v1102 = vadd.f32 0.0, %v1101
      %v1103 = vpop.f32.mrb[0].mxu0
      %1104 = vdwg.mxu0
      %v1105 = vadd.f32 %v966, %v1075
      %v1106 = vadd.f32 %v967, %v1078
      %v1107 = vadd.f32 %v968, %v1083
      %v1108 = vadd.f32 %v969, %v1086
      %v1109 = vadd.f32 %v970, %v1091
      %v1110 = vadd.f32 %v971, %v1094
      %v1111 = vadd.f32 %v972, %v1099
      %v1112 = vadd.f32 %v973, %v1102
      %s1113 = scalar_lea.vmem %s232, 192
      %v1114 = vld [vmem:[%s1113] sm:$0xf]
      %v1115 = vld [vmem:[%s1113 + $0x4] sm:$0xf]
      %v1116 = vld [vmem:[%s1113 + $0x8] sm:$0xf]
      %v1117 = vld [vmem:[%s1113 + $0xc] sm:$0xf]
      %v1118 = vld [vmem:[%s1113 + $0x10] sm:$0xf]
      %v1119 = vld [vmem:[%s1113 + $0x14] sm:$0xf]
      %v1120 = vld [vmem:[%s1113 + $0x18] sm:$0xf]
      %v1121 = vld [vmem:[%s1113 + $0x1c] sm:$0xf]
      %v1130 = vunpack.c.l.b16 %v1114
      %v1131 = vunpack.c.l.b16 %v1115
      %v1132 = vunpack.c.l.b16 %v1116
      %v1133 = vunpack.c.l.b16 %v1117
      %v1134 = vunpack.c.l.b16 %v1118
      %v1135 = vunpack.c.l.b16 %v1119
      %v1136 = vunpack.c.l.b16 %v1120
      %v1137 = vunpack.c.l.b16 %v1121
      %v1138 = vpack.c.b16 %v1131, %v1130
      %v1139 = vpack.c.b16 %v1133, %v1132
      %v1140 = vpack.c.b16 %v1135, %v1134
      %v1141 = vpack.c.b16 %v1137, %v1136
      %1142 = vrot.lane.b32.xlu0 %v325, 122
      %v1143 = vpop.permute.xlu0 %1142
      %1144 = vrot.lane.b32.xlu0 %v326, 122
      %v1145 = vpop.permute.xlu0 %1144
      %1146 = vrot.lane.b32.xlu0 %v327, 122
      %v1147 = vpop.permute.xlu0 %1146
      %1148 = vrot.lane.b32.xlu0 %v328, 122
      %v1149 = vpop.permute.xlu0 %1148
      %1150 = vrot.lane.b32.xlu0 %v329, 122
      %v1151 = vpop.permute.xlu0 %1150
      %1152 = vrot.lane.b32.xlu0 %v330, 122
      %v1153 = vpop.permute.xlu0 %1152
      %1154 = vrot.lane.b32.xlu0 %v331, 122
      %v1155 = vpop.permute.xlu0 %1154
      %1156 = vrot.lane.b32.xlu0 %v332, 122
      %v1157 = vpop.permute.xlu0 %1156
      %vm1158 = vcmask 998400
      %v1159 = vsel %vm1158, %v1143, %v1145
      %v1160 = vsel %vm1158, %v1147, %v1149
      %v1161 = vsel %vm1158, %v1151, %v1153
      %v1162 = vsel %vm1158, %v1155, %v1157
      %v1168 = vsel %vm358, %v1138, 0
      %v1171 = vsel %vm358, %v1139, 0
      %v1174 = vsel %vm358, %v1140, 0
      %v1177 = vsel %vm358, %v1141, 0
      %1179 = vmatprep.subr.bf16.mxu0 0
      %1180 = vmatpush1.bf16.msra.mxu0 %v1159
      %1181 = vmatprep.subr.bf16.mxu0 0
      %1182 = vmatpush1.bf16.msra.mxu0 %v1160
      %1183 = vmatprep.subr.bf16.mxu0 0
      %1184 = vmatpush1.bf16.msra.mxu0 %v1161
      %1185 = vmatprep.subr.bf16.mxu0 0
      %1186 = vmatpush1.bf16.msra.mxu0 %v1162
      %1187 = vmatprep.subr.bf16.mxu0 0
      %1188 = vmatpush1.bf16.msra.mxu0 0
      %1189 = vmatprep.subr.bf16.mxu0 0
      %1190 = vmatpush1.bf16.msra.mxu0 0
      %1191 = vmatprep.subr.bf16.mxu0 0
      %1192 = vmatpush1.bf16.msra.mxu0 0
      %1193 = vmatprep.subr.bf16.mxu0 0
      %1194 = vmatpush1.bf16.msra.mxu0 0
      %1195 = vmatprep.subr.bf16.mxu0 0
      %1196 = vmatpush1.bf16.msra.mxu0 0
      %1197 = vmatprep.subr.bf16.mxu0 0
      %1198 = vmatpush1.bf16.msra.mxu0 0
      %1199 = vmatprep.subr.bf16.mxu0 0
      %1200 = vmatpush1.bf16.msra.mxu0 0
      %1201 = vmatprep.subr.bf16.mxu0 0
      %1202 = vmatpush1.bf16.msra.mxu0 0
      %1203 = vmatprep.subr.bf16.mxu0 0
      %1204 = vmatpush1.bf16.msra.mxu0 0
      %1205 = vmatprep.subr.bf16.mxu0 0
      %1206 = vmatpush1.bf16.msra.mxu0 0
      %1207 = vmatprep.subr.bf16.mxu0 0
      %1208 = vmatpush1.bf16.msra.mxu0 0
      %1209 = vmatprep.subr.bf16.mxu0 0
      %1210 = vmatpush1.bf16.msra.mxu0 0
      %1211 = vmatprep.mubr.bf16.mxu0 0
      %1212 = vmatmul.mubr.bf16.gmra.mrb[0].mxu0 %v1168
      %v1213 = vpop.f32.mrb[0].mxu0
      %v1214 = vadd.f32 0.0, %v1213
      %v1215 = vpop.f32.mrb[0].mxu0
      %v1216 = vpop.f32.mrb[0].mxu0
      %v1217 = vadd.f32 0.0, %v1216
      %v1218 = vpop.f32.mrb[0].mxu0
      %1219 = vmatprep.mubr.bf16.mxu0 0
      %1220 = vmatmul.mubr.bf16.gmra.mrb[0].mxu0 %v1171
      %v1221 = vpop.f32.mrb[0].mxu0
      %v1222 = vadd.f32 0.0, %v1221
      %v1223 = vpop.f32.mrb[0].mxu0
      %v1224 = vpop.f32.mrb[0].mxu0
      %v1225 = vadd.f32 0.0, %v1224
      %v1226 = vpop.f32.mrb[0].mxu0
      %1227 = vmatprep.mubr.bf16.mxu0 0
      %1228 = vmatmul.mubr.bf16.gmra.mrb[0].mxu0 %v1174
      %v1229 = vpop.f32.mrb[0].mxu0
      %v1230 = vadd.f32 0.0, %v1229
      %v1231 = vpop.f32.mrb[0].mxu0
      %v1232 = vpop.f32.mrb[0].mxu0
      %v1233 = vadd.f32 0.0, %v1232
      %v1234 = vpop.f32.mrb[0].mxu0
      %1235 = vmatprep.mubr.bf16.mxu0 0
      %1236 = vmatmul.mubr.bf16.gmra.mrb[0].mxu0 %v1177
      %v1237 = vpop.f32.mrb[0].mxu0
      %v1238 = vadd.f32 0.0, %v1237
      %v1239 = vpop.f32.mrb[0].mxu0
      %v1240 = vpop.f32.mrb[0].mxu0
      %v1241 = vadd.f32 0.0, %v1240
      %v1242 = vpop.f32.mrb[0].mxu0
      %1243 = vdwg.mxu0
      %v1244 = vadd.f32 %v1105, %v1214
      %v1245 = vadd.f32 %v1106, %v1217
      %v1246 = vadd.f32 %v1107, %v1222
      %v1247 = vadd.f32 %v1108, %v1225
      %v1248 = vadd.f32 %v1109, %v1230
      %v1249 = vadd.f32 %v1110, %v1233
      %v1250 = vadd.f32 %v1111, %v1238
      %v1251 = vadd.f32 %v1112, %v1241
      %s1252 = scalar_lea.vmem %s232, 224
      %v1253 = vld [vmem:[%s1252] sm:$0xf]
      %v1254 = vld [vmem:[%s1252 + $0x4] sm:$0xf]
      %v1255 = vld [vmem:[%s1252 + $0x8] sm:$0xf]
      %v1256 = vld [vmem:[%s1252 + $0xc] sm:$0xf]
      %v1257 = vld [vmem:[%s1252 + $0x10] sm:$0xf]
      %v1258 = vld [vmem:[%s1252 + $0x14] sm:$0xf]
      %v1259 = vld [vmem:[%s1252 + $0x18] sm:$0xf]
      %v1260 = vld [vmem:[%s1252 + $0x1c] sm:$0xf]
      %v1269 = vunpack.c.l.b16 %v1253
      %v1270 = vunpack.c.l.b16 %v1254
      %v1271 = vunpack.c.l.b16 %v1255
      %v1272 = vunpack.c.l.b16 %v1256
      %v1273 = vunpack.c.l.b16 %v1257
      %v1274 = vunpack.c.l.b16 %v1258
      %v1275 = vunpack.c.l.b16 %v1259
      %v1276 = vunpack.c.l.b16 %v1260
      %v1277 = vpack.c.b16 %v1270, %v1269
      %v1278 = vpack.c.b16 %v1272, %v1271
      %v1279 = vpack.c.b16 %v1274, %v1273
      %v1280 = vpack.c.b16 %v1276, %v1275
      %1281 = vrot.lane.b32.xlu0 %v325, 121
      %v1282 = vpop.permute.xlu0 %1281
      %1283 = vrot.lane.b32.xlu0 %v326, 121
      %v1284 = vpop.permute.xlu0 %1283
      %1285 = vrot.lane.b32.xlu0 %v327, 121
      %v1286 = vpop.permute.xlu0 %1285
      %1287 = vrot.lane.b32.xlu0 %v328, 121
      %v1288 = vpop.permute.xlu0 %1287
      %1289 = vrot.lane.b32.xlu0 %v329, 121
      %v1290 = vpop.permute.xlu0 %1289
      %1291 = vrot.lane.b32.xlu0 %v330, 121
      %v1292 = vpop.permute.xlu0 %1291
      %1293 = vrot.lane.b32.xlu0 %v331, 121
      %v1294 = vpop.permute.xlu0 %1293
      %1295 = vrot.lane.b32.xlu0 %v332, 121
      %v1296 = vpop.permute.xlu0 %1295
      %vm1297 = vcmask 990208
      %v1298 = vsel %vm1297, %v1282, %v1284
      %v1299 = vsel %vm1297, %v1286, %v1288
      %v1300 = vsel %vm1297, %v1290, %v1292
      %v1301 = vsel %vm1297, %v1294, %v1296
      %v1307 = vsel %vm358, %v1277, 0
      %v1310 = vsel %vm358, %v1278, 0
      %v1313 = vsel %vm358, %v1279, 0
      %v1316 = vsel %vm358, %v1280, 0
      %1318 = vmatprep.subr.bf16.mxu0 0
      %1319 = vmatpush1.bf16.msra.mxu0 %v1298
      %1320 = vmatprep.subr.bf16.mxu0 0
      %1321 = vmatpush1.bf16.msra.mxu0 %v1299
      %1322 = vmatprep.subr.bf16.mxu0 0
      %1323 = vmatpush1.bf16.msra.mxu0 %v1300
      %1324 = vmatprep.subr.bf16.mxu0 0
      %1325 = vmatpush1.bf16.msra.mxu0 %v1301
      %1326 = vmatprep.subr.bf16.mxu0 0
      %1327 = vmatpush1.bf16.msra.mxu0 0
      %1328 = vmatprep.subr.bf16.mxu0 0
      %1329 = vmatpush1.bf16.msra.mxu0 0
      %1330 = vmatprep.subr.bf16.mxu0 0
      %1331 = vmatpush1.bf16.msra.mxu0 0
      %1332 = vmatprep.subr.bf16.mxu0 0
      %1333 = vmatpush1.bf16.msra.mxu0 0
      %1334 = vmatprep.subr.bf16.mxu0 0
      %1335 = vmatpush1.bf16.msra.mxu0 0
      %1336 = vmatprep.subr.bf16.mxu0 0
      %1337 = vmatpush1.bf16.msra.mxu0 0
      %1338 = vmatprep.subr.bf16.mxu0 0
      %1339 = vmatpush1.bf16.msra.mxu0 0
      %1340 = vmatprep.subr.bf16.mxu0 0
      %1341 = vmatpush1.bf16.msra.mxu0 0
      %1342 = vmatprep.subr.bf16.mxu0 0
      %1343 = vmatpush1.bf16.msra.mxu0 0
      %1344 = vmatprep.subr.bf16.mxu0 0
      %1345 = vmatpush1.bf16.msra.mxu0 0
      %1346 = vmatprep.subr.bf16.mxu0 0
      %1347 = vmatpush1.bf16.msra.mxu0 0
      %1348 = vmatprep.subr.bf16.mxu0 0
      %1349 = vmatpush1.bf16.msra.mxu0 0
      %1350 = vmatprep.mubr.bf16.mxu0 0
      %1351 = vmatmul.mubr.bf16.gmra.mrb[0].mxu0 %v1307
      %v1352 = vpop.f32.mrb[0].mxu0
      %v1353 = vadd.f32 0.0, %v1352
      %v1354 = vpop.f32.mrb[0].mxu0
      %v1355 = vpop.f32.mrb[0].mxu0
      %v1356 = vadd.f32 0.0, %v1355
      %v1357 = vpop.f32.mrb[0].mxu0
      %1358 = vmatprep.mubr.bf16.mxu0 0
      %1359 = vmatmul.mubr.bf16.gmra.mrb[0].mxu0 %v1310
      %v1360 = vpop.f32.mrb[0].mxu0
      %v1361 = vadd.f32 0.0, %v1360
      %v1362 = vpop.f32.mrb[0].mxu0
      %v1363 = vpop.f32.mrb[0].mxu0
      %v1364 = vadd.f32 0.0, %v1363
      %v1365 = vpop.f32.mrb[0].mxu0
      %1366 = vmatprep.mubr.bf16.mxu0 0
      %1367 = vmatmul.mubr.bf16.gmra.mrb[0].mxu0 %v1313
      %v1368 = vpop.f32.mrb[0].mxu0
      %v1369 = vadd.f32 0.0, %v1368
      %v1370 = vpop.f32.mrb[0].mxu0
      %v1371 = vpop.f32.mrb[0].mxu0
      %v1372 = vadd.f32 0.0, %v1371
      %v1373 = vpop.f32.mrb[0].mxu0
      %1374 = vmatprep.mubr.bf16.mxu0 0
      %1375 = vmatmul.mubr.bf16.gmra.mrb[0].mxu0 %v1316
      %v1376 = vpop.f32.mrb[0].mxu0
      %v1377 = vadd.f32 0.0, %v1376
      %v1378 = vpop.f32.mrb[0].mxu0
      %v1379 = vpop.f32.mrb[0].mxu0
      %v1380 = vadd.f32 0.0, %v1379
      %v1381 = vpop.f32.mrb[0].mxu0
      %1382 = vdwg.mxu0
      %v1383 = vadd.f32 %v1244, %v1353
      %v1384 = vadd.f32 %v1245, %v1356
      %v1385 = vadd.f32 %v1246, %v1361
      %v1386 = vadd.f32 %v1247, %v1364
      %v1387 = vadd.f32 %v1248, %v1369
      %v1388 = vadd.f32 %v1249, %v1372
      %v1389 = vadd.f32 %v1250, %v1377
      %v1390 = vadd.f32 %v1251, %v1380
      %s1391 = scalar_lea.vmem %s232, 256
      %v1392 = vld [vmem:[%s1391] sm:$0xf]
      %v1393 = vld [vmem:[%s1391 + $0x4] sm:$0xf]
      %v1394 = vld [vmem:[%s1391 + $0x8] sm:$0xf]
      %v1395 = vld [vmem:[%s1391 + $0xc] sm:$0xf]
      %v1396 = vld [vmem:[%s1391 + $0x10] sm:$0xf]
      %v1397 = vld [vmem:[%s1391 + $0x14] sm:$0xf]
      %v1398 = vld [vmem:[%s1391 + $0x18] sm:$0xf]
      %v1399 = vld [vmem:[%s1391 + $0x1c] sm:$0xf]
      %v1408 = vunpack.c.l.b16 %v1392
      %v1409 = vunpack.c.l.b16 %v1393
      %v1410 = vunpack.c.l.b16 %v1394
      %v1411 = vunpack.c.l.b16 %v1395
      %v1412 = vunpack.c.l.b16 %v1396
      %v1413 = vunpack.c.l.b16 %v1397
      %v1414 = vunpack.c.l.b16 %v1398
      %v1415 = vunpack.c.l.b16 %v1399
      %v1416 = vpack.c.b16 %v1409, %v1408
      %v1417 = vpack.c.b16 %v1411, %v1410
      %v1418 = vpack.c.b16 %v1413, %v1412
      %v1419 = vpack.c.b16 %v1415, %v1414
      %1420 = vrot.lane.b32.xlu0 %v325, 120
      %v1421 = vpop.permute.xlu0 %1420
      %1422 = vrot.lane.b32.xlu0 %v326, 120
      %v1423 = vpop.permute.xlu0 %1422
      %1424 = vrot.lane.b32.xlu0 %v327, 120
      %v1425 = vpop.permute.xlu0 %1424
      %1426 = vrot.lane.b32.xlu0 %v328, 120
      %v1427 = vpop.permute.xlu0 %1426
      %1428 = vrot.lane.b32.xlu0 %v329, 120
      %v1429 = vpop.permute.xlu0 %1428
      %1430 = vrot.lane.b32.xlu0 %v330, 120
      %v1431 = vpop.permute.xlu0 %1430
      %1432 = vrot.lane.b32.xlu0 %v331, 120
      %v1433 = vpop.permute.xlu0 %1432
      %1434 = vrot.lane.b32.xlu0 %v332, 120
      %v1435 = vpop.permute.xlu0 %1434
      %vm1436 = vcmask 982016
      %v1437 = vsel %vm1436, %v1421, %v1423
      %v1438 = vsel %vm1436, %v1425, %v1427
      %v1439 = vsel %vm1436, %v1429, %v1431
      %v1440 = vsel %vm1436, %v1433, %v1435
      %v1446 = vsel %vm358, %v1416, 0
      %v1449 = vsel %vm358, %v1417, 0
      %v1452 = vsel %vm358, %v1418, 0
      %v1455 = vsel %vm358, %v1419, 0
      %1457 = vmatprep.subr.bf16.mxu0 0
      %1458 = vmatpush1.bf16.msra.mxu0 %v1437
      %1459 = vmatprep.subr.bf16.mxu0 0
      %1460 = vmatpush1.bf16.msra.mxu0 %v1438
      %1461 = vmatprep.subr.bf16.mxu0 0
      %1462 = vmatpush1.bf16.msra.mxu0 %v1439
      %1463 = vmatprep.subr.bf16.mxu0 0
      %1464 = vmatpush1.bf16.msra.mxu0 %v1440
      %1465 = vmatprep.subr.bf16.mxu0 0
      %1466 = vmatpush1.bf16.msra.mxu0 0
      %1467 = vmatprep.subr.bf16.mxu0 0
      %1468 = vmatpush1.bf16.msra.mxu0 0
      %1469 = vmatprep.subr.bf16.mxu0 0
      %1470 = vmatpush1.bf16.msra.mxu0 0
      %1471 = vmatprep.subr.bf16.mxu0 0
      %1472 = vmatpush1.bf16.msra.mxu0 0
      %1473 = vmatprep.subr.bf16.mxu0 0
      %1474 = vmatpush1.bf16.msra.mxu0 0
      %1475 = vmatprep.subr.bf16.mxu0 0
      %1476 = vmatpush1.bf16.msra.mxu0 0
      %1477 = vmatprep.subr.bf16.mxu0 0
      %1478 = vmatpush1.bf16.msra.mxu0 0
      %1479 = vmatprep.subr.bf16.mxu0 0
      %1480 = vmatpush1.bf16.msra.mxu0 0
      %1481 = vmatprep.subr.bf16.mxu0 0
      %1482 = vmatpush1.bf16.msra.mxu0 0
      %1483 = vmatprep.subr.bf16.mxu0 0
      %1484 = vmatpush1.bf16.msra.mxu0 0
      %1485 = vmatprep.subr.bf16.mxu0 0
      %1486 = vmatpush1.bf16.msra.mxu0 0
      %1487 = vmatprep.subr.bf16.mxu0 0
      %1488 = vmatpush1.bf16.msra.mxu0 0
      %1489 = vmatprep.mubr.bf16.mxu0 0
      %1490 = vmatmul.mubr.bf16.gmra.mrb[0].mxu0 %v1446
      %v1491 = vpop.f32.mrb[0].mxu0
      %v1492 = vadd.f32 0.0, %v1491
      %v1493 = vpop.f32.mrb[0].mxu0
      %v1494 = vpop.f32.mrb[0].mxu0
      %v1495 = vadd.f32 0.0, %v1494
      %v1496 = vpop.f32.mrb[0].mxu0
      %1497 = vmatprep.mubr.bf16.mxu0 0
      %1498 = vmatmul.mubr.bf16.gmra.mrb[0].mxu0 %v1449
      %v1499 = vpop.f32.mrb[0].mxu0
      %v1500 = vadd.f32 0.0, %v1499
      %v1501 = vpop.f32.mrb[0].mxu0
      %v1502 = vpop.f32.mrb[0].mxu0
      %v1503 = vadd.f32 0.0, %v1502
      %v1504 = vpop.f32.mrb[0].mxu0
      %1505 = vmatprep.mubr.bf16.mxu0 0
      %1506 = vmatmul.mubr.bf16.gmra.mrb[0].mxu0 %v1452
      %v1507 = vpop.f32.mrb[0].mxu0
      %v1508 = vadd.f32 0.0, %v1507
      %v1509 = vpop.f32.mrb[0].mxu0
      %v1510 = vpop.f32.mrb[0].mxu0
      %v1511 = vadd.f32 0.0, %v1510
      %v1512 = vpop.f32.mrb[0].mxu0
      %1513 = vmatprep.mubr.bf16.mxu0 0
      %1514 = vmatmul.mubr.bf16.gmra.mrb[0].mxu0 %v1455
      %v1515 = vpop.f32.mrb[0].mxu0
      %v1516 = vadd.f32 0.0, %v1515
      %v1517 = vpop.f32.mrb[0].mxu0
      %v1518 = vpop.f32.mrb[0].mxu0
      %v1519 = vadd.f32 0.0, %v1518
      %v1520 = vpop.f32.mrb[0].mxu0
      %1521 = vdwg.mxu0
      %v1522 = vadd.f32 %v1383, %v1492
      %v1523 = vadd.f32 %v1384, %v1495
      %v1524 = vadd.f32 %v1385, %v1500
      %v1525 = vadd.f32 %v1386, %v1503
      %v1526 = vadd.f32 %v1387, %v1508
      %v1527 = vadd.f32 %v1388, %v1511
      %v1528 = vadd.f32 %v1389, %v1516
      %v1529 = vadd.f32 %v1390, %v1519
      %s1530 = scalar_lea.vmem %s232, 288
      %v1531 = vld [vmem:[%s1530] sm:$0xf]
      %v1532 = vld [vmem:[%s1530 + $0x4] sm:$0xf]
      %v1533 = vld [vmem:[%s1530 + $0x8] sm:$0xf]
      %v1534 = vld [vmem:[%s1530 + $0xc] sm:$0xf]
      %v1535 = vld [vmem:[%s1530 + $0x10] sm:$0xf]
      %v1536 = vld [vmem:[%s1530 + $0x14] sm:$0xf]
      %v1537 = vld [vmem:[%s1530 + $0x18] sm:$0xf]
      %v1538 = vld [vmem:[%s1530 + $0x1c] sm:$0xf]
      %v1547 = vunpack.c.l.b16 %v1531
      %v1548 = vunpack.c.l.b16 %v1532
      %v1549 = vunpack.c.l.b16 %v1533
      %v1550 = vunpack.c.l.b16 %v1534
      %v1551 = vunpack.c.l.b16 %v1535
      %v1552 = vunpack.c.l.b16 %v1536
      %v1553 = vunpack.c.l.b16 %v1537
      %v1554 = vunpack.c.l.b16 %v1538
      %v1555 = vpack.c.b16 %v1548, %v1547
      %v1556 = vpack.c.b16 %v1550, %v1549
      %v1557 = vpack.c.b16 %v1552, %v1551
      %v1558 = vpack.c.b16 %v1554, %v1553
      %1559 = vrot.lane.b32.xlu0 %v325, 119
      %v1560 = vpop.permute.xlu0 %1559
      %1561 = vrot.lane.b32.xlu0 %v326, 119
      %v1562 = vpop.permute.xlu0 %1561
      %1563 = vrot.lane.b32.xlu0 %v327, 119
      %v1564 = vpop.permute.xlu0 %1563
      %1565 = vrot.lane.b32.xlu0 %v328, 119
      %v1566 = vpop.permute.xlu0 %1565
      %1567 = vrot.lane.b32.xlu0 %v329, 119
      %v1568 = vpop.permute.xlu0 %1567
      %1569 = vrot.lane.b32.xlu0 %v330, 119
      %v1570 = vpop.permute.xlu0 %1569
      %1571 = vrot.lane.b32.xlu0 %v331, 119
      %v1572 = vpop.permute.xlu0 %1571
      %1573 = vrot.lane.b32.xlu0 %v332, 119
      %v1574 = vpop.permute.xlu0 %1573
      %vm1575 = vcmask 973824
      %v1576 = vsel %vm1575, %v1560, %v1562
      %v1577 = vsel %vm1575, %v1564, %v1566
      %v1578 = vsel %vm1575, %v1568, %v1570
      %v1579 = vsel %vm1575, %v1572, %v1574
      %v1585 = vsel %vm358, %v1555, 0
      %v1588 = vsel %vm358, %v1556, 0
      %v1591 = vsel %vm358, %v1557, 0
      %v1594 = vsel %vm358, %v1558, 0
      %1596 = vmatprep.subr.bf16.mxu0 0
      %1597 = vmatpush1.bf16.msra.mxu0 %v1576
      %1598 = vmatprep.subr.bf16.mxu0 0
      %1599 = vmatpush1.bf16.msra.mxu0 %v1577
      %1600 = vmatprep.subr.bf16.mxu0 0
      %1601 = vmatpush1.bf16.msra.mxu0 %v1578
      %1602 = vmatprep.subr.bf16.mxu0 0
      %1603 = vmatpush1.bf16.msra.mxu0 %v1579
      %1604 = vmatprep.subr.bf16.mxu0 0
      %1605 = vmatpush1.bf16.msra.mxu0 0
      %1606 = vmatprep.subr.bf16.mxu0 0
      %1607 = vmatpush1.bf16.msra.mxu0 0
      %1608 = vmatprep.subr.bf16.mxu0 0
      %1609 = vmatpush1.bf16.msra.mxu0 0
      %1610 = vmatprep.subr.bf16.mxu0 0
      %1611 = vmatpush1.bf16.msra.mxu0 0
      %1612 = vmatprep.subr.bf16.mxu0 0
      %1613 = vmatpush1.bf16.msra.mxu0 0
      %1614 = vmatprep.subr.bf16.mxu0 0
      %1615 = vmatpush1.bf16.msra.mxu0 0
      %1616 = vmatprep.subr.bf16.mxu0 0
      %1617 = vmatpush1.bf16.msra.mxu0 0
      %1618 = vmatprep.subr.bf16.mxu0 0
      %1619 = vmatpush1.bf16.msra.mxu0 0
      %1620 = vmatprep.subr.bf16.mxu0 0
      %1621 = vmatpush1.bf16.msra.mxu0 0
      %1622 = vmatprep.subr.bf16.mxu0 0
      %1623 = vmatpush1.bf16.msra.mxu0 0
      %1624 = vmatprep.subr.bf16.mxu0 0
      %1625 = vmatpush1.bf16.msra.mxu0 0
      %1626 = vmatprep.subr.bf16.mxu0 0
      %1627 = vmatpush1.bf16.msra.mxu0 0
      %1628 = vmatprep.mubr.bf16.mxu0 0
      %1629 = vmatmul.mubr.bf16.gmra.mrb[0].mxu0 %v1585
      %v1630 = vpop.f32.mrb[0].mxu0
      %v1631 = vadd.f32 0.0, %v1630
      %v1632 = vpop.f32.mrb[0].mxu0
      %v1633 = vpop.f32.mrb[0].mxu0
      %v1634 = vadd.f32 0.0, %v1633
      %v1635 = vpop.f32.mrb[0].mxu0
      %1636 = vmatprep.mubr.bf16.mxu0 0
      %1637 = vmatmul.mubr.bf16.gmra.mrb[0].mxu0 %v1588
      %v1638 = vpop.f32.mrb[0].mxu0
      %v1639 = vadd.f32 0.0, %v1638
      %v1640 = vpop.f32.mrb[0].mxu0
      %v1641 = vpop.f32.mrb[0].mxu0
      %v1642 = vadd.f32 0.0, %v1641
      %v1643 = vpop.f32.mrb[0].mxu0
      %1644 = vmatprep.mubr.bf16.mxu0 0
      %1645 = vmatmul.mubr.bf16.gmra.mrb[0].mxu0 %v1591
      %v1646 = vpop.f32.mrb[0].mxu0
      %v1647 = vadd.f32 0.0, %v1646
      %v1648 = vpop.f32.mrb[0].mxu0
      %v1649 = vpop.f32.mrb[0].mxu0
      %v1650 = vadd.f32 0.0, %v1649
      %v1651 = vpop.f32.mrb[0].mxu0
      %1652 = vmatprep.mubr.bf16.mxu0 0
      %1653 = vmatmul.mubr.bf16.gmra.mrb[0].mxu0 %v1594
      %v1654 = vpop.f32.mrb[0].mxu0
      %v1655 = vadd.f32 0.0, %v1654
      %v1656 = vpop.f32.mrb[0].mxu0
      %v1657 = vpop.f32.mrb[0].mxu0
      %v1658 = vadd.f32 0.0, %v1657
      %v1659 = vpop.f32.mrb[0].mxu0
      %1660 = vdwg.mxu0
      %v1661 = vadd.f32 %v1522, %v1631
      %v1662 = vadd.f32 %v1523, %v1634
      %v1663 = vadd.f32 %v1524, %v1639
      %v1664 = vadd.f32 %v1525, %v1642
      %v1665 = vadd.f32 %v1526, %v1647
      %v1666 = vadd.f32 %v1527, %v1650
      %v1667 = vadd.f32 %v1528, %v1655
      %v1668 = vadd.f32 %v1529, %v1658
      %s1669 = scalar_lea.vmem %s232, 320
      %v1670 = vld [vmem:[%s1669] sm:$0xf]
      %v1671 = vld [vmem:[%s1669 + $0x4] sm:$0xf]
      %v1672 = vld [vmem:[%s1669 + $0x8] sm:$0xf]
      %v1673 = vld [vmem:[%s1669 + $0xc] sm:$0xf]
      %v1674 = vld [vmem:[%s1669 + $0x10] sm:$0xf]
      %v1675 = vld [vmem:[%s1669 + $0x14] sm:$0xf]
      %v1676 = vld [vmem:[%s1669 + $0x18] sm:$0xf]
      %v1677 = vld [vmem:[%s1669 + $0x1c] sm:$0xf]
      %v1686 = vunpack.c.l.b16 %v1670
      %v1687 = vunpack.c.l.b16 %v1671
      %v1688 = vunpack.c.l.b16 %v1672
      %v1689 = vunpack.c.l.b16 %v1673
      %v1690 = vunpack.c.l.b16 %v1674
      %v1691 = vunpack.c.l.b16 %v1675
      %v1692 = vunpack.c.l.b16 %v1676
      %v1693 = vunpack.c.l.b16 %v1677
      %v1694 = vpack.c.b16 %v1687, %v1686
      %v1695 = vpack.c.b16 %v1689, %v1688
      %v1696 = vpack.c.b16 %v1691, %v1690
      %v1697 = vpack.c.b16 %v1693, %v1692
      %1698 = vrot.lane.b32.xlu0 %v325, 118
      %v1699 = vpop.permute.xlu0 %1698
      %1700 = vrot.lane.b32.xlu0 %v326, 118
      %v1701 = vpop.permute.xlu0 %1700
      %1702 = vrot.lane.b32.xlu0 %v327, 118
      %v1703 = vpop.permute.xlu0 %1702
      %1704 = vrot.lane.b32.xlu0 %v328, 118
      %v1705 = vpop.permute.xlu0 %1704
      %1706 = vrot.lane.b32.xlu0 %v329, 118
      %v1707 = vpop.permute.xlu0 %1706
      %1708 = vrot.lane.b32.xlu0 %v330, 118
      %v1709 = vpop.permute.xlu0 %1708
      %1710 = vrot.lane.b32.xlu0 %v331, 118
      %v1711 = vpop.permute.xlu0 %1710
      %1712 = vrot.lane.b32.xlu0 %v332, 118
      %v1713 = vpop.permute.xlu0 %1712
      %vm1714 = vcmask 965632
      %v1715 = vsel %vm1714, %v1699, %v1701
      %v1716 = vsel %vm1714, %v1703, %v1705
      %v1717 = vsel %vm1714, %v1707, %v1709
      %v1718 = vsel %vm1714, %v1711, %v1713
      %v1724 = vsel %vm358, %v1694, 0
      %v1727 = vsel %vm358, %v1695, 0
      %v1730 = vsel %vm358, %v1696, 0
      %v1733 = vsel %vm358, %v1697, 0
      %1735 = vmatprep.subr.bf16.mxu0 0
      %1736 = vmatpush1.bf16.msra.mxu0 %v1715
      %1737 = vmatprep.subr.bf16.mxu0 0
      %1738 = vmatpush1.bf16.msra.mxu0 %v1716
      %1739 = vmatprep.subr.bf16.mxu0 0
      %1740 = vmatpush1.bf16.msra.mxu0 %v1717
      %1741 = vmatprep.subr.bf16.mxu0 0
      %1742 = vmatpush1.bf16.msra.mxu0 %v1718
      %1743 = vmatprep.subr.bf16.mxu0 0
      %1744 = vmatpush1.bf16.msra.mxu0 0
      %1745 = vmatprep.subr.bf16.mxu0 0
      %1746 = vmatpush1.bf16.msra.mxu0 0
      %1747 = vmatprep.subr.bf16.mxu0 0
      %1748 = vmatpush1.bf16.msra.mxu0 0
      %1749 = vmatprep.subr.bf16.mxu0 0
      %1750 = vmatpush1.bf16.msra.mxu0 0
      %1751 = vmatprep.subr.bf16.mxu0 0
      %1752 = vmatpush1.bf16.msra.mxu0 0
      %1753 = vmatprep.subr.bf16.mxu0 0
      %1754 = vmatpush1.bf16.msra.mxu0 0
      %1755 = vmatprep.subr.bf16.mxu0 0
      %1756 = vmatpush1.bf16.msra.mxu0 0
      %1757 = vmatprep.subr.bf16.mxu0 0
      %1758 = vmatpush1.bf16.msra.mxu0 0
      %1759 = vmatprep.subr.bf16.mxu0 0
      %1760 = vmatpush1.bf16.msra.mxu0 0
      %1761 = vmatprep.subr.bf16.mxu0 0
      %1762 = vmatpush1.bf16.msra.mxu0 0
      %1763 = vmatprep.subr.bf16.mxu0 0
      %1764 = vmatpush1.bf16.msra.mxu0 0
      %1765 = vmatprep.subr.bf16.mxu0 0
      %1766 = vmatpush1.bf16.msra.mxu0 0
      %1767 = vmatprep.mubr.bf16.mxu0 0
      %1768 = vmatmul.mubr.bf16.gmra.mrb[0].mxu0 %v1724
      %v1769 = vpop.f32.mrb[0].mxu0
      %v1770 = vadd.f32 0.0, %v1769
      %v1771 = vpop.f32.mrb[0].mxu0
      %v1772 = vpop.f32.mrb[0].mxu0
      %v1773 = vadd.f32 0.0, %v1772
      %v1774 = vpop.f32.mrb[0].mxu0
      %1775 = vmatprep.mubr.bf16.mxu0 0
      %1776 = vmatmul.mubr.bf16.gmra.mrb[0].mxu0 %v1727
      %v1777 = vpop.f32.mrb[0].mxu0
      %v1778 = vadd.f32 0.0, %v1777
      %v1779 = vpop.f32.mrb[0].mxu0
      %v1780 = vpop.f32.mrb[0].mxu0
      %v1781 = vadd.f32 0.0, %v1780
      %v1782 = vpop.f32.mrb[0].mxu0
      %1783 = vmatprep.mubr.bf16.mxu0 0
      %1784 = vmatmul.mubr.bf16.gmra.mrb[0].mxu0 %v1730
      %v1785 = vpop.f32.mrb[0].mxu0
      %v1786 = vadd.f32 0.0, %v1785
      %v1787 = vpop.f32.mrb[0].mxu0
      %v1788 = vpop.f32.mrb[0].mxu0
      %v1789 = vadd.f32 0.0, %v1788
      %v1790 = vpop.f32.mrb[0].mxu0
      %1791 = vmatprep.mubr.bf16.mxu0 0
      %1792 = vmatmul.mubr.bf16.gmra.mrb[0].mxu0 %v1733
      %v1793 = vpop.f32.mrb[0].mxu0
      %v1794 = vadd.f32 0.0, %v1793
      %v1795 = vpop.f32.mrb[0].mxu0
      %v1796 = vpop.f32.mrb[0].mxu0
      %v1797 = vadd.f32 0.0, %v1796
      %v1798 = vpop.f32.mrb[0].mxu0
      %1799 = vdwg.mxu0
      %v1800 = vadd.f32 %v1661, %v1770
      %v1801 = vadd.f32 %v1662, %v1773
      %v1802 = vadd.f32 %v1663, %v1778
      %v1803 = vadd.f32 %v1664, %v1781
      %v1804 = vadd.f32 %v1665, %v1786
      %v1805 = vadd.f32 %v1666, %v1789
      %v1806 = vadd.f32 %v1667, %v1794
      %v1807 = vadd.f32 %v1668, %v1797
      %v1808 = vld [vmem:[%s237] sm:$0xff]
      %v1809 = vld [vmem:[%s237 + $0x8] sm:$0xff]
      %v1810 = vld [vmem:[%s237 + $0x10] sm:$0xff]
      %v1811 = vld [vmem:[%s237 + $0x18] sm:$0xff]
      %v1812 = vld [vmem:[%s237 + $0x20] sm:$0xff]
      %v1813 = vld [vmem:[%s237 + $0x28] sm:$0xff]
      %v1814 = vld [vmem:[%s237 + $0x30] sm:$0xff]
      %v1815 = vld [vmem:[%s237 + $0x38] sm:$0xff]
      %1817 = vset.pattern.permute.xlu0 0
      %1818 = vperm.xlu0 %1817, %v1808
      %v1819 = vpop.permute.xlu0 %1818
      %1822 = vset.pattern.permute.xlu0 0
      %1823 = vperm.xlu0 %1822, %v1809
      %v1824 = vpop.permute.xlu0 %1823
      %1827 = vset.pattern.permute.xlu0 0
      %1828 = vperm.xlu0 %1827, %v1810
      %v1829 = vpop.permute.xlu0 %1828
      %1832 = vset.pattern.permute.xlu0 0
      %1833 = vperm.xlu0 %1832, %v1811
      %v1834 = vpop.permute.xlu0 %1833
      %1837 = vset.pattern.permute.xlu0 0
      %1838 = vperm.xlu0 %1837, %v1812
      %v1839 = vpop.permute.xlu0 %1838
      %1842 = vset.pattern.permute.xlu0 0
      %1843 = vperm.xlu0 %1842, %v1813
      %v1844 = vpop.permute.xlu0 %1843
      %1847 = vset.pattern.permute.xlu0 0
      %1848 = vperm.xlu0 %1847, %v1814
      %v1849 = vpop.permute.xlu0 %1848
      %1852 = vset.pattern.permute.xlu0 0
      %1853 = vperm.xlu0 %1852, %v1815
      %v1854 = vpop.permute.xlu0 %1853
      %v1856 = vadd.f32 %v1800, %v1819
      %v1857 = vadd.f32 %v1801, %v1824
      %v1858 = vadd.f32 %v1802, %v1829
      %v1859 = vadd.f32 %v1803, %v1834
      %v1860 = vadd.f32 %v1804, %v1839
      %v1861 = vadd.f32 %v1805, %v1844
      %v1862 = vadd.f32 %v1806, %v1849
      %v1863 = vadd.f32 %v1807, %v1854
      %vm1864 = vcmp.ge.f32.partialorder %v1856, 0.0
      %vm1865 = vcmp.ge.f32.partialorder %v1857, 0.0
      %vm1866 = vcmp.ge.f32.partialorder %v1858, 0.0
      %vm1867 = vcmp.ge.f32.partialorder %v1859, 0.0
      %vm1868 = vcmp.ge.f32.partialorder %v1860, 0.0
      %vm1869 = vcmp.ge.f32.partialorder %v1861, 0.0
      %vm1870 = vcmp.ge.f32.partialorder %v1862, 0.0
      %vm1871 = vcmp.ge.f32.partialorder %v1863, 0.0
      %v1872 = vmul.f32 %v1856, 0.2
      %v1873 = vmul.f32 %v1857, 0.2
      %v1874 = vmul.f32 %v1858, 0.2
      %v1875 = vmul.f32 %v1859, 0.2
      %v1876 = vmul.f32 %v1860, 0.2
      %v1877 = vmul.f32 %v1861, 0.2
      %v1878 = vmul.f32 %v1862, 0.2
      %v1879 = vmul.f32 %v1863, 0.2
      %v1880 = vsel %vm1864, %v1856, %v1872
      %v1881 = vsel %vm1865, %v1857, %v1873
      %v1882 = vsel %vm1866, %v1858, %v1874
      %v1883 = vsel %vm1867, %v1859, %v1875
      %v1884 = vsel %vm1868, %v1860, %v1876
      %v1885 = vsel %vm1869, %v1861, %v1877
      %v1886 = vsel %vm1870, %v1862, %v1878
      %v1887 = vsel %vm1871, %v1863, %v1879
      %1888 = vst [vmem:[%s246] sm:$0xff] %v1880
      %1889 = vst [vmem:[%s246 + $0x8] sm:$0xff] %v1881
      %1890 = vst [vmem:[%s246 + $0x10] sm:$0xff] %v1882
      %1891 = vst [vmem:[%s246 + $0x18] sm:$0xff] %v1883
      %1892 = vst [vmem:[%s246 + $0x20] sm:$0xff] %v1884
      %1893 = vst [vmem:[%s246 + $0x28] sm:$0xff] %v1885
      %1894 = vst [vmem:[%s246 + $0x30] sm:$0xff] %v1886
      %1895 = vst [vmem:[%s246 + $0x38] sm:$0xff] %v1887
      %p1896 = scmp.lt.s32.totalorder %s19, 1
      %s1897 = scalar_select %p1896, %s19, 1
      %p1898 = scmp.lt.s32.totalorder %s18, 0
      %s1899 = scalar_select %p1898, %s18, 0
      %s1900 = smul.addr %s1899, 8
      %s1901 = smul.addr %s1897, 8
      %s1902 = sadd.s32 %s1900, %s1901
      %s1903 = smul.addr %s1902, 8
      %s1904 = scalar_lea.vmem %s3, %s1903
      // Predicated region
      $region33: #{forward.19} parent=31 // pred_check
        %p1905 = pneg %p126
      $region34: #{forward.19} parent=31 // pred_check_branch
        %1907 = sbr.rel (%p1905) target = $region36
      $region35: #{forward.19} parent=31 // pred_region
        _
      $region36: #{forward.19} parent=31 // pred_fallthru
        _
    $region32: #{forward.19} parent=5 // pred_fallthru
      _
    %p1908 = scmp.le.s32.totalorder 2, %s9
    // Predicated region
    $region37: #{forward.19} parent=5 // pred_check
      %p1909 = pneg %p1908
    $region38: #{forward.19} parent=5 // pred_check_branch
      %1911 = sbr.rel (%p1909) target = $region40
    $region39: #{forward.19} parent=5 // pred_region
      %s1912 = ssub.s32 %s9, 2
      // Predicated region
      $region41: #{forward.19} parent=39 // pred_check
        %p1913 = pneg %p132
      $region42: #{forward.19} parent=39 // pred_check_branch
        %1915 = sbr.rel (%p1913) target = $region44
      $region43: #{forward.19} parent=39 // pred_region
        %p1916 = scmp.lt.s32.totalorder %s21, 1
        %s1917 = scalar_select %p1916, %s21, 1
        %p1918 = scmp.lt.s32.totalorder %s20, 0
        %s1919 = scalar_select %p1918, %s20, 0
        %s1920 = smul.addr %s1919, 8
        %s1921 = smul.addr %s1917, 8
        %s1922 = sadd.s32 %s1920, %s1921
        %s1923 = smul.addr %s1922, 8
        %s1924 = scalar_lea.vmem %s3, %s1923
      $region44: #{forward.19} parent=39 // pred_fallthru
        _
    $region40: #{forward.19} parent=5 // pred_fallthru
      _
  $region6: #{forward.19} parent=0 // loop_footer
    %s13 = sadd.s32 1, %s9
  $region7: #{forward.19} parent=0 // loop_footer_branch
    %8 = sbr.rel target = $region3
  $region8: #{forward.19} parent=0 // loop_exit
    _

// kernel: forward.20
$region0: #{forward.20}
  #allocation0 [shape = 'u32[]', space=smem, size = 0x4, offset = 0x4, fixed_abs, tag = 'smem constant byte address 0x4 - core index']
  #allocation1 [shape = 'u32[144,128]{1,0:T(1,128)}', space=vmem, size = 0x12000, scoped, tag = 'internal scratch']
  %s0 = inlined_call_operand.vmem [shape: bf16[2,1,64,132], index: 0, kind: input, shape index: {}]
  %s1 = inlined_call_operand.vmem [shape: bf16[1,5,128,64], index: 1, kind: input, shape index: {}]
  %s2 = inlined_call_operand.vmem [shape: f32[1,128,1], index: 2, kind: input, shape index: {}]
  %s3 = inlined_call_operand.vmem [shape: f32[2,1,128,128], index: 3, kind: output, shape index: {}]
  %s4 = sld [smem:[#allocation0]]
  $region45: #{forward.20} parent=0
    _
  %s6 = ssub.s32 1, %s4
  %s7 = scalar_select 0, %s6, %s4
  loop: start=0, step=1, limit=4
  $region2: #{forward.20} parent=0 // loop_pre_header
    _
  $region3: #{forward.20} parent=0 // loop_header
    %s9 = sphi 0, %s13
    %p10 = scmp.ge.s32.totalorder %s9, 4
    %s16 = sphi 0, %s28
    %s17 = sphi 0, %s24
    %s18 = sphi 0, %s16
    %s19 = sphi 0, %s17
    %s20 = sphi 0, %s18
    %s21 = sphi 0, %s19
    %s33 = sphi 0, %s35
    %s36 = sphi 0, %s33
    %s37 = sphi 0, %s36
    %s53 = sphi 0, %s37
    %s59 = sphi 0, %s61
    %s62 = sphi 0, %s59
    %s63 = sphi 0, %s62
    %s79 = sphi 0, %s63
    %s85 = sphi 0, %s87
    %s88 = sphi 0, %s85
    %s89 = sphi 0, %s88
    %s105 = sphi 0, %s89
    %s113 = sphi 0, %s115
    %s116 = sphi 0, %s113
    %s117 = sphi 0, %s116
    %s133 = sphi 0, %s117
  $region4: #{forward.20} parent=0 // loop_header_branch
    %12 = sbr.rel (%p10) target = $region8
  $region5: #{forward.20} parent=0 // loop_body
    %s14 = ssub.s32 %s9, 1
    %s15 = ssub.s32 %s9, 2
    %s22 = sadd.s32 1, %s17
    %p23 = scmp.ge.s32.totalorder %s22, 2
    %s24 = scalar_select %p23, 0, %s22
    %s25 = sadd.s32 1, %s16
    %s26 = scalar_select %p23, %s25, %s16
    %p27 = scmp.ge.s32.totalorder %s26, 1
    %s28 = scalar_select %p27, 0, %s26
    %s29 = ssub.s32 %s17, %s24
    %s30 = ssub.s32 %s16, %s28
    %s31 = sor.u32 %s29, %s30
    %p32 = scmp.eq.s32.totalorder %s31, 0
    %s34 = sadd.s32 %s33, 1
    %s35 = scalar_select %p32, %s33, %s34
    %p38 = pneg %p32
    %p39 = scmp.eq.s32.totalorder %s9, 1
    %p40 = por %p38, %p39
    %p41 = scmp.ne.s32.totalorder %s33, %s36
    %p42 = scmp.eq.s32.totalorder %s9, 0
    %p43 = por %p41, %p42
    %p44 = scmp.ne.s32.totalorder %s33, %s36
    %p45 = scmp.eq.s32.totalorder %s14, 1
    %p46 = por %p44, %p45
    %p47 = scmp.ne.s32.totalorder %s36, %s37
    %p48 = scmp.eq.s32.totalorder %s14, 0
    %p49 = por %p47, %p48
    %p50 = scmp.ne.s32.totalorder %s36, %s37
    %p51 = scmp.eq.s32.totalorder %s15, 1
    %p52 = por %p50, %p51
    %p54 = scmp.ne.s32.totalorder %s37, %s53
    %p55 = scmp.eq.s32.totalorder %s15, 0
    %p56 = por %p54, %p55
    %s57 = ssub.s32 %s16, %s28
    %p58 = scmp.eq.s32.totalorder %s57, 0
    %s60 = sadd.s32 %s59, 1
    %s61 = scalar_select %p58, %s59, %s60
    %p64 = pneg %p58
    %p65 = scmp.eq.s32.totalorder %s9, 1
    %p66 = por %p64, %p65
    %p67 = scmp.ne.s32.totalorder %s59, %s62
    %p68 = scmp.eq.s32.totalorder %s9, 0
    %p69 = por %p67, %p68
    %p70 = scmp.ne.s32.totalorder %s59, %s62
    %p71 = scmp.eq.s32.totalorder %s14, 1
    %p72 = por %p70, %p71
    %p73 = scmp.ne.s32.totalorder %s62, %s63
    %p74 = scmp.eq.s32.totalorder %s14, 0
    %p75 = por %p73, %p74
    %p76 = scmp.ne.s32.totalorder %s62, %s63
    %p77 = scmp.eq.s32.totalorder %s15, 1
    %p78 = por %p76, %p77
    %p80 = scmp.ne.s32.totalorder %s63, %s79
    %p81 = scmp.eq.s32.totalorder %s15, 0
    %p82 = por %p80, %p81
    %s83 = ssub.s32 %s16, %s28
    %p84 = scmp.eq.s32.totalorder %s83, 0
    %s86 = sadd.s32 %s85, 1
    %s87 = scalar_select %p84, %s85, %s86
    %p90 = pneg %p84
    %p91 = scmp.eq.s32.totalorder %s9, 1
    %p92 = por %p90, %p91
    %p93 = scmp.ne.s32.totalorder %s85, %s88
    %p94 = scmp.eq.s32.totalorder %s9, 0
    %p95 = por %p93, %p94
    %p96 = scmp.ne.s32.totalorder %s85, %s88
    %p97 = scmp.eq.s32.totalorder %s14, 1
    %p98 = por %p96, %p97
    %p99 = scmp.ne.s32.totalorder %s88, %s89
    %p100 = scmp.eq.s32.totalorder %s14, 0
    %p101 = por %p99, %p100
    %p102 = scmp.ne.s32.totalorder %s88, %s89
    %p103 = scmp.eq.s32.totalorder %s15, 1
    %p104 = por %p102, %p103
    %p106 = scmp.ne.s32.totalorder %s89, %s105
    %p107 = scmp.eq.s32.totalorder %s15, 0
    %p108 = por %p106, %p107
    %s109 = ssub.s32 %s17, %s24
    %s110 = ssub.s32 %s16, %s28
    %s111 = sor.u32 %s109, %s110
    %p112 = scmp.eq.s32.totalorder %s111, 0
    %s114 = sadd.s32 %s113, 1
    %s115 = scalar_select %p112, %s113, %s114
    %p118 = pneg %p112
    %p119 = scmp.eq.s32.totalorder %s9, 1
    %p120 = por %p118, %p119
    %p121 = scmp.ne.s32.totalorder %s113, %s116
    %p122 = scmp.eq.s32.totalorder %s9, 0
    %p123 = por %p121, %p122
    %p124 = scmp.ne.s32.totalorder %s113, %s116
    %p125 = scmp.eq.s32.totalorder %s14, 1
    %p126 = por %p124, %p125
    %p127 = scmp.ne.s32.totalorder %s116, %s117
    %p128 = scmp.eq.s32.totalorder %s14, 0
    %p129 = por %p127, %p128
    %p130 = scmp.ne.s32.totalorder %s116, %s117
    %p131 = scmp.eq.s32.totalorder %s15, 1
    %p132 = por %p130, %p131
    %p134 = scmp.ne.s32.totalorder %s117, %s133
    %p135 = scmp.eq.s32.totalorder %s15, 0
    %p136 = por %p134, %p135
    %p137 = scmp.le.s32.totalorder 1, %s9
    %p138 = scmp.lt.s32.totalorder %s9, 3
    %p139 = pnand %p137, %p138
    %p140 = pneg %p139
    // Predicated region
    $region9: #{forward.20} parent=5 // pred_check
      _
    $region10: #{forward.20} parent=5 // pred_check_branch
      %142 = sbr.rel (%p139) target = $region12
    $region11: #{forward.20} parent=5 // pred_region
      %s143 = ssub.s32 %s9, 1
      // Predicated region
      $region13: #{forward.20} parent=11 // pred_check
        %p144 = pneg %p75
      $region14: #{forward.20} parent=11 // pred_check_branch
        %146 = sbr.rel (%p144) target = $region16
      $region15: #{forward.20} parent=11 // pred_region
        %p147 = scmp.lt.s32.totalorder %s18, 0
        %s148 = scalar_select %p147, %s18, 0
        %s149 = smul.addr %s148, 80
        %s150 = smul.addr %s149, 4
        %s151 = scalar_lea.vmem %s1, %s150
      $region16: #{forward.20} parent=11 // pred_fallthru
        _
      // Predicated region
      $region17: #{forward.20} parent=11 // pred_check
        %p152 = pneg %p101
      $region18: #{forward.20} parent=11 // pred_check_branch
        %154 = sbr.rel (%p152) target = $region20
      $region19: #{forward.20} parent=11 // pred_region
        %p155 = scmp.lt.s32.totalorder %s18, 0
        %s156 = scalar_select %p155, %s18, 0
        %s157 = smul.addr %s156, 16
        %s158 = smul.addr %s157, 8
        %s159 = scalar_lea.vmem %s2, %s158
      $region20: #{forward.20} parent=11 // pred_fallthru
        _
    $region12: #{forward.20} parent=5 // pred_fallthru
      _
    %p160 = scmp.lt.s32.totalorder %s9, 2
    // Predicated region
    $region21: #{forward.20} parent=5 // pred_check
      %p161 = pneg %p160
    $region22: #{forward.20} parent=5 // pred_check_branch
      %163 = sbr.rel (%p161) target = $region24
    $region23: #{forward.20} parent=5 // pred_region
      // Predicated region
      $region25: #{forward.20} parent=23 // pred_check
        %p164 = pneg %p43
      $region26: #{forward.20} parent=23 // pred_check_branch
        %166 = sbr.rel (%p164) target = $region28
      $region27: #{forward.20} parent=23 // pred_region
        %p167 = scmp.lt.s32.totalorder %s17, 1
        %s168 = scalar_select %p167, %s17, 1
        %p169 = scmp.lt.s32.totalorder %s16, 0
        %s170 = scalar_select %p169, %s16, 0
        %s171 = smul.addr %s170, 16
        %s172 = smul.addr %s168, 16
        %s173 = sadd.s32 %s171, %s172
        %s174 = smul.addr %s173, 4
        %s175 = scalar_lea.vmem %s0, %s174
      $region28: #{forward.20} parent=23 // pred_fallthru
        _
    $region24: #{forward.20} parent=5 // pred_fallthru
      _
    %p176 = scmp.le.s32.totalorder 1, %s9
    %p177 = scmp.lt.s32.totalorder %s9, 3
    %p178 = pnand %p176, %p177
    %p179 = pneg %p178
    // Predicated region
    $region29: #{forward.20} parent=5 // pred_check
      _
    $region30: #{forward.20} parent=5 // pred_check_branch
      %181 = sbr.rel (%p178) target = $region32
    $region31: #{forward.20} parent=5 // pred_region
      %s182 = ssub.s32 %s9, 1
      %p183 = scmp.lt.s32.totalorder %s19, 1
      %s184 = scalar_select %p183, %s19, 1
      %p185 = scmp.lt.s32.totalorder %s18, 0
      %s186 = scalar_select %p185, %s18, 0
      %s187 = smul.addr %s186, 16
      %s188 = smul.addr %s184, 16
      %s189 = sadd.s32 %s187, %s188
      %s190 = smul.addr %s189, 4
      %s191 = scalar_lea.vmem %s0, %s190
      %p192 = pneg %p49
      %p193 = pneg %p46
      %p194 = scmp.lt.s32.totalorder %s18, 0
      %s195 = scalar_select %p194, %s18, 0
      %s196 = smul.addr %s195, 80
      %s197 = smul.addr %s196, 4
      %s198 = scalar_lea.vmem %s1, %s197
      %p199 = pneg %p75
      %p200 = pneg %p72
      %p201 = scmp.lt.s32.totalorder %s18, 0
      %s202 = scalar_select %p201, %s18, 0
      %s203 = smul.addr %s202, 16
      %s204 = smul.addr %s203, 8
      %s205 = scalar_lea.vmem %s2, %s204
      %p206 = pneg %p101
      %p207 = pneg %p98
      %p208 = pneg %p129
      %p209 = pneg %p126
      %p210 = scmp.lt.s32.totalorder %s19, 1
      %s211 = scalar_select %p210, %s19, 1
      %p212 = scmp.lt.s32.totalorder %s18, 0
      %s213 = scalar_select %p212, %s18, 0
      %s214 = smul.addr %s213, 16
      %s215 = smul.addr %s211, 16
      %s216 = sadd.s32 %s214, %s215
      %s217 = smul.addr %s216, 8
      %s218 = scalar_lea.vmem %s3, %s217
      %p219 = scmp.lt.s32.totalorder %s19, 1
      %s220 = scalar_select %p219, %s19, 1
      %p221 = scmp.lt.s32.totalorder %s18, 0
      %s222 = scalar_select %p221, %s18, 0
      %s223 = smul.addr %s222, 16
      %s224 = smul.addr %s220, 16
      %s225 = sadd.s32 %s223, %s224
      %s226 = smul.addr %s225, 4
      %s227 = scalar_lea.vmem %s0, %s226
      %p228 = scmp.lt.s32.totalorder %s18, 0
      %s229 = scalar_select %p228, %s18, 0
      %s230 = smul.addr %s229, 80
      %s231 = smul.addr %s230, 4
      %s232 = scalar_lea.vmem %s1, %s231
      %p233 = scmp.lt.s32.totalorder %s18, 0
      %s234 = scalar_select %p233, %s18, 0
      %s235 = smul.addr %s234, 16
      %s236 = smul.addr %s235, 8
      %s237 = scalar_lea.vmem %s2, %s236
      %p238 = scmp.lt.s32.totalorder %s19, 1
      %s239 = scalar_select %p238, %s19, 1
      %p240 = scmp.lt.s32.totalorder %s18, 0
      %s241 = scalar_select %p240, %s18, 0
      %s242 = smul.addr %s241, 16
      %s243 = smul.addr %s239, 16
      %s244 = sadd.s32 %s242, %s243
      %s245 = smul.addr %s244, 8
      %s246 = scalar_lea.vmem %s3, %s245
      %v248 = vld [vmem:[%s232] sm:$0xf]
      %v249 = vld [vmem:[%s232 + $0x4] sm:$0xf]
      %v250 = vld [vmem:[%s232 + $0x8] sm:$0xf]
      %v251 = vld [vmem:[%s232 + $0xc] sm:$0xf]
      %v252 = vld [vmem:[%s232 + $0x10] sm:$0xf]
      %v253 = vld [vmem:[%s232 + $0x14] sm:$0xf]
      %v254 = vld [vmem:[%s232 + $0x18] sm:$0xf]
      %v255 = vld [vmem:[%s232 + $0x1c] sm:$0xf]
      %v256 = vld [vmem:[%s232 + $0x20] sm:$0xf]
      %v257 = vld [vmem:[%s232 + $0x24] sm:$0xf]
      %v258 = vld [vmem:[%s232 + $0x28] sm:$0xf]
      %v259 = vld [vmem:[%s232 + $0x2c] sm:$0xf]
      %v260 = vld [vmem:[%s232 + $0x30] sm:$0xf]
      %v261 = vld [vmem:[%s232 + $0x34] sm:$0xf]
      %v262 = vld [vmem:[%s232 + $0x38] sm:$0xf]
      %v263 = vld [vmem:[%s232 + $0x3c] sm:$0xf]
      %v264 = vld [vmem:[%s227] sm:$0xf]
      %v265 = vld [vmem:[%s227 + $0x8] sm:$0xf]
      %v266 = vld [vmem:[%s227 + $0x10] sm:$0xf]
      %v267 = vld [vmem:[%s227 + $0x18] sm:$0xf]
      %v268 = vld [vmem:[%s227 + $0x20] sm:$0xf]
      %v269 = vld [vmem:[%s227 + $0x28] sm:$0xf]
      %v270 = vld [vmem:[%s227 + $0x30] sm:$0xf]
      %v271 = vld [vmem:[%s227 + $0x38] sm:$0xf]
      %s272 = scalar_lea.vmem %s232, 64
      %v273 = vld [vmem:[%s272] sm:$0xf]
      %v274 = vld [vmem:[%s272 + $0x4] sm:$0xf]
      %v275 = vld [vmem:[%s272 + $0x8] sm:$0xf]
      %v276 = vld [vmem:[%s272 + $0xc] sm:$0xf]
      %v277 = vld [vmem:[%s272 + $0x10] sm:$0xf]
      %v278 = vld [vmem:[%s272 + $0x14] sm:$0xf]
      %v279 = vld [vmem:[%s272 + $0x18] sm:$0xf]
      %v280 = vld [vmem:[%s272 + $0x1c] sm:$0xf]
      %v281 = vld [vmem:[%s272 + $0x20] sm:$0xf]
      %v282 = vld [vmem:[%s272 + $0x24] sm:$0xf]
      %v283 = vld [vmem:[%s272 + $0x28] sm:$0xf]
      %v284 = vld [vmem:[%s272 + $0x2c] sm:$0xf]
      %v285 = vld [vmem:[%s272 + $0x30] sm:$0xf]
      %v286 = vld [vmem:[%s272 + $0x34] sm:$0xf]
      %v287 = vld [vmem:[%s272 + $0x38] sm:$0xf]
      %v288 = vld [vmem:[%s272 + $0x3c] sm:$0xf]
      %v289 = vld [vmem:[%s227] sm:$0xff]
      %v290 = vld [vmem:[%s227 + $0x8] sm:$0xff]
      %v291 = vld [vmem:[%s227 + $0x10] sm:$0xff]
      %v292 = vld [vmem:[%s227 + $0x18] sm:$0xff]
      %v293 = vld [vmem:[%s227 + $0x20] sm:$0xff]
      %v294 = vld [vmem:[%s227 + $0x28] sm:$0xff]
      %v295 = vld [vmem:[%s227 + $0x30] sm:$0xff]
      %v296 = vld [vmem:[%s227 + $0x38] sm:$0xff]
      %v313 = vunpack.c.l.b16 %v273
      %v314 = vunpack.c.l.b16 %v274
      %v315 = vunpack.c.l.b16 %v275
      %v316 = vunpack.c.l.b16 %v276
      %v317 = vunpack.c.l.b16 %v277
      %v318 = vunpack.c.l.b16 %v278
      %v319 = vunpack.c.l.b16 %v279
      %v320 = vunpack.c.l.b16 %v280
      %v321 = vunpack.c.l.b16 %v281
      %v322 = vunpack.c.l.b16 %v282
      %v323 = vunpack.c.l.b16 %v283
      %v324 = vunpack.c.l.b16 %v284
      %v325 = vunpack.c.l.b16 %v285
      %v326 = vunpack.c.l.b16 %v286
      %v327 = vunpack.c.l.b16 %v287
      %v328 = vunpack.c.l.b16 %v288
      %v329 = vpack.c.b16 %v314, %v313
      %v330 = vpack.c.b16 %v316, %v315
      %v331 = vpack.c.b16 %v318, %v317
      %v332 = vpack.c.b16 %v320, %v319
      %v333 = vpack.c.b16 %v322, %v321
      %v334 = vpack.c.b16 %v324, %v323
      %v335 = vpack.c.b16 %v326, %v325
      %v336 = vpack.c.b16 %v328, %v327
      %v345 = vunpack.c.l.b16 %v289
      %v346 = vunpack.c.h.b16 %v289
      %v347 = vunpack.c.l.b16 %v290
      %v348 = vunpack.c.h.b16 %v290
      %v349 = vunpack.c.l.b16 %v291
      %v350 = vunpack.c.h.b16 %v291
      %v351 = vunpack.c.l.b16 %v292
      %v352 = vunpack.c.h.b16 %v292
      %v353 = vunpack.c.l.b16 %v293
      %v354 = vunpack.c.h.b16 %v293
      %v355 = vunpack.c.l.b16 %v294
      %v356 = vunpack.c.h.b16 %v294
      %v357 = vunpack.c.l.b16 %v295
      %v358 = vunpack.c.h.b16 %v295
      %v359 = vunpack.c.l.b16 %v296
      %v360 = vunpack.c.h.b16 %v296
      %v361 = vpack.c.b16 %v347, %v345
      %v362 = vpack.c.b16 %v348, %v346
      %v363 = vpack.c.b16 %v351, %v349
      %v364 = vpack.c.b16 %v352, %v350
      %v365 = vpack.c.b16 %v355, %v353
      %v366 = vpack.c.b16 %v356, %v354
      %v367 = vpack.c.b16 %v359, %v357
      %v368 = vpack.c.b16 %v360, %v358
      %369 = vrot.lane.b32.xlu0 %v361, 127
      %v370 = vpop.permute.xlu0 %369
      %371 = vrot.lane.b32.xlu0 %v362, 127
      %v372 = vpop.permute.xlu0 %371
      %373 = vrot.lane.b32.xlu0 %v363, 127
      %v374 = vpop.permute.xlu0 %373
      %375 = vrot.lane.b32.xlu0 %v364, 127
      %v376 = vpop.permute.xlu0 %375
      %377 = vrot.lane.b32.xlu0 %v365, 127
      %v378 = vpop.permute.xlu0 %377
      %379 = vrot.lane.b32.xlu0 %v366, 127
      %v380 = vpop.permute.xlu0 %379
      %381 = vrot.lane.b32.xlu0 %v367, 127
      %v382 = vpop.permute.xlu0 %381
      %383 = vrot.lane.b32.xlu0 %v368, 127
      %v384 = vpop.permute.xlu0 %383
      %vm385 = vcmask 1039360
      %v386 = vsel %vm385, %v370, %v372
      %v387 = vsel %vm385, %v374, %v376
      %v388 = vsel %vm385, %v378, %v380
      %v389 = vsel %vm385, %v382, %v384
      %vm394 = vcmask 523264
      %v396 = vsel %vm394, %v329, 0
      %v399 = vsel %vm394, %v330, 0
      %v402 = vsel %vm394, %v331, 0
      %v405 = vsel %vm394, %v332, 0
      %v408 = vsel %vm394, %v333, 0
      %v411 = vsel %vm394, %v334, 0
      %v414 = vsel %vm394, %v335, 0
      %v417 = vsel %vm394, %v336, 0
      %419 = vmatprep.subr.bf16.mxu0 0
      %420 = vmatpush1.bf16.msra.mxu0 %v386
      %421 = vmatprep.subr.bf16.mxu0 0
      %422 = vmatpush1.bf16.msra.mxu0 %v387
      %423 = vmatprep.subr.bf16.mxu0 0
      %424 = vmatpush1.bf16.msra.mxu0 %v388
      %425 = vmatprep.subr.bf16.mxu0 0
      %426 = vmatpush1.bf16.msra.mxu0 %v389
      %427 = vmatprep.subr.bf16.mxu0 0
      %428 = vmatpush1.bf16.msra.mxu0 0
      %429 = vmatprep.subr.bf16.mxu0 0
      %430 = vmatpush1.bf16.msra.mxu0 0
      %431 = vmatprep.subr.bf16.mxu0 0
      %432 = vmatpush1.bf16.msra.mxu0 0
      %433 = vmatprep.subr.bf16.mxu0 0
      %434 = vmatpush1.bf16.msra.mxu0 0
      %435 = vmatprep.subr.bf16.mxu0 0
      %436 = vmatpush1.bf16.msra.mxu0 0
      %437 = vmatprep.subr.bf16.mxu0 0
      %438 = vmatpush1.bf16.msra.mxu0 0
      %439 = vmatprep.subr.bf16.mxu0 0
      %440 = vmatpush1.bf16.msra.mxu0 0
      %441 = vmatprep.subr.bf16.mxu0 0
      %442 = vmatpush1.bf16.msra.mxu0 0
      %443 = vmatprep.subr.bf16.mxu0 0
      %444 = vmatpush1.bf16.msra.mxu0 0
      %445 = vmatprep.subr.bf16.mxu0 0
      %446 = vmatpush1.bf16.msra.mxu0 0
      %447 = vmatprep.subr.bf16.mxu0 0
      %448 = vmatpush1.bf16.msra.mxu0 0
      %449 = vmatprep.subr.bf16.mxu0 0
      %450 = vmatpush1.bf16.msra.mxu0 0
      %451 = vmatprep.mubr.bf16.mxu0 0
      %452 = vmatmul.mubr.bf16.gmra.mrb[0].mxu0 %v396
      %v453 = vpop.f32.mrb[0].mxu0
      %v454 = vadd.f32 0.0, %v453
      %v455 = vpop.f32.mrb[0].mxu0
      %v456 = vpop.f32.mrb[0].mxu0
      %v457 = vadd.f32 0.0, %v456
      %v458 = vpop.f32.mrb[0].mxu0
      %459 = vmatprep.mubr.bf16.mxu0 0
      %460 = vmatmul.mubr.bf16.gmra.mrb[0].mxu0 %v399
      %v461 = vpop.f32.mrb[0].mxu0
      %v462 = vadd.f32 0.0, %v461
      %v463 = vpop.f32.mrb[0].mxu0
      %v464 = vpop.f32.mrb[0].mxu0
      %v465 = vadd.f32 0.0, %v464
      %v466 = vpop.f32.mrb[0].mxu0
      %467 = vmatprep.mubr.bf16.mxu0 0
      %468 = vmatmul.mubr.bf16.gmra.mrb[0].mxu0 %v402
      %v469 = vpop.f32.mrb[0].mxu0
      %v470 = vadd.f32 0.0, %v469
      %v471 = vpop.f32.mrb[0].mxu0
      %v472 = vpop.f32.mrb[0].mxu0
      %v473 = vadd.f32 0.0, %v472
      %v474 = vpop.f32.mrb[0].mxu0
      %475 = vmatprep.mubr.bf16.mxu0 0
      %476 = vmatmul.mubr.bf16.gmra.mrb[0].mxu0 %v405
      %v477 = vpop.f32.mrb[0].mxu0
      %v478 = vadd.f32 0.0, %v477
      %v479 = vpop.f32.mrb[0].mxu0
      %v480 = vpop.f32.mrb[0].mxu0
      %v481 = vadd.f32 0.0, %v480
      %v482 = vpop.f32.mrb[0].mxu0
      %483 = vmatprep.mubr.bf16.mxu0 0
      %484 = vmatmul.mubr.bf16.gmra.mrb[0].mxu0 %v408
      %v485 = vpop.f32.mrb[0].mxu0
      %v486 = vadd.f32 0.0, %v485
      %v487 = vpop.f32.mrb[0].mxu0
      %v488 = vpop.f32.mrb[0].mxu0
      %v489 = vadd.f32 0.0, %v488
      %v490 = vpop.f32.mrb[0].mxu0
      %491 = vmatprep.mubr.bf16.mxu0 0
      %492 = vmatmul.mubr.bf16.gmra.mrb[0].mxu0 %v411
      %v493 = vpop.f32.mrb[0].mxu0
      %v494 = vadd.f32 0.0, %v493
      %v495 = vpop.f32.mrb[0].mxu0
      %v496 = vpop.f32.mrb[0].mxu0
      %v497 = vadd.f32 0.0, %v496
      %v498 = vpop.f32.mrb[0].mxu0
      %499 = vmatprep.mubr.bf16.mxu0 0
      %500 = vmatmul.mubr.bf16.gmra.mrb[0].mxu0 %v414
      %v501 = vpop.f32.mrb[0].mxu0
      %v502 = vadd.f32 0.0, %v501
      %v503 = vpop.f32.mrb[0].mxu0
      %v504 = vpop.f32.mrb[0].mxu0
      %v505 = vadd.f32 0.0, %v504
      %v506 = vpop.f32.mrb[0].mxu0
      %507 = vmatprep.mubr.bf16.mxu0 0
      %508 = vmatmul.mubr.bf16.gmra.mrb[0].mxu0 %v417
      %v509 = vpop.f32.mrb[0].mxu0
      %v510 = vadd.f32 0.0, %v509
      %v511 = vpop.f32.mrb[0].mxu0
      %v512 = vpop.f32.mrb[0].mxu0
      %v513 = vadd.f32 0.0, %v512
      %v514 = vpop.f32.mrb[0].mxu0
      %515 = vdwg.mxu0
      %v532 = vunpack.c.l.b16 %v248
      %v533 = vunpack.c.l.b16 %v249
      %v534 = vunpack.c.l.b16 %v250
      %v535 = vunpack.c.l.b16 %v251
      %v536 = vunpack.c.l.b16 %v252
      %v537 = vunpack.c.l.b16 %v253
      %v538 = vunpack.c.l.b16 %v254
      %v539 = vunpack.c.l.b16 %v255
      %v540 = vunpack.c.l.b16 %v256
      %v541 = vunpack.c.l.b16 %v257
      %v542 = vunpack.c.l.b16 %v258
      %v543 = vunpack.c.l.b16 %v259
      %v544 = vunpack.c.l.b16 %v260
      %v545 = vunpack.c.l.b16 %v261
      %v546 = vunpack.c.l.b16 %v262
      %v547 = vunpack.c.l.b16 %v263
      %v548 = vpack.c.b16 %v533, %v532
      %v549 = vpack.c.b16 %v535, %v534
      %v550 = vpack.c.b16 %v537, %v536
      %v551 = vpack.c.b16 %v539, %v538
      %v552 = vpack.c.b16 %v541, %v540
      %v553 = vpack.c.b16 %v543, %v542
      %v554 = vpack.c.b16 %v545, %v544
      %v555 = vpack.c.b16 %v547, %v546
      %v564 = vunpack.c.l.b16 %v264
      %v565 = vunpack.c.l.b16 %v265
      %v566 = vunpack.c.l.b16 %v266
      %v567 = vunpack.c.l.b16 %v267
      %v568 = vunpack.c.l.b16 %v268
      %v569 = vunpack.c.l.b16 %v269
      %v570 = vunpack.c.l.b16 %v270
      %v571 = vunpack.c.l.b16 %v271
      %v572 = vpack.c.b16 %v565, %v564
      %v573 = vpack.c.b16 %v567, %v566
      %v574 = vpack.c.b16 %v569, %v568
      %v575 = vpack.c.b16 %v571, %v570
      %v581 = vsel %vm394, %v548, 0
      %v584 = vsel %vm394, %v549, 0
      %v587 = vsel %vm394, %v550, 0
      %v590 = vsel %vm394, %v551, 0
      %v593 = vsel %vm394, %v552, 0
      %v596 = vsel %vm394, %v553, 0
      %v599 = vsel %vm394, %v554, 0
      %v602 = vsel %vm394, %v555, 0
      %604 = vmatprep.subr.bf16.mxu0 0
      %605 = vmatpush1.bf16.msra.mxu0 %v572
      %606 = vmatprep.subr.bf16.mxu0 0
      %607 = vmatpush1.bf16.msra.mxu0 %v573
      %608 = vmatprep.subr.bf16.mxu0 0
      %609 = vmatpush1.bf16.msra.mxu0 %v574
      %610 = vmatprep.subr.bf16.mxu0 0
      %611 = vmatpush1.bf16.msra.mxu0 %v575
      %612 = vmatprep.subr.bf16.mxu0 0
      %613 = vmatpush1.bf16.msra.mxu0 0
      %614 = vmatprep.subr.bf16.mxu0 0
      %615 = vmatpush1.bf16.msra.mxu0 0
      %616 = vmatprep.subr.bf16.mxu0 0
      %617 = vmatpush1.bf16.msra.mxu0 0
      %618 = vmatprep.subr.bf16.mxu0 0
      %619 = vmatpush1.bf16.msra.mxu0 0
      %620 = vmatprep.subr.bf16.mxu0 0
      %621 = vmatpush1.bf16.msra.mxu0 0
      %622 = vmatprep.subr.bf16.mxu0 0
      %623 = vmatpush1.bf16.msra.mxu0 0
      %624 = vmatprep.subr.bf16.mxu0 0
      %625 = vmatpush1.bf16.msra.mxu0 0
      %626 = vmatprep.subr.bf16.mxu0 0
      %627 = vmatpush1.bf16.msra.mxu0 0
      %628 = vmatprep.subr.bf16.mxu0 0
      %629 = vmatpush1.bf16.msra.mxu0 0
      %630 = vmatprep.subr.bf16.mxu0 0
      %631 = vmatpush1.bf16.msra.mxu0 0
      %632 = vmatprep.subr.bf16.mxu0 0
      %633 = vmatpush1.bf16.msra.mxu0 0
      %634 = vmatprep.subr.bf16.mxu0 0
      %635 = vmatpush1.bf16.msra.mxu0 0
      %636 = vmatprep.mubr.bf16.mxu0 0
      %637 = vmatmul.mubr.bf16.gmra.mrb[0].mxu0 %v581
      %v638 = vpop.f32.mrb[0].mxu0
      %v639 = vadd.f32 %v454, %v638
      %v640 = vpop.f32.mrb[0].mxu0
      %v641 = vpop.f32.mrb[0].mxu0
      %v642 = vadd.f32 %v457, %v641
      %v643 = vpop.f32.mrb[0].mxu0
      %644 = vmatprep.mubr.bf16.mxu0 0
      %645 = vmatmul.mubr.bf16.gmra.mrb[0].mxu0 %v584
      %v646 = vpop.f32.mrb[0].mxu0
      %v647 = vadd.f32 %v462, %v646
      %v648 = vpop.f32.mrb[0].mxu0
      %v649 = vpop.f32.mrb[0].mxu0
      %v650 = vadd.f32 %v465, %v649
      %v651 = vpop.f32.mrb[0].mxu0
      %652 = vmatprep.mubr.bf16.mxu0 0
      %653 = vmatmul.mubr.bf16.gmra.mrb[0].mxu0 %v587
      %v654 = vpop.f32.mrb[0].mxu0
      %v655 = vadd.f32 %v470, %v654
      %v656 = vpop.f32.mrb[0].mxu0
      %v657 = vpop.f32.mrb[0].mxu0
      %v658 = vadd.f32 %v473, %v657
      %v659 = vpop.f32.mrb[0].mxu0
      %660 = vmatprep.mubr.bf16.mxu0 0
      %661 = vmatmul.mubr.bf16.gmra.mrb[0].mxu0 %v590
      %v662 = vpop.f32.mrb[0].mxu0
      %v663 = vadd.f32 %v478, %v662
      %v664 = vpop.f32.mrb[0].mxu0
      %v665 = vpop.f32.mrb[0].mxu0
      %v666 = vadd.f32 %v481, %v665
      %v667 = vpop.f32.mrb[0].mxu0
      %668 = vmatprep.mubr.bf16.mxu0 0
      %669 = vmatmul.mubr.bf16.gmra.mrb[0].mxu0 %v593
      %v670 = vpop.f32.mrb[0].mxu0
      %v671 = vadd.f32 %v486, %v670
      %v672 = vpop.f32.mrb[0].mxu0
      %v673 = vpop.f32.mrb[0].mxu0
      %v674 = vadd.f32 %v489, %v673
      %v675 = vpop.f32.mrb[0].mxu0
      %676 = vmatprep.mubr.bf16.mxu0 0
      %677 = vmatmul.mubr.bf16.gmra.mrb[0].mxu0 %v596
      %v678 = vpop.f32.mrb[0].mxu0
      %v679 = vadd.f32 %v494, %v678
      %v680 = vpop.f32.mrb[0].mxu0
      %v681 = vpop.f32.mrb[0].mxu0
      %v682 = vadd.f32 %v497, %v681
      %v683 = vpop.f32.mrb[0].mxu0
      %684 = vmatprep.mubr.bf16.mxu0 0
      %685 = vmatmul.mubr.bf16.gmra.mrb[0].mxu0 %v599
      %v686 = vpop.f32.mrb[0].mxu0
      %v687 = vadd.f32 %v502, %v686
      %v688 = vpop.f32.mrb[0].mxu0
      %v689 = vpop.f32.mrb[0].mxu0
      %v690 = vadd.f32 %v505, %v689
      %v691 = vpop.f32.mrb[0].mxu0
      %692 = vmatprep.mubr.bf16.mxu0 0
      %693 = vmatmul.mubr.bf16.gmra.mrb[0].mxu0 %v602
      %v694 = vpop.f32.mrb[0].mxu0
      %v695 = vadd.f32 %v510, %v694
      %v696 = vpop.f32.mrb[0].mxu0
      %v697 = vpop.f32.mrb[0].mxu0
      %v698 = vadd.f32 %v513, %v697
      %v699 = vpop.f32.mrb[0].mxu0
      %700 = vdwg.mxu0
      %s701 = scalar_lea.vmem %s232, 128
      %v702 = vld [vmem:[%s701] sm:$0xf]
      %v703 = vld [vmem:[%s701 + $0x4] sm:$0xf]
      %v704 = vld [vmem:[%s701 + $0x8] sm:$0xf]
      %v705 = vld [vmem:[%s701 + $0xc] sm:$0xf]
      %v706 = vld [vmem:[%s701 + $0x10] sm:$0xf]
      %v707 = vld [vmem:[%s701 + $0x14] sm:$0xf]
      %v708 = vld [vmem:[%s701 + $0x18] sm:$0xf]
      %v709 = vld [vmem:[%s701 + $0x1c] sm:$0xf]
      %v710 = vld [vmem:[%s701 + $0x20] sm:$0xf]
      %v711 = vld [vmem:[%s701 + $0x24] sm:$0xf]
      %v712 = vld [vmem:[%s701 + $0x28] sm:$0xf]
      %v713 = vld [vmem:[%s701 + $0x2c] sm:$0xf]
      %v714 = vld [vmem:[%s701 + $0x30] sm:$0xf]
      %v715 = vld [vmem:[%s701 + $0x34] sm:$0xf]
      %v716 = vld [vmem:[%s701 + $0x38] sm:$0xf]
      %v717 = vld [vmem:[%s701 + $0x3c] sm:$0xf]
      %v734 = vunpack.c.l.b16 %v702
      %v735 = vunpack.c.l.b16 %v703
      %v736 = vunpack.c.l.b16 %v704
      %v737 = vunpack.c.l.b16 %v705
      %v738 = vunpack.c.l.b16 %v706
      %v739 = vunpack.c.l.b16 %v707
      %v740 = vunpack.c.l.b16 %v708
      %v741 = vunpack.c.l.b16 %v709
      %v742 = vunpack.c.l.b16 %v710
      %v743 = vunpack.c.l.b16 %v711
      %v744 = vunpack.c.l.b16 %v712
      %v745 = vunpack.c.l.b16 %v713
      %v746 = vunpack.c.l.b16 %v714
      %v747 = vunpack.c.l.b16 %v715
      %v748 = vunpack.c.l.b16 %v716
      %v749 = vunpack.c.l.b16 %v717
      %v750 = vpack.c.b16 %v735, %v734
      %v751 = vpack.c.b16 %v737, %v736
      %v752 = vpack.c.b16 %v739, %v738
      %v753 = vpack.c.b16 %v741, %v740
      %v754 = vpack.c.b16 %v743, %v742
      %v755 = vpack.c.b16 %v745, %v744
      %v756 = vpack.c.b16 %v747, %v746
      %v757 = vpack.c.b16 %v749, %v748
      %758 = vrot.lane.b32.xlu0 %v361, 126
      %v759 = vpop.permute.xlu0 %758
      %760 = vrot.lane.b32.xlu0 %v362, 126
      %v761 = vpop.permute.xlu0 %760
      %762 = vrot.lane.b32.xlu0 %v363, 126
      %v763 = vpop.permute.xlu0 %762
      %764 = vrot.lane.b32.xlu0 %v364, 126
      %v765 = vpop.permute.xlu0 %764
      %766 = vrot.lane.b32.xlu0 %v365, 126
      %v767 = vpop.permute.xlu0 %766
      %768 = vrot.lane.b32.xlu0 %v366, 126
      %v769 = vpop.permute.xlu0 %768
      %770 = vrot.lane.b32.xlu0 %v367, 126
      %v771 = vpop.permute.xlu0 %770
      %772 = vrot.lane.b32.xlu0 %v368, 126
      %v773 = vpop.permute.xlu0 %772
      %vm774 = vcmask 1031168
      %v775 = vsel %vm774, %v759, %v761
      %v776 = vsel %vm774, %v763, %v765
      %v777 = vsel %vm774, %v767, %v769
      %v778 = vsel %vm774, %v771, %v773
      %v784 = vsel %vm394, %v750, 0
      %v787 = vsel %vm394, %v751, 0
      %v790 = vsel %vm394, %v752, 0
      %v793 = vsel %vm394, %v753, 0
      %v796 = vsel %vm394, %v754, 0
      %v799 = vsel %vm394, %v755, 0
      %v802 = vsel %vm394, %v756, 0
      %v805 = vsel %vm394, %v757, 0
      %807 = vmatprep.subr.bf16.mxu0 0
      %808 = vmatpush1.bf16.msra.mxu0 %v775
      %809 = vmatprep.subr.bf16.mxu0 0
      %810 = vmatpush1.bf16.msra.mxu0 %v776
      %811 = vmatprep.subr.bf16.mxu0 0
      %812 = vmatpush1.bf16.msra.mxu0 %v777
      %813 = vmatprep.subr.bf16.mxu0 0
      %814 = vmatpush1.bf16.msra.mxu0 %v778
      %815 = vmatprep.subr.bf16.mxu0 0
      %816 = vmatpush1.bf16.msra.mxu0 0
      %817 = vmatprep.subr.bf16.mxu0 0
      %818 = vmatpush1.bf16.msra.mxu0 0
      %819 = vmatprep.subr.bf16.mxu0 0
      %820 = vmatpush1.bf16.msra.mxu0 0
      %821 = vmatprep.subr.bf16.mxu0 0
      %822 = vmatpush1.bf16.msra.mxu0 0
      %823 = vmatprep.subr.bf16.mxu0 0
      %824 = vmatpush1.bf16.msra.mxu0 0
      %825 = vmatprep.subr.bf16.mxu0 0
      %826 = vmatpush1.bf16.msra.mxu0 0
      %827 = vmatprep.subr.bf16.mxu0 0
      %828 = vmatpush1.bf16.msra.mxu0 0
      %829 = vmatprep.subr.bf16.mxu0 0
      %830 = vmatpush1.bf16.msra.mxu0 0
      %831 = vmatprep.subr.bf16.mxu0 0
      %832 = vmatpush1.bf16.msra.mxu0 0
      %833 = vmatprep.subr.bf16.mxu0 0
      %834 = vmatpush1.bf16.msra.mxu0 0
      %835 = vmatprep.subr.bf16.mxu0 0
      %836 = vmatpush1.bf16.msra.mxu0 0
      %837 = vmatprep.subr.bf16.mxu0 0
      %838 = vmatpush1.bf16.msra.mxu0 0
      %839 = vmatprep.mubr.bf16.mxu0 0
      %840 = vmatmul.mubr.bf16.gmra.mrb[0].mxu0 %v784
      %v841 = vpop.f32.mrb[0].mxu0
      %v842 = vadd.f32 0.0, %v841
      %v843 = vpop.f32.mrb[0].mxu0
      %v844 = vpop.f32.mrb[0].mxu0
      %v845 = vadd.f32 0.0, %v844
      %v846 = vpop.f32.mrb[0].mxu0
      %847 = vmatprep.mubr.bf16.mxu0 0
      %848 = vmatmul.mubr.bf16.gmra.mrb[0].mxu0 %v787
      %v849 = vpop.f32.mrb[0].mxu0
      %v850 = vadd.f32 0.0, %v849
      %v851 = vpop.f32.mrb[0].mxu0
      %v852 = vpop.f32.mrb[0].mxu0
      %v853 = vadd.f32 0.0, %v852
      %v854 = vpop.f32.mrb[0].mxu0
      %855 = vmatprep.mubr.bf16.mxu0 0
      %856 = vmatmul.mubr.bf16.gmra.mrb[0].mxu0 %v790
      %v857 = vpop.f32.mrb[0].mxu0
      %v858 = vadd.f32 0.0, %v857
      %v859 = vpop.f32.mrb[0].mxu0
      %v860 = vpop.f32.mrb[0].mxu0
      %v861 = vadd.f32 0.0, %v860
      %v862 = vpop.f32.mrb[0].mxu0
      %863 = vmatprep.mubr.bf16.mxu0 0
      %864 = vmatmul.mubr.bf16.gmra.mrb[0].mxu0 %v793
      %v865 = vpop.f32.mrb[0].mxu0
      %v866 = vadd.f32 0.0, %v865
      %v867 = vpop.f32.mrb[0].mxu0
      %v868 = vpop.f32.mrb[0].mxu0
      %v869 = vadd.f32 0.0, %v868
      %v870 = vpop.f32.mrb[0].mxu0
      %871 = vmatprep.mubr.bf16.mxu0 0
      %872 = vmatmul.mubr.bf16.gmra.mrb[0].mxu0 %v796
      %v873 = vpop.f32.mrb[0].mxu0
      %v874 = vadd.f32 0.0, %v873
      %v875 = vpop.f32.mrb[0].mxu0
      %v876 = vpop.f32.mrb[0].mxu0
      %v877 = vadd.f32 0.0, %v876
      %v878 = vpop.f32.mrb[0].mxu0
      %879 = vmatprep.mubr.bf16.mxu0 0
      %880 = vmatmul.mubr.bf16.gmra.mrb[0].mxu0 %v799
      %v881 = vpop.f32.mrb[0].mxu0
      %v882 = vadd.f32 0.0, %v881
      %v883 = vpop.f32.mrb[0].mxu0
      %v884 = vpop.f32.mrb[0].mxu0
      %v885 = vadd.f32 0.0, %v884
      %v886 = vpop.f32.mrb[0].mxu0
      %887 = vmatprep.mubr.bf16.mxu0 0
      %888 = vmatmul.mubr.bf16.gmra.mrb[0].mxu0 %v802
      %v889 = vpop.f32.mrb[0].mxu0
      %v890 = vadd.f32 0.0, %v889
      %v891 = vpop.f32.mrb[0].mxu0
      %v892 = vpop.f32.mrb[0].mxu0
      %v893 = vadd.f32 0.0, %v892
      %v894 = vpop.f32.mrb[0].mxu0
      %895 = vmatprep.mubr.bf16.mxu0 0
      %896 = vmatmul.mubr.bf16.gmra.mrb[0].mxu0 %v805
      %v897 = vpop.f32.mrb[0].mxu0
      %v898 = vadd.f32 0.0, %v897
      %v899 = vpop.f32.mrb[0].mxu0
      %v900 = vpop.f32.mrb[0].mxu0
      %v901 = vadd.f32 0.0, %v900
      %v902 = vpop.f32.mrb[0].mxu0
      %903 = vdwg.mxu0
      %v904 = vadd.f32 %v639, %v842
      %v905 = vadd.f32 %v642, %v845
      %v906 = vadd.f32 %v647, %v850
      %v907 = vadd.f32 %v650, %v853
      %v908 = vadd.f32 %v655, %v858
      %v909 = vadd.f32 %v658, %v861
      %v910 = vadd.f32 %v663, %v866
      %v911 = vadd.f32 %v666, %v869
      %v912 = vadd.f32 %v671, %v874
      %v913 = vadd.f32 %v674, %v877
      %v914 = vadd.f32 %v679, %v882
      %v915 = vadd.f32 %v682, %v885
      %v916 = vadd.f32 %v687, %v890
      %v917 = vadd.f32 %v690, %v893
      %v918 = vadd.f32 %v695, %v898
      %v919 = vadd.f32 %v698, %v901
      %s920 = scalar_lea.vmem %s232, 192
      %v921 = vld [vmem:[%s920] sm:$0xf]
      %v922 = vld [vmem:[%s920 + $0x4] sm:$0xf]
      %v923 = vld [vmem:[%s920 + $0x8] sm:$0xf]
      %v924 = vld [vmem:[%s920 + $0xc] sm:$0xf]
      %v925 = vld [vmem:[%s920 + $0x10] sm:$0xf]
      %v926 = vld [vmem:[%s920 + $0x14] sm:$0xf]
      %v927 = vld [vmem:[%s920 + $0x18] sm:$0xf]
      %v928 = vld [vmem:[%s920 + $0x1c] sm:$0xf]
      %v929 = vld [vmem:[%s920 + $0x20] sm:$0xf]
      %v930 = vld [vmem:[%s920 + $0x24] sm:$0xf]
      %v931 = vld [vmem:[%s920 + $0x28] sm:$0xf]
      %v932 = vld [vmem:[%s920 + $0x2c] sm:$0xf]
      %v933 = vld [vmem:[%s920 + $0x30] sm:$0xf]
      %v934 = vld [vmem:[%s920 + $0x34] sm:$0xf]
      %v935 = vld [vmem:[%s920 + $0x38] sm:$0xf]
      %v936 = vld [vmem:[%s920 + $0x3c] sm:$0xf]
      %v953 = vunpack.c.l.b16 %v921
      %v954 = vunpack.c.l.b16 %v922
      %v955 = vunpack.c.l.b16 %v923
      %v956 = vunpack.c.l.b16 %v924
      %v957 = vunpack.c.l.b16 %v925
      %v958 = vunpack.c.l.b16 %v926
      %v959 = vunpack.c.l.b16 %v927
      %v960 = vunpack.c.l.b16 %v928
      %v961 = vunpack.c.l.b16 %v929
      %v962 = vunpack.c.l.b16 %v930
      %v963 = vunpack.c.l.b16 %v931
      %v964 = vunpack.c.l.b16 %v932
      %v965 = vunpack.c.l.b16 %v933
      %v966 = vunpack.c.l.b16 %v934
      %v967 = vunpack.c.l.b16 %v935
      %v968 = vunpack.c.l.b16 %v936
      %v969 = vpack.c.b16 %v954, %v953
      %v970 = vpack.c.b16 %v956, %v955
      %v971 = vpack.c.b16 %v958, %v957
      %v972 = vpack.c.b16 %v960, %v959
      %v973 = vpack.c.b16 %v962, %v961
      %v974 = vpack.c.b16 %v964, %v963
      %v975 = vpack.c.b16 %v966, %v965
      %v976 = vpack.c.b16 %v968, %v967
      %977 = vrot.lane.b32.xlu0 %v361, 125
      %v978 = vpop.permute.xlu0 %977
      %979 = vrot.lane.b32.xlu0 %v362, 125
      %v980 = vpop.permute.xlu0 %979
      %981 = vrot.lane.b32.xlu0 %v363, 125
      %v982 = vpop.permute.xlu0 %981
      %983 = vrot.lane.b32.xlu0 %v364, 125
      %v984 = vpop.permute.xlu0 %983
      %985 = vrot.lane.b32.xlu0 %v365, 125
      %v986 = vpop.permute.xlu0 %985
      %987 = vrot.lane.b32.xlu0 %v366, 125
      %v988 = vpop.permute.xlu0 %987
      %989 = vrot.lane.b32.xlu0 %v367, 125
      %v990 = vpop.permute.xlu0 %989
      %991 = vrot.lane.b32.xlu0 %v368, 125
      %v992 = vpop.permute.xlu0 %991
      %vm993 = vcmask 1022976
      %v994 = vsel %vm993, %v978, %v980
      %v995 = vsel %vm993, %v982, %v984
      %v996 = vsel %vm993, %v986, %v988
      %v997 = vsel %vm993, %v990, %v992
      %v1003 = vsel %vm394, %v969, 0
      %v1006 = vsel %vm394, %v970, 0
      %v1009 = vsel %vm394, %v971, 0
      %v1012 = vsel %vm394, %v972, 0
      %v1015 = vsel %vm394, %v973, 0
      %v1018 = vsel %vm394, %v974, 0
      %v1021 = vsel %vm394, %v975, 0
      %v1024 = vsel %vm394, %v976, 0
      %1026 = vmatprep.subr.bf16.mxu0 0
      %1027 = vmatpush1.bf16.msra.mxu0 %v994
      %1028 = vmatprep.subr.bf16.mxu0 0
      %1029 = vmatpush1.bf16.msra.mxu0 %v995
      %1030 = vmatprep.subr.bf16.mxu0 0
      %1031 = vmatpush1.bf16.msra.mxu0 %v996
      %1032 = vmatprep.subr.bf16.mxu0 0
      %1033 = vmatpush1.bf16.msra.mxu0 %v997
      %1034 = vmatprep.subr.bf16.mxu0 0
      %1035 = vmatpush1.bf16.msra.mxu0 0
      %1036 = vmatprep.subr.bf16.mxu0 0
      %1037 = vmatpush1.bf16.msra.mxu0 0
      %1038 = vmatprep.subr.bf16.mxu0 0
      %1039 = vmatpush1.bf16.msra.mxu0 0
      %1040 = vmatprep.subr.bf16.mxu0 0
      %1041 = vmatpush1.bf16.msra.mxu0 0
      %1042 = vmatprep.subr.bf16.mxu0 0
      %1043 = vmatpush1.bf16.msra.mxu0 0
      %1044 = vmatprep.subr.bf16.mxu0 0
      %1045 = vmatpush1.bf16.msra.mxu0 0
      %1046 = vmatprep.subr.bf16.mxu0 0
      %1047 = vmatpush1.bf16.msra.mxu0 0
      %1048 = vmatprep.subr.bf16.mxu0 0
      %1049 = vmatpush1.bf16.msra.mxu0 0
      %1050 = vmatprep.subr.bf16.mxu0 0
      %1051 = vmatpush1.bf16.msra.mxu0 0
      %1052 = vmatprep.subr.bf16.mxu0 0
      %1053 = vmatpush1.bf16.msra.mxu0 0
      %1054 = vmatprep.subr.bf16.mxu0 0
      %1055 = vmatpush1.bf16.msra.mxu0 0
      %1056 = vmatprep.subr.bf16.mxu0 0
      %1057 = vmatpush1.bf16.msra.mxu0 0
      %1058 = vmatprep.mubr.bf16.mxu0 0
      %1059 = vmatmul.mubr.bf16.gmra.mrb[0].mxu0 %v1003
      %v1060 = vpop.f32.mrb[0].mxu0
      %v1061 = vadd.f32 0.0, %v1060
      %v1062 = vpop.f32.mrb[0].mxu0
      %v1063 = vpop.f32.mrb[0].mxu0
      %v1064 = vadd.f32 0.0, %v1063
      %v1065 = vpop.f32.mrb[0].mxu0
      %1066 = vmatprep.mubr.bf16.mxu0 0
      %1067 = vmatmul.mubr.bf16.gmra.mrb[0].mxu0 %v1006
      %v1068 = vpop.f32.mrb[0].mxu0
      %v1069 = vadd.f32 0.0, %v1068
      %v1070 = vpop.f32.mrb[0].mxu0
      %v1071 = vpop.f32.mrb[0].mxu0
      %v1072 = vadd.f32 0.0, %v1071
      %v1073 = vpop.f32.mrb[0].mxu0
      %1074 = vmatprep.mubr.bf16.mxu0 0
      %1075 = vmatmul.mubr.bf16.gmra.mrb[0].mxu0 %v1009
      %v1076 = vpop.f32.mrb[0].mxu0
      %v1077 = vadd.f32 0.0, %v1076
      %v1078 = vpop.f32.mrb[0].mxu0
      %v1079 = vpop.f32.mrb[0].mxu0
      %v1080 = vadd.f32 0.0, %v1079
      %v1081 = vpop.f32.mrb[0].mxu0
      %1082 = vmatprep.mubr.bf16.mxu0 0
      %1083 = vmatmul.mubr.bf16.gmra.mrb[0].mxu0 %v1012
      %v1084 = vpop.f32.mrb[0].mxu0
      %v1085 = vadd.f32 0.0, %v1084
      %v1086 = vpop.f32.mrb[0].mxu0
      %v1087 = vpop.f32.mrb[0].mxu0
      %v1088 = vadd.f32 0.0, %v1087
      %v1089 = vpop.f32.mrb[0].mxu0
      %1090 = vmatprep.mubr.bf16.mxu0 0
      %1091 = vmatmul.mubr.bf16.gmra.mrb[0].mxu0 %v1015
      %v1092 = vpop.f32.mrb[0].mxu0
      %v1093 = vadd.f32 0.0, %v1092
      %v1094 = vpop.f32.mrb[0].mxu0
      %v1095 = vpop.f32.mrb[0].mxu0
      %v1096 = vadd.f32 0.0, %v1095
      %v1097 = vpop.f32.mrb[0].mxu0
      %1098 = vmatprep.mubr.bf16.mxu0 0
      %1099 = vmatmul.mubr.bf16.gmra.mrb[0].mxu0 %v1018
      %v1100 = vpop.f32.mrb[0].mxu0
      %v1101 = vadd.f32 0.0, %v1100
      %v1102 = vpop.f32.mrb[0].mxu0
      %v1103 = vpop.f32.mrb[0].mxu0
      %v1104 = vadd.f32 0.0, %v1103
      %v1105 = vpop.f32.mrb[0].mxu0
      %1106 = vmatprep.mubr.bf16.mxu0 0
      %1107 = vmatmul.mubr.bf16.gmra.mrb[0].mxu0 %v1021
      %v1108 = vpop.f32.mrb[0].mxu0
      %v1109 = vadd.f32 0.0, %v1108
      %v1110 = vpop.f32.mrb[0].mxu0
      %v1111 = vpop.f32.mrb[0].mxu0
      %v1112 = vadd.f32 0.0, %v1111
      %v1113 = vpop.f32.mrb[0].mxu0
      %1114 = vmatprep.mubr.bf16.mxu0 0
      %1115 = vmatmul.mubr.bf16.gmra.mrb[0].mxu0 %v1024
      %v1116 = vpop.f32.mrb[0].mxu0
      %v1117 = vadd.f32 0.0, %v1116
      %v1118 = vpop.f32.mrb[0].mxu0
      %v1119 = vpop.f32.mrb[0].mxu0
      %v1120 = vadd.f32 0.0, %v1119
      %v1121 = vpop.f32.mrb[0].mxu0
      %1122 = vdwg.mxu0
      %v1123 = vadd.f32 %v904, %v1061
      %v1124 = vadd.f32 %v905, %v1064
      %v1125 = vadd.f32 %v906, %v1069
      %v1126 = vadd.f32 %v907, %v1072
      %v1127 = vadd.f32 %v908, %v1077
      %v1128 = vadd.f32 %v909, %v1080
      %v1129 = vadd.f32 %v910, %v1085
      %v1130 = vadd.f32 %v911, %v1088
      %v1131 = vadd.f32 %v912, %v1093
      %v1132 = vadd.f32 %v913, %v1096
      %v1133 = vadd.f32 %v914, %v1101
      %v1134 = vadd.f32 %v915, %v1104
      %v1135 = vadd.f32 %v916, %v1109
      %v1136 = vadd.f32 %v917, %v1112
      %v1137 = vadd.f32 %v918, %v1117
      %v1138 = vadd.f32 %v919, %v1120
      %s1139 = scalar_lea.vmem %s232, 256
      %v1140 = vld [vmem:[%s1139] sm:$0xf]
      %v1141 = vld [vmem:[%s1139 + $0x4] sm:$0xf]
      %v1142 = vld [vmem:[%s1139 + $0x8] sm:$0xf]
      %v1143 = vld [vmem:[%s1139 + $0xc] sm:$0xf]
      %v1144 = vld [vmem:[%s1139 + $0x10] sm:$0xf]
      %v1145 = vld [vmem:[%s1139 + $0x14] sm:$0xf]
      %v1146 = vld [vmem:[%s1139 + $0x18] sm:$0xf]
      %v1147 = vld [vmem:[%s1139 + $0x1c] sm:$0xf]
      %v1148 = vld [vmem:[%s1139 + $0x20] sm:$0xf]
      %v1149 = vld [vmem:[%s1139 + $0x24] sm:$0xf]
      %v1150 = vld [vmem:[%s1139 + $0x28] sm:$0xf]
      %v1151 = vld [vmem:[%s1139 + $0x2c] sm:$0xf]
      %v1152 = vld [vmem:[%s1139 + $0x30] sm:$0xf]
      %v1153 = vld [vmem:[%s1139 + $0x34] sm:$0xf]
      %v1154 = vld [vmem:[%s1139 + $0x38] sm:$0xf]
      %v1155 = vld [vmem:[%s1139 + $0x3c] sm:$0xf]
      %v1172 = vunpack.c.l.b16 %v1140
      %v1173 = vunpack.c.l.b16 %v1141
      %v1174 = vunpack.c.l.b16 %v1142
      %v1175 = vunpack.c.l.b16 %v1143
      %v1176 = vunpack.c.l.b16 %v1144
      %v1177 = vunpack.c.l.b16 %v1145
      %v1178 = vunpack.c.l.b16 %v1146
      %v1179 = vunpack.c.l.b16 %v1147
      %v1180 = vunpack.c.l.b16 %v1148
      %v1181 = vunpack.c.l.b16 %v1149
      %v1182 = vunpack.c.l.b16 %v1150
      %v1183 = vunpack.c.l.b16 %v1151
      %v1184 = vunpack.c.l.b16 %v1152
      %v1185 = vunpack.c.l.b16 %v1153
      %v1186 = vunpack.c.l.b16 %v1154
      %v1187 = vunpack.c.l.b16 %v1155
      %v1188 = vpack.c.b16 %v1173, %v1172
      %v1189 = vpack.c.b16 %v1175, %v1174
      %v1190 = vpack.c.b16 %v1177, %v1176
      %v1191 = vpack.c.b16 %v1179, %v1178
      %v1192 = vpack.c.b16 %v1181, %v1180
      %v1193 = vpack.c.b16 %v1183, %v1182
      %v1194 = vpack.c.b16 %v1185, %v1184
      %v1195 = vpack.c.b16 %v1187, %v1186
      %1196 = vrot.lane.b32.xlu0 %v361, 124
      %v1197 = vpop.permute.xlu0 %1196
      %1198 = vrot.lane.b32.xlu0 %v362, 124
      %v1199 = vpop.permute.xlu0 %1198
      %1200 = vrot.lane.b32.xlu0 %v363, 124
      %v1201 = vpop.permute.xlu0 %1200
      %1202 = vrot.lane.b32.xlu0 %v364, 124
      %v1203 = vpop.permute.xlu0 %1202
      %1204 = vrot.lane.b32.xlu0 %v365, 124
      %v1205 = vpop.permute.xlu0 %1204
      %1206 = vrot.lane.b32.xlu0 %v366, 124
      %v1207 = vpop.permute.xlu0 %1206
      %1208 = vrot.lane.b32.xlu0 %v367, 124
      %v1209 = vpop.permute.xlu0 %1208
      %1210 = vrot.lane.b32.xlu0 %v368, 124
      %v1211 = vpop.permute.xlu0 %1210
      %vm1212 = vcmask 1014784
      %v1213 = vsel %vm1212, %v1197, %v1199
      %v1214 = vsel %vm1212, %v1201, %v1203
      %v1215 = vsel %vm1212, %v1205, %v1207
      %v1216 = vsel %vm1212, %v1209, %v1211
      %v1222 = vsel %vm394, %v1188, 0
      %v1225 = vsel %vm394, %v1189, 0
      %v1228 = vsel %vm394, %v1190, 0
      %v1231 = vsel %vm394, %v1191, 0
      %v1234 = vsel %vm394, %v1192, 0
      %v1237 = vsel %vm394, %v1193, 0
      %v1240 = vsel %vm394, %v1194, 0
      %v1243 = vsel %vm394, %v1195, 0
      %1245 = vmatprep.subr.bf16.mxu0 0
      %1246 = vmatpush1.bf16.msra.mxu0 %v1213
      %1247 = vmatprep.subr.bf16.mxu0 0
      %1248 = vmatpush1.bf16.msra.mxu0 %v1214
      %1249 = vmatprep.subr.bf16.mxu0 0
      %1250 = vmatpush1.bf16.msra.mxu0 %v1215
      %1251 = vmatprep.subr.bf16.mxu0 0
      %1252 = vmatpush1.bf16.msra.mxu0 %v1216
      %1253 = vmatprep.subr.bf16.mxu0 0
      %1254 = vmatpush1.bf16.msra.mxu0 0
      %1255 = vmatprep.subr.bf16.mxu0 0
      %1256 = vmatpush1.bf16.msra.mxu0 0
      %1257 = vmatprep.subr.bf16.mxu0 0
      %1258 = vmatpush1.bf16.msra.mxu0 0
      %1259 = vmatprep.subr.bf16.mxu0 0
      %1260 = vmatpush1.bf16.msra.mxu0 0
      %1261 = vmatprep.subr.bf16.mxu0 0
      %1262 = vmatpush1.bf16.msra.mxu0 0
      %1263 = vmatprep.subr.bf16.mxu0 0
      %1264 = vmatpush1.bf16.msra.mxu0 0
      %1265 = vmatprep.subr.bf16.mxu0 0
      %1266 = vmatpush1.bf16.msra.mxu0 0
      %1267 = vmatprep.subr.bf16.mxu0 0
      %1268 = vmatpush1.bf16.msra.mxu0 0
      %1269 = vmatprep.subr.bf16.mxu0 0
      %1270 = vmatpush1.bf16.msra.mxu0 0
      %1271 = vmatprep.subr.bf16.mxu0 0
      %1272 = vmatpush1.bf16.msra.mxu0 0
      %1273 = vmatprep.subr.bf16.mxu0 0
      %1274 = vmatpush1.bf16.msra.mxu0 0
      %1275 = vmatprep.subr.bf16.mxu0 0
      %1276 = vmatpush1.bf16.msra.mxu0 0
      %1277 = vmatprep.mubr.bf16.mxu0 0
      %1278 = vmatmul.mubr.bf16.gmra.mrb[0].mxu0 %v1222
      %v1279 = vpop.f32.mrb[0].mxu0
      %v1280 = vadd.f32 0.0, %v1279
      %v1281 = vpop.f32.mrb[0].mxu0
      %v1282 = vpop.f32.mrb[0].mxu0
      %v1283 = vadd.f32 0.0, %v1282
      %v1284 = vpop.f32.mrb[0].mxu0
      %1285 = vmatprep.mubr.bf16.mxu0 0
      %1286 = vmatmul.mubr.bf16.gmra.mrb[0].mxu0 %v1225
      %v1287 = vpop.f32.mrb[0].mxu0
      %v1288 = vadd.f32 0.0, %v1287
      %v1289 = vpop.f32.mrb[0].mxu0
      %v1290 = vpop.f32.mrb[0].mxu0
      %v1291 = vadd.f32 0.0, %v1290
      %v1292 = vpop.f32.mrb[0].mxu0
      %1293 = vmatprep.mubr.bf16.mxu0 0
      %1294 = vmatmul.mubr.bf16.gmra.mrb[0].mxu0 %v1228
      %v1295 = vpop.f32.mrb[0].mxu0
      %v1296 = vadd.f32 0.0, %v1295
      %v1297 = vpop.f32.mrb[0].mxu0
      %v1298 = vpop.f32.mrb[0].mxu0
      %v1299 = vadd.f32 0.0, %v1298
      %v1300 = vpop.f32.mrb[0].mxu0
      %1301 = vmatprep.mubr.bf16.mxu0 0
      %1302 = vmatmul.mubr.bf16.gmra.mrb[0].mxu0 %v1231
      %v1303 = vpop.f32.mrb[0].mxu0
      %v1304 = vadd.f32 0.0, %v1303
      %v1305 = vpop.f32.mrb[0].mxu0
      %v1306 = vpop.f32.mrb[0].mxu0
      %v1307 = vadd.f32 0.0, %v1306
      %v1308 = vpop.f32.mrb[0].mxu0
      %1309 = vmatprep.mubr.bf16.mxu0 0
      %1310 = vmatmul.mubr.bf16.gmra.mrb[0].mxu0 %v1234
      %v1311 = vpop.f32.mrb[0].mxu0
      %v1312 = vadd.f32 0.0, %v1311
      %v1313 = vpop.f32.mrb[0].mxu0
      %v1314 = vpop.f32.mrb[0].mxu0
      %v1315 = vadd.f32 0.0, %v1314
      %v1316 = vpop.f32.mrb[0].mxu0
      %1317 = vmatprep.mubr.bf16.mxu0 0
      %1318 = vmatmul.mubr.bf16.gmra.mrb[0].mxu0 %v1237
      %v1319 = vpop.f32.mrb[0].mxu0
      %v1320 = vadd.f32 0.0, %v1319
      %v1321 = vpop.f32.mrb[0].mxu0
      %v1322 = vpop.f32.mrb[0].mxu0
      %v1323 = vadd.f32 0.0, %v1322
      %v1324 = vpop.f32.mrb[0].mxu0
      %1325 = vmatprep.mubr.bf16.mxu0 0
      %1326 = vmatmul.mubr.bf16.gmra.mrb[0].mxu0 %v1240
      %v1327 = vpop.f32.mrb[0].mxu0
      %v1328 = vadd.f32 0.0, %v1327
      %v1329 = vpop.f32.mrb[0].mxu0
      %v1330 = vpop.f32.mrb[0].mxu0
      %v1331 = vadd.f32 0.0, %v1330
      %v1332 = vpop.f32.mrb[0].mxu0
      %1333 = vmatprep.mubr.bf16.mxu0 0
      %1334 = vmatmul.mubr.bf16.gmra.mrb[0].mxu0 %v1243
      %v1335 = vpop.f32.mrb[0].mxu0
      %v1336 = vadd.f32 0.0, %v1335
      %v1337 = vpop.f32.mrb[0].mxu0
      %v1338 = vpop.f32.mrb[0].mxu0
      %v1339 = vadd.f32 0.0, %v1338
      %v1340 = vpop.f32.mrb[0].mxu0
      %1341 = vdwg.mxu0
      %v1342 = vadd.f32 %v1123, %v1280
      %v1343 = vadd.f32 %v1124, %v1283
      %v1344 = vadd.f32 %v1125, %v1288
      %v1345 = vadd.f32 %v1126, %v1291
      %v1346 = vadd.f32 %v1127, %v1296
      %v1347 = vadd.f32 %v1128, %v1299
      %v1348 = vadd.f32 %v1129, %v1304
      %v1349 = vadd.f32 %v1130, %v1307
      %v1350 = vadd.f32 %v1131, %v1312
      %v1351 = vadd.f32 %v1132, %v1315
      %v1352 = vadd.f32 %v1133, %v1320
      %v1353 = vadd.f32 %v1134, %v1323
      %v1354 = vadd.f32 %v1135, %v1328
      %v1355 = vadd.f32 %v1136, %v1331
      %v1356 = vadd.f32 %v1137, %v1336
      %v1357 = vadd.f32 %v1138, %v1339
      %v1358 = vld [vmem:[%s237] sm:$0xff]
      %v1359 = vld [vmem:[%s237 + $0x8] sm:$0xff]
      %v1360 = vld [vmem:[%s237 + $0x10] sm:$0xff]
      %v1361 = vld [vmem:[%s237 + $0x18] sm:$0xff]
      %v1362 = vld [vmem:[%s237 + $0x20] sm:$0xff]
      %v1363 = vld [vmem:[%s237 + $0x28] sm:$0xff]
      %v1364 = vld [vmem:[%s237 + $0x30] sm:$0xff]
      %v1365 = vld [vmem:[%s237 + $0x38] sm:$0xff]
      %v1366 = vld [vmem:[%s237 + $0x40] sm:$0xff]
      %v1367 = vld [vmem:[%s237 + $0x48] sm:$0xff]
      %v1368 = vld [vmem:[%s237 + $0x50] sm:$0xff]
      %v1369 = vld [vmem:[%s237 + $0x58] sm:$0xff]
      %v1370 = vld [vmem:[%s237 + $0x60] sm:$0xff]
      %v1371 = vld [vmem:[%s237 + $0x68] sm:$0xff]
      %v1372 = vld [vmem:[%s237 + $0x70] sm:$0xff]
      %v1373 = vld [vmem:[%s237 + $0x78] sm:$0xff]
      %1375 = vset.pattern.permute.xlu0 0
      %1376 = vperm.xlu0 %1375, %v1358
      %v1377 = vpop.permute.xlu0 %1376
      %1380 = vset.pattern.permute.xlu0 0
      %1381 = vperm.xlu0 %1380, %v1359
      %v1382 = vpop.permute.xlu0 %1381
      %1385 = vset.pattern.permute.xlu0 0
      %1386 = vperm.xlu0 %1385, %v1360
      %v1387 = vpop.permute.xlu0 %1386
      %1390 = vset.pattern.permute.xlu0 0
      %1391 = vperm.xlu0 %1390, %v1361
      %v1392 = vpop.permute.xlu0 %1391
      %1395 = vset.pattern.permute.xlu0 0
      %1396 = vperm.xlu0 %1395, %v1362
      %v1397 = vpop.permute.xlu0 %1396
      %1400 = vset.pattern.permute.xlu0 0
      %1401 = vperm.xlu0 %1400, %v1363
      %v1402 = vpop.permute.xlu0 %1401
      %1405 = vset.pattern.permute.xlu0 0
      %1406 = vperm.xlu0 %1405, %v1364
      %v1407 = vpop.permute.xlu0 %1406
      %1410 = vset.pattern.permute.xlu0 0
      %1411 = vperm.xlu0 %1410, %v1365
      %v1412 = vpop.permute.xlu0 %1411
      %1415 = vset.pattern.permute.xlu0 0
      %1416 = vperm.xlu0 %1415, %v1366
      %v1417 = vpop.permute.xlu0 %1416
      %1420 = vset.pattern.permute.xlu0 0
      %1421 = vperm.xlu0 %1420, %v1367
      %v1422 = vpop.permute.xlu0 %1421
      %1425 = vset.pattern.permute.xlu0 0
      %1426 = vperm.xlu0 %1425, %v1368
      %v1427 = vpop.permute.xlu0 %1426
      %1430 = vset.pattern.permute.xlu0 0
      %1431 = vperm.xlu0 %1430, %v1369
      %v1432 = vpop.permute.xlu0 %1431
      %1435 = vset.pattern.permute.xlu0 0
      %1436 = vperm.xlu0 %1435, %v1370
      %v1437 = vpop.permute.xlu0 %1436
      %1440 = vset.pattern.permute.xlu0 0
      %1441 = vperm.xlu0 %1440, %v1371
      %v1442 = vpop.permute.xlu0 %1441
      %1445 = vset.pattern.permute.xlu0 0
      %1446 = vperm.xlu0 %1445, %v1372
      %v1447 = vpop.permute.xlu0 %1446
      %1450 = vset.pattern.permute.xlu0 0
      %1451 = vperm.xlu0 %1450, %v1373
      %v1452 = vpop.permute.xlu0 %1451
      %v1454 = vadd.f32 %v1342, %v1377
      %v1455 = vadd.f32 %v1343, %v1382
      %v1456 = vadd.f32 %v1344, %v1387
      %v1457 = vadd.f32 %v1345, %v1392
      %v1458 = vadd.f32 %v1346, %v1397
      %v1459 = vadd.f32 %v1347, %v1402
      %v1460 = vadd.f32 %v1348, %v1407
      %v1461 = vadd.f32 %v1349, %v1412
      %v1462 = vadd.f32 %v1350, %v1417
      %v1463 = vadd.f32 %v1351, %v1422
      %v1464 = vadd.f32 %v1352, %v1427
      %v1465 = vadd.f32 %v1353, %v1432
      %v1466 = vadd.f32 %v1354, %v1437
      %v1467 = vadd.f32 %v1355, %v1442
      %v1468 = vadd.f32 %v1356, %v1447
      %v1469 = vadd.f32 %v1357, %v1452
      %vm1470 = vcmp.ge.f32.partialorder %v1454, 0.0
      %vm1471 = vcmp.ge.f32.partialorder %v1455, 0.0
      %vm1472 = vcmp.ge.f32.partialorder %v1456, 0.0
      %vm1473 = vcmp.ge.f32.partialorder %v1457, 0.0
      %vm1474 = vcmp.ge.f32.partialorder %v1458, 0.0
      %vm1475 = vcmp.ge.f32.partialorder %v1459, 0.0
      %vm1476 = vcmp.ge.f32.partialorder %v1460, 0.0
      %vm1477 = vcmp.ge.f32.partialorder %v1461, 0.0
      %vm1478 = vcmp.ge.f32.partialorder %v1462, 0.0
      %vm1479 = vcmp.ge.f32.partialorder %v1463, 0.0
      %vm1480 = vcmp.ge.f32.partialorder %v1464, 0.0
      %vm1481 = vcmp.ge.f32.partialorder %v1465, 0.0
      %vm1482 = vcmp.ge.f32.partialorder %v1466, 0.0
      %vm1483 = vcmp.ge.f32.partialorder %v1467, 0.0
      %vm1484 = vcmp.ge.f32.partialorder %v1468, 0.0
      %vm1485 = vcmp.ge.f32.partialorder %v1469, 0.0
      %v1486 = vmul.f32 %v1454, 0.2
      %v1487 = vmul.f32 %v1455, 0.2
      %v1488 = vmul.f32 %v1456, 0.2
      %v1489 = vmul.f32 %v1457, 0.2
      %v1490 = vmul.f32 %v1458, 0.2
      %v1491 = vmul.f32 %v1459, 0.2
      %v1492 = vmul.f32 %v1460, 0.2
      %v1493 = vmul.f32 %v1461, 0.2
      %v1494 = vmul.f32 %v1462, 0.2
      %v1495 = vmul.f32 %v1463, 0.2
      %v1496 = vmul.f32 %v1464, 0.2
      %v1497 = vmul.f32 %v1465, 0.2
      %v1498 = vmul.f32 %v1466, 0.2
      %v1499 = vmul.f32 %v1467, 0.2
      %v1500 = vmul.f32 %v1468, 0.2
      %v1501 = vmul.f32 %v1469, 0.2
      %v1502 = vsel %vm1470, %v1454, %v1486
      %v1503 = vsel %vm1471, %v1455, %v1487
      %v1504 = vsel %vm1472, %v1456, %v1488
      %v1505 = vsel %vm1473, %v1457, %v1489
      %v1506 = vsel %vm1474, %v1458, %v1490
      %v1507 = vsel %vm1475, %v1459, %v1491
      %v1508 = vsel %vm1476, %v1460, %v1492
      %v1509 = vsel %vm1477, %v1461, %v1493
      %v1510 = vsel %vm1478, %v1462, %v1494
      %v1511 = vsel %vm1479, %v1463, %v1495
      %v1512 = vsel %vm1480, %v1464, %v1496
      %v1513 = vsel %vm1481, %v1465, %v1497
      %v1514 = vsel %vm1482, %v1466, %v1498
      %v1515 = vsel %vm1483, %v1467, %v1499
      %v1516 = vsel %vm1484, %v1468, %v1500
      %v1517 = vsel %vm1485, %v1469, %v1501
      %1518 = vst [vmem:[%s246] sm:$0xff] %v1502
      %1519 = vst [vmem:[%s246 + $0x8] sm:$0xff] %v1503
      %1520 = vst [vmem:[%s246 + $0x10] sm:$0xff] %v1504
      %1521 = vst [vmem:[%s246 + $0x18] sm:$0xff] %v1505
      %1522 = vst [vmem:[%s246 + $0x20] sm:$0xff] %v1506
      %1523 = vst [vmem:[%s246 + $0x28] sm:$0xff] %v1507
      %1524 = vst [vmem:[%s246 + $0x30] sm:$0xff] %v1508
      %1525 = vst [vmem:[%s246 + $0x38] sm:$0xff] %v1509
      %1526 = vst [vmem:[%s246 + $0x40] sm:$0xff] %v1510
      %1527 = vst [vmem:[%s246 + $0x48] sm:$0xff] %v1511
      %1528 = vst [vmem:[%s246 + $0x50] sm:$0xff] %v1512
      %1529 = vst [vmem:[%s246 + $0x58] sm:$0xff] %v1513
      %1530 = vst [vmem:[%s246 + $0x60] sm:$0xff] %v1514
      %1531 = vst [vmem:[%s246 + $0x68] sm:$0xff] %v1515
      %1532 = vst [vmem:[%s246 + $0x70] sm:$0xff] %v1516
      %1533 = vst [vmem:[%s246 + $0x78] sm:$0xff] %v1517
      %p1534 = scmp.lt.s32.totalorder %s19, 1
      %s1535 = scalar_select %p1534, %s19, 1
      %p1536 = scmp.lt.s32.totalorder %s18, 0
      %s1537 = scalar_select %p1536, %s18, 0
      %s1538 = smul.addr %s1537, 16
      %s1539 = smul.addr %s1535, 16
      %s1540 = sadd.s32 %s1538, %s1539
      %s1541 = smul.addr %s1540, 8
      %s1542 = scalar_lea.vmem %s3, %s1541
      // Predicated region
      $region33: #{forward.20} parent=31 // pred_check
        %p1543 = pneg %p126
      $region34: #{forward.20} parent=31 // pred_check_branch
        %1545 = sbr.rel (%p1543) target = $region36
      $region35: #{forward.20} parent=31 // pred_region
        _
      $region36: #{forward.20} parent=31 // pred_fallthru
        _
    $region32: #{forward.20} parent=5 // pred_fallthru
      _
    %p1546 = scmp.le.s32.totalorder 2, %s9
    // Predicated region
    $region37: #{forward.20} parent=5 // pred_check
      %p1547 = pneg %p1546
    $region38: #{forward.20} parent=5 // pred_check_branch
      %1549 = sbr.rel (%p1547) target = $region40
    $region39: #{forward.20} parent=5 // pred_region
      %s1550 = ssub.s32 %s9, 2
      // Predicated region
      $region41: #{forward.20} parent=39 // pred_check
        %p1551 = pneg %p132
      $region42: #{forward.20} parent=39 // pred_check_branch
        %1553 = sbr.rel (%p1551) target = $region44
      $region43: #{forward.20} parent=39 // pred_region
        %p1554 = scmp.lt.s32.totalorder %s21, 1
        %s1555 = scalar_select %p1554, %s21, 1
        %p1556 = scmp.lt.s32.totalorder %s20, 0
        %s1557 = scalar_select %p1556, %s20, 0
        %s1558 = smul.addr %s1557, 16
        %s1559 = smul.addr %s1555, 16
        %s1560 = sadd.s32 %s1558, %s1559
        %s1561 = smul.addr %s1560, 8
        %s1562 = scalar_lea.vmem %s3, %s1561
      $region44: #{forward.20} parent=39 // pred_fallthru
        _
    $region40: #{forward.20} parent=5 // pred_fallthru
      _
  $region6: #{forward.20} parent=0 // loop_footer
    %s13 = sadd.s32 1, %s9
  $region7: #{forward.20} parent=0 // loop_footer_branch
    %8 = sbr.rel target = $region3
  $region8: #{forward.20} parent=0 // loop_exit
    _

// kernel: forward.21
$region0: #{forward.21}
  #allocation0 [shape = 'u32[]', space=smem, size = 0x4, offset = 0x4, fixed_abs, tag = 'smem constant byte address 0x4 - core index']
  #allocation1 [shape = 'u32[144,128]{1,0:T(1,128)}', space=vmem, size = 0x12000, scoped, tag = 'internal scratch']
  %s0 = inlined_call_operand.vmem [shape: bf16[2,1,128,130], index: 0, kind: input, shape index: {}]
  %s1 = inlined_call_operand.vmem [shape: bf16[1,3,8,128], index: 1, kind: input, shape index: {}]
  %s2 = inlined_call_operand.vmem [shape: f32[1,8,1], index: 2, kind: input, shape index: {}]
  %s3 = inlined_call_operand.vmem [shape: f32[2,1,8,128], index: 3, kind: output, shape index: {}]
  %s4 = sld [smem:[#allocation0]]
  $region45: #{forward.21} parent=0
    _
  %s6 = ssub.s32 1, %s4
  %s7 = scalar_select 0, %s6, %s4
  loop: start=0, step=1, limit=4
  $region2: #{forward.21} parent=0 // loop_pre_header
    _
  $region3: #{forward.21} parent=0 // loop_header
    %s9 = sphi 0, %s13
    %p10 = scmp.ge.s32.totalorder %s9, 4
    %s16 = sphi 0, %s28
    %s17 = sphi 0, %s24
    %s18 = sphi 0, %s16
    %s19 = sphi 0, %s17
    %s20 = sphi 0, %s18
    %s21 = sphi 0, %s19
    %s33 = sphi 0, %s35
    %s36 = sphi 0, %s33
    %s37 = sphi 0, %s36
    %s53 = sphi 0, %s37
    %s59 = sphi 0, %s61
    %s62 = sphi 0, %s59
    %s63 = sphi 0, %s62
    %s79 = sphi 0, %s63
    %s85 = sphi 0, %s87
    %s88 = sphi 0, %s85
    %s89 = sphi 0, %s88
    %s105 = sphi 0, %s89
    %s113 = sphi 0, %s115
    %s116 = sphi 0, %s113
    %s117 = sphi 0, %s116
    %s133 = sphi 0, %s117
  $region4: #{forward.21} parent=0 // loop_header_branch
    %12 = sbr.rel (%p10) target = $region8
  $region5: #{forward.21} parent=0 // loop_body
    %s14 = ssub.s32 %s9, 1
    %s15 = ssub.s32 %s9, 2
    %s22 = sadd.s32 1, %s17
    %p23 = scmp.ge.s32.totalorder %s22, 2
    %s24 = scalar_select %p23, 0, %s22
    %s25 = sadd.s32 1, %s16
    %s26 = scalar_select %p23, %s25, %s16
    %p27 = scmp.ge.s32.totalorder %s26, 1
    %s28 = scalar_select %p27, 0, %s26
    %s29 = ssub.s32 %s17, %s24
    %s30 = ssub.s32 %s16, %s28
    %s31 = sor.u32 %s29, %s30
    %p32 = scmp.eq.s32.totalorder %s31, 0
    %s34 = sadd.s32 %s33, 1
    %s35 = scalar_select %p32, %s33, %s34
    %p38 = pneg %p32
    %p39 = scmp.eq.s32.totalorder %s9, 1
    %p40 = por %p38, %p39
    %p41 = scmp.ne.s32.totalorder %s33, %s36
    %p42 = scmp.eq.s32.totalorder %s9, 0
    %p43 = por %p41, %p42
    %p44 = scmp.ne.s32.totalorder %s33, %s36
    %p45 = scmp.eq.s32.totalorder %s14, 1
    %p46 = por %p44, %p45
    %p47 = scmp.ne.s32.totalorder %s36, %s37
    %p48 = scmp.eq.s32.totalorder %s14, 0
    %p49 = por %p47, %p48
    %p50 = scmp.ne.s32.totalorder %s36, %s37
    %p51 = scmp.eq.s32.totalorder %s15, 1
    %p52 = por %p50, %p51
    %p54 = scmp.ne.s32.totalorder %s37, %s53
    %p55 = scmp.eq.s32.totalorder %s15, 0
    %p56 = por %p54, %p55
    %s57 = ssub.s32 %s16, %s28
    %p58 = scmp.eq.s32.totalorder %s57, 0
    %s60 = sadd.s32 %s59, 1
    %s61 = scalar_select %p58, %s59, %s60
    %p64 = pneg %p58
    %p65 = scmp.eq.s32.totalorder %s9, 1
    %p66 = por %p64, %p65
    %p67 = scmp.ne.s32.totalorder %s59, %s62
    %p68 = scmp.eq.s32.totalorder %s9, 0
    %p69 = por %p67, %p68
    %p70 = scmp.ne.s32.totalorder %s59, %s62
    %p71 = scmp.eq.s32.totalorder %s14, 1
    %p72 = por %p70, %p71
    %p73 = scmp.ne.s32.totalorder %s62, %s63
    %p74 = scmp.eq.s32.totalorder %s14, 0
    %p75 = por %p73, %p74
    %p76 = scmp.ne.s32.totalorder %s62, %s63
    %p77 = scmp.eq.s32.totalorder %s15, 1
    %p78 = por %p76, %p77
    %p80 = scmp.ne.s32.totalorder %s63, %s79
    %p81 = scmp.eq.s32.totalorder %s15, 0
    %p82 = por %p80, %p81
    %s83 = ssub.s32 %s16, %s28
    %p84 = scmp.eq.s32.totalorder %s83, 0
    %s86 = sadd.s32 %s85, 1
    %s87 = scalar_select %p84, %s85, %s86
    %p90 = pneg %p84
    %p91 = scmp.eq.s32.totalorder %s9, 1
    %p92 = por %p90, %p91
    %p93 = scmp.ne.s32.totalorder %s85, %s88
    %p94 = scmp.eq.s32.totalorder %s9, 0
    %p95 = por %p93, %p94
    %p96 = scmp.ne.s32.totalorder %s85, %s88
    %p97 = scmp.eq.s32.totalorder %s14, 1
    %p98 = por %p96, %p97
    %p99 = scmp.ne.s32.totalorder %s88, %s89
    %p100 = scmp.eq.s32.totalorder %s14, 0
    %p101 = por %p99, %p100
    %p102 = scmp.ne.s32.totalorder %s88, %s89
    %p103 = scmp.eq.s32.totalorder %s15, 1
    %p104 = por %p102, %p103
    %p106 = scmp.ne.s32.totalorder %s89, %s105
    %p107 = scmp.eq.s32.totalorder %s15, 0
    %p108 = por %p106, %p107
    %s109 = ssub.s32 %s17, %s24
    %s110 = ssub.s32 %s16, %s28
    %s111 = sor.u32 %s109, %s110
    %p112 = scmp.eq.s32.totalorder %s111, 0
    %s114 = sadd.s32 %s113, 1
    %s115 = scalar_select %p112, %s113, %s114
    %p118 = pneg %p112
    %p119 = scmp.eq.s32.totalorder %s9, 1
    %p120 = por %p118, %p119
    %p121 = scmp.ne.s32.totalorder %s113, %s116
    %p122 = scmp.eq.s32.totalorder %s9, 0
    %p123 = por %p121, %p122
    %p124 = scmp.ne.s32.totalorder %s113, %s116
    %p125 = scmp.eq.s32.totalorder %s14, 1
    %p126 = por %p124, %p125
    %p127 = scmp.ne.s32.totalorder %s116, %s117
    %p128 = scmp.eq.s32.totalorder %s14, 0
    %p129 = por %p127, %p128
    %p130 = scmp.ne.s32.totalorder %s116, %s117
    %p131 = scmp.eq.s32.totalorder %s15, 1
    %p132 = por %p130, %p131
    %p134 = scmp.ne.s32.totalorder %s117, %s133
    %p135 = scmp.eq.s32.totalorder %s15, 0
    %p136 = por %p134, %p135
    %p137 = scmp.le.s32.totalorder 1, %s9
    %p138 = scmp.lt.s32.totalorder %s9, 3
    %p139 = pnand %p137, %p138
    %p140 = pneg %p139
    // Predicated region
    $region9: #{forward.21} parent=5 // pred_check
      _
    $region10: #{forward.21} parent=5 // pred_check_branch
      %142 = sbr.rel (%p139) target = $region12
    $region11: #{forward.21} parent=5 // pred_region
      %s143 = ssub.s32 %s9, 1
      // Predicated region
      $region13: #{forward.21} parent=11 // pred_check
        %p144 = pneg %p75
      $region14: #{forward.21} parent=11 // pred_check_branch
        %146 = sbr.rel (%p144) target = $region16
      $region15: #{forward.21} parent=11 // pred_region
        %p147 = scmp.lt.s32.totalorder %s18, 0
        %s148 = scalar_select %p147, %s18, 0
        %s149 = smul.addr %s148, 3
        %s150 = smul.addr %s149, 4
        %s151 = scalar_lea.vmem %s1, %s150
      $region16: #{forward.21} parent=11 // pred_fallthru
        _
      // Predicated region
      $region17: #{forward.21} parent=11 // pred_check
        %p152 = pneg %p101
      $region18: #{forward.21} parent=11 // pred_check_branch
        %154 = sbr.rel (%p152) target = $region20
      $region19: #{forward.21} parent=11 // pred_region
        %p155 = scmp.lt.s32.totalorder %s18, 0
        %s156 = scalar_select %p155, %s18, 0
        %s157 = smul.addr %s156, 8
        %s158 = scalar_lea.vmem %s2, %s157
      $region20: #{forward.21} parent=11 // pred_fallthru
        _
    $region12: #{forward.21} parent=5 // pred_fallthru
      _
    %p159 = scmp.lt.s32.totalorder %s9, 2
    // Predicated region
    $region21: #{forward.21} parent=5 // pred_check
      %p160 = pneg %p159
    $region22: #{forward.21} parent=5 // pred_check_branch
      %162 = sbr.rel (%p160) target = $region24
    $region23: #{forward.21} parent=5 // pred_region
      // Predicated region
      $region25: #{forward.21} parent=23 // pred_check
        %p163 = pneg %p43
      $region26: #{forward.21} parent=23 // pred_check_branch
        %165 = sbr.rel (%p163) target = $region28
      $region27: #{forward.21} parent=23 // pred_region
        %p166 = scmp.lt.s32.totalorder %s17, 1
        %s167 = scalar_select %p166, %s17, 1
        %p168 = scmp.lt.s32.totalorder %s16, 0
        %s169 = scalar_select %p168, %s16, 0
        %s170 = smul.addr %s169, 32
        %s171 = smul.addr %s167, 32
        %s172 = sadd.s32 %s170, %s171
        %s173 = smul.addr %s172, 4
        %s174 = scalar_lea.vmem %s0, %s173
      $region28: #{forward.21} parent=23 // pred_fallthru
        _
    $region24: #{forward.21} parent=5 // pred_fallthru
      _
    %p175 = scmp.le.s32.totalorder 1, %s9
    %p176 = scmp.lt.s32.totalorder %s9, 3
    %p177 = pnand %p175, %p176
    %p178 = pneg %p177
    // Predicated region
    $region29: #{forward.21} parent=5 // pred_check
      _
    $region30: #{forward.21} parent=5 // pred_check_branch
      %180 = sbr.rel (%p177) target = $region32
    $region31: #{forward.21} parent=5 // pred_region
      %s181 = ssub.s32 %s9, 1
      %p182 = scmp.lt.s32.totalorder %s19, 1
      %s183 = scalar_select %p182, %s19, 1
      %p184 = scmp.lt.s32.totalorder %s18, 0
      %s185 = scalar_select %p184, %s18, 0
      %s186 = smul.addr %s185, 32
      %s187 = smul.addr %s183, 32
      %s188 = sadd.s32 %s186, %s187
      %s189 = smul.addr %s188, 4
      %s190 = scalar_lea.vmem %s0, %s189
      %p191 = pneg %p49
      %p192 = pneg %p46
      %p193 = scmp.lt.s32.totalorder %s18, 0
      %s194 = scalar_select %p193, %s18, 0
      %s195 = smul.addr %s194, 3
      %s196 = smul.addr %s195, 4
      %s197 = scalar_lea.vmem %s1, %s196
      %p198 = pneg %p75
      %p199 = pneg %p72
      %p200 = scmp.lt.s32.totalorder %s18, 0
      %s201 = scalar_select %p200, %s18, 0
      %s202 = smul.addr %s201, 8
      %s203 = scalar_lea.vmem %s2, %s202
      %p204 = pneg %p101
      %p205 = pneg %p98
      %p206 = pneg %p129
      %p207 = pneg %p126
      %p208 = scmp.lt.s32.totalorder %s19, 1
      %s209 = scalar_select %p208, %s19, 1
      %p210 = scmp.lt.s32.totalorder %s18, 0
      %s211 = scalar_select %p210, %s18, 0
      %s212 = sadd.s32 %s211, %s209
      %s213 = smul.addr %s212, 8
      %s214 = scalar_lea.vmem %s3, %s213
      %p215 = scmp.lt.s32.totalorder %s19, 1
      %s216 = scalar_select %p215, %s19, 1
      %p217 = scmp.lt.s32.totalorder %s18, 0
      %s218 = scalar_select %p217, %s18, 0
      %s219 = smul.addr %s218, 32
      %s220 = smul.addr %s216, 32
      %s221 = sadd.s32 %s219, %s220
      %s222 = smul.addr %s221, 4
      %s223 = scalar_lea.vmem %s0, %s222
      %p224 = scmp.lt.s32.totalorder %s18, 0
      %s225 = scalar_select %p224, %s18, 0
      %s226 = smul.addr %s225, 3
      %s227 = smul.addr %s226, 4
      %s228 = scalar_lea.vmem %s1, %s227
      %p229 = scmp.lt.s32.totalorder %s18, 0
      %s230 = scalar_select %p229, %s18, 0
      %s231 = smul.addr %s230, 8
      %s232 = scalar_lea.vmem %s2, %s231
      %p233 = scmp.lt.s32.totalorder %s19, 1
      %s234 = scalar_select %p233, %s19, 1
      %p235 = scmp.lt.s32.totalorder %s18, 0
      %s236 = scalar_select %p235, %s18, 0
      %s237 = sadd.s32 %s236, %s234
      %s238 = smul.addr %s237, 8
      %s239 = scalar_lea.vmem %s3, %s238
      %v241 = vld [vmem:[%s228] sm:$0xf]
      %v242 = vld [vmem:[%s223] sm:$0xf]
      %v243 = vld [vmem:[%s223 + $0x8] sm:$0xf]
      %v244 = vld [vmem:[%s223 + $0x10] sm:$0xf]
      %v245 = vld [vmem:[%s223 + $0x18] sm:$0xf]
      %v246 = vld [vmem:[%s223 + $0x20] sm:$0xf]
      %v247 = vld [vmem:[%s223 + $0x28] sm:$0xf]
      %v248 = vld [vmem:[%s223 + $0x30] sm:$0xf]
      %v249 = vld [vmem:[%s223 + $0x38] sm:$0xf]
      %v250 = vld [vmem:[%s223 + $0x40] sm:$0xf]
      %v251 = vld [vmem:[%s223 + $0x48] sm:$0xf]
      %v252 = vld [vmem:[%s223 + $0x50] sm:$0xf]
      %v253 = vld [vmem:[%s223 + $0x58] sm:$0xf]
      %v254 = vld [vmem:[%s223 + $0x60] sm:$0xf]
      %v255 = vld [vmem:[%s223 + $0x68] sm:$0xf]
      %v256 = vld [vmem:[%s223 + $0x70] sm:$0xf]
      %v257 = vld [vmem:[%s223 + $0x78] sm:$0xf]
      %s258 = scalar_lea.vmem %s228, 4
      %v259 = vld [vmem:[%s258] sm:$0xf]
      %v260 = vld [vmem:[%s223] sm:$0xff]
      %v261 = vld [vmem:[%s223 + $0x8] sm:$0xff]
      %v262 = vld [vmem:[%s223 + $0x10] sm:$0xff]
      %v263 = vld [vmem:[%s223 + $0x18] sm:$0xff]
      %v264 = vld [vmem:[%s223 + $0x20] sm:$0xff]
      %v265 = vld [vmem:[%s223 + $0x28] sm:$0xff]
      %v266 = vld [vmem:[%s223 + $0x30] sm:$0xff]
      %v267 = vld [vmem:[%s223 + $0x38] sm:$0xff]
      %v268 = vld [vmem:[%s223 + $0x40] sm:$0xff]
      %v269 = vld [vmem:[%s223 + $0x48] sm:$0xff]
      %v270 = vld [vmem:[%s223 + $0x50] sm:$0xff]
      %v271 = vld [vmem:[%s223 + $0x58] sm:$0xff]
      %v272 = vld [vmem:[%s223 + $0x60] sm:$0xff]
      %v273 = vld [vmem:[%s223 + $0x68] sm:$0xff]
      %v274 = vld [vmem:[%s223 + $0x70] sm:$0xff]
      %v275 = vld [vmem:[%s223 + $0x78] sm:$0xff]
      %v292 = vunpack.c.l.b16 %v260
      %v293 = vunpack.c.h.b16 %v260
      %v294 = vunpack.c.l.b16 %v261
      %v295 = vunpack.c.h.b16 %v261
      %v296 = vunpack.c.l.b16 %v262
      %v297 = vunpack.c.h.b16 %v262
      %v298 = vunpack.c.l.b16 %v263
      %v299 = vunpack.c.h.b16 %v263
      %v300 = vunpack.c.l.b16 %v264
      %v301 = vunpack.c.h.b16 %v264
      %v302 = vunpack.c.l.b16 %v265
      %v303 = vunpack.c.h.b16 %v265
      %v304 = vunpack.c.l.b16 %v266
      %v305 = vunpack.c.h.b16 %v266
      %v306 = vunpack.c.l.b16 %v267
      %v307 = vunpack.c.h.b16 %v267
      %v308 = vunpack.c.l.b16 %v268
      %v309 = vunpack.c.h.b16 %v268
      %v310 = vunpack.c.l.b16 %v269
      %v311 = vunpack.c.h.b16 %v269
      %v312 = vunpack.c.l.b16 %v270
      %v313 = vunpack.c.h.b16 %v270
      %v314 = vunpack.c.l.b16 %v271
      %v315 = vunpack.c.h.b16 %v271
      %v316 = vunpack.c.l.b16 %v272
      %v317 = vunpack.c.h.b16 %v272
      %v318 = vunpack.c.l.b16 %v273
      %v319 = vunpack.c.h.b16 %v273
      %v320 = vunpack.c.l.b16 %v274
      %v321 = vunpack.c.h.b16 %v274
      %v322 = vunpack.c.l.b16 %v275
      %v323 = vunpack.c.h.b16 %v275
      %v324 = vpack.c.b16 %v294, %v292
      %v325 = vpack.c.b16 %v295, %v293
      %v326 = vpack.c.b16 %v298, %v296
      %v327 = vpack.c.b16 %v299, %v297
      %v328 = vpack.c.b16 %v302, %v300
      %v329 = vpack.c.b16 %v303, %v301
      %v330 = vpack.c.b16 %v306, %v304
      %v331 = vpack.c.b16 %v307, %v305
      %v332 = vpack.c.b16 %v310, %v308
      %v333 = vpack.c.b16 %v311, %v309
      %v334 = vpack.c.b16 %v314, %v312
      %v335 = vpack.c.b16 %v315, %v313
      %v336 = vpack.c.b16 %v318, %v316
      %v337 = vpack.c.b16 %v319, %v317
      %v338 = vpack.c.b16 %v322, %v320
      %v339 = vpack.c.b16 %v323, %v321
      %340 = vrot.lane.b32.xlu0 %v324, 127
      %v341 = vpop.permute.xlu0 %340
      %342 = vrot.lane.b32.xlu0 %v325, 127
      %v343 = vpop.permute.xlu0 %342
      %344 = vrot.lane.b32.xlu0 %v326, 127
      %v345 = vpop.permute.xlu0 %344
      %346 = vrot.lane.b32.xlu0 %v327, 127
      %v347 = vpop.permute.xlu0 %346
      %348 = vrot.lane.b32.xlu0 %v328, 127
      %v349 = vpop.permute.xlu0 %348
      %350 = vrot.lane.b32.xlu0 %v329, 127
      %v351 = vpop.permute.xlu0 %350
      %352 = vrot.lane.b32.xlu0 %v330, 127
      %v353 = vpop.permute.xlu0 %352
      %354 = vrot.lane.b32.xlu0 %v331, 127
      %v355 = vpop.permute.xlu0 %354
      %356 = vrot.lane.b32.xlu0 %v332, 127
      %v357 = vpop.permute.xlu0 %356
      %358 = vrot.lane.b32.xlu0 %v333, 127
      %v359 = vpop.permute.xlu0 %358
      %360 = vrot.lane.b32.xlu0 %v334, 127
      %v361 = vpop.permute.xlu0 %360
      %362 = vrot.lane.b32.xlu0 %v335, 127
      %v363 = vpop.permute.xlu0 %362
      %364 = vrot.lane.b32.xlu0 %v336, 127
      %v365 = vpop.permute.xlu0 %364
      %366 = vrot.lane.b32.xlu0 %v337, 127
      %v367 = vpop.permute.xlu0 %366
      %368 = vrot.lane.b32.xlu0 %v338, 127
      %v369 = vpop.permute.xlu0 %368
      %370 = vrot.lane.b32.xlu0 %v339, 127
      %v371 = vpop.permute.xlu0 %370
      %vm372 = vcmask 1039360
      %v373 = vsel %vm372, %v341, %v343
      %v374 = vsel %vm372, %v345, %v347
      %v375 = vsel %vm372, %v349, %v351
      %v376 = vsel %vm372, %v353, %v355
      %v377 = vsel %vm372, %v357, %v359
      %v378 = vsel %vm372, %v361, %v363
      %v379 = vsel %vm372, %v365, %v367
      %v380 = vsel %vm372, %v369, %v371
      %389 = vmatprep.subr.bf16.mxu0 0
      %390 = vmatpush1.bf16.msra.mxu0 %v373
      %391 = vmatprep.subr.bf16.mxu0 0
      %392 = vmatpush1.bf16.msra.mxu0 %v374
      %393 = vmatprep.subr.bf16.mxu0 0
      %394 = vmatpush1.bf16.msra.mxu0 %v375
      %395 = vmatprep.subr.bf16.mxu0 0
      %396 = vmatpush1.bf16.msra.mxu0 %v376
      %397 = vmatprep.subr.bf16.mxu0 0
      %398 = vmatpush1.bf16.msra.mxu0 %v377
      %399 = vmatprep.subr.bf16.mxu0 0
      %400 = vmatpush1.bf16.msra.mxu0 %v378
      %401 = vmatprep.subr.bf16.mxu0 0
      %402 = vmatpush1.bf16.msra.mxu0 %v379
      %403 = vmatprep.subr.bf16.mxu0 0
      %404 = vmatpush1.bf16.msra.mxu0 %v380
      %405 = vmatprep.subr.bf16.mxu0 0
      %406 = vmatpush1.bf16.msra.mxu0 0
      %407 = vmatprep.subr.bf16.mxu0 0
      %408 = vmatpush1.bf16.msra.mxu0 0
      %409 = vmatprep.subr.bf16.mxu0 0
      %410 = vmatpush1.bf16.msra.mxu0 0
      %411 = vmatprep.subr.bf16.mxu0 0
      %412 = vmatpush1.bf16.msra.mxu0 0
      %413 = vmatprep.subr.bf16.mxu0 0
      %414 = vmatpush1.bf16.msra.mxu0 0
      %415 = vmatprep.subr.bf16.mxu0 0
      %416 = vmatpush1.bf16.msra.mxu0 0
      %417 = vmatprep.subr.bf16.mxu0 0
      %418 = vmatpush1.bf16.msra.mxu0 0
      %419 = vmatprep.subr.bf16.mxu0 0
      %420 = vmatpush1.bf16.msra.mxu0 0
      %421 = vmatprep.mubr.bf16.mxu0 0
      %422 = vmatmul.mubr.bf16.gmra.mrb[0].mxu0 %v259
      %v423 = vpop.f32.mrb[0].mxu0
      %v424 = vadd.f32 0.0, %v423
      %v425 = vpop.f32.mrb[0].mxu0
      %v426 = vpop.f32.mrb[0].mxu0
      %v427 = vpop.f32.mrb[0].mxu0
      %428 = vdwg.mxu0
      %v445 = vunpack.c.l.b16 %v242
      %v446 = vunpack.c.l.b16 %v243
      %v447 = vunpack.c.l.b16 %v244
      %v448 = vunpack.c.l.b16 %v245
      %v449 = vunpack.c.l.b16 %v246
      %v450 = vunpack.c.l.b16 %v247
      %v451 = vunpack.c.l.b16 %v248
      %v452 = vunpack.c.l.b16 %v249
      %v453 = vunpack.c.l.b16 %v250
      %v454 = vunpack.c.l.b16 %v251
      %v455 = vunpack.c.l.b16 %v252
      %v456 = vunpack.c.l.b16 %v253
      %v457 = vunpack.c.l.b16 %v254
      %v458 = vunpack.c.l.b16 %v255
      %v459 = vunpack.c.l.b16 %v256
      %v460 = vunpack.c.l.b16 %v257
      %v461 = vpack.c.b16 %v446, %v445
      %v462 = vpack.c.b16 %v448, %v447
      %v463 = vpack.c.b16 %v450, %v449
      %v464 = vpack.c.b16 %v452, %v451
      %v465 = vpack.c.b16 %v454, %v453
      %v466 = vpack.c.b16 %v456, %v455
      %v467 = vpack.c.b16 %v458, %v457
      %v468 = vpack.c.b16 %v460, %v459
      %477 = vmatprep.subr.bf16.mxu0 0
      %478 = vmatpush1.bf16.msra.mxu0 %v461
      %479 = vmatprep.subr.bf16.mxu0 0
      %480 = vmatpush1.bf16.msra.mxu0 %v462
      %481 = vmatprep.subr.bf16.mxu0 0
      %482 = vmatpush1.bf16.msra.mxu0 %v463
      %483 = vmatprep.subr.bf16.mxu0 0
      %484 = vmatpush1.bf16.msra.mxu0 %v464
      %485 = vmatprep.subr.bf16.mxu0 0
      %486 = vmatpush1.bf16.msra.mxu0 %v465
      %487 = vmatprep.subr.bf16.mxu0 0
      %488 = vmatpush1.bf16.msra.mxu0 %v466
      %489 = vmatprep.subr.bf16.mxu0 0
      %490 = vmatpush1.bf16.msra.mxu0 %v467
      %491 = vmatprep.subr.bf16.mxu0 0
      %492 = vmatpush1.bf16.msra.mxu0 %v468
      %493 = vmatprep.subr.bf16.mxu0 0
      %494 = vmatpush1.bf16.msra.mxu0 0
      %495 = vmatprep.subr.bf16.mxu0 0
      %496 = vmatpush1.bf16.msra.mxu0 0
      %497 = vmatprep.subr.bf16.mxu0 0
      %498 = vmatpush1.bf16.msra.mxu0 0
      %499 = vmatprep.subr.bf16.mxu0 0
      %500 = vmatpush1.bf16.msra.mxu0 0
      %501 = vmatprep.subr.bf16.mxu0 0
      %502 = vmatpush1.bf16.msra.mxu0 0
      %503 = vmatprep.subr.bf16.mxu0 0
      %504 = vmatpush1.bf16.msra.mxu0 0
      %505 = vmatprep.subr.bf16.mxu0 0
      %506 = vmatpush1.bf16.msra.mxu0 0
      %507 = vmatprep.subr.bf16.mxu0 0
      %508 = vmatpush1.bf16.msra.mxu0 0
      %509 = vmatprep.mubr.bf16.mxu0 0
      %510 = vmatmul.mubr.bf16.gmra.mrb[0].mxu0 %v241
      %v511 = vpop.f32.mrb[0].mxu0
      %v512 = vadd.f32 %v424, %v511
      %v513 = vpop.f32.mrb[0].mxu0
      %v514 = vpop.f32.mrb[0].mxu0
      %v515 = vpop.f32.mrb[0].mxu0
      %516 = vdwg.mxu0
      %s517 = scalar_lea.vmem %s228, 8
      %v518 = vld [vmem:[%s517] sm:$0xf]
      %519 = vrot.lane.b32.xlu0 %v324, 126
      %v520 = vpop.permute.xlu0 %519
      %521 = vrot.lane.b32.xlu0 %v325, 126
      %v522 = vpop.permute.xlu0 %521
      %523 = vrot.lane.b32.xlu0 %v326, 126
      %v524 = vpop.permute.xlu0 %523
      %525 = vrot.lane.b32.xlu0 %v327, 126
      %v526 = vpop.permute.xlu0 %525
      %527 = vrot.lane.b32.xlu0 %v328, 126
      %v528 = vpop.permute.xlu0 %527
      %529 = vrot.lane.b32.xlu0 %v329, 126
      %v530 = vpop.permute.xlu0 %529
      %531 = vrot.lane.b32.xlu0 %v330, 126
      %v532 = vpop.permute.xlu0 %531
      %533 = vrot.lane.b32.xlu0 %v331, 126
      %v534 = vpop.permute.xlu0 %533
      %535 = vrot.lane.b32.xlu0 %v332, 126
      %v536 = vpop.permute.xlu0 %535
      %537 = vrot.lane.b32.xlu0 %v333, 126
      %v538 = vpop.permute.xlu0 %537
      %539 = vrot.lane.b32.xlu0 %v334, 126
      %v540 = vpop.permute.xlu0 %539
      %541 = vrot.lane.b32.xlu0 %v335, 126
      %v542 = vpop.permute.xlu0 %541
      %543 = vrot.lane.b32.xlu0 %v336, 126
      %v544 = vpop.permute.xlu0 %543
      %545 = vrot.lane.b32.xlu0 %v337, 126
      %v546 = vpop.permute.xlu0 %545
      %547 = vrot.lane.b32.xlu0 %v338, 126
      %v548 = vpop.permute.xlu0 %547
      %549 = vrot.lane.b32.xlu0 %v339, 126
      %v550 = vpop.permute.xlu0 %549
      %vm551 = vcmask 1031168
      %v552 = vsel %vm551, %v520, %v522
      %v553 = vsel %vm551, %v524, %v526
      %v554 = vsel %vm551, %v528, %v530
      %v555 = vsel %vm551, %v532, %v534
      %v556 = vsel %vm551, %v536, %v538
      %v557 = vsel %vm551, %v540, %v542
      %v558 = vsel %vm551, %v544, %v546
      %v559 = vsel %vm551, %v548, %v550
      %568 = vmatprep.subr.bf16.mxu0 0
      %569 = vmatpush1.bf16.msra.mxu0 %v552
      %570 = vmatprep.subr.bf16.mxu0 0
      %571 = vmatpush1.bf16.msra.mxu0 %v553
      %572 = vmatprep.subr.bf16.mxu0 0
      %573 = vmatpush1.bf16.msra.mxu0 %v554
      %574 = vmatprep.subr.bf16.mxu0 0
      %575 = vmatpush1.bf16.msra.mxu0 %v555
      %576 = vmatprep.subr.bf16.mxu0 0
      %577 = vmatpush1.bf16.msra.mxu0 %v556
      %578 = vmatprep.subr.bf16.mxu0 0
      %579 = vmatpush1.bf16.msra.mxu0 %v557
      %580 = vmatprep.subr.bf16.mxu0 0
      %581 = vmatpush1.bf16.msra.mxu0 %v558
      %582 = vmatprep.subr.bf16.mxu0 0
      %583 = vmatpush1.bf16.msra.mxu0 %v559
      %584 = vmatprep.subr.bf16.mxu0 0
      %585 = vmatpush1.bf16.msra.mxu0 0
      %586 = vmatprep.subr.bf16.mxu0 0
      %587 = vmatpush1.bf16.msra.mxu0 0
      %588 = vmatprep.subr.bf16.mxu0 0
      %589 = vmatpush1.bf16.msra.mxu0 0
      %590 = vmatprep.subr.bf16.mxu0 0
      %591 = vmatpush1.bf16.msra.mxu0 0
      %592 = vmatprep.subr.bf16.mxu0 0
      %593 = vmatpush1.bf16.msra.mxu0 0
      %594 = vmatprep.subr.bf16.mxu0 0
      %595 = vmatpush1.bf16.msra.mxu0 0
      %596 = vmatprep.subr.bf16.mxu0 0
      %597 = vmatpush1.bf16.msra.mxu0 0
      %598 = vmatprep.subr.bf16.mxu0 0
      %599 = vmatpush1.bf16.msra.mxu0 0
      %600 = vmatprep.mubr.bf16.mxu0 0
      %601 = vmatmul.mubr.bf16.gmra.mrb[0].mxu0 %v518
      %v602 = vpop.f32.mrb[0].mxu0
      %v603 = vadd.f32 0.0, %v602
      %v604 = vpop.f32.mrb[0].mxu0
      %v605 = vpop.f32.mrb[0].mxu0
      %v606 = vpop.f32.mrb[0].mxu0
      %607 = vdwg.mxu0
      %v608 = vadd.f32 %v512, %v603
      %v609 = vld [vmem:[%s232] sm:$0xff]
      %611 = vset.pattern.permute.xlu0 0
      %612 = vperm.xlu0 %611, %v609
      %v613 = vpop.permute.xlu0 %612
      %v615 = vadd.f32 %v608, %v613
      %vm616 = vcmp.ge.f32.partialorder %v615, 0.0
      %v617 = vmul.f32 %v615, 0.2
      %v618 = vsel %vm616, %v615, %v617
      %619 = vst [vmem:[%s239] sm:$0xff] %v618
      %p620 = scmp.lt.s32.totalorder %s19, 1
      %s621 = scalar_select %p620, %s19, 1
      %p622 = scmp.lt.s32.totalorder %s18, 0
      %s623 = scalar_select %p622, %s18, 0
      %s624 = sadd.s32 %s623, %s621
      %s625 = smul.addr %s624, 8
      %s626 = scalar_lea.vmem %s3, %s625
      // Predicated region
      $region33: #{forward.21} parent=31 // pred_check
        %p627 = pneg %p126
      $region34: #{forward.21} parent=31 // pred_check_branch
        %629 = sbr.rel (%p627) target = $region36
      $region35: #{forward.21} parent=31 // pred_region
        _
      $region36: #{forward.21} parent=31 // pred_fallthru
        _
    $region32: #{forward.21} parent=5 // pred_fallthru
      _
    %p630 = scmp.le.s32.totalorder 2, %s9
    // Predicated region
    $region37: #{forward.21} parent=5 // pred_check
      %p631 = pneg %p630
    $region38: #{forward.21} parent=5 // pred_check_branch
      %633 = sbr.rel (%p631) target = $region40
    $region39: #{forward.21} parent=5 // pred_region
      %s634 = ssub.s32 %s9, 2
      // Predicated region
      $region41: #{forward.21} parent=39 // pred_check
        %p635 = pneg %p132
      $region42: #{forward.21} parent=39 // pred_check_branch
        %637 = sbr.rel (%p635) target = $region44
      $region43: #{forward.21} parent=39 // pred_region
        %p638 = scmp.lt.s32.totalorder %s21, 1
        %s639 = scalar_select %p638, %s21, 1
        %p640 = scmp.lt.s32.totalorder %s20, 0
        %s641 = scalar_select %p640, %s20, 0
        %s642 = sadd.s32 %s641, %s639
        %s643 = smul.addr %s642, 8
        %s644 = scalar_lea.vmem %s3, %s643
      $region44: #{forward.21} parent=39 // pred_fallthru
        _
    $region40: #{forward.21} parent=5 // pred_fallthru
      _
  $region6: #{forward.21} parent=0 // loop_footer
    %s13 = sadd.s32 1, %s9
  $region7: #{forward.21} parent=0 // loop_footer_branch
    %8 = sbr.rel target = $region3
  $region8: #{forward.21} parent=0 // loop_exit
    _

// kernel: forward.11
$region0: #{forward.11}
  #allocation0 [shape = 'u32[]', space=smem, size = 0x4, offset = 0x4, fixed_abs, tag = 'smem constant byte address 0x4 - core index']
  #allocation1 [shape = 'u32[144,128]{1,0:T(1,128)}', space=vmem, size = 0x12000, scoped, tag = 'internal scratch']
  %s0 = inlined_call_operand.vmem [shape: bf16[2,1,8,270], index: 0, kind: input, shape index: {}]
  %s1 = inlined_call_operand.vmem [shape: bf16[1,15,16,8], index: 1, kind: input, shape index: {}]
  %s2 = inlined_call_operand.vmem [shape: f32[1,16,1], index: 2, kind: input, shape index: {}]
  %s3 = inlined_call_operand.vmem [shape: f32[2,1,16,256], index: 3, kind: output, shape index: {}]
  %s4 = sld [smem:[#allocation0]]
  $region45: #{forward.11} parent=0
    _
  %s6 = ssub.s32 1, %s4
  %s7 = scalar_select 0, %s6, %s4
  loop: start=0, step=1, limit=4
  $region2: #{forward.11} parent=0 // loop_pre_header
    _
  $region3: #{forward.11} parent=0 // loop_header
    %s9 = sphi 0, %s13
    %p10 = scmp.ge.s32.totalorder %s9, 4
    %s16 = sphi 0, %s28
    %s17 = sphi 0, %s24
    %s18 = sphi 0, %s16
    %s19 = sphi 0, %s17
    %s20 = sphi 0, %s18
    %s21 = sphi 0, %s19
    %s33 = sphi 0, %s35
    %s36 = sphi 0, %s33
    %s37 = sphi 0, %s36
    %s53 = sphi 0, %s37
    %s59 = sphi 0, %s61
    %s62 = sphi 0, %s59
    %s63 = sphi 0, %s62
    %s79 = sphi 0, %s63
    %s85 = sphi 0, %s87
    %s88 = sphi 0, %s85
    %s89 = sphi 0, %s88
    %s105 = sphi 0, %s89
    %s113 = sphi 0, %s115
    %s116 = sphi 0, %s113
    %s117 = sphi 0, %s116
    %s133 = sphi 0, %s117
  $region4: #{forward.11} parent=0 // loop_header_branch
    %12 = sbr.rel (%p10) target = $region8
  $region5: #{forward.11} parent=0 // loop_body
    %s14 = ssub.s32 %s9, 1
    %s15 = ssub.s32 %s9, 2
    %s22 = sadd.s32 1, %s17
    %p23 = scmp.ge.s32.totalorder %s22, 2
    %s24 = scalar_select %p23, 0, %s22
    %s25 = sadd.s32 1, %s16
    %s26 = scalar_select %p23, %s25, %s16
    %p27 = scmp.ge.s32.totalorder %s26, 1
    %s28 = scalar_select %p27, 0, %s26
    %s29 = ssub.s32 %s17, %s24
    %s30 = ssub.s32 %s16, %s28
    %s31 = sor.u32 %s29, %s30
    %p32 = scmp.eq.s32.totalorder %s31, 0
    %s34 = sadd.s32 %s33, 1
    %s35 = scalar_select %p32, %s33, %s34
    %p38 = pneg %p32
    %p39 = scmp.eq.s32.totalorder %s9, 1
    %p40 = por %p38, %p39
    %p41 = scmp.ne.s32.totalorder %s33, %s36
    %p42 = scmp.eq.s32.totalorder %s9, 0
    %p43 = por %p41, %p42
    %p44 = scmp.ne.s32.totalorder %s33, %s36
    %p45 = scmp.eq.s32.totalorder %s14, 1
    %p46 = por %p44, %p45
    %p47 = scmp.ne.s32.totalorder %s36, %s37
    %p48 = scmp.eq.s32.totalorder %s14, 0
    %p49 = por %p47, %p48
    %p50 = scmp.ne.s32.totalorder %s36, %s37
    %p51 = scmp.eq.s32.totalorder %s15, 1
    %p52 = por %p50, %p51
    %p54 = scmp.ne.s32.totalorder %s37, %s53
    %p55 = scmp.eq.s32.totalorder %s15, 0
    %p56 = por %p54, %p55
    %s57 = ssub.s32 %s16, %s28
    %p58 = scmp.eq.s32.totalorder %s57, 0
    %s60 = sadd.s32 %s59, 1
    %s61 = scalar_select %p58, %s59, %s60
    %p64 = pneg %p58
    %p65 = scmp.eq.s32.totalorder %s9, 1
    %p66 = por %p64, %p65
    %p67 = scmp.ne.s32.totalorder %s59, %s62
    %p68 = scmp.eq.s32.totalorder %s9, 0
    %p69 = por %p67, %p68
    %p70 = scmp.ne.s32.totalorder %s59, %s62
    %p71 = scmp.eq.s32.totalorder %s14, 1
    %p72 = por %p70, %p71
    %p73 = scmp.ne.s32.totalorder %s62, %s63
    %p74 = scmp.eq.s32.totalorder %s14, 0
    %p75 = por %p73, %p74
    %p76 = scmp.ne.s32.totalorder %s62, %s63
    %p77 = scmp.eq.s32.totalorder %s15, 1
    %p78 = por %p76, %p77
    %p80 = scmp.ne.s32.totalorder %s63, %s79
    %p81 = scmp.eq.s32.totalorder %s15, 0
    %p82 = por %p80, %p81
    %s83 = ssub.s32 %s16, %s28
    %p84 = scmp.eq.s32.totalorder %s83, 0
    %s86 = sadd.s32 %s85, 1
    %s87 = scalar_select %p84, %s85, %s86
    %p90 = pneg %p84
    %p91 = scmp.eq.s32.totalorder %s9, 1
    %p92 = por %p90, %p91
    %p93 = scmp.ne.s32.totalorder %s85, %s88
    %p94 = scmp.eq.s32.totalorder %s9, 0
    %p95 = por %p93, %p94
    %p96 = scmp.ne.s32.totalorder %s85, %s88
    %p97 = scmp.eq.s32.totalorder %s14, 1
    %p98 = por %p96, %p97
    %p99 = scmp.ne.s32.totalorder %s88, %s89
    %p100 = scmp.eq.s32.totalorder %s14, 0
    %p101 = por %p99, %p100
    %p102 = scmp.ne.s32.totalorder %s88, %s89
    %p103 = scmp.eq.s32.totalorder %s15, 1
    %p104 = por %p102, %p103
    %p106 = scmp.ne.s32.totalorder %s89, %s105
    %p107 = scmp.eq.s32.totalorder %s15, 0
    %p108 = por %p106, %p107
    %s109 = ssub.s32 %s17, %s24
    %s110 = ssub.s32 %s16, %s28
    %s111 = sor.u32 %s109, %s110
    %p112 = scmp.eq.s32.totalorder %s111, 0
    %s114 = sadd.s32 %s113, 1
    %s115 = scalar_select %p112, %s113, %s114
    %p118 = pneg %p112
    %p119 = scmp.eq.s32.totalorder %s9, 1
    %p120 = por %p118, %p119
    %p121 = scmp.ne.s32.totalorder %s113, %s116
    %p122 = scmp.eq.s32.totalorder %s9, 0
    %p123 = por %p121, %p122
    %p124 = scmp.ne.s32.totalorder %s113, %s116
    %p125 = scmp.eq.s32.totalorder %s14, 1
    %p126 = por %p124, %p125
    %p127 = scmp.ne.s32.totalorder %s116, %s117
    %p128 = scmp.eq.s32.totalorder %s14, 0
    %p129 = por %p127, %p128
    %p130 = scmp.ne.s32.totalorder %s116, %s117
    %p131 = scmp.eq.s32.totalorder %s15, 1
    %p132 = por %p130, %p131
    %p134 = scmp.ne.s32.totalorder %s117, %s133
    %p135 = scmp.eq.s32.totalorder %s15, 0
    %p136 = por %p134, %p135
    %p137 = scmp.le.s32.totalorder 1, %s9
    %p138 = scmp.lt.s32.totalorder %s9, 3
    %p139 = pnand %p137, %p138
    %p140 = pneg %p139
    // Predicated region
    $region9: #{forward.11} parent=5 // pred_check
      _
    $region10: #{forward.11} parent=5 // pred_check_branch
      %142 = sbr.rel (%p139) target = $region12
    $region11: #{forward.11} parent=5 // pred_region
      %s143 = ssub.s32 %s9, 1
      // Predicated region
      $region13: #{forward.11} parent=11 // pred_check
        %p144 = pneg %p75
      $region14: #{forward.11} parent=11 // pred_check_branch
        %146 = sbr.rel (%p144) target = $region16
      $region15: #{forward.11} parent=11 // pred_region
        %p147 = scmp.lt.s32.totalorder %s18, 0
        %s148 = scalar_select %p147, %s18, 0
        %s149 = smul.addr %s148, 30
        %s150 = smul.addr %s149, 4
        %s151 = scalar_lea.vmem %s1, %s150
      $region16: #{forward.11} parent=11 // pred_fallthru
        _
      // Predicated region
      $region17: #{forward.11} parent=11 // pred_check
        %p152 = pneg %p101
      $region18: #{forward.11} parent=11 // pred_check_branch
        %154 = sbr.rel (%p152) target = $region20
      $region19: #{forward.11} parent=11 // pred_region
        %p155 = scmp.lt.s32.totalorder %s18, 0
        %s156 = scalar_select %p155, %s18, 0
        %s157 = smul.addr %s156, 2
        %s158 = smul.addr %s157, 8
        %s159 = scalar_lea.vmem %s2, %s158
      $region20: #{forward.11} parent=11 // pred_fallthru
        _
    $region12: #{forward.11} parent=5 // pred_fallthru
      _
    %p160 = scmp.lt.s32.totalorder %s9, 2
    // Predicated region
    $region21: #{forward.11} parent=5 // pred_check
      %p161 = pneg %p160
    $region22: #{forward.11} parent=5 // pred_check_branch
      %163 = sbr.rel (%p161) target = $region24
    $region23: #{forward.11} parent=5 // pred_region
      // Predicated region
      $region25: #{forward.11} parent=23 // pred_check
        %p164 = pneg %p43
      $region26: #{forward.11} parent=23 // pred_check_branch
        %166 = sbr.rel (%p164) target = $region28
      $region27: #{forward.11} parent=23 // pred_region
        %p167 = scmp.lt.s32.totalorder %s17, 1
        %s168 = scalar_select %p167, %s17, 1
        %p169 = scmp.lt.s32.totalorder %s16, 0
        %s170 = scalar_select %p169, %s16, 0
        %s171 = smul.addr %s170, 3
        %s172 = smul.addr %s168, 3
        %s173 = sadd.s32 %s171, %s172
        %s174 = smul.addr %s173, 4
        %s175 = scalar_lea.vmem %s0, %s174
      $region28: #{forward.11} parent=23 // pred_fallthru
        _
    $region24: #{forward.11} parent=5 // pred_fallthru
      _
    %p176 = scmp.le.s32.totalorder 1, %s9
    %p177 = scmp.lt.s32.totalorder %s9, 3
    %p178 = pnand %p176, %p177
    %p179 = pneg %p178
    // Predicated region
    $region29: #{forward.11} parent=5 // pred_check
      _
    $region30: #{forward.11} parent=5 // pred_check_branch
      %181 = sbr.rel (%p178) target = $region32
    $region31: #{forward.11} parent=5 // pred_region
      %s182 = ssub.s32 %s9, 1
      %p183 = scmp.lt.s32.totalorder %s19, 1
      %s184 = scalar_select %p183, %s19, 1
      %p185 = scmp.lt.s32.totalorder %s18, 0
      %s186 = scalar_select %p185, %s18, 0
      %s187 = smul.addr %s186, 3
      %s188 = smul.addr %s184, 3
      %s189 = sadd.s32 %s187, %s188
      %s190 = smul.addr %s189, 4
      %s191 = scalar_lea.vmem %s0, %s190
      %p192 = pneg %p49
      %p193 = pneg %p46
      %p194 = scmp.lt.s32.totalorder %s18, 0
      %s195 = scalar_select %p194, %s18, 0
      %s196 = smul.addr %s195, 30
      %s197 = smul.addr %s196, 4
      %s198 = scalar_lea.vmem %s1, %s197
      %p199 = pneg %p75
      %p200 = pneg %p72
      %p201 = scmp.lt.s32.totalorder %s18, 0
      %s202 = scalar_select %p201, %s18, 0
      %s203 = smul.addr %s202, 2
      %s204 = smul.addr %s203, 8
      %s205 = scalar_lea.vmem %s2, %s204
      %p206 = pneg %p101
      %p207 = pneg %p98
      %p208 = pneg %p129
      %p209 = pneg %p126
      %p210 = scmp.lt.s32.totalorder %s19, 1
      %s211 = scalar_select %p210, %s19, 1
      %p212 = scmp.lt.s32.totalorder %s18, 0
      %s213 = scalar_select %p212, %s18, 0
      %s214 = smul.addr %s213, 4
      %s215 = smul.addr %s211, 4
      %s216 = sadd.s32 %s214, %s215
      %s217 = smul.addr %s216, 8
      %s218 = scalar_lea.vmem %s3, %s217
      %p219 = scmp.lt.s32.totalorder %s19, 1
      %s220 = scalar_select %p219, %s19, 1
      %p221 = scmp.lt.s32.totalorder %s18, 0
      %s222 = scalar_select %p221, %s18, 0
      %s223 = smul.addr %s222, 3
      %s224 = smul.addr %s220, 3
      %s225 = sadd.s32 %s223, %s224
      %s226 = smul.addr %s225, 4
      %s227 = scalar_lea.vmem %s0, %s226
      %p228 = scmp.lt.s32.totalorder %s18, 0
      %s229 = scalar_select %p228, %s18, 0
      %s230 = smul.addr %s229, 30
      %s231 = smul.addr %s230, 4
      %s232 = scalar_lea.vmem %s1, %s231
      %p233 = scmp.lt.s32.totalorder %s18, 0
      %s234 = scalar_select %p233, %s18, 0
      %s235 = smul.addr %s234, 2
      %s236 = smul.addr %s235, 8
      %s237 = scalar_lea.vmem %s2, %s236
      %p238 = scmp.lt.s32.totalorder %s19, 1
      %s239 = scalar_select %p238, %s19, 1
      %p240 = scmp.lt.s32.totalorder %s18, 0
      %s241 = scalar_select %p240, %s18, 0
      %s242 = smul.addr %s241, 4
      %s243 = smul.addr %s239, 4
      %s244 = sadd.s32 %s242, %s243
      %s245 = smul.addr %s244, 8
      %s246 = scalar_lea.vmem %s3, %s245
      %v248 = vld [vmem:[%s232] sm:$0xf]
      %v249 = vld [vmem:[%s232 + $0x4] sm:$0xf]
      %v250 = vld [vmem:[%s227] sm:$0xff]
      %s251 = scalar_lea.vmem %s232, 8
      %v252 = vld [vmem:[%s251] sm:$0xf]
      %v253 = vld [vmem:[%s251 + $0x4] sm:$0xf]
      %v254 = vld [vmem:[%s227 + $0x8] sm:$0xf]
      %v257 = vunpack.c.l.b16 %v252
      %v258 = vunpack.c.l.b16 %v253
      %v259 = vpack.c.b16 %v258, %v257
      %v262 = vunpack.c.l.b16 %v250
      %v263 = vunpack.c.h.b16 %v250
      %v264 = vunpack.c.l.b16 %v254
      %v265 = vpack.c.b16 %v262, %v262
      %v266 = vpack.c.b16 %v263, %v263
      %v267 = vpack.c.b16 %v264, %v264
      %268 = vrot.lane.b32.xlu0 %v265, 127
      %v269 = vpop.permute.xlu0 %268
      %270 = vrot.lane.b32.xlu0 %v266, 127
      %v271 = vpop.permute.xlu0 %270
      %272 = vrot.lane.b32.xlu0 %v267, 127
      %v273 = vpop.permute.xlu0 %272
      %vm274 = vcmask 1039360
      %v275 = vsel %vm274, %v269, %v271
      %v276 = vsel %vm274, %v271, %v273
      %vm277 = vcmask 64512
      %v279 = vsel %vm277, %v259, 0
      %vm281 = vcmask 1043456
      %v283 = vsel %vm281, %v275, 0
      %v286 = vsel %vm281, %v276, 0
      %288 = vmatprep.subr.bf16.mxu0 %v286
      %289 = vmatpush1.bf16.msra.mxu0 %v283
      %290 = vmatprep.subr.bf16.mxu0 0
      %291 = vmatpush1.bf16.msra.mxu0 0
      %292 = vmatprep.subr.bf16.mxu0 0
      %293 = vmatpush1.bf16.msra.mxu0 0
      %294 = vmatprep.subr.bf16.mxu0 0
      %295 = vmatpush1.bf16.msra.mxu0 0
      %296 = vmatprep.subr.bf16.mxu0 0
      %297 = vmatpush1.bf16.msra.mxu0 0
      %298 = vmatprep.subr.bf16.mxu0 0
      %299 = vmatpush1.bf16.msra.mxu0 0
      %300 = vmatprep.subr.bf16.mxu0 0
      %301 = vmatpush1.bf16.msra.mxu0 0
      %302 = vmatprep.subr.bf16.mxu0 0
      %303 = vmatpush1.bf16.msra.mxu0 0
      %304 = vmatprep.subr.bf16.mxu0 0
      %305 = vmatpush1.bf16.msra.mxu0 0
      %306 = vmatprep.subr.bf16.mxu0 0
      %307 = vmatpush1.bf16.msra.mxu0 0
      %308 = vmatprep.subr.bf16.mxu0 0
      %309 = vmatpush1.bf16.msra.mxu0 0
      %310 = vmatprep.subr.bf16.mxu0 0
      %311 = vmatpush1.bf16.msra.mxu0 0
      %312 = vmatprep.subr.bf16.mxu0 0
      %313 = vmatpush1.bf16.msra.mxu0 0
      %314 = vmatprep.subr.bf16.mxu0 0
      %315 = vmatpush1.bf16.msra.mxu0 0
      %316 = vmatprep.subr.bf16.mxu0 0
      %317 = vmatpush1.bf16.msra.mxu0 0
      %318 = vmatprep.subr.bf16.mxu0 0
      %319 = vmatpush1.bf16.msra.mxu0 0
      %320 = vmatprep.mubr.bf16.mxu0 0
      %321 = vmatmul.mubr.bf16.gmra.mrb[0].mxu0 %v279
      %v322 = vpop.f32.mrb[0].mxu0
      %v323 = vadd.f32 0.0, %v322
      %v324 = vpop.f32.mrb[0].mxu0
      %v325 = vadd.f32 0.0, %v324
      %v326 = vpop.f32.mrb[0].mxu0
      %v327 = vadd.f32 0.0, %v326
      %v328 = vpop.f32.mrb[0].mxu0
      %v329 = vadd.f32 0.0, %v328
      %330 = vdwg.mxu0
      %v333 = vunpack.c.l.b16 %v248
      %v334 = vunpack.c.l.b16 %v249
      %v335 = vpack.c.b16 %v334, %v333
      %v337 = vsel %vm277, %v335, 0
      %v340 = vsel %vm281, %v265, 0
      %v343 = vsel %vm281, %v266, 0
      %345 = vmatprep.subr.bf16.mxu0 %v343
      %346 = vmatpush1.bf16.msra.mxu0 %v340
      %347 = vmatprep.subr.bf16.mxu0 0
      %348 = vmatpush1.bf16.msra.mxu0 0
      %349 = vmatprep.subr.bf16.mxu0 0
      %350 = vmatpush1.bf16.msra.mxu0 0
      %351 = vmatprep.subr.bf16.mxu0 0
      %352 = vmatpush1.bf16.msra.mxu0 0
      %353 = vmatprep.subr.bf16.mxu0 0
      %354 = vmatpush1.bf16.msra.mxu0 0
      %355 = vmatprep.subr.bf16.mxu0 0
      %356 = vmatpush1.bf16.msra.mxu0 0
      %357 = vmatprep.subr.bf16.mxu0 0
      %358 = vmatpush1.bf16.msra.mxu0 0
      %359 = vmatprep.subr.bf16.mxu0 0
      %360 = vmatpush1.bf16.msra.mxu0 0
      %361 = vmatprep.subr.bf16.mxu0 0
      %362 = vmatpush1.bf16.msra.mxu0 0
      %363 = vmatprep.subr.bf16.mxu0 0
      %364 = vmatpush1.bf16.msra.mxu0 0
      %365 = vmatprep.subr.bf16.mxu0 0
      %366 = vmatpush1.bf16.msra.mxu0 0
      %367 = vmatprep.subr.bf16.mxu0 0
      %368 = vmatpush1.bf16.msra.mxu0 0
      %369 = vmatprep.subr.bf16.mxu0 0
      %370 = vmatpush1.bf16.msra.mxu0 0
      %371 = vmatprep.subr.bf16.mxu0 0
      %372 = vmatpush1.bf16.msra.mxu0 0
      %373 = vmatprep.subr.bf16.mxu0 0
      %374 = vmatpush1.bf16.msra.mxu0 0
      %375 = vmatprep.subr.bf16.mxu0 0
      %376 = vmatpush1.bf16.msra.mxu0 0
      %377 = vmatprep.mubr.bf16.mxu0 0
      %378 = vmatmul.mubr.bf16.gmra.mrb[0].mxu0 %v337
      %v379 = vpop.f32.mrb[0].mxu0
      %v380 = vadd.f32 %v323, %v379
      %v381 = vpop.f32.mrb[0].mxu0
      %v382 = vadd.f32 %v325, %v381
      %v383 = vpop.f32.mrb[0].mxu0
      %v384 = vadd.f32 %v327, %v383
      %v385 = vpop.f32.mrb[0].mxu0
      %v386 = vadd.f32 %v329, %v385
      %387 = vdwg.mxu0
      %s388 = scalar_lea.vmem %s232, 16
      %v389 = vld [vmem:[%s388] sm:$0xf]
      %v390 = vld [vmem:[%s388 + $0x4] sm:$0xf]
      %v393 = vunpack.c.l.b16 %v389
      %v394 = vunpack.c.l.b16 %v390
      %v395 = vpack.c.b16 %v394, %v393
      %396 = vrot.lane.b32.xlu0 %v265, 126
      %v397 = vpop.permute.xlu0 %396
      %398 = vrot.lane.b32.xlu0 %v266, 126
      %v399 = vpop.permute.xlu0 %398
      %400 = vrot.lane.b32.xlu0 %v267, 126
      %v401 = vpop.permute.xlu0 %400
      %vm402 = vcmask 1031168
      %v403 = vsel %vm402, %v397, %v399
      %v404 = vsel %vm402, %v399, %v401
      %v406 = vsel %vm277, %v395, 0
      %v409 = vsel %vm281, %v403, 0
      %v412 = vsel %vm281, %v404, 0
      %414 = vmatprep.subr.bf16.mxu0 %v412
      %415 = vmatpush1.bf16.msra.mxu0 %v409
      %416 = vmatprep.subr.bf16.mxu0 0
      %417 = vmatpush1.bf16.msra.mxu0 0
      %418 = vmatprep.subr.bf16.mxu0 0
      %419 = vmatpush1.bf16.msra.mxu0 0
      %420 = vmatprep.subr.bf16.mxu0 0
      %421 = vmatpush1.bf16.msra.mxu0 0
      %422 = vmatprep.subr.bf16.mxu0 0
      %423 = vmatpush1.bf16.msra.mxu0 0
      %424 = vmatprep.subr.bf16.mxu0 0
      %425 = vmatpush1.bf16.msra.mxu0 0
      %426 = vmatprep.subr.bf16.mxu0 0
      %427 = vmatpush1.bf16.msra.mxu0 0
      %428 = vmatprep.subr.bf16.mxu0 0
      %429 = vmatpush1.bf16.msra.mxu0 0
      %430 = vmatprep.subr.bf16.mxu0 0
      %431 = vmatpush1.bf16.msra.mxu0 0
      %432 = vmatprep.subr.bf16.mxu0 0
      %433 = vmatpush1.bf16.msra.mxu0 0
      %434 = vmatprep.subr.bf16.mxu0 0
      %435 = vmatpush1.bf16.msra.mxu0 0
      %436 = vmatprep.subr.bf16.mxu0 0
      %437 = vmatpush1.bf16.msra.mxu0 0
      %438 = vmatprep.subr.bf16.mxu0 0
      %439 = vmatpush1.bf16.msra.mxu0 0
      %440 = vmatprep.subr.bf16.mxu0 0
      %441 = vmatpush1.bf16.msra.mxu0 0
      %442 = vmatprep.subr.bf16.mxu0 0
      %443 = vmatpush1.bf16.msra.mxu0 0
      %444 = vmatprep.subr.bf16.mxu0 0
      %445 = vmatpush1.bf16.msra.mxu0 0
      %446 = vmatprep.mubr.bf16.mxu0 0
      %447 = vmatmul.mubr.bf16.gmra.mrb[0].mxu0 %v406
      %v448 = vpop.f32.mrb[0].mxu0
      %v449 = vadd.f32 0.0, %v448
      %v450 = vpop.f32.mrb[0].mxu0
      %v451 = vadd.f32 0.0, %v450
      %v452 = vpop.f32.mrb[0].mxu0
      %v453 = vadd.f32 0.0, %v452
      %v454 = vpop.f32.mrb[0].mxu0
      %v455 = vadd.f32 0.0, %v454
      %456 = vdwg.mxu0
      %v457 = vadd.f32 %v380, %v449
      %v458 = vadd.f32 %v382, %v451
      %v459 = vadd.f32 %v384, %v453
      %v460 = vadd.f32 %v386, %v455
      %s461 = scalar_lea.vmem %s232, 24
      %v462 = vld [vmem:[%s461] sm:$0xf]
      %v463 = vld [vmem:[%s461 + $0x4] sm:$0xf]
      %v466 = vunpack.c.l.b16 %v462
      %v467 = vunpack.c.l.b16 %v463
      %v468 = vpack.c.b16 %v467, %v466
      %469 = vrot.lane.b32.xlu0 %v265, 125
      %v470 = vpop.permute.xlu0 %469
      %471 = vrot.lane.b32.xlu0 %v266, 125
      %v472 = vpop.permute.xlu0 %471
      %473 = vrot.lane.b32.xlu0 %v267, 125
      %v474 = vpop.permute.xlu0 %473
      %vm475 = vcmask 1022976
      %v476 = vsel %vm475, %v470, %v472
      %v477 = vsel %vm475, %v472, %v474
      %v479 = vsel %vm277, %v468, 0
      %v482 = vsel %vm281, %v476, 0
      %v485 = vsel %vm281, %v477, 0
      %487 = vmatprep.subr.bf16.mxu0 %v485
      %488 = vmatpush1.bf16.msra.mxu0 %v482
      %489 = vmatprep.subr.bf16.mxu0 0
      %490 = vmatpush1.bf16.msra.mxu0 0
      %491 = vmatprep.subr.bf16.mxu0 0
      %492 = vmatpush1.bf16.msra.mxu0 0
      %493 = vmatprep.subr.bf16.mxu0 0
      %494 = vmatpush1.bf16.msra.mxu0 0
      %495 = vmatprep.subr.bf16.mxu0 0
      %496 = vmatpush1.bf16.msra.mxu0 0
      %497 = vmatprep.subr.bf16.mxu0 0
      %498 = vmatpush1.bf16.msra.mxu0 0
      %499 = vmatprep.subr.bf16.mxu0 0
      %500 = vmatpush1.bf16.msra.mxu0 0
      %501 = vmatprep.subr.bf16.mxu0 0
      %502 = vmatpush1.bf16.msra.mxu0 0
      %503 = vmatprep.subr.bf16.mxu0 0
      %504 = vmatpush1.bf16.msra.mxu0 0
      %505 = vmatprep.subr.bf16.mxu0 0
      %506 = vmatpush1.bf16.msra.mxu0 0
      %507 = vmatprep.subr.bf16.mxu0 0
      %508 = vmatpush1.bf16.msra.mxu0 0
      %509 = vmatprep.subr.bf16.mxu0 0
      %510 = vmatpush1.bf16.msra.mxu0 0
      %511 = vmatprep.subr.bf16.mxu0 0
      %512 = vmatpush1.bf16.msra.mxu0 0
      %513 = vmatprep.subr.bf16.mxu0 0
      %514 = vmatpush1.bf16.msra.mxu0 0
      %515 = vmatprep.subr.bf16.mxu0 0
      %516 = vmatpush1.bf16.msra.mxu0 0
      %517 = vmatprep.subr.bf16.mxu0 0
      %518 = vmatpush1.bf16.msra.mxu0 0
      %519 = vmatprep.mubr.bf16.mxu0 0
      %520 = vmatmul.mubr.bf16.gmra.mrb[0].mxu0 %v479
      %v521 = vpop.f32.mrb[0].mxu0
      %v522 = vadd.f32 0.0, %v521
      %v523 = vpop.f32.mrb[0].mxu0
      %v524 = vadd.f32 0.0, %v523
      %v525 = vpop.f32.mrb[0].mxu0
      %v526 = vadd.f32 0.0, %v525
      %v527 = vpop.f32.mrb[0].mxu0
      %v528 = vadd.f32 0.0, %v527
      %529 = vdwg.mxu0
      %v530 = vadd.f32 %v457, %v522
      %v531 = vadd.f32 %v458, %v524
      %v532 = vadd.f32 %v459, %v526
      %v533 = vadd.f32 %v460, %v528
      %s534 = scalar_lea.vmem %s232, 32
      %v535 = vld [vmem:[%s534] sm:$0xf]
      %v536 = vld [vmem:[%s534 + $0x4] sm:$0xf]
      %v539 = vunpack.c.l.b16 %v535
      %v540 = vunpack.c.l.b16 %v536
      %v541 = vpack.c.b16 %v540, %v539
      %542 = vrot.lane.b32.xlu0 %v265, 124
      %v543 = vpop.permute.xlu0 %542
      %544 = vrot.lane.b32.xlu0 %v266, 124
      %v545 = vpop.permute.xlu0 %544
      %546 = vrot.lane.b32.xlu0 %v267, 124
      %v547 = vpop.permute.xlu0 %546
      %vm548 = vcmask 1014784
      %v549 = vsel %vm548, %v543, %v545
      %v550 = vsel %vm548, %v545, %v547
      %v552 = vsel %vm277, %v541, 0
      %v555 = vsel %vm281, %v549, 0
      %v558 = vsel %vm281, %v550, 0
      %560 = vmatprep.subr.bf16.mxu0 %v558
      %561 = vmatpush1.bf16.msra.mxu0 %v555
      %562 = vmatprep.subr.bf16.mxu0 0
      %563 = vmatpush1.bf16.msra.mxu0 0
      %564 = vmatprep.subr.bf16.mxu0 0
      %565 = vmatpush1.bf16.msra.mxu0 0
      %566 = vmatprep.subr.bf16.mxu0 0
      %567 = vmatpush1.bf16.msra.mxu0 0
      %568 = vmatprep.subr.bf16.mxu0 0
      %569 = vmatpush1.bf16.msra.mxu0 0
      %570 = vmatprep.subr.bf16.mxu0 0
      %571 = vmatpush1.bf16.msra.mxu0 0
      %572 = vmatprep.subr.bf16.mxu0 0
      %573 = vmatpush1.bf16.msra.mxu0 0
      %574 = vmatprep.subr.bf16.mxu0 0
      %575 = vmatpush1.bf16.msra.mxu0 0
      %576 = vmatprep.subr.bf16.mxu0 0
      %577 = vmatpush1.bf16.msra.mxu0 0
      %578 = vmatprep.subr.bf16.mxu0 0
      %579 = vmatpush1.bf16.msra.mxu0 0
      %580 = vmatprep.subr.bf16.mxu0 0
      %581 = vmatpush1.bf16.msra.mxu0 0
      %582 = vmatprep.subr.bf16.mxu0 0
      %583 = vmatpush1.bf16.msra.mxu0 0
      %584 = vmatprep.subr.bf16.mxu0 0
      %585 = vmatpush1.bf16.msra.mxu0 0
      %586 = vmatprep.subr.bf16.mxu0 0
      %587 = vmatpush1.bf16.msra.mxu0 0
      %588 = vmatprep.subr.bf16.mxu0 0
      %589 = vmatpush1.bf16.msra.mxu0 0
      %590 = vmatprep.subr.bf16.mxu0 0
      %591 = vmatpush1.bf16.msra.mxu0 0
      %592 = vmatprep.mubr.bf16.mxu0 0
      %593 = vmatmul.mubr.bf16.gmra.mrb[0].mxu0 %v552
      %v594 = vpop.f32.mrb[0].mxu0
      %v595 = vadd.f32 0.0, %v594
      %v596 = vpop.f32.mrb[0].mxu0
      %v597 = vadd.f32 0.0, %v596
      %v598 = vpop.f32.mrb[0].mxu0
      %v599 = vadd.f32 0.0, %v598
      %v600 = vpop.f32.mrb[0].mxu0
      %v601 = vadd.f32 0.0, %v600
      %602 = vdwg.mxu0
      %v603 = vadd.f32 %v530, %v595
      %v604 = vadd.f32 %v531, %v597
      %v605 = vadd.f32 %v532, %v599
      %v606 = vadd.f32 %v533, %v601
      %s607 = scalar_lea.vmem %s232, 40
      %v608 = vld [vmem:[%s607] sm:$0xf]
      %v609 = vld [vmem:[%s607 + $0x4] sm:$0xf]
      %v612 = vunpack.c.l.b16 %v608
      %v613 = vunpack.c.l.b16 %v609
      %v614 = vpack.c.b16 %v613, %v612
      %615 = vrot.lane.b32.xlu0 %v265, 123
      %v616 = vpop.permute.xlu0 %615
      %617 = vrot.lane.b32.xlu0 %v266, 123
      %v618 = vpop.permute.xlu0 %617
      %619 = vrot.lane.b32.xlu0 %v267, 123
      %v620 = vpop.permute.xlu0 %619
      %vm621 = vcmask 1006592
      %v622 = vsel %vm621, %v616, %v618
      %v623 = vsel %vm621, %v618, %v620
      %v625 = vsel %vm277, %v614, 0
      %v628 = vsel %vm281, %v622, 0
      %v631 = vsel %vm281, %v623, 0
      %633 = vmatprep.subr.bf16.mxu0 %v631
      %634 = vmatpush1.bf16.msra.mxu0 %v628
      %635 = vmatprep.subr.bf16.mxu0 0
      %636 = vmatpush1.bf16.msra.mxu0 0
      %637 = vmatprep.subr.bf16.mxu0 0
      %638 = vmatpush1.bf16.msra.mxu0 0
      %639 = vmatprep.subr.bf16.mxu0 0
      %640 = vmatpush1.bf16.msra.mxu0 0
      %641 = vmatprep.subr.bf16.mxu0 0
      %642 = vmatpush1.bf16.msra.mxu0 0
      %643 = vmatprep.subr.bf16.mxu0 0
      %644 = vmatpush1.bf16.msra.mxu0 0
      %645 = vmatprep.subr.bf16.mxu0 0
      %646 = vmatpush1.bf16.msra.mxu0 0
      %647 = vmatprep.subr.bf16.mxu0 0
      %648 = vmatpush1.bf16.msra.mxu0 0
      %649 = vmatprep.subr.bf16.mxu0 0
      %650 = vmatpush1.bf16.msra.mxu0 0
      %651 = vmatprep.subr.bf16.mxu0 0
      %652 = vmatpush1.bf16.msra.mxu0 0
      %653 = vmatprep.subr.bf16.mxu0 0
      %654 = vmatpush1.bf16.msra.mxu0 0
      %655 = vmatprep.subr.bf16.mxu0 0
      %656 = vmatpush1.bf16.msra.mxu0 0
      %657 = vmatprep.subr.bf16.mxu0 0
      %658 = vmatpush1.bf16.msra.mxu0 0
      %659 = vmatprep.subr.bf16.mxu0 0
      %660 = vmatpush1.bf16.msra.mxu0 0
      %661 = vmatprep.subr.bf16.mxu0 0
      %662 = vmatpush1.bf16.msra.mxu0 0
      %663 = vmatprep.subr.bf16.mxu0 0
      %664 = vmatpush1.bf16.msra.mxu0 0
      %665 = vmatprep.mubr.bf16.mxu0 0
      %666 = vmatmul.mubr.bf16.gmra.mrb[0].mxu0 %v625
      %v667 = vpop.f32.mrb[0].mxu0
      %v668 = vadd.f32 0.0, %v667
      %v669 = vpop.f32.mrb[0].mxu0
      %v670 = vadd.f32 0.0, %v669
      %v671 = vpop.f32.mrb[0].mxu0
      %v672 = vadd.f32 0.0, %v671
      %v673 = vpop.f32.mrb[0].mxu0
      %v674 = vadd.f32 0.0, %v673
      %675 = vdwg.mxu0
      %v676 = vadd.f32 %v603, %v668
      %v677 = vadd.f32 %v604, %v670
      %v678 = vadd.f32 %v605, %v672
      %v679 = vadd.f32 %v606, %v674
      %s680 = scalar_lea.vmem %s232, 48
      %v681 = vld [vmem:[%s680] sm:$0xf]
      %v682 = vld [vmem:[%s680 + $0x4] sm:$0xf]
      %v685 = vunpack.c.l.b16 %v681
      %v686 = vunpack.c.l.b16 %v682
      %v687 = vpack.c.b16 %v686, %v685
      %688 = vrot.lane.b32.xlu0 %v265, 122
      %v689 = vpop.permute.xlu0 %688
      %690 = vrot.lane.b32.xlu0 %v266, 122
      %v691 = vpop.permute.xlu0 %690
      %692 = vrot.lane.b32.xlu0 %v267, 122
      %v693 = vpop.permute.xlu0 %692
      %vm694 = vcmask 998400
      %v695 = vsel %vm694, %v689, %v691
      %v696 = vsel %vm694, %v691, %v693
      %v698 = vsel %vm277, %v687, 0
      %v701 = vsel %vm281, %v695, 0
      %v704 = vsel %vm281, %v696, 0
      %706 = vmatprep.subr.bf16.mxu0 %v704
      %707 = vmatpush1.bf16.msra.mxu0 %v701
      %708 = vmatprep.subr.bf16.mxu0 0
      %709 = vmatpush1.bf16.msra.mxu0 0
      %710 = vmatprep.subr.bf16.mxu0 0
      %711 = vmatpush1.bf16.msra.mxu0 0
      %712 = vmatprep.subr.bf16.mxu0 0
      %713 = vmatpush1.bf16.msra.mxu0 0
      %714 = vmatprep.subr.bf16.mxu0 0
      %715 = vmatpush1.bf16.msra.mxu0 0
      %716 = vmatprep.subr.bf16.mxu0 0
      %717 = vmatpush1.bf16.msra.mxu0 0
      %718 = vmatprep.subr.bf16.mxu0 0
      %719 = vmatpush1.bf16.msra.mxu0 0
      %720 = vmatprep.subr.bf16.mxu0 0
      %721 = vmatpush1.bf16.msra.mxu0 0
      %722 = vmatprep.subr.bf16.mxu0 0
      %723 = vmatpush1.bf16.msra.mxu0 0
      %724 = vmatprep.subr.bf16.mxu0 0
      %725 = vmatpush1.bf16.msra.mxu0 0
      %726 = vmatprep.subr.bf16.mxu0 0
      %727 = vmatpush1.bf16.msra.mxu0 0
      %728 = vmatprep.subr.bf16.mxu0 0
      %729 = vmatpush1.bf16.msra.mxu0 0
      %730 = vmatprep.subr.bf16.mxu0 0
      %731 = vmatpush1.bf16.msra.mxu0 0
      %732 = vmatprep.subr.bf16.mxu0 0
      %733 = vmatpush1.bf16.msra.mxu0 0
      %734 = vmatprep.subr.bf16.mxu0 0
      %735 = vmatpush1.bf16.msra.mxu0 0
      %736 = vmatprep.subr.bf16.mxu0 0
      %737 = vmatpush1.bf16.msra.mxu0 0
      %738 = vmatprep.mubr.bf16.mxu0 0
      %739 = vmatmul.mubr.bf16.gmra.mrb[0].mxu0 %v698
      %v740 = vpop.f32.mrb[0].mxu0
      %v741 = vadd.f32 0.0, %v740
      %v742 = vpop.f32.mrb[0].mxu0
      %v743 = vadd.f32 0.0, %v742
      %v744 = vpop.f32.mrb[0].mxu0
      %v745 = vadd.f32 0.0, %v744
      %v746 = vpop.f32.mrb[0].mxu0
      %v747 = vadd.f32 0.0, %v746
      %748 = vdwg.mxu0
      %v749 = vadd.f32 %v676, %v741
      %v750 = vadd.f32 %v677, %v743
      %v751 = vadd.f32 %v678, %v745
      %v752 = vadd.f32 %v679, %v747
      %s753 = scalar_lea.vmem %s232, 56
      %v754 = vld [vmem:[%s753] sm:$0xf]
      %v755 = vld [vmem:[%s753 + $0x4] sm:$0xf]
      %v758 = vunpack.c.l.b16 %v754
      %v759 = vunpack.c.l.b16 %v755
      %v760 = vpack.c.b16 %v759, %v758
      %761 = vrot.lane.b32.xlu0 %v265, 121
      %v762 = vpop.permute.xlu0 %761
      %763 = vrot.lane.b32.xlu0 %v266, 121
      %v764 = vpop.permute.xlu0 %763
      %765 = vrot.lane.b32.xlu0 %v267, 121
      %v766 = vpop.permute.xlu0 %765
      %vm767 = vcmask 990208
      %v768 = vsel %vm767, %v762, %v764
      %v769 = vsel %vm767, %v764, %v766
      %v771 = vsel %vm277, %v760, 0
      %v774 = vsel %vm281, %v768, 0
      %v777 = vsel %vm281, %v769, 0
      %779 = vmatprep.subr.bf16.mxu0 %v777
      %780 = vmatpush1.bf16.msra.mxu0 %v774
      %781 = vmatprep.subr.bf16.mxu0 0
      %782 = vmatpush1.bf16.msra.mxu0 0
      %783 = vmatprep.subr.bf16.mxu0 0
      %784 = vmatpush1.bf16.msra.mxu0 0
      %785 = vmatprep.subr.bf16.mxu0 0
      %786 = vmatpush1.bf16.msra.mxu0 0
      %787 = vmatprep.subr.bf16.mxu0 0
      %788 = vmatpush1.bf16.msra.mxu0 0
      %789 = vmatprep.subr.bf16.mxu0 0
      %790 = vmatpush1.bf16.msra.mxu0 0
      %791 = vmatprep.subr.bf16.mxu0 0
      %792 = vmatpush1.bf16.msra.mxu0 0
      %793 = vmatprep.subr.bf16.mxu0 0
      %794 = vmatpush1.bf16.msra.mxu0 0
      %795 = vmatprep.subr.bf16.mxu0 0
      %796 = vmatpush1.bf16.msra.mxu0 0
      %797 = vmatprep.subr.bf16.mxu0 0
      %798 = vmatpush1.bf16.msra.mxu0 0
      %799 = vmatprep.subr.bf16.mxu0 0
      %800 = vmatpush1.bf16.msra.mxu0 0
      %801 = vmatprep.subr.bf16.mxu0 0
      %802 = vmatpush1.bf16.msra.mxu0 0
      %803 = vmatprep.subr.bf16.mxu0 0
      %804 = vmatpush1.bf16.msra.mxu0 0
      %805 = vmatprep.subr.bf16.mxu0 0
      %806 = vmatpush1.bf16.msra.mxu0 0
      %807 = vmatprep.subr.bf16.mxu0 0
      %808 = vmatpush1.bf16.msra.mxu0 0
      %809 = vmatprep.subr.bf16.mxu0 0
      %810 = vmatpush1.bf16.msra.mxu0 0
      %811 = vmatprep.mubr.bf16.mxu0 0
      %812 = vmatmul.mubr.bf16.gmra.mrb[0].mxu0 %v771
      %v813 = vpop.f32.mrb[0].mxu0
      %v814 = vadd.f32 0.0, %v813
      %v815 = vpop.f32.mrb[0].mxu0
      %v816 = vadd.f32 0.0, %v815
      %v817 = vpop.f32.mrb[0].mxu0
      %v818 = vadd.f32 0.0, %v817
      %v819 = vpop.f32.mrb[0].mxu0
      %v820 = vadd.f32 0.0, %v819
      %821 = vdwg.mxu0
      %v822 = vadd.f32 %v749, %v814
      %v823 = vadd.f32 %v750, %v816
      %v824 = vadd.f32 %v751, %v818
      %v825 = vadd.f32 %v752, %v820
      %s826 = scalar_lea.vmem %s232, 64
      %v827 = vld [vmem:[%s826] sm:$0xf]
      %v828 = vld [vmem:[%s826 + $0x4] sm:$0xf]
      %v831 = vunpack.c.l.b16 %v827
      %v832 = vunpack.c.l.b16 %v828
      %v833 = vpack.c.b16 %v832, %v831
      %834 = vrot.lane.b32.xlu0 %v265, 120
      %v835 = vpop.permute.xlu0 %834
      %836 = vrot.lane.b32.xlu0 %v266, 120
      %v837 = vpop.permute.xlu0 %836
      %838 = vrot.lane.b32.xlu0 %v267, 120
      %v839 = vpop.permute.xlu0 %838
      %vm840 = vcmask 982016
      %v841 = vsel %vm840, %v835, %v837
      %v842 = vsel %vm840, %v837, %v839
      %v844 = vsel %vm277, %v833, 0
      %v847 = vsel %vm281, %v841, 0
      %v850 = vsel %vm281, %v842, 0
      %852 = vmatprep.subr.bf16.mxu0 %v850
      %853 = vmatpush1.bf16.msra.mxu0 %v847
      %854 = vmatprep.subr.bf16.mxu0 0
      %855 = vmatpush1.bf16.msra.mxu0 0
      %856 = vmatprep.subr.bf16.mxu0 0
      %857 = vmatpush1.bf16.msra.mxu0 0
      %858 = vmatprep.subr.bf16.mxu0 0
      %859 = vmatpush1.bf16.msra.mxu0 0
      %860 = vmatprep.subr.bf16.mxu0 0
      %861 = vmatpush1.bf16.msra.mxu0 0
      %862 = vmatprep.subr.bf16.mxu0 0
      %863 = vmatpush1.bf16.msra.mxu0 0
      %864 = vmatprep.subr.bf16.mxu0 0
      %865 = vmatpush1.bf16.msra.mxu0 0
      %866 = vmatprep.subr.bf16.mxu0 0
      %867 = vmatpush1.bf16.msra.mxu0 0
      %868 = vmatprep.subr.bf16.mxu0 0
      %869 = vmatpush1.bf16.msra.mxu0 0
      %870 = vmatprep.subr.bf16.mxu0 0
      %871 = vmatpush1.bf16.msra.mxu0 0
      %872 = vmatprep.subr.bf16.mxu0 0
      %873 = vmatpush1.bf16.msra.mxu0 0
      %874 = vmatprep.subr.bf16.mxu0 0
      %875 = vmatpush1.bf16.msra.mxu0 0
      %876 = vmatprep.subr.bf16.mxu0 0
      %877 = vmatpush1.bf16.msra.mxu0 0
      %878 = vmatprep.subr.bf16.mxu0 0
      %879 = vmatpush1.bf16.msra.mxu0 0
      %880 = vmatprep.subr.bf16.mxu0 0
      %881 = vmatpush1.bf16.msra.mxu0 0
      %882 = vmatprep.subr.bf16.mxu0 0
      %883 = vmatpush1.bf16.msra.mxu0 0
      %884 = vmatprep.mubr.bf16.mxu0 0
      %885 = vmatmul.mubr.bf16.gmra.mrb[0].mxu0 %v844
      %v886 = vpop.f32.mrb[0].mxu0
      %v887 = vadd.f32 0.0, %v886
      %v888 = vpop.f32.mrb[0].mxu0
      %v889 = vadd.f32 0.0, %v888
      %v890 = vpop.f32.mrb[0].mxu0
      %v891 = vadd.f32 0.0, %v890
      %v892 = vpop.f32.mrb[0].mxu0
      %v893 = vadd.f32 0.0, %v892
      %894 = vdwg.mxu0
      %v895 = vadd.f32 %v822, %v887
      %v896 = vadd.f32 %v823, %v889
      %v897 = vadd.f32 %v824, %v891
      %v898 = vadd.f32 %v825, %v893
      %s899 = scalar_lea.vmem %s232, 72
      %v900 = vld [vmem:[%s899] sm:$0xf]
      %v901 = vld [vmem:[%s899 + $0x4] sm:$0xf]
      %v904 = vunpack.c.l.b16 %v900
      %v905 = vunpack.c.l.b16 %v901
      %v906 = vpack.c.b16 %v905, %v904
      %907 = vrot.lane.b32.xlu0 %v265, 119
      %v908 = vpop.permute.xlu0 %907
      %909 = vrot.lane.b32.xlu0 %v266, 119
      %v910 = vpop.permute.xlu0 %909
      %911 = vrot.lane.b32.xlu0 %v267, 119
      %v912 = vpop.permute.xlu0 %911
      %vm913 = vcmask 973824
      %v914 = vsel %vm913, %v908, %v910
      %v915 = vsel %vm913, %v910, %v912
      %v917 = vsel %vm277, %v906, 0
      %v920 = vsel %vm281, %v914, 0
      %v923 = vsel %vm281, %v915, 0
      %925 = vmatprep.subr.bf16.mxu0 %v923
      %926 = vmatpush1.bf16.msra.mxu0 %v920
      %927 = vmatprep.subr.bf16.mxu0 0
      %928 = vmatpush1.bf16.msra.mxu0 0
      %929 = vmatprep.subr.bf16.mxu0 0
      %930 = vmatpush1.bf16.msra.mxu0 0
      %931 = vmatprep.subr.bf16.mxu0 0
      %932 = vmatpush1.bf16.msra.mxu0 0
      %933 = vmatprep.subr.bf16.mxu0 0
      %934 = vmatpush1.bf16.msra.mxu0 0
      %935 = vmatprep.subr.bf16.mxu0 0
      %936 = vmatpush1.bf16.msra.mxu0 0
      %937 = vmatprep.subr.bf16.mxu0 0
      %938 = vmatpush1.bf16.msra.mxu0 0
      %939 = vmatprep.subr.bf16.mxu0 0
      %940 = vmatpush1.bf16.msra.mxu0 0
      %941 = vmatprep.subr.bf16.mxu0 0
      %942 = vmatpush1.bf16.msra.mxu0 0
      %943 = vmatprep.subr.bf16.mxu0 0
      %944 = vmatpush1.bf16.msra.mxu0 0
      %945 = vmatprep.subr.bf16.mxu0 0
      %946 = vmatpush1.bf16.msra.mxu0 0
      %947 = vmatprep.subr.bf16.mxu0 0
      %948 = vmatpush1.bf16.msra.mxu0 0
      %949 = vmatprep.subr.bf16.mxu0 0
      %950 = vmatpush1.bf16.msra.mxu0 0
      %951 = vmatprep.subr.bf16.mxu0 0
      %952 = vmatpush1.bf16.msra.mxu0 0
      %953 = vmatprep.subr.bf16.mxu0 0
      %954 = vmatpush1.bf16.msra.mxu0 0
      %955 = vmatprep.subr.bf16.mxu0 0
      %956 = vmatpush1.bf16.msra.mxu0 0
      %957 = vmatprep.mubr.bf16.mxu0 0
      %958 = vmatmul.mubr.bf16.gmra.mrb[0].mxu0 %v917
      %v959 = vpop.f32.mrb[0].mxu0
      %v960 = vadd.f32 0.0, %v959
      %v961 = vpop.f32.mrb[0].mxu0
      %v962 = vadd.f32 0.0, %v961
      %v963 = vpop.f32.mrb[0].mxu0
      %v964 = vadd.f32 0.0, %v963
      %v965 = vpop.f32.mrb[0].mxu0
      %v966 = vadd.f32 0.0, %v965
      %967 = vdwg.mxu0
      %v968 = vadd.f32 %v895, %v960
      %v969 = vadd.f32 %v896, %v962
      %v970 = vadd.f32 %v897, %v964
      %v971 = vadd.f32 %v898, %v966
      %s972 = scalar_lea.vmem %s232, 80
      %v973 = vld [vmem:[%s972] sm:$0xf]
      %v974 = vld [vmem:[%s972 + $0x4] sm:$0xf]
      %v977 = vunpack.c.l.b16 %v973
      %v978 = vunpack.c.l.b16 %v974
      %v979 = vpack.c.b16 %v978, %v977
      %980 = vrot.lane.b32.xlu0 %v265, 118
      %v981 = vpop.permute.xlu0 %980
      %982 = vrot.lane.b32.xlu0 %v266, 118
      %v983 = vpop.permute.xlu0 %982
      %984 = vrot.lane.b32.xlu0 %v267, 118
      %v985 = vpop.permute.xlu0 %984
      %vm986 = vcmask 965632
      %v987 = vsel %vm986, %v981, %v983
      %v988 = vsel %vm986, %v983, %v985
      %v990 = vsel %vm277, %v979, 0
      %v993 = vsel %vm281, %v987, 0
      %v996 = vsel %vm281, %v988, 0
      %998 = vmatprep.subr.bf16.mxu0 %v996
      %999 = vmatpush1.bf16.msra.mxu0 %v993
      %1000 = vmatprep.subr.bf16.mxu0 0
      %1001 = vmatpush1.bf16.msra.mxu0 0
      %1002 = vmatprep.subr.bf16.mxu0 0
      %1003 = vmatpush1.bf16.msra.mxu0 0
      %1004 = vmatprep.subr.bf16.mxu0 0
      %1005 = vmatpush1.bf16.msra.mxu0 0
      %1006 = vmatprep.subr.bf16.mxu0 0
      %1007 = vmatpush1.bf16.msra.mxu0 0
      %1008 = vmatprep.subr.bf16.mxu0 0
      %1009 = vmatpush1.bf16.msra.mxu0 0
      %1010 = vmatprep.subr.bf16.mxu0 0
      %1011 = vmatpush1.bf16.msra.mxu0 0
      %1012 = vmatprep.subr.bf16.mxu0 0
      %1013 = vmatpush1.bf16.msra.mxu0 0
      %1014 = vmatprep.subr.bf16.mxu0 0
      %1015 = vmatpush1.bf16.msra.mxu0 0
      %1016 = vmatprep.subr.bf16.mxu0 0
      %1017 = vmatpush1.bf16.msra.mxu0 0
      %1018 = vmatprep.subr.bf16.mxu0 0
      %1019 = vmatpush1.bf16.msra.mxu0 0
      %1020 = vmatprep.subr.bf16.mxu0 0
      %1021 = vmatpush1.bf16.msra.mxu0 0
      %1022 = vmatprep.subr.bf16.mxu0 0
      %1023 = vmatpush1.bf16.msra.mxu0 0
      %1024 = vmatprep.subr.bf16.mxu0 0
      %1025 = vmatpush1.bf16.msra.mxu0 0
      %1026 = vmatprep.subr.bf16.mxu0 0
      %1027 = vmatpush1.bf16.msra.mxu0 0
      %1028 = vmatprep.subr.bf16.mxu0 0
      %1029 = vmatpush1.bf16.msra.mxu0 0
      %1030 = vmatprep.mubr.bf16.mxu0 0
      %1031 = vmatmul.mubr.bf16.gmra.mrb[0].mxu0 %v990
      %v1032 = vpop.f32.mrb[0].mxu0
      %v1033 = vadd.f32 0.0, %v1032
      %v1034 = vpop.f32.mrb[0].mxu0
      %v1035 = vadd.f32 0.0, %v1034
      %v1036 = vpop.f32.mrb[0].mxu0
      %v1037 = vadd.f32 0.0, %v1036
      %v1038 = vpop.f32.mrb[0].mxu0
      %v1039 = vadd.f32 0.0, %v1038
      %1040 = vdwg.mxu0
      %v1041 = vadd.f32 %v968, %v1033
      %v1042 = vadd.f32 %v969, %v1035
      %v1043 = vadd.f32 %v970, %v1037
      %v1044 = vadd.f32 %v971, %v1039
      %s1045 = scalar_lea.vmem %s232, 88
      %v1046 = vld [vmem:[%s1045] sm:$0xf]
      %v1047 = vld [vmem:[%s1045 + $0x4] sm:$0xf]
      %v1050 = vunpack.c.l.b16 %v1046
      %v1051 = vunpack.c.l.b16 %v1047
      %v1052 = vpack.c.b16 %v1051, %v1050
      %1053 = vrot.lane.b32.xlu0 %v265, 117
      %v1054 = vpop.permute.xlu0 %1053
      %1055 = vrot.lane.b32.xlu0 %v266, 117
      %v1056 = vpop.permute.xlu0 %1055
      %1057 = vrot.lane.b32.xlu0 %v267, 117
      %v1058 = vpop.permute.xlu0 %1057
      %vm1059 = vcmask 957440
      %v1060 = vsel %vm1059, %v1054, %v1056
      %v1061 = vsel %vm1059, %v1056, %v1058
      %v1063 = vsel %vm277, %v1052, 0
      %v1066 = vsel %vm281, %v1060, 0
      %v1069 = vsel %vm281, %v1061, 0
      %1071 = vmatprep.subr.bf16.mxu0 %v1069
      %1072 = vmatpush1.bf16.msra.mxu0 %v1066
      %1073 = vmatprep.subr.bf16.mxu0 0
      %1074 = vmatpush1.bf16.msra.mxu0 0
      %1075 = vmatprep.subr.bf16.mxu0 0
      %1076 = vmatpush1.bf16.msra.mxu0 0
      %1077 = vmatprep.subr.bf16.mxu0 0
      %1078 = vmatpush1.bf16.msra.mxu0 0
      %1079 = vmatprep.subr.bf16.mxu0 0
      %1080 = vmatpush1.bf16.msra.mxu0 0
      %1081 = vmatprep.subr.bf16.mxu0 0
      %1082 = vmatpush1.bf16.msra.mxu0 0
      %1083 = vmatprep.subr.bf16.mxu0 0
      %1084 = vmatpush1.bf16.msra.mxu0 0
      %1085 = vmatprep.subr.bf16.mxu0 0
      %1086 = vmatpush1.bf16.msra.mxu0 0
      %1087 = vmatprep.subr.bf16.mxu0 0
      %1088 = vmatpush1.bf16.msra.mxu0 0
      %1089 = vmatprep.subr.bf16.mxu0 0
      %1090 = vmatpush1.bf16.msra.mxu0 0
      %1091 = vmatprep.subr.bf16.mxu0 0
      %1092 = vmatpush1.bf16.msra.mxu0 0
      %1093 = vmatprep.subr.bf16.mxu0 0
      %1094 = vmatpush1.bf16.msra.mxu0 0
      %1095 = vmatprep.subr.bf16.mxu0 0
      %1096 = vmatpush1.bf16.msra.mxu0 0
      %1097 = vmatprep.subr.bf16.mxu0 0
      %1098 = vmatpush1.bf16.msra.mxu0 0
      %1099 = vmatprep.subr.bf16.mxu0 0
      %1100 = vmatpush1.bf16.msra.mxu0 0
      %1101 = vmatprep.subr.bf16.mxu0 0
      %1102 = vmatpush1.bf16.msra.mxu0 0
      %1103 = vmatprep.mubr.bf16.mxu0 0
      %1104 = vmatmul.mubr.bf16.gmra.mrb[0].mxu0 %v1063
      %v1105 = vpop.f32.mrb[0].mxu0
      %v1106 = vadd.f32 0.0, %v1105
      %v1107 = vpop.f32.mrb[0].mxu0
      %v1108 = vadd.f32 0.0, %v1107
      %v1109 = vpop.f32.mrb[0].mxu0
      %v1110 = vadd.f32 0.0, %v1109
      %v1111 = vpop.f32.mrb[0].mxu0
      %v1112 = vadd.f32 0.0, %v1111
      %1113 = vdwg.mxu0
      %v1114 = vadd.f32 %v1041, %v1106
      %v1115 = vadd.f32 %v1042, %v1108
      %v1116 = vadd.f32 %v1043, %v1110
      %v1117 = vadd.f32 %v1044, %v1112
      %s1118 = scalar_lea.vmem %s232, 96
      %v1119 = vld [vmem:[%s1118] sm:$0xf]
      %v1120 = vld [vmem:[%s1118 + $0x4] sm:$0xf]
      %v1123 = vunpack.c.l.b16 %v1119
      %v1124 = vunpack.c.l.b16 %v1120
      %v1125 = vpack.c.b16 %v1124, %v1123
      %1126 = vrot.lane.b32.xlu0 %v265, 116
      %v1127 = vpop.permute.xlu0 %1126
      %1128 = vrot.lane.b32.xlu0 %v266, 116
      %v1129 = vpop.permute.xlu0 %1128
      %1130 = vrot.lane.b32.xlu0 %v267, 116
      %v1131 = vpop.permute.xlu0 %1130
      %vm1132 = vcmask 949248
      %v1133 = vsel %vm1132, %v1127, %v1129
      %v1134 = vsel %vm1132, %v1129, %v1131
      %v1136 = vsel %vm277, %v1125, 0
      %v1139 = vsel %vm281, %v1133, 0
      %v1142 = vsel %vm281, %v1134, 0
      %1144 = vmatprep.subr.bf16.mxu0 %v1142
      %1145 = vmatpush1.bf16.msra.mxu0 %v1139
      %1146 = vmatprep.subr.bf16.mxu0 0
      %1147 = vmatpush1.bf16.msra.mxu0 0
      %1148 = vmatprep.subr.bf16.mxu0 0
      %1149 = vmatpush1.bf16.msra.mxu0 0
      %1150 = vmatprep.subr.bf16.mxu0 0
      %1151 = vmatpush1.bf16.msra.mxu0 0
      %1152 = vmatprep.subr.bf16.mxu0 0
      %1153 = vmatpush1.bf16.msra.mxu0 0
      %1154 = vmatprep.subr.bf16.mxu0 0
      %1155 = vmatpush1.bf16.msra.mxu0 0
      %1156 = vmatprep.subr.bf16.mxu0 0
      %1157 = vmatpush1.bf16.msra.mxu0 0
      %1158 = vmatprep.subr.bf16.mxu0 0
      %1159 = vmatpush1.bf16.msra.mxu0 0
      %1160 = vmatprep.subr.bf16.mxu0 0
      %1161 = vmatpush1.bf16.msra.mxu0 0
      %1162 = vmatprep.subr.bf16.mxu0 0
      %1163 = vmatpush1.bf16.msra.mxu0 0
      %1164 = vmatprep.subr.bf16.mxu0 0
      %1165 = vmatpush1.bf16.msra.mxu0 0
      %1166 = vmatprep.subr.bf16.mxu0 0
      %1167 = vmatpush1.bf16.msra.mxu0 0
      %1168 = vmatprep.subr.bf16.mxu0 0
      %1169 = vmatpush1.bf16.msra.mxu0 0
      %1170 = vmatprep.subr.bf16.mxu0 0
      %1171 = vmatpush1.bf16.msra.mxu0 0
      %1172 = vmatprep.subr.bf16.mxu0 0
      %1173 = vmatpush1.bf16.msra.mxu0 0
      %1174 = vmatprep.subr.bf16.mxu0 0
      %1175 = vmatpush1.bf16.msra.mxu0 0
      %1176 = vmatprep.mubr.bf16.mxu0 0
      %1177 = vmatmul.mubr.bf16.gmra.mrb[0].mxu0 %v1136
      %v1178 = vpop.f32.mrb[0].mxu0
      %v1179 = vadd.f32 0.0, %v1178
      %v1180 = vpop.f32.mrb[0].mxu0
      %v1181 = vadd.f32 0.0, %v1180
      %v1182 = vpop.f32.mrb[0].mxu0
      %v1183 = vadd.f32 0.0, %v1182
      %v1184 = vpop.f32.mrb[0].mxu0
      %v1185 = vadd.f32 0.0, %v1184
      %1186 = vdwg.mxu0
      %v1187 = vadd.f32 %v1114, %v1179
      %v1188 = vadd.f32 %v1115, %v1181
      %v1189 = vadd.f32 %v1116, %v1183
      %v1190 = vadd.f32 %v1117, %v1185
      %s1191 = scalar_lea.vmem %s232, 104
      %v1192 = vld [vmem:[%s1191] sm:$0xf]
      %v1193 = vld [vmem:[%s1191 + $0x4] sm:$0xf]
      %v1196 = vunpack.c.l.b16 %v1192
      %v1197 = vunpack.c.l.b16 %v1193
      %v1198 = vpack.c.b16 %v1197, %v1196
      %1199 = vrot.lane.b32.xlu0 %v265, 115
      %v1200 = vpop.permute.xlu0 %1199
      %1201 = vrot.lane.b32.xlu0 %v266, 115
      %v1202 = vpop.permute.xlu0 %1201
      %1203 = vrot.lane.b32.xlu0 %v267, 115
      %v1204 = vpop.permute.xlu0 %1203
      %vm1205 = vcmask 941056
      %v1206 = vsel %vm1205, %v1200, %v1202
      %v1207 = vsel %vm1205, %v1202, %v1204
      %v1209 = vsel %vm277, %v1198, 0
      %v1212 = vsel %vm281, %v1206, 0
      %v1215 = vsel %vm281, %v1207, 0
      %1217 = vmatprep.subr.bf16.mxu0 %v1215
      %1218 = vmatpush1.bf16.msra.mxu0 %v1212
      %1219 = vmatprep.subr.bf16.mxu0 0
      %1220 = vmatpush1.bf16.msra.mxu0 0
      %1221 = vmatprep.subr.bf16.mxu0 0
      %1222 = vmatpush1.bf16.msra.mxu0 0
      %1223 = vmatprep.subr.bf16.mxu0 0
      %1224 = vmatpush1.bf16.msra.mxu0 0
      %1225 = vmatprep.subr.bf16.mxu0 0
      %1226 = vmatpush1.bf16.msra.mxu0 0
      %1227 = vmatprep.subr.bf16.mxu0 0
      %1228 = vmatpush1.bf16.msra.mxu0 0
      %1229 = vmatprep.subr.bf16.mxu0 0
      %1230 = vmatpush1.bf16.msra.mxu0 0
      %1231 = vmatprep.subr.bf16.mxu0 0
      %1232 = vmatpush1.bf16.msra.mxu0 0
      %1233 = vmatprep.subr.bf16.mxu0 0
      %1234 = vmatpush1.bf16.msra.mxu0 0
      %1235 = vmatprep.subr.bf16.mxu0 0
      %1236 = vmatpush1.bf16.msra.mxu0 0
      %1237 = vmatprep.subr.bf16.mxu0 0
      %1238 = vmatpush1.bf16.msra.mxu0 0
      %1239 = vmatprep.subr.bf16.mxu0 0
      %1240 = vmatpush1.bf16.msra.mxu0 0
      %1241 = vmatprep.subr.bf16.mxu0 0
      %1242 = vmatpush1.bf16.msra.mxu0 0
      %1243 = vmatprep.subr.bf16.mxu0 0
      %1244 = vmatpush1.bf16.msra.mxu0 0
      %1245 = vmatprep.subr.bf16.mxu0 0
      %1246 = vmatpush1.bf16.msra.mxu0 0
      %1247 = vmatprep.subr.bf16.mxu0 0
      %1248 = vmatpush1.bf16.msra.mxu0 0
      %1249 = vmatprep.mubr.bf16.mxu0 0
      %1250 = vmatmul.mubr.bf16.gmra.mrb[0].mxu0 %v1209
      %v1251 = vpop.f32.mrb[0].mxu0
      %v1252 = vadd.f32 0.0, %v1251
      %v1253 = vpop.f32.mrb[0].mxu0
      %v1254 = vadd.f32 0.0, %v1253
      %v1255 = vpop.f32.mrb[0].mxu0
      %v1256 = vadd.f32 0.0, %v1255
      %v1257 = vpop.f32.mrb[0].mxu0
      %v1258 = vadd.f32 0.0, %v1257
      %1259 = vdwg.mxu0
      %v1260 = vadd.f32 %v1187, %v1252
      %v1261 = vadd.f32 %v1188, %v1254
      %v1262 = vadd.f32 %v1189, %v1256
      %v1263 = vadd.f32 %v1190, %v1258
      %s1264 = scalar_lea.vmem %s232, 112
      %v1265 = vld [vmem:[%s1264] sm:$0xf]
      %v1266 = vld [vmem:[%s1264 + $0x4] sm:$0xf]
      %v1269 = vunpack.c.l.b16 %v1265
      %v1270 = vunpack.c.l.b16 %v1266
      %v1271 = vpack.c.b16 %v1270, %v1269
      %1272 = vrot.lane.b32.xlu0 %v265, 114
      %v1273 = vpop.permute.xlu0 %1272
      %1274 = vrot.lane.b32.xlu0 %v266, 114
      %v1275 = vpop.permute.xlu0 %1274
      %1276 = vrot.lane.b32.xlu0 %v267, 114
      %v1277 = vpop.permute.xlu0 %1276
      %vm1278 = vcmask 932864
      %v1279 = vsel %vm1278, %v1273, %v1275
      %v1280 = vsel %vm1278, %v1275, %v1277
      %v1282 = vsel %vm277, %v1271, 0
      %v1285 = vsel %vm281, %v1279, 0
      %v1288 = vsel %vm281, %v1280, 0
      %1290 = vmatprep.subr.bf16.mxu0 %v1288
      %1291 = vmatpush1.bf16.msra.mxu0 %v1285
      %1292 = vmatprep.subr.bf16.mxu0 0
      %1293 = vmatpush1.bf16.msra.mxu0 0
      %1294 = vmatprep.subr.bf16.mxu0 0
      %1295 = vmatpush1.bf16.msra.mxu0 0
      %1296 = vmatprep.subr.bf16.mxu0 0
      %1297 = vmatpush1.bf16.msra.mxu0 0
      %1298 = vmatprep.subr.bf16.mxu0 0
      %1299 = vmatpush1.bf16.msra.mxu0 0
      %1300 = vmatprep.subr.bf16.mxu0 0
      %1301 = vmatpush1.bf16.msra.mxu0 0
      %1302 = vmatprep.subr.bf16.mxu0 0
      %1303 = vmatpush1.bf16.msra.mxu0 0
      %1304 = vmatprep.subr.bf16.mxu0 0
      %1305 = vmatpush1.bf16.msra.mxu0 0
      %1306 = vmatprep.subr.bf16.mxu0 0
      %1307 = vmatpush1.bf16.msra.mxu0 0
      %1308 = vmatprep.subr.bf16.mxu0 0
      %1309 = vmatpush1.bf16.msra.mxu0 0
      %1310 = vmatprep.subr.bf16.mxu0 0
      %1311 = vmatpush1.bf16.msra.mxu0 0
      %1312 = vmatprep.subr.bf16.mxu0 0
      %1313 = vmatpush1.bf16.msra.mxu0 0
      %1314 = vmatprep.subr.bf16.mxu0 0
      %1315 = vmatpush1.bf16.msra.mxu0 0
      %1316 = vmatprep.subr.bf16.mxu0 0
      %1317 = vmatpush1.bf16.msra.mxu0 0
      %1318 = vmatprep.subr.bf16.mxu0 0
      %1319 = vmatpush1.bf16.msra.mxu0 0
      %1320 = vmatprep.subr.bf16.mxu0 0
      %1321 = vmatpush1.bf16.msra.mxu0 0
      %1322 = vmatprep.mubr.bf16.mxu0 0
      %1323 = vmatmul.mubr.bf16.gmra.mrb[0].mxu0 %v1282
      %v1324 = vpop.f32.mrb[0].mxu0
      %v1325 = vadd.f32 0.0, %v1324
      %v1326 = vpop.f32.mrb[0].mxu0
      %v1327 = vadd.f32 0.0, %v1326
      %v1328 = vpop.f32.mrb[0].mxu0
      %v1329 = vadd.f32 0.0, %v1328
      %v1330 = vpop.f32.mrb[0].mxu0
      %v1331 = vadd.f32 0.0, %v1330
      %1332 = vdwg.mxu0
      %v1333 = vadd.f32 %v1260, %v1325
      %v1334 = vadd.f32 %v1261, %v1327
      %v1335 = vadd.f32 %v1262, %v1329
      %v1336 = vadd.f32 %v1263, %v1331
      %v1337 = vld [vmem:[%s237] sm:$0xff]
      %v1338 = vld [vmem:[%s237 + $0x8] sm:$0xff]
      %1340 = vset.pattern.permute.xlu0 0
      %1341 = vperm.xlu0 %1340, %v1337
      %v1342 = vpop.permute.xlu0 %1341
      %1345 = vset.pattern.permute.xlu0 0
      %1346 = vperm.xlu0 %1345, %v1338
      %v1347 = vpop.permute.xlu0 %1346
      %v1349 = vadd.f32 %v1333, %v1342
      %v1350 = vadd.f32 %v1334, %v1342
      %v1351 = vadd.f32 %v1335, %v1347
      %v1352 = vadd.f32 %v1336, %v1347
      %vm1353 = vcmp.ge.f32.partialorder %v1349, 0.0
      %vm1354 = vcmp.ge.f32.partialorder %v1350, 0.0
      %vm1355 = vcmp.ge.f32.partialorder %v1351, 0.0
      %vm1356 = vcmp.ge.f32.partialorder %v1352, 0.0
      %v1357 = vmul.f32 %v1349, 0.2
      %v1358 = vmul.f32 %v1350, 0.2
      %v1359 = vmul.f32 %v1351, 0.2
      %v1360 = vmul.f32 %v1352, 0.2
      %v1361 = vsel %vm1353, %v1349, %v1357
      %v1362 = vsel %vm1354, %v1350, %v1358
      %v1363 = vsel %vm1355, %v1351, %v1359
      %v1364 = vsel %vm1356, %v1352, %v1360
      %1365 = vst [vmem:[%s246] sm:$0xff] %v1361
      %1366 = vst [vmem:[%s246 + $0x8] sm:$0xff] %v1362
      %1367 = vst [vmem:[%s246 + $0x10] sm:$0xff] %v1363
      %1368 = vst [vmem:[%s246 + $0x18] sm:$0xff] %v1364
      %p1369 = scmp.lt.s32.totalorder %s19, 1
      %s1370 = scalar_select %p1369, %s19, 1
      %p1371 = scmp.lt.s32.totalorder %s18, 0
      %s1372 = scalar_select %p1371, %s18, 0
      %s1373 = smul.addr %s1372, 4
      %s1374 = smul.addr %s1370, 4
      %s1375 = sadd.s32 %s1373, %s1374
      %s1376 = smul.addr %s1375, 8
      %s1377 = scalar_lea.vmem %s3, %s1376
      // Predicated region
      $region33: #{forward.11} parent=31 // pred_check
        %p1378 = pneg %p126
      $region34: #{forward.11} parent=31 // pred_check_branch
        %1380 = sbr.rel (%p1378) target = $region36
      $region35: #{forward.11} parent=31 // pred_region
        _
      $region36: #{forward.11} parent=31 // pred_fallthru
        _
    $region32: #{forward.11} parent=5 // pred_fallthru
      _
    %p1381 = scmp.le.s32.totalorder 2, %s9
    // Predicated region
    $region37: #{forward.11} parent=5 // pred_check
      %p1382 = pneg %p1381
    $region38: #{forward.11} parent=5 // pred_check_branch
      %1384 = sbr.rel (%p1382) target = $region40
    $region39: #{forward.11} parent=5 // pred_region
      %s1385 = ssub.s32 %s9, 2
      // Predicated region
      $region41: #{forward.11} parent=39 // pred_check
        %p1386 = pneg %p132
      $region42: #{forward.11} parent=39 // pred_check_branch
        %1388 = sbr.rel (%p1386) target = $region44
      $region43: #{forward.11} parent=39 // pred_region
        %p1389 = scmp.lt.s32.totalorder %s21, 1
        %s1390 = scalar_select %p1389, %s21, 1
        %p1391 = scmp.lt.s32.totalorder %s20, 0
        %s1392 = scalar_select %p1391, %s20, 0
        %s1393 = smul.addr %s1392, 4
        %s1394 = smul.addr %s1390, 4
        %s1395 = sadd.s32 %s1393, %s1394
        %s1396 = smul.addr %s1395, 8
        %s1397 = scalar_lea.vmem %s3, %s1396
      $region44: #{forward.11} parent=39 // pred_fallthru
        _
    $region40: #{forward.11} parent=5 // pred_fallthru
      _
  $region6: #{forward.11} parent=0 // loop_footer
    %s13 = sadd.s32 1, %s9
  $region7: #{forward.11} parent=0 // loop_footer_branch
    %8 = sbr.rel target = $region3
  $region8: #{forward.11} parent=0 // loop_exit
    _

</llo_original>
